<compile_context>
chip_gen: v6e
topology: v6e:2x2x1
jax: 0.10.0
libtpu: 0.0.40
codegen_flags: <defaults>
</compile_context>

<pallas_src>
import functools
import math

import jax
import jax.numpy as jnp
from jax.experimental import pallas as pl
from jax.experimental.pallas import tpu as pltpu


# ------------------------------ fused kernel ---------------------------------

def _informer_kernel(sc, offs, x_enc_ref, x_mark_enc_ref, x_dec_ref,
                     x_mark_dec_ref, slab_ref, o_ref):
    """Full Informer forward for one batch element; weights live in slab_ref."""
    Le, Ld = sc["Le"], sc["Ld"]
    H, Dh = sc["H"], sc["Dh"]
    n_enc, n_dec = sc["n_enc_layers"], sc["n_dec_layers"]
    out_len = sc["out_len"]
    scale = 1.0 / math.sqrt(Dh)
    f32, bf16 = jnp.float32, jnp.bfloat16

    def get(name):
        r, m, n = offs[name]
        return slab_ref[r:r + m, :n]        # static, 8-row-aligned, lane-0 slice

    def mm(a, b):
        # bf16 operands on the MXU, f32 accumulation.
        return jax.lax.dot_general(
            a.astype(bf16), b.astype(bf16),
            dimension_numbers=(((1,), (0,)), ((), ())),
            preferred_element_type=f32)

    def mm_nt(a, b):
        # a:[M,K] x b:[N,K] -> [M,N] (contract last dims; no explicit transpose)
        return jax.lax.dot_general(
            a.astype(bf16), b.astype(bf16),
            dimension_numbers=(((1,), (1,)), ((), ())),
            preferred_element_type=f32)

    def layernorm(x, pfx, eps=1e-5):
        mean = jnp.mean(x, axis=-1, keepdims=True)
        var = jnp.mean(jnp.square(x - mean), axis=-1, keepdims=True)
        return (x - mean) * jax.lax.rsqrt(var + eps) * get(pfx + "_g") + get(pfx + "_b")

    # Causal additive mask for decoder self-attention; built once, reused for
    # every head/layer.  Every row keeps its diagonal so -1e30 is safe.
    row = jax.lax.broadcasted_iota(jnp.int32, (Ld, Ld), 0)
    col = jax.lax.broadcasted_iota(jnp.int32, (Ld, Ld), 1)
    causal_bias = jnp.where(col <= row, 0.0, -1e30).astype(f32)

    def attention(pfx, xq, xkv, bias):
        # Per-head weights pre-sliced host-side; wo folded into the PV output,
        # so there is no H-way lane concatenate and every MXU operand starts
        # at lane 0.  ProbSparse == dense here (see module docstring).
        out = None
        for h in range(H):
            q = mm(xq, get(f"{pfx}_wq{h}")) + get(f"{pfx}_bq{h}")
            k = mm(xkv, get(f"{pfx}_wk{h}")) + get(f"{pfx}_bk{h}")
            v = mm(xkv, get(f"{pfx}_wv{h}")) + get(f"{pfx}_bv{h}")
            s = mm_nt(q, k) * scale
            if bias is not None:
                s = s + bias
            s = s - jnp.max(s, axis=-1, keepdims=True)
            p = jnp.exp(s)
            p = p * pl.reciprocal(jnp.sum(p, axis=-1, keepdims=True), approx=True)
            head = mm(p, v)                              # [Lq, Dh]
            contrib = mm(head, get(f"{pfx}_wo{h}"))      # [Lq, dm]
            out = contrib if out is None else out + contrib
        return out + get(f"{pfx}_bo")

    def embed(pfx, x, mark, L):
        # TokenEmbedding: Conv1d(c_in, d_model, k=3, circular pad, no bias)
        # computed as three tap matmuls on circularly shifted rows, plus the
        # precomputed positional embedding and TimeFeatureEmbedding linear.
        # dropout p=0 -> identity.
        x_prev = jnp.concatenate([x[L - 1:L, :], x[:L - 1, :]], axis=0)
        x_next = jnp.concatenate([x[1:L, :], x[0:1, :]], axis=0)
        ve = (mm(x_prev, get(f"{pfx}_tap0")) +
              mm(x, get(f"{pfx}_tap1")) +
              mm(x_next, get(f"{pfx}_tap2")))
        te = mm(mark, get(f"{pfx}_temp_w")) + get(f"{pfx}_temp_b")
        return ve + te + get(f"{pfx}_pe")

    x_enc = x_enc_ref[0].astype(f32)
    x_mark_enc = x_mark_enc_ref[0].astype(f32)
    x_dec = x_dec_ref[0].astype(f32)
    x_mark_dec = x_mark_dec_ref[0].astype(f32)

    # --------------------------------- encoder ------------------------------
    enc = embed("enc_emb", x_enc, x_mark_enc, Le)
    for i in range(n_enc):
        pfx = f"enc{i}"
        enc = layernorm(enc + attention(f"{pfx}_attn", enc, enc, None),
                        f"{pfx}_norm1")
        y = jnp.maximum(mm(enc, get(f"{pfx}_w1")) + get(f"{pfx}_b1"), 0.0)
        y = mm(y, get(f"{pfx}_w2")) + get(f"{pfx}_b2")
        enc = layernorm(enc + y, f"{pfx}_norm2")
    enc = layernorm(enc, "enc_norm")

    # --------------------------------- decoder ------------------------------
    dec = embed("dec_emb", x_dec, x_mark_dec, Ld)
    for i in range(n_dec):
        pfx = f"dec{i}"
        dec = layernorm(dec + attention(f"{pfx}_self", dec, dec, causal_bias),
                        f"{pfx}_norm1")
        dec = layernorm(dec + attention(f"{pfx}_cross", dec, enc, None),
                        f"{pfx}_norm2")
        y = jnp.maximum(mm(dec, get(f"{pfx}_w1")) + get(f"{pfx}_b1"), 0.0)
        y = mm(y, get(f"{pfx}_w2")) + get(f"{pfx}_b2")
        dec = layernorm(dec + y, f"{pfx}_norm3")
    dec = layernorm(dec, "dec_norm")

    proj = mm(dec, get("proj_w")) + get("proj_b")        # [Ld, c_out]
    # Single HBM writeback.
    o_ref[0] = proj[Ld - out_len:, :].astype(o_ref.dtype)


# --------------------------- weight slab packing ------------------------------

class _SlabPacker:
    """Packs 1-D / 2-D f32 params into one lane-dense [R, 128] slab.

    Every entry starts at an 8-row boundary and at lane 0, so static in-kernel
    slices need no lane/sublane realignment."""

    def __init__(self):
        self._blocks = []
        self._offsets = {}
        self._rows = 0

    def add(self, name, arr):
        arr = jnp.asarray(arr, jnp.float32)
        if arr.ndim == 1:
            arr = arr.reshape(1, -1)
        m, n = arr.shape
        assert n <= 128 and name not in self._offsets
        rows = ((m + 7) // 8) * 8
        self._blocks.append(jnp.pad(arr, ((0, rows - m), (0, 128 - n))))
        self._offsets[name] = (self._rows, m, n)
        self._rows += rows

    def finalize(self):
        return jnp.concatenate(self._blocks, axis=0), self._offsets


def positional_embedding(L, d_model):
    pos = jnp.arange(L, dtype=jnp.float32)[:, None]
    div = jnp.exp(jnp.arange(0, d_model, 2, dtype=jnp.float32)
                  * (-math.log(10000.0) / d_model))
    pe = jnp.zeros((L, d_model), jnp.float32)
    pe = pe.at[:, 0::2].set(jnp.sin(pos * div))
    pe = pe.at[:, 1::2].set(jnp.cos(pos * div))
    return pe


def pack_params(params, cfg, Le, Ld):
    """Fold all weights into one kernel-friendly slab (done once, host-side)."""
    dm, H = cfg["d_model"], cfg["n_heads"]
    Dh = dm // H
    pk = _SlabPacker()

    def add_emb(pfx, p, L):
        for t in range(3):                                   # circular Conv1d taps
            pk.add(f"{pfx}_tap{t}", p["conv_w"][:, :, t].T)  # [c_in, d_model]
        pk.add(f"{pfx}_temp_w", p["temp_w"])
        pk.add(f"{pfx}_temp_b", p["temp_b"])
        pk.add(f"{pfx}_pe", positional_embedding(L, dm))

    def add_attn(pfx, p):
        for h in range(H):                                   # per-head weight slices
            sl = slice(h * Dh, (h + 1) * Dh)
            pk.add(f"{pfx}_wq{h}", p["wq"][:, sl])
            pk.add(f"{pfx}_bq{h}", p["bq"][sl])
            pk.add(f"{pfx}_wk{h}", p["wk"][:, sl])
            pk.add(f"{pfx}_bk{h}", p["bk"][sl])
            pk.add(f"{pfx}_wv{h}", p["wv"][:, sl])
            pk.add(f"{pfx}_bv{h}", p["bv"][sl])
            pk.add(f"{pfx}_wo{h}", p["wo"][sl, :])           # out-proj folded per head
        pk.add(f"{pfx}_bo", p["bo"])

    def add_ffn(pfx, p):
        pk.add(f"{pfx}_w1", p["w1"]); pk.add(f"{pfx}_b1", p["b1"])
        pk.add(f"{pfx}_w2", p["w2"]); pk.add(f"{pfx}_b2", p["b2"])

    def add_norm(pfx, g, b):
        pk.add(f"{pfx}_g", g); pk.add(f"{pfx}_b", b)

    add_emb("enc_emb", params["enc_emb"], Le)
    add_emb("dec_emb", params["dec_emb"], Ld)
    for i, p in enumerate(params["enc_layers"]):
        add_attn(f"enc{i}_attn", p["attn"])
        add_ffn(f"enc{i}", p)
        add_norm(f"enc{i}_norm1", p["norm1_g"], p["norm1_b"])
        add_norm(f"enc{i}_norm2", p["norm2_g"], p["norm2_b"])
    add_norm("enc_norm", params["enc_norm_g"], params["enc_norm_b"])
    for i, p in enumerate(params["dec_layers"]):
        add_attn(f"dec{i}_self", p["self_attn"])
        add_attn(f"dec{i}_cross", p["cross_attn"])
        add_ffn(f"dec{i}", p)
        add_norm(f"dec{i}_norm1", p["norm1_g"], p["norm1_b"])
        add_norm(f"dec{i}_norm2", p["norm2_g"], p["norm2_b"])
        add_norm(f"dec{i}_norm3", p["norm3_g"], p["norm3_b"])
    add_norm("dec_norm", params["dec_norm_g"], params["dec_norm_b"])
    pk.add("proj_w", params["proj_w"])
    pk.add("proj_b", params["proj_b"])
    return pk.finalize()


# ------------------------------- forward -------------------------------------

def informer_forward(params, x_enc, x_mark_enc, x_dec, x_mark_dec, *, cfg):
    B, Le, Ce = x_enc.shape
    _, Ld, Cd = x_dec.shape
    Cm = x_mark_enc.shape[-1]
    dm, H = cfg["d_model"], cfg["n_heads"]
    out_len, c_out = cfg["out_len"], cfg["c_out"]

    # ProbSparse == dense equivalence guards: if every query is in the top-u
    # set, dense (causal) softmax attention is exact.
    assert cfg["factor"] * math.ceil(math.log(Le)) >= Le, "top-u would drop encoder queries"
    assert cfg["factor"] * math.ceil(math.log(Ld)) >= Ld, "top-u would drop decoder queries"

    slab, offs = pack_params(params, cfg, Le, Ld)
    sc = dict(Le=Le, Ld=Ld, dm=dm, H=H, Dh=dm // H, out_len=out_len,
              n_enc_layers=len(params["enc_layers"]),
              n_dec_layers=len(params["dec_layers"]))

    kernel = functools.partial(_informer_kernel, sc, offs)
    grid_spec = pltpu.PrefetchScalarGridSpec(
        num_scalar_prefetch=0,
        grid=(B,),                                       # one batch elem / step
        in_specs=[
            pl.BlockSpec((1, Le, Ce), lambda b: (b, 0, 0)),
            pl.BlockSpec((1, Le, Cm), lambda b: (b, 0, 0)),
            pl.BlockSpec((1, Ld, Cd), lambda b: (b, 0, 0)),
            pl.BlockSpec((1, Ld, Cm), lambda b: (b, 0, 0)),
            pl.BlockSpec(slab.shape, lambda b: (0, 0)),  # one weight-slab DMA
        ],
        out_specs=pl.BlockSpec((1, out_len, c_out), lambda b: (b, 0, 0)),
    )
    return pl.pallas_call(
        kernel,
        out_shape=jax.ShapeDtypeStruct((B, out_len, c_out), x_enc.dtype),
        grid_spec=grid_spec,
        compiler_params=pltpu.CompilerParams(
            dimension_semantics=("parallel",)),          # v7x: batch across 2 TCs
    )(x_enc, x_mark_enc, x_dec, x_mark_dec, slab)


# ------------------------------- parameters ----------------------------------

class KeyGen:
    def __init__(self, key):
        self.key, self.i = key, 0

    def __call__(self):
        self.i += 1
        return jax.random.fold_in(self.key, self.i)


def _w(kg, shape, scale=0.02):
    return scale * jax.random.normal(kg(), shape, dtype=jnp.float32)


def _zeros(n):
    return jnp.zeros((n,), jnp.float32)


def _ones(n):
    return jnp.ones((n,), jnp.float32)


def init_attention_layer(kg, d_model):
    return dict(
        wq=_w(kg, (d_model, d_model)), bq=_zeros(d_model),
        wk=_w(kg, (d_model, d_model)), bk=_zeros(d_model),
        wv=_w(kg, (d_model, d_model)), bv=_zeros(d_model),
        wo=_w(kg, (d_model, d_model)), bo=_zeros(d_model),
    )


def init_embedding(kg, c_in, d_model, mark_dim):
    return dict(
        conv_w=_w(kg, (d_model, c_in, 3)),        # torch Conv1d weight layout
        temp_w=_w(kg, (mark_dim, d_model)),       # TimeFeatureEmbedding linear
        temp_b=_zeros(d_model),
    )


def init_encoder_layer(kg, d_model, d_ff):
    return dict(
        attn=init_attention_layer(kg, d_model),
        w1=_w(kg, (d_model, d_ff)), b1=_zeros(d_ff),
        w2=_w(kg, (d_ff, d_model)), b2=_zeros(d_model),
        norm1_g=_ones(d_model), norm1_b=_zeros(d_model),
        norm2_g=_ones(d_model), norm2_b=_zeros(d_model),
    )


def init_decoder_layer(kg, d_model, d_ff):
    return dict(
        self_attn=init_attention_layer(kg, d_model),
        cross_attn=init_attention_layer(kg, d_model),
        w1=_w(kg, (d_model, d_ff)), b1=_zeros(d_ff),
        w2=_w(kg, (d_ff, d_model)), b2=_zeros(d_model),
        norm1_g=_ones(d_model), norm1_b=_zeros(d_model),
        norm2_g=_ones(d_model), norm2_b=_zeros(d_model),
        norm3_g=_ones(d_model), norm3_b=_zeros(d_model),
    )


def init_informer(key, cfg):
    kg = KeyGen(key)
    return dict(
        enc_emb=init_embedding(kg, cfg["enc_in"], cfg["d_model"], cfg["mark_dim"]),
        dec_emb=init_embedding(kg, cfg["dec_in"], cfg["d_model"], cfg["mark_dim"]),
        enc_layers=[init_encoder_layer(kg, cfg["d_model"], cfg["d_ff_enc"])
                    for _ in range(cfg["n_enc_layers"])],
        enc_norm_g=_ones(cfg["d_model"]), enc_norm_b=_zeros(cfg["d_model"]),
        dec_layers=[init_decoder_layer(kg, cfg["d_model"], cfg["d_ff_dec"])
                    for _ in range(cfg["n_dec_layers"])],
        dec_norm_g=_ones(cfg["d_model"]), dec_norm_b=_zeros(cfg["d_model"]),
        proj_w=_w(kg, (cfg["d_model"], cfg["c_out"])),
        proj_b=_zeros(cfg["c_out"]),
    )


# ---------------------------------- main --------------------------------------

if __name__ == "__main__":
    cfg = dict(
        enc_in=4, dec_in=4, c_out=4, mark_dim=4,   # inputs, outputs, time marks
        d_model=32, n_heads=4, d_ff_enc=64, d_ff_dec=64,
        n_enc_layers=2, n_dec_layers=1,
        factor=6, out_len=8,
    )
    B, L_enc, L_dec = 2, 16, 12

    params = init_informer(jax.random.PRNGKey(0), cfg)

    kin = jax.random.split(jax.random.PRNGKey(0), 4)
    x_enc = jax.random.normal(kin[0], (B, L_enc, cfg["enc_in"]), jnp.float32)
    x_mark_enc = jax.random.normal(kin[1], (B, L_enc, cfg["mark_dim"]), jnp.float32)
    x_dec = jax.random.normal(kin[2], (B, L_dec, cfg["dec_in"]), jnp.float32)
    x_mark_dec = jax.random.normal(kin[3], (B, L_dec, cfg["mark_dim"]), jnp.float32)

    fwd = jax.jit(functools.partial(informer_forward, cfg=cfg))
    out = fwd(params, x_enc, x_mark_enc, x_dec, x_mark_dec)
    out = jax.block_until_ready(out)
    assert out.shape == (B, cfg["out_len"], cfg["c_out"]), out.shape
    assert bool(jnp.all(jnp.isfinite(out)))
    print("KERNEL_OK")
</pallas_src>

<mosaic_0001>
module attributes {stable_mosaic.version = 11 : i64} {
  func.func @_informer_kernel(%arg0: i32, %arg1: memref<1x16x4xf32, #tpu.memory_space<vmem>>, %arg2: memref<1x16x4xf32, #tpu.memory_space<vmem>>, %arg3: memref<1x12x4xf32, #tpu.memory_space<vmem>>, %arg4: memref<1x12x4xf32, #tpu.memory_space<vmem>>, %arg5: memref<2712x128xf32, #tpu.memory_space<vmem>>, %arg6: memref<1x8x4xf32, #tpu.memory_space<vmem>>) attributes {dimension_semantics = [#tpu.dimension_semantics<parallel>], iteration_bounds = array<i64: 2>, scalar_prefetch = 0 : i64, scratch_operands = 0 : i64, tpu.core_type = #tpu.core_type<tc>, window_params = [{transform_indices = @transform_0, window_bounds = array<i64: 1, 16, 4>}, {transform_indices = @transform_1, window_bounds = array<i64: 1, 16, 4>}, {transform_indices = @transform_2, window_bounds = array<i64: 1, 12, 4>}, {transform_indices = @transform_3, window_bounds = array<i64: 1, 12, 4>}, {pipeline_mode = #tpu.pipeline_mode<synchronous>, transform_indices = @transform_4, window_bounds = array<i64: 2712, 128>}, {transform_indices = @transform_5, window_bounds = array<i64: 1, 8, 4>}]} {
    %0 = tpu.iota {dimensions = array<i32: 0>} : vector<12x12xi32>
    %1 = tpu.iota {dimensions = array<i32: 1>} : vector<12x12xi32>
    %2 = arith.cmpi sle, %1, %0 : vector<12x12xi32>
    %cst = arith.constant 0.000000e+00 : f32
    %cst_0 = arith.constant -1.000000e+30 : f32
    %3 = vector.broadcast %cst : f32 to vector<12x12xf32>
    %4 = vector.broadcast %cst_0 : f32 to vector<12x12xf32>
    %5 = arith.select %2, %3, %4 : vector<12x12xi1>, vector<12x12xf32>
    %c0 = arith.constant 0 : index
    %c0_1 = arith.constant 0 : index
    %c0_2 = arith.constant 0 : index
    %6 = vector.load %arg1[%c0, %c0_1, %c0_2] : memref<1x16x4xf32, #tpu.memory_space<vmem>>, vector<1x16x4xf32>
    %7 = vector.shape_cast %6 : vector<1x16x4xf32> to vector<16x4xf32>
    %c0_3 = arith.constant 0 : index
    %c0_4 = arith.constant 0 : index
    %c0_5 = arith.constant 0 : index
    %8 = vector.load %arg2[%c0_3, %c0_4, %c0_5] : memref<1x16x4xf32, #tpu.memory_space<vmem>>, vector<1x16x4xf32>
    %9 = vector.shape_cast %8 : vector<1x16x4xf32> to vector<16x4xf32>
    %c0_6 = arith.constant 0 : index
    %c0_7 = arith.constant 0 : index
    %c0_8 = arith.constant 0 : index
    %10 = vector.load %arg3[%c0_6, %c0_7, %c0_8] : memref<1x12x4xf32, #tpu.memory_space<vmem>>, vector<1x12x4xf32>
    %11 = vector.shape_cast %10 : vector<1x12x4xf32> to vector<12x4xf32>
    %c0_9 = arith.constant 0 : index
    %c0_10 = arith.constant 0 : index
    %c0_11 = arith.constant 0 : index
    %12 = vector.load %arg4[%c0_9, %c0_10, %c0_11] : memref<1x12x4xf32, #tpu.memory_space<vmem>>, vector<1x12x4xf32>
    %13 = vector.shape_cast %12 : vector<1x12x4xf32> to vector<12x4xf32>
    %14 = vector.extract_strided_slice %7 {offsets = [15, 0], sizes = [1, 4], strides = [1, 1]} : vector<16x4xf32> to vector<1x4xf32>
    %15 = vector.extract_strided_slice %7 {offsets = [0, 0], sizes = [15, 4], strides = [1, 1]} : vector<16x4xf32> to vector<15x4xf32>
    %16 = tpu.concatenate %14, %15 in 0 : vector<1x4xf32>, vector<15x4xf32> -> vector<16x4xf32>
    %17 = vector.extract_strided_slice %7 {offsets = [1, 0], sizes = [15, 4], strides = [1, 1]} : vector<16x4xf32> to vector<15x4xf32>
    %18 = vector.extract_strided_slice %7 {offsets = [0, 0], sizes = [1, 4], strides = [1, 1]} : vector<16x4xf32> to vector<1x4xf32>
    %19 = tpu.concatenate %17, %18 in 0 : vector<15x4xf32>, vector<1x4xf32> -> vector<16x4xf32>
    %c0_12 = arith.constant 0 : index
    %c0_13 = arith.constant 0 : index
    %20 = vector.load %arg5[%c0_12, %c0_13] : memref<2712x128xf32, #tpu.memory_space<vmem>>, vector<4x32xf32>
    %21 = arith.truncf %16 : vector<16x4xf32> to vector<16x4xbf16>
    %22 = arith.truncf %20 : vector<4x32xf32> to vector<4x32xbf16>
    %cst_14 = arith.constant dense<0.000000e+00> : vector<16x32xf32>
    %23 = tpu.matmul %21, %22, %cst_14 {dimension_numbers = #tpu.dot_dimension_numbers<[1], [0], [0], [1], [0, 0, 1, 1], [], []>} : vector<16x4xbf16>, vector<4x32xbf16>, vector<16x32xf32> -> vector<16x32xf32>
    %c8 = arith.constant 8 : index
    %c0_15 = arith.constant 0 : index
    %24 = vector.load %arg5[%c8, %c0_15] : memref<2712x128xf32, #tpu.memory_space<vmem>>, vector<4x32xf32>
    %25 = arith.truncf %7 : vector<16x4xf32> to vector<16x4xbf16>
    %26 = arith.truncf %24 : vector<4x32xf32> to vector<4x32xbf16>
    %cst_16 = arith.constant dense<0.000000e+00> : vector<16x32xf32>
    %27 = tpu.matmul %25, %26, %cst_16 {dimension_numbers = #tpu.dot_dimension_numbers<[1], [0], [0], [1], [0, 0, 1, 1], [], []>} : vector<16x4xbf16>, vector<4x32xbf16>, vector<16x32xf32> -> vector<16x32xf32>
    %28 = arith.addf %23, %27 : vector<16x32xf32>
    %c16 = arith.constant 16 : index
    %c0_17 = arith.constant 0 : index
    %29 = vector.load %arg5[%c16, %c0_17] : memref<2712x128xf32, #tpu.memory_space<vmem>>, vector<4x32xf32>
    %30 = arith.truncf %19 : vector<16x4xf32> to vector<16x4xbf16>
    %31 = arith.truncf %29 : vector<4x32xf32> to vector<4x32xbf16>
    %cst_18 = arith.constant dense<0.000000e+00> : vector<16x32xf32>
    %32 = tpu.matmul %30, %31, %cst_18 {dimension_numbers = #tpu.dot_dimension_numbers<[1], [0], [0], [1], [0, 0, 1, 1], [], []>} : vector<16x4xbf16>, vector<4x32xbf16>, vector<16x32xf32> -> vector<16x32xf32>
    %33 = arith.addf %28, %32 : vector<16x32xf32>
    %c24 = arith.constant 24 : index
    %c0_19 = arith.constant 0 : index
    %34 = vector.load %arg5[%c24, %c0_19] : memref<2712x128xf32, #tpu.memory_space<vmem>>, vector<4x32xf32>
    %35 = arith.truncf %9 : vector<16x4xf32> to vector<16x4xbf16>
    %36 = arith.truncf %34 : vector<4x32xf32> to vector<4x32xbf16>
    %cst_20 = arith.constant dense<0.000000e+00> : vector<16x32xf32>
    %37 = tpu.matmul %35, %36, %cst_20 {dimension_numbers = #tpu.dot_dimension_numbers<[1], [0], [0], [1], [0, 0, 1, 1], [], []>} : vector<16x4xbf16>, vector<4x32xbf16>, vector<16x32xf32> -> vector<16x32xf32>
    %c32 = arith.constant 32 : index
    %c0_21 = arith.constant 0 : index
    %38 = vector.load %arg5[%c32, %c0_21] : memref<2712x128xf32, #tpu.memory_space<vmem>>, vector<1x32xf32>
    %39 = vector.broadcast %38 : vector<1x32xf32> to vector<16x32xf32>
    %40 = arith.addf %37, %39 : vector<16x32xf32>
    %41 = arith.addf %33, %40 : vector<16x32xf32>
    %c40 = arith.constant 40 : index
    %c0_22 = arith.constant 0 : index
    %42 = vector.load %arg5[%c40, %c0_22] : memref<2712x128xf32, #tpu.memory_space<vmem>>, vector<16x32xf32>
    %43 = arith.addf %41, %42 : vector<16x32xf32>
    %c112 = arith.constant 112 : index
    %c0_23 = arith.constant 0 : index
    %44 = vector.load %arg5[%c112, %c0_23] : memref<2712x128xf32, #tpu.memory_space<vmem>>, vector<32x8xf32>
    %45 = arith.truncf %43 : vector<16x32xf32> to vector<16x32xbf16>
    %46 = arith.truncf %44 : vector<32x8xf32> to vector<32x8xbf16>
    %cst_24 = arith.constant dense<0.000000e+00> : vector<16x8xf32>
    %47 = tpu.matmul %45, %46, %cst_24 {dimension_numbers = #tpu.dot_dimension_numbers<[1], [0], [0], [1], [0, 0, 1, 1], [], []>} : vector<16x32xbf16>, vector<32x8xbf16>, vector<16x8xf32> -> vector<16x8xf32>
    %c144 = arith.constant 144 : index
    %c0_25 = arith.constant 0 : index
    %48 = vector.load %arg5[%c144, %c0_25] : memref<2712x128xf32, #tpu.memory_space<vmem>>, vector<1x8xf32>
    %49 = vector.broadcast %48 : vector<1x8xf32> to vector<16x8xf32>
    %50 = arith.addf %47, %49 : vector<16x8xf32>
    %c152 = arith.constant 152 : index
    %c0_26 = arith.constant 0 : index
    %51 = vector.load %arg5[%c152, %c0_26] : memref<2712x128xf32, #tpu.memory_space<vmem>>, vector<32x8xf32>
    %52 = arith.truncf %43 : vector<16x32xf32> to vector<16x32xbf16>
    %53 = arith.truncf %51 : vector<32x8xf32> to vector<32x8xbf16>
    %cst_27 = arith.constant dense<0.000000e+00> : vector<16x8xf32>
    %54 = tpu.matmul %52, %53, %cst_27 {dimension_numbers = #tpu.dot_dimension_numbers<[1], [0], [0], [1], [0, 0, 1, 1], [], []>} : vector<16x32xbf16>, vector<32x8xbf16>, vector<16x8xf32> -> vector<16x8xf32>
    %c184 = arith.constant 184 : index
    %c0_28 = arith.constant 0 : index
    %55 = vector.load %arg5[%c184, %c0_28] : memref<2712x128xf32, #tpu.memory_space<vmem>>, vector<1x8xf32>
    %56 = vector.broadcast %55 : vector<1x8xf32> to vector<16x8xf32>
    %57 = arith.addf %54, %56 : vector<16x8xf32>
    %c192 = arith.constant 192 : index
    %c0_29 = arith.constant 0 : index
    %58 = vector.load %arg5[%c192, %c0_29] : memref<2712x128xf32, #tpu.memory_space<vmem>>, vector<32x8xf32>
    %59 = arith.truncf %43 : vector<16x32xf32> to vector<16x32xbf16>
    %60 = arith.truncf %58 : vector<32x8xf32> to vector<32x8xbf16>
    %cst_30 = arith.constant dense<0.000000e+00> : vector<16x8xf32>
    %61 = tpu.matmul %59, %60, %cst_30 {dimension_numbers = #tpu.dot_dimension_numbers<[1], [0], [0], [1], [0, 0, 1, 1], [], []>} : vector<16x32xbf16>, vector<32x8xbf16>, vector<16x8xf32> -> vector<16x8xf32>
    %c224 = arith.constant 224 : index
    %c0_31 = arith.constant 0 : index
    %62 = vector.load %arg5[%c224, %c0_31] : memref<2712x128xf32, #tpu.memory_space<vmem>>, vector<1x8xf32>
    %63 = vector.broadcast %62 : vector<1x8xf32> to vector<16x8xf32>
    %64 = arith.addf %61, %63 : vector<16x8xf32>
    %65 = arith.truncf %50 : vector<16x8xf32> to vector<16x8xbf16>
    %66 = arith.truncf %57 : vector<16x8xf32> to vector<16x8xbf16>
    %cst_32 = arith.constant dense<0.000000e+00> : vector<16x16xf32>
    %67 = tpu.matmul %65, %66, %cst_32 {dimension_numbers = #tpu.dot_dimension_numbers<[1], [1], [0], [0], [0, 0, 1, 0], [], []>} : vector<16x8xbf16>, vector<16x8xbf16>, vector<16x16xf32> -> vector<16x16xf32>
    %cst_33 = arith.constant 0.353553385 : f32
    %68 = vector.broadcast %cst_33 : f32 to vector<16x16xf32>
    %69 = arith.mulf %67, %68 : vector<16x16xf32>
    %cst_34 = arith.constant dense<0xFF800000> : vector<16xf32>
    %70 = vector.multi_reduction <maximumf>, %69, %cst_34 [1] : vector<16x16xf32> to vector<16xf32>
    %71 = vector.shape_cast %70 : vector<16xf32> to vector<16x1xf32>
    %72 = vector.broadcast %71 : vector<16x1xf32> to vector<16x16xf32>
    %73 = arith.subf %69, %72 : vector<16x16xf32>
    %74 = math.exp %73 : vector<16x16xf32>
    %cst_35 = arith.constant dense<0.000000e+00> : vector<16xf32>
    %75 = vector.multi_reduction <add>, %74, %cst_35 [1] : vector<16x16xf32> to vector<16xf32>
    %76 = vector.shape_cast %75 : vector<16xf32> to vector<16x1xf32>
    %77 = tpu.reciprocal %76 {approx = true} : vector<16x1xf32> -> vector<16x1xf32>
    %78 = vector.broadcast %77 : vector<16x1xf32> to vector<16x16xf32>
    %79 = arith.mulf %74, %78 : vector<16x16xf32>
    %80 = arith.truncf %79 : vector<16x16xf32> to vector<16x16xbf16>
    %81 = arith.truncf %64 : vector<16x8xf32> to vector<16x8xbf16>
    %cst_36 = arith.constant dense<0.000000e+00> : vector<16x8xf32>
    %82 = tpu.matmul %80, %81, %cst_36 {dimension_numbers = #tpu.dot_dimension_numbers<[1], [0], [0], [1], [0, 0, 1, 1], [], []>} : vector<16x16xbf16>, vector<16x8xbf16>, vector<16x8xf32> -> vector<16x8xf32>
    %c232 = arith.constant 232 : index
    %c0_37 = arith.constant 0 : index
    %83 = vector.load %arg5[%c232, %c0_37] : memref<2712x128xf32, #tpu.memory_space<vmem>>, vector<8x32xf32>
    %84 = arith.truncf %82 : vector<16x8xf32> to vector<16x8xbf16>
    %85 = arith.truncf %83 : vector<8x32xf32> to vector<8x32xbf16>
    %cst_38 = arith.constant dense<0.000000e+00> : vector<16x32xf32>
    %86 = tpu.matmul %84, %85, %cst_38 {dimension_numbers = #tpu.dot_dimension_numbers<[1], [0], [0], [1], [0, 0, 1, 1], [], []>} : vector<16x8xbf16>, vector<8x32xbf16>, vector<16x32xf32> -> vector<16x32xf32>
    %c240 = arith.constant 240 : index
    %c0_39 = arith.constant 0 : index
    %87 = vector.load %arg5[%c240, %c0_39] : memref<2712x128xf32, #tpu.memory_space<vmem>>, vector<32x8xf32>
    %88 = arith.truncf %43 : vector<16x32xf32> to vector<16x32xbf16>
    %89 = arith.truncf %87 : vector<32x8xf32> to vector<32x8xbf16>
    %cst_40 = arith.constant dense<0.000000e+00> : vector<16x8xf32>
    %90 = tpu.matmul %88, %89, %cst_40 {dimension_numbers = #tpu.dot_dimension_numbers<[1], [0], [0], [1], [0, 0, 1, 1], [], []>} : vector<16x32xbf16>, vector<32x8xbf16>, vector<16x8xf32> -> vector<16x8xf32>
    %c272 = arith.constant 272 : index
    %c0_41 = arith.constant 0 : index
    %91 = vector.load %arg5[%c272, %c0_41] : memref<2712x128xf32, #tpu.memory_space<vmem>>, vector<1x8xf32>
    %92 = vector.broadcast %91 : vector<1x8xf32> to vector<16x8xf32>
    %93 = arith.addf %90, %92 : vector<16x8xf32>
    %c280 = arith.constant 280 : index
    %c0_42 = arith.constant 0 : index
    %94 = vector.load %arg5[%c280, %c0_42] : memref<2712x128xf32, #tpu.memory_space<vmem>>, vector<32x8xf32>
    %95 = arith.truncf %43 : vector<16x32xf32> to vector<16x32xbf16>
    %96 = arith.truncf %94 : vector<32x8xf32> to vector<32x8xbf16>
    %cst_43 = arith.constant dense<0.000000e+00> : vector<16x8xf32>
    %97 = tpu.matmul %95, %96, %cst_43 {dimension_numbers = #tpu.dot_dimension_numbers<[1], [0], [0], [1], [0, 0, 1, 1], [], []>} : vector<16x32xbf16>, vector<32x8xbf16>, vector<16x8xf32> -> vector<16x8xf32>
    %c312 = arith.constant 312 : index
    %c0_44 = arith.constant 0 : index
    %98 = vector.load %arg5[%c312, %c0_44] : memref<2712x128xf32, #tpu.memory_space<vmem>>, vector<1x8xf32>
    %99 = vector.broadcast %98 : vector<1x8xf32> to vector<16x8xf32>
    %100 = arith.addf %97, %99 : vector<16x8xf32>
    %c320 = arith.constant 320 : index
    %c0_45 = arith.constant 0 : index
    %101 = vector.load %arg5[%c320, %c0_45] : memref<2712x128xf32, #tpu.memory_space<vmem>>, vector<32x8xf32>
    %102 = arith.truncf %43 : vector<16x32xf32> to vector<16x32xbf16>
    %103 = arith.truncf %101 : vector<32x8xf32> to vector<32x8xbf16>
    %cst_46 = arith.constant dense<0.000000e+00> : vector<16x8xf32>
    %104 = tpu.matmul %102, %103, %cst_46 {dimension_numbers = #tpu.dot_dimension_numbers<[1], [0], [0], [1], [0, 0, 1, 1], [], []>} : vector<16x32xbf16>, vector<32x8xbf16>, vector<16x8xf32> -> vector<16x8xf32>
    %c352 = arith.constant 352 : index
    %c0_47 = arith.constant 0 : index
    %105 = vector.load %arg5[%c352, %c0_47] : memref<2712x128xf32, #tpu.memory_space<vmem>>, vector<1x8xf32>
    %106 = vector.broadcast %105 : vector<1x8xf32> to vector<16x8xf32>
    %107 = arith.addf %104, %106 : vector<16x8xf32>
    %108 = arith.truncf %93 : vector<16x8xf32> to vector<16x8xbf16>
    %109 = arith.truncf %100 : vector<16x8xf32> to vector<16x8xbf16>
    %cst_48 = arith.constant dense<0.000000e+00> : vector<16x16xf32>
    %110 = tpu.matmul %108, %109, %cst_48 {dimension_numbers = #tpu.dot_dimension_numbers<[1], [1], [0], [0], [0, 0, 1, 0], [], []>} : vector<16x8xbf16>, vector<16x8xbf16>, vector<16x16xf32> -> vector<16x16xf32>
    %cst_49 = arith.constant 0.353553385 : f32
    %111 = vector.broadcast %cst_49 : f32 to vector<16x16xf32>
    %112 = arith.mulf %110, %111 : vector<16x16xf32>
    %cst_50 = arith.constant dense<0xFF800000> : vector<16xf32>
    %113 = vector.multi_reduction <maximumf>, %112, %cst_50 [1] : vector<16x16xf32> to vector<16xf32>
    %114 = vector.shape_cast %113 : vector<16xf32> to vector<16x1xf32>
    %115 = vector.broadcast %114 : vector<16x1xf32> to vector<16x16xf32>
    %116 = arith.subf %112, %115 : vector<16x16xf32>
    %117 = math.exp %116 : vector<16x16xf32>
    %cst_51 = arith.constant dense<0.000000e+00> : vector<16xf32>
    %118 = vector.multi_reduction <add>, %117, %cst_51 [1] : vector<16x16xf32> to vector<16xf32>
    %119 = vector.shape_cast %118 : vector<16xf32> to vector<16x1xf32>
    %120 = tpu.reciprocal %119 {approx = true} : vector<16x1xf32> -> vector<16x1xf32>
    %121 = vector.broadcast %120 : vector<16x1xf32> to vector<16x16xf32>
    %122 = arith.mulf %117, %121 : vector<16x16xf32>
    %123 = arith.truncf %122 : vector<16x16xf32> to vector<16x16xbf16>
    %124 = arith.truncf %107 : vector<16x8xf32> to vector<16x8xbf16>
    %cst_52 = arith.constant dense<0.000000e+00> : vector<16x8xf32>
    %125 = tpu.matmul %123, %124, %cst_52 {dimension_numbers = #tpu.dot_dimension_numbers<[1], [0], [0], [1], [0, 0, 1, 1], [], []>} : vector<16x16xbf16>, vector<16x8xbf16>, vector<16x8xf32> -> vector<16x8xf32>
    %c360 = arith.constant 360 : index
    %c0_53 = arith.constant 0 : index
    %126 = vector.load %arg5[%c360, %c0_53] : memref<2712x128xf32, #tpu.memory_space<vmem>>, vector<8x32xf32>
    %127 = arith.truncf %125 : vector<16x8xf32> to vector<16x8xbf16>
    %128 = arith.truncf %126 : vector<8x32xf32> to vector<8x32xbf16>
    %cst_54 = arith.constant dense<0.000000e+00> : vector<16x32xf32>
    %129 = tpu.matmul %127, %128, %cst_54 {dimension_numbers = #tpu.dot_dimension_numbers<[1], [0], [0], [1], [0, 0, 1, 1], [], []>} : vector<16x8xbf16>, vector<8x32xbf16>, vector<16x32xf32> -> vector<16x32xf32>
    %130 = arith.addf %86, %129 : vector<16x32xf32>
    %c368 = arith.constant 368 : index
    %c0_55 = arith.constant 0 : index
    %131 = vector.load %arg5[%c368, %c0_55] : memref<2712x128xf32, #tpu.memory_space<vmem>>, vector<32x8xf32>
    %132 = arith.truncf %43 : vector<16x32xf32> to vector<16x32xbf16>
    %133 = arith.truncf %131 : vector<32x8xf32> to vector<32x8xbf16>
    %cst_56 = arith.constant dense<0.000000e+00> : vector<16x8xf32>
    %134 = tpu.matmul %132, %133, %cst_56 {dimension_numbers = #tpu.dot_dimension_numbers<[1], [0], [0], [1], [0, 0, 1, 1], [], []>} : vector<16x32xbf16>, vector<32x8xbf16>, vector<16x8xf32> -> vector<16x8xf32>
    %c400 = arith.constant 400 : index
    %c0_57 = arith.constant 0 : index
    %135 = vector.load %arg5[%c400, %c0_57] : memref<2712x128xf32, #tpu.memory_space<vmem>>, vector<1x8xf32>
    %136 = vector.broadcast %135 : vector<1x8xf32> to vector<16x8xf32>
    %137 = arith.addf %134, %136 : vector<16x8xf32>
    %c408 = arith.constant 408 : index
    %c0_58 = arith.constant 0 : index
    %138 = vector.load %arg5[%c408, %c0_58] : memref<2712x128xf32, #tpu.memory_space<vmem>>, vector<32x8xf32>
    %139 = arith.truncf %43 : vector<16x32xf32> to vector<16x32xbf16>
    %140 = arith.truncf %138 : vector<32x8xf32> to vector<32x8xbf16>
    %cst_59 = arith.constant dense<0.000000e+00> : vector<16x8xf32>
    %141 = tpu.matmul %139, %140, %cst_59 {dimension_numbers = #tpu.dot_dimension_numbers<[1], [0], [0], [1], [0, 0, 1, 1], [], []>} : vector<16x32xbf16>, vector<32x8xbf16>, vector<16x8xf32> -> vector<16x8xf32>
    %c440 = arith.constant 440 : index
    %c0_60 = arith.constant 0 : index
    %142 = vector.load %arg5[%c440, %c0_60] : memref<2712x128xf32, #tpu.memory_space<vmem>>, vector<1x8xf32>
    %143 = vector.broadcast %142 : vector<1x8xf32> to vector<16x8xf32>
    %144 = arith.addf %141, %143 : vector<16x8xf32>
    %c448 = arith.constant 448 : index
    %c0_61 = arith.constant 0 : index
    %145 = vector.load %arg5[%c448, %c0_61] : memref<2712x128xf32, #tpu.memory_space<vmem>>, vector<32x8xf32>
    %146 = arith.truncf %43 : vector<16x32xf32> to vector<16x32xbf16>
    %147 = arith.truncf %145 : vector<32x8xf32> to vector<32x8xbf16>
    %cst_62 = arith.constant dense<0.000000e+00> : vector<16x8xf32>
    %148 = tpu.matmul %146, %147, %cst_62 {dimension_numbers = #tpu.dot_dimension_numbers<[1], [0], [0], [1], [0, 0, 1, 1], [], []>} : vector<16x32xbf16>, vector<32x8xbf16>, vector<16x8xf32> -> vector<16x8xf32>
    %c480 = arith.constant 480 : index
    %c0_63 = arith.constant 0 : index
    %149 = vector.load %arg5[%c480, %c0_63] : memref<2712x128xf32, #tpu.memory_space<vmem>>, vector<1x8xf32>
    %150 = vector.broadcast %149 : vector<1x8xf32> to vector<16x8xf32>
    %151 = arith.addf %148, %150 : vector<16x8xf32>
    %152 = arith.truncf %137 : vector<16x8xf32> to vector<16x8xbf16>
    %153 = arith.truncf %144 : vector<16x8xf32> to vector<16x8xbf16>
    %cst_64 = arith.constant dense<0.000000e+00> : vector<16x16xf32>
    %154 = tpu.matmul %152, %153, %cst_64 {dimension_numbers = #tpu.dot_dimension_numbers<[1], [1], [0], [0], [0, 0, 1, 0], [], []>} : vector<16x8xbf16>, vector<16x8xbf16>, vector<16x16xf32> -> vector<16x16xf32>
    %cst_65 = arith.constant 0.353553385 : f32
    %155 = vector.broadcast %cst_65 : f32 to vector<16x16xf32>
    %156 = arith.mulf %154, %155 : vector<16x16xf32>
    %cst_66 = arith.constant dense<0xFF800000> : vector<16xf32>
    %157 = vector.multi_reduction <maximumf>, %156, %cst_66 [1] : vector<16x16xf32> to vector<16xf32>
    %158 = vector.shape_cast %157 : vector<16xf32> to vector<16x1xf32>
    %159 = vector.broadcast %158 : vector<16x1xf32> to vector<16x16xf32>
    %160 = arith.subf %156, %159 : vector<16x16xf32>
    %161 = math.exp %160 : vector<16x16xf32>
    %cst_67 = arith.constant dense<0.000000e+00> : vector<16xf32>
    %162 = vector.multi_reduction <add>, %161, %cst_67 [1] : vector<16x16xf32> to vector<16xf32>
    %163 = vector.shape_cast %162 : vector<16xf32> to vector<16x1xf32>
    %164 = tpu.reciprocal %163 {approx = true} : vector<16x1xf32> -> vector<16x1xf32>
    %165 = vector.broadcast %164 : vector<16x1xf32> to vector<16x16xf32>
    %166 = arith.mulf %161, %165 : vector<16x16xf32>
    %167 = arith.truncf %166 : vector<16x16xf32> to vector<16x16xbf16>
    %168 = arith.truncf %151 : vector<16x8xf32> to vector<16x8xbf16>
    %cst_68 = arith.constant dense<0.000000e+00> : vector<16x8xf32>
    %169 = tpu.matmul %167, %168, %cst_68 {dimension_numbers = #tpu.dot_dimension_numbers<[1], [0], [0], [1], [0, 0, 1, 1], [], []>} : vector<16x16xbf16>, vector<16x8xbf16>, vector<16x8xf32> -> vector<16x8xf32>
    %c488 = arith.constant 488 : index
    %c0_69 = arith.constant 0 : index
    %170 = vector.load %arg5[%c488, %c0_69] : memref<2712x128xf32, #tpu.memory_space<vmem>>, vector<8x32xf32>
    %171 = arith.truncf %169 : vector<16x8xf32> to vector<16x8xbf16>
    %172 = arith.truncf %170 : vector<8x32xf32> to vector<8x32xbf16>
    %cst_70 = arith.constant dense<0.000000e+00> : vector<16x32xf32>
    %173 = tpu.matmul %171, %172, %cst_70 {dimension_numbers = #tpu.dot_dimension_numbers<[1], [0], [0], [1], [0, 0, 1, 1], [], []>} : vector<16x8xbf16>, vector<8x32xbf16>, vector<16x32xf32> -> vector<16x32xf32>
    %174 = arith.addf %130, %173 : vector<16x32xf32>
    %c496 = arith.constant 496 : index
    %c0_71 = arith.constant 0 : index
    %175 = vector.load %arg5[%c496, %c0_71] : memref<2712x128xf32, #tpu.memory_space<vmem>>, vector<32x8xf32>
    %176 = arith.truncf %43 : vector<16x32xf32> to vector<16x32xbf16>
    %177 = arith.truncf %175 : vector<32x8xf32> to vector<32x8xbf16>
    %cst_72 = arith.constant dense<0.000000e+00> : vector<16x8xf32>
    %178 = tpu.matmul %176, %177, %cst_72 {dimension_numbers = #tpu.dot_dimension_numbers<[1], [0], [0], [1], [0, 0, 1, 1], [], []>} : vector<16x32xbf16>, vector<32x8xbf16>, vector<16x8xf32> -> vector<16x8xf32>
    %c528 = arith.constant 528 : index
    %c0_73 = arith.constant 0 : index
    %179 = vector.load %arg5[%c528, %c0_73] : memref<2712x128xf32, #tpu.memory_space<vmem>>, vector<1x8xf32>
    %180 = vector.broadcast %179 : vector<1x8xf32> to vector<16x8xf32>
    %181 = arith.addf %178, %180 : vector<16x8xf32>
    %c536 = arith.constant 536 : index
    %c0_74 = arith.constant 0 : index
    %182 = vector.load %arg5[%c536, %c0_74] : memref<2712x128xf32, #tpu.memory_space<vmem>>, vector<32x8xf32>
    %183 = arith.truncf %43 : vector<16x32xf32> to vector<16x32xbf16>
    %184 = arith.truncf %182 : vector<32x8xf32> to vector<32x8xbf16>
    %cst_75 = arith.constant dense<0.000000e+00> : vector<16x8xf32>
    %185 = tpu.matmul %183, %184, %cst_75 {dimension_numbers = #tpu.dot_dimension_numbers<[1], [0], [0], [1], [0, 0, 1, 1], [], []>} : vector<16x32xbf16>, vector<32x8xbf16>, vector<16x8xf32> -> vector<16x8xf32>
    %c568 = arith.constant 568 : index
    %c0_76 = arith.constant 0 : index
    %186 = vector.load %arg5[%c568, %c0_76] : memref<2712x128xf32, #tpu.memory_space<vmem>>, vector<1x8xf32>
    %187 = vector.broadcast %186 : vector<1x8xf32> to vector<16x8xf32>
    %188 = arith.addf %185, %187 : vector<16x8xf32>
    %c576 = arith.constant 576 : index
    %c0_77 = arith.constant 0 : index
    %189 = vector.load %arg5[%c576, %c0_77] : memref<2712x128xf32, #tpu.memory_space<vmem>>, vector<32x8xf32>
    %190 = arith.truncf %43 : vector<16x32xf32> to vector<16x32xbf16>
    %191 = arith.truncf %189 : vector<32x8xf32> to vector<32x8xbf16>
    %cst_78 = arith.constant dense<0.000000e+00> : vector<16x8xf32>
    %192 = tpu.matmul %190, %191, %cst_78 {dimension_numbers = #tpu.dot_dimension_numbers<[1], [0], [0], [1], [0, 0, 1, 1], [], []>} : vector<16x32xbf16>, vector<32x8xbf16>, vector<16x8xf32> -> vector<16x8xf32>
    %c608 = arith.constant 608 : index
    %c0_79 = arith.constant 0 : index
    %193 = vector.load %arg5[%c608, %c0_79] : memref<2712x128xf32, #tpu.memory_space<vmem>>, vector<1x8xf32>
    %194 = vector.broadcast %193 : vector<1x8xf32> to vector<16x8xf32>
    %195 = arith.addf %192, %194 : vector<16x8xf32>
    %196 = arith.truncf %181 : vector<16x8xf32> to vector<16x8xbf16>
    %197 = arith.truncf %188 : vector<16x8xf32> to vector<16x8xbf16>
    %cst_80 = arith.constant dense<0.000000e+00> : vector<16x16xf32>
    %198 = tpu.matmul %196, %197, %cst_80 {dimension_numbers = #tpu.dot_dimension_numbers<[1], [1], [0], [0], [0, 0, 1, 0], [], []>} : vector<16x8xbf16>, vector<16x8xbf16>, vector<16x16xf32> -> vector<16x16xf32>
    %cst_81 = arith.constant 0.353553385 : f32
    %199 = vector.broadcast %cst_81 : f32 to vector<16x16xf32>
    %200 = arith.mulf %198, %199 : vector<16x16xf32>
    %cst_82 = arith.constant dense<0xFF800000> : vector<16xf32>
    %201 = vector.multi_reduction <maximumf>, %200, %cst_82 [1] : vector<16x16xf32> to vector<16xf32>
    %202 = vector.shape_cast %201 : vector<16xf32> to vector<16x1xf32>
    %203 = vector.broadcast %202 : vector<16x1xf32> to vector<16x16xf32>
    %204 = arith.subf %200, %203 : vector<16x16xf32>
    %205 = math.exp %204 : vector<16x16xf32>
    %cst_83 = arith.constant dense<0.000000e+00> : vector<16xf32>
    %206 = vector.multi_reduction <add>, %205, %cst_83 [1] : vector<16x16xf32> to vector<16xf32>
    %207 = vector.shape_cast %206 : vector<16xf32> to vector<16x1xf32>
    %208 = tpu.reciprocal %207 {approx = true} : vector<16x1xf32> -> vector<16x1xf32>
    %209 = vector.broadcast %208 : vector<16x1xf32> to vector<16x16xf32>
    %210 = arith.mulf %205, %209 : vector<16x16xf32>
    %211 = arith.truncf %210 : vector<16x16xf32> to vector<16x16xbf16>
    %212 = arith.truncf %195 : vector<16x8xf32> to vector<16x8xbf16>
    %cst_84 = arith.constant dense<0.000000e+00> : vector<16x8xf32>
    %213 = tpu.matmul %211, %212, %cst_84 {dimension_numbers = #tpu.dot_dimension_numbers<[1], [0], [0], [1], [0, 0, 1, 1], [], []>} : vector<16x16xbf16>, vector<16x8xbf16>, vector<16x8xf32> -> vector<16x8xf32>
    %c616 = arith.constant 616 : index
    %c0_85 = arith.constant 0 : index
    %214 = vector.load %arg5[%c616, %c0_85] : memref<2712x128xf32, #tpu.memory_space<vmem>>, vector<8x32xf32>
    %215 = arith.truncf %213 : vector<16x8xf32> to vector<16x8xbf16>
    %216 = arith.truncf %214 : vector<8x32xf32> to vector<8x32xbf16>
    %cst_86 = arith.constant dense<0.000000e+00> : vector<16x32xf32>
    %217 = tpu.matmul %215, %216, %cst_86 {dimension_numbers = #tpu.dot_dimension_numbers<[1], [0], [0], [1], [0, 0, 1, 1], [], []>} : vector<16x8xbf16>, vector<8x32xbf16>, vector<16x32xf32> -> vector<16x32xf32>
    %218 = arith.addf %174, %217 : vector<16x32xf32>
    %c624 = arith.constant 624 : index
    %c0_87 = arith.constant 0 : index
    %219 = vector.load %arg5[%c624, %c0_87] : memref<2712x128xf32, #tpu.memory_space<vmem>>, vector<1x32xf32>
    %220 = vector.broadcast %219 : vector<1x32xf32> to vector<16x32xf32>
    %221 = arith.addf %218, %220 : vector<16x32xf32>
    %222 = arith.addf %43, %221 : vector<16x32xf32>
    %cst_88 = arith.constant dense<0.000000e+00> : vector<16xf32>
    %223 = vector.multi_reduction <add>, %222, %cst_88 [1] : vector<16x32xf32> to vector<16xf32>
    %224 = vector.shape_cast %223 : vector<16xf32> to vector<16x1xf32>
    %cst_89 = arith.constant 3.200000e+01 : f32
    %225 = vector.broadcast %cst_89 : f32 to vector<16x1xf32>
    %226 = arith.divf %224, %225 : vector<16x1xf32>
    %227 = vector.broadcast %226 : vector<16x1xf32> to vector<16x32xf32>
    %228 = arith.subf %222, %227 : vector<16x32xf32>
    %229 = arith.mulf %228, %228 : vector<16x32xf32>
    %cst_90 = arith.constant dense<0.000000e+00> : vector<16xf32>
    %230 = vector.multi_reduction <add>, %229, %cst_90 [1] : vector<16x32xf32> to vector<16xf32>
    %231 = vector.shape_cast %230 : vector<16xf32> to vector<16x1xf32>
    %cst_91 = arith.constant 3.200000e+01 : f32
    %232 = vector.broadcast %cst_91 : f32 to vector<16x1xf32>
    %233 = arith.divf %231, %232 : vector<16x1xf32>
    %234 = vector.broadcast %226 : vector<16x1xf32> to vector<16x32xf32>
    %235 = arith.subf %222, %234 : vector<16x32xf32>
    %cst_92 = arith.constant 9.99999974E-6 : f32
    %236 = vector.broadcast %cst_92 : f32 to vector<16x1xf32>
    %237 = arith.addf %233, %236 : vector<16x1xf32>
    %238 = math.rsqrt %237 : vector<16x1xf32>
    %239 = vector.broadcast %238 : vector<16x1xf32> to vector<16x32xf32>
    %240 = arith.mulf %235, %239 : vector<16x32xf32>
    %c744 = arith.constant 744 : index
    %c0_93 = arith.constant 0 : index
    %241 = vector.load %arg5[%c744, %c0_93] : memref<2712x128xf32, #tpu.memory_space<vmem>>, vector<1x32xf32>
    %242 = vector.broadcast %241 : vector<1x32xf32> to vector<16x32xf32>
    %243 = arith.mulf %240, %242 : vector<16x32xf32>
    %c752 = arith.constant 752 : index
    %c0_94 = arith.constant 0 : index
    %244 = vector.load %arg5[%c752, %c0_94] : memref<2712x128xf32, #tpu.memory_space<vmem>>, vector<1x32xf32>
    %245 = vector.broadcast %244 : vector<1x32xf32> to vector<16x32xf32>
    %246 = arith.addf %243, %245 : vector<16x32xf32>
    %c632 = arith.constant 632 : index
    %c0_95 = arith.constant 0 : index
    %247 = vector.load %arg5[%c632, %c0_95] : memref<2712x128xf32, #tpu.memory_space<vmem>>, vector<32x64xf32>
    %248 = arith.truncf %246 : vector<16x32xf32> to vector<16x32xbf16>
    %249 = arith.truncf %247 : vector<32x64xf32> to vector<32x64xbf16>
    %cst_96 = arith.constant dense<0.000000e+00> : vector<16x64xf32>
    %250 = tpu.matmul %248, %249, %cst_96 {dimension_numbers = #tpu.dot_dimension_numbers<[1], [0], [0], [1], [0, 0, 1, 1], [], []>} : vector<16x32xbf16>, vector<32x64xbf16>, vector<16x64xf32> -> vector<16x64xf32>
    %c664 = arith.constant 664 : index
    %c0_97 = arith.constant 0 : index
    %251 = vector.load %arg5[%c664, %c0_97] : memref<2712x128xf32, #tpu.memory_space<vmem>>, vector<1x64xf32>
    %252 = vector.broadcast %251 : vector<1x64xf32> to vector<16x64xf32>
    %253 = arith.addf %250, %252 : vector<16x64xf32>
    %cst_98 = arith.constant 0.000000e+00 : f32
    %254 = vector.broadcast %cst_98 : f32 to vector<16x64xf32>
    %255 = arith.maximumf %253, %254 : vector<16x64xf32>
    %c672 = arith.constant 672 : index
    %c0_99 = arith.constant 0 : index
    %256 = vector.load %arg5[%c672, %c0_99] : memref<2712x128xf32, #tpu.memory_space<vmem>>, vector<64x32xf32>
    %257 = arith.truncf %255 : vector<16x64xf32> to vector<16x64xbf16>
    %258 = arith.truncf %256 : vector<64x32xf32> to vector<64x32xbf16>
    %cst_100 = arith.constant dense<0.000000e+00> : vector<16x32xf32>
    %259 = tpu.matmul %257, %258, %cst_100 {dimension_numbers = #tpu.dot_dimension_numbers<[1], [0], [0], [1], [0, 0, 1, 1], [], []>} : vector<16x64xbf16>, vector<64x32xbf16>, vector<16x32xf32> -> vector<16x32xf32>
    %c736 = arith.constant 736 : index
    %c0_101 = arith.constant 0 : index
    %260 = vector.load %arg5[%c736, %c0_101] : memref<2712x128xf32, #tpu.memory_space<vmem>>, vector<1x32xf32>
    %261 = vector.broadcast %260 : vector<1x32xf32> to vector<16x32xf32>
    %262 = arith.addf %259, %261 : vector<16x32xf32>
    %263 = arith.addf %246, %262 : vector<16x32xf32>
    %cst_102 = arith.constant dense<0.000000e+00> : vector<16xf32>
    %264 = vector.multi_reduction <add>, %263, %cst_102 [1] : vector<16x32xf32> to vector<16xf32>
    %265 = vector.shape_cast %264 : vector<16xf32> to vector<16x1xf32>
    %cst_103 = arith.constant 3.200000e+01 : f32
    %266 = vector.broadcast %cst_103 : f32 to vector<16x1xf32>
    %267 = arith.divf %265, %266 : vector<16x1xf32>
    %268 = vector.broadcast %267 : vector<16x1xf32> to vector<16x32xf32>
    %269 = arith.subf %263, %268 : vector<16x32xf32>
    %270 = arith.mulf %269, %269 : vector<16x32xf32>
    %cst_104 = arith.constant dense<0.000000e+00> : vector<16xf32>
    %271 = vector.multi_reduction <add>, %270, %cst_104 [1] : vector<16x32xf32> to vector<16xf32>
    %272 = vector.shape_cast %271 : vector<16xf32> to vector<16x1xf32>
    %cst_105 = arith.constant 3.200000e+01 : f32
    %273 = vector.broadcast %cst_105 : f32 to vector<16x1xf32>
    %274 = arith.divf %272, %273 : vector<16x1xf32>
    %275 = vector.broadcast %267 : vector<16x1xf32> to vector<16x32xf32>
    %276 = arith.subf %263, %275 : vector<16x32xf32>
    %cst_106 = arith.constant 9.99999974E-6 : f32
    %277 = vector.broadcast %cst_106 : f32 to vector<16x1xf32>
    %278 = arith.addf %274, %277 : vector<16x1xf32>
    %279 = math.rsqrt %278 : vector<16x1xf32>
    %280 = vector.broadcast %279 : vector<16x1xf32> to vector<16x32xf32>
    %281 = arith.mulf %276, %280 : vector<16x32xf32>
    %c760 = arith.constant 760 : index
    %c0_107 = arith.constant 0 : index
    %282 = vector.load %arg5[%c760, %c0_107] : memref<2712x128xf32, #tpu.memory_space<vmem>>, vector<1x32xf32>
    %283 = vector.broadcast %282 : vector<1x32xf32> to vector<16x32xf32>
    %284 = arith.mulf %281, %283 : vector<16x32xf32>
    %c768 = arith.constant 768 : index
    %c0_108 = arith.constant 0 : index
    %285 = vector.load %arg5[%c768, %c0_108] : memref<2712x128xf32, #tpu.memory_space<vmem>>, vector<1x32xf32>
    %286 = vector.broadcast %285 : vector<1x32xf32> to vector<16x32xf32>
    %287 = arith.addf %284, %286 : vector<16x32xf32>
    %c776 = arith.constant 776 : index
    %c0_109 = arith.constant 0 : index
    %288 = vector.load %arg5[%c776, %c0_109] : memref<2712x128xf32, #tpu.memory_space<vmem>>, vector<32x8xf32>
    %289 = arith.truncf %287 : vector<16x32xf32> to vector<16x32xbf16>
    %290 = arith.truncf %288 : vector<32x8xf32> to vector<32x8xbf16>
    %cst_110 = arith.constant dense<0.000000e+00> : vector<16x8xf32>
    %291 = tpu.matmul %289, %290, %cst_110 {dimension_numbers = #tpu.dot_dimension_numbers<[1], [0], [0], [1], [0, 0, 1, 1], [], []>} : vector<16x32xbf16>, vector<32x8xbf16>, vector<16x8xf32> -> vector<16x8xf32>
    %c808 = arith.constant 808 : index
    %c0_111 = arith.constant 0 : index
    %292 = vector.load %arg5[%c808, %c0_111] : memref<2712x128xf32, #tpu.memory_space<vmem>>, vector<1x8xf32>
    %293 = vector.broadcast %292 : vector<1x8xf32> to vector<16x8xf32>
    %294 = arith.addf %291, %293 : vector<16x8xf32>
    %c816 = arith.constant 816 : index
    %c0_112 = arith.constant 0 : index
    %295 = vector.load %arg5[%c816, %c0_112] : memref<2712x128xf32, #tpu.memory_space<vmem>>, vector<32x8xf32>
    %296 = arith.truncf %287 : vector<16x32xf32> to vector<16x32xbf16>
    %297 = arith.truncf %295 : vector<32x8xf32> to vector<32x8xbf16>
    %cst_113 = arith.constant dense<0.000000e+00> : vector<16x8xf32>
    %298 = tpu.matmul %296, %297, %cst_113 {dimension_numbers = #tpu.dot_dimension_numbers<[1], [0], [0], [1], [0, 0, 1, 1], [], []>} : vector<16x32xbf16>, vector<32x8xbf16>, vector<16x8xf32> -> vector<16x8xf32>
    %c848 = arith.constant 848 : index
    %c0_114 = arith.constant 0 : index
    %299 = vector.load %arg5[%c848, %c0_114] : memref<2712x128xf32, #tpu.memory_space<vmem>>, vector<1x8xf32>
    %300 = vector.broadcast %299 : vector<1x8xf32> to vector<16x8xf32>
    %301 = arith.addf %298, %300 : vector<16x8xf32>
    %c856 = arith.constant 856 : index
    %c0_115 = arith.constant 0 : index
    %302 = vector.load %arg5[%c856, %c0_115] : memref<2712x128xf32, #tpu.memory_space<vmem>>, vector<32x8xf32>
    %303 = arith.truncf %287 : vector<16x32xf32> to vector<16x32xbf16>
    %304 = arith.truncf %302 : vector<32x8xf32> to vector<32x8xbf16>
    %cst_116 = arith.constant dense<0.000000e+00> : vector<16x8xf32>
    %305 = tpu.matmul %303, %304, %cst_116 {dimension_numbers = #tpu.dot_dimension_numbers<[1], [0], [0], [1], [0, 0, 1, 1], [], []>} : vector<16x32xbf16>, vector<32x8xbf16>, vector<16x8xf32> -> vector<16x8xf32>
    %c888 = arith.constant 888 : index
    %c0_117 = arith.constant 0 : index
    %306 = vector.load %arg5[%c888, %c0_117] : memref<2712x128xf32, #tpu.memory_space<vmem>>, vector<1x8xf32>
    %307 = vector.broadcast %306 : vector<1x8xf32> to vector<16x8xf32>
    %308 = arith.addf %305, %307 : vector<16x8xf32>
    %309 = arith.truncf %294 : vector<16x8xf32> to vector<16x8xbf16>
    %310 = arith.truncf %301 : vector<16x8xf32> to vector<16x8xbf16>
    %cst_118 = arith.constant dense<0.000000e+00> : vector<16x16xf32>
    %311 = tpu.matmul %309, %310, %cst_118 {dimension_numbers = #tpu.dot_dimension_numbers<[1], [1], [0], [0], [0, 0, 1, 0], [], []>} : vector<16x8xbf16>, vector<16x8xbf16>, vector<16x16xf32> -> vector<16x16xf32>
    %cst_119 = arith.constant 0.353553385 : f32
    %312 = vector.broadcast %cst_119 : f32 to vector<16x16xf32>
    %313 = arith.mulf %311, %312 : vector<16x16xf32>
    %cst_120 = arith.constant dense<0xFF800000> : vector<16xf32>
    %314 = vector.multi_reduction <maximumf>, %313, %cst_120 [1] : vector<16x16xf32> to vector<16xf32>
    %315 = vector.shape_cast %314 : vector<16xf32> to vector<16x1xf32>
    %316 = vector.broadcast %315 : vector<16x1xf32> to vector<16x16xf32>
    %317 = arith.subf %313, %316 : vector<16x16xf32>
    %318 = math.exp %317 : vector<16x16xf32>
    %cst_121 = arith.constant dense<0.000000e+00> : vector<16xf32>
    %319 = vector.multi_reduction <add>, %318, %cst_121 [1] : vector<16x16xf32> to vector<16xf32>
    %320 = vector.shape_cast %319 : vector<16xf32> to vector<16x1xf32>
    %321 = tpu.reciprocal %320 {approx = true} : vector<16x1xf32> -> vector<16x1xf32>
    %322 = vector.broadcast %321 : vector<16x1xf32> to vector<16x16xf32>
    %323 = arith.mulf %318, %322 : vector<16x16xf32>
    %324 = arith.truncf %323 : vector<16x16xf32> to vector<16x16xbf16>
    %325 = arith.truncf %308 : vector<16x8xf32> to vector<16x8xbf16>
    %cst_122 = arith.constant dense<0.000000e+00> : vector<16x8xf32>
    %326 = tpu.matmul %324, %325, %cst_122 {dimension_numbers = #tpu.dot_dimension_numbers<[1], [0], [0], [1], [0, 0, 1, 1], [], []>} : vector<16x16xbf16>, vector<16x8xbf16>, vector<16x8xf32> -> vector<16x8xf32>
    %c896 = arith.constant 896 : index
    %c0_123 = arith.constant 0 : index
    %327 = vector.load %arg5[%c896, %c0_123] : memref<2712x128xf32, #tpu.memory_space<vmem>>, vector<8x32xf32>
    %328 = arith.truncf %326 : vector<16x8xf32> to vector<16x8xbf16>
    %329 = arith.truncf %327 : vector<8x32xf32> to vector<8x32xbf16>
    %cst_124 = arith.constant dense<0.000000e+00> : vector<16x32xf32>
    %330 = tpu.matmul %328, %329, %cst_124 {dimension_numbers = #tpu.dot_dimension_numbers<[1], [0], [0], [1], [0, 0, 1, 1], [], []>} : vector<16x8xbf16>, vector<8x32xbf16>, vector<16x32xf32> -> vector<16x32xf32>
    %c904 = arith.constant 904 : index
    %c0_125 = arith.constant 0 : index
    %331 = vector.load %arg5[%c904, %c0_125] : memref<2712x128xf32, #tpu.memory_space<vmem>>, vector<32x8xf32>
    %332 = arith.truncf %287 : vector<16x32xf32> to vector<16x32xbf16>
    %333 = arith.truncf %331 : vector<32x8xf32> to vector<32x8xbf16>
    %cst_126 = arith.constant dense<0.000000e+00> : vector<16x8xf32>
    %334 = tpu.matmul %332, %333, %cst_126 {dimension_numbers = #tpu.dot_dimension_numbers<[1], [0], [0], [1], [0, 0, 1, 1], [], []>} : vector<16x32xbf16>, vector<32x8xbf16>, vector<16x8xf32> -> vector<16x8xf32>
    %c936 = arith.constant 936 : index
    %c0_127 = arith.constant 0 : index
    %335 = vector.load %arg5[%c936, %c0_127] : memref<2712x128xf32, #tpu.memory_space<vmem>>, vector<1x8xf32>
    %336 = vector.broadcast %335 : vector<1x8xf32> to vector<16x8xf32>
    %337 = arith.addf %334, %336 : vector<16x8xf32>
    %c944 = arith.constant 944 : index
    %c0_128 = arith.constant 0 : index
    %338 = vector.load %arg5[%c944, %c0_128] : memref<2712x128xf32, #tpu.memory_space<vmem>>, vector<32x8xf32>
    %339 = arith.truncf %287 : vector<16x32xf32> to vector<16x32xbf16>
    %340 = arith.truncf %338 : vector<32x8xf32> to vector<32x8xbf16>
    %cst_129 = arith.constant dense<0.000000e+00> : vector<16x8xf32>
    %341 = tpu.matmul %339, %340, %cst_129 {dimension_numbers = #tpu.dot_dimension_numbers<[1], [0], [0], [1], [0, 0, 1, 1], [], []>} : vector<16x32xbf16>, vector<32x8xbf16>, vector<16x8xf32> -> vector<16x8xf32>
    %c976 = arith.constant 976 : index
    %c0_130 = arith.constant 0 : index
    %342 = vector.load %arg5[%c976, %c0_130] : memref<2712x128xf32, #tpu.memory_space<vmem>>, vector<1x8xf32>
    %343 = vector.broadcast %342 : vector<1x8xf32> to vector<16x8xf32>
    %344 = arith.addf %341, %343 : vector<16x8xf32>
    %c984 = arith.constant 984 : index
    %c0_131 = arith.constant 0 : index
    %345 = vector.load %arg5[%c984, %c0_131] : memref<2712x128xf32, #tpu.memory_space<vmem>>, vector<32x8xf32>
    %346 = arith.truncf %287 : vector<16x32xf32> to vector<16x32xbf16>
    %347 = arith.truncf %345 : vector<32x8xf32> to vector<32x8xbf16>
    %cst_132 = arith.constant dense<0.000000e+00> : vector<16x8xf32>
    %348 = tpu.matmul %346, %347, %cst_132 {dimension_numbers = #tpu.dot_dimension_numbers<[1], [0], [0], [1], [0, 0, 1, 1], [], []>} : vector<16x32xbf16>, vector<32x8xbf16>, vector<16x8xf32> -> vector<16x8xf32>
    %c1016 = arith.constant 1016 : index
    %c0_133 = arith.constant 0 : index
    %349 = vector.load %arg5[%c1016, %c0_133] : memref<2712x128xf32, #tpu.memory_space<vmem>>, vector<1x8xf32>
    %350 = vector.broadcast %349 : vector<1x8xf32> to vector<16x8xf32>
    %351 = arith.addf %348, %350 : vector<16x8xf32>
    %352 = arith.truncf %337 : vector<16x8xf32> to vector<16x8xbf16>
    %353 = arith.truncf %344 : vector<16x8xf32> to vector<16x8xbf16>
    %cst_134 = arith.constant dense<0.000000e+00> : vector<16x16xf32>
    %354 = tpu.matmul %352, %353, %cst_134 {dimension_numbers = #tpu.dot_dimension_numbers<[1], [1], [0], [0], [0, 0, 1, 0], [], []>} : vector<16x8xbf16>, vector<16x8xbf16>, vector<16x16xf32> -> vector<16x16xf32>
    %cst_135 = arith.constant 0.353553385 : f32
    %355 = vector.broadcast %cst_135 : f32 to vector<16x16xf32>
    %356 = arith.mulf %354, %355 : vector<16x16xf32>
    %cst_136 = arith.constant dense<0xFF800000> : vector<16xf32>
    %357 = vector.multi_reduction <maximumf>, %356, %cst_136 [1] : vector<16x16xf32> to vector<16xf32>
    %358 = vector.shape_cast %357 : vector<16xf32> to vector<16x1xf32>
    %359 = vector.broadcast %358 : vector<16x1xf32> to vector<16x16xf32>
    %360 = arith.subf %356, %359 : vector<16x16xf32>
    %361 = math.exp %360 : vector<16x16xf32>
    %cst_137 = arith.constant dense<0.000000e+00> : vector<16xf32>
    %362 = vector.multi_reduction <add>, %361, %cst_137 [1] : vector<16x16xf32> to vector<16xf32>
    %363 = vector.shape_cast %362 : vector<16xf32> to vector<16x1xf32>
    %364 = tpu.reciprocal %363 {approx = true} : vector<16x1xf32> -> vector<16x1xf32>
    %365 = vector.broadcast %364 : vector<16x1xf32> to vector<16x16xf32>
    %366 = arith.mulf %361, %365 : vector<16x16xf32>
    %367 = arith.truncf %366 : vector<16x16xf32> to vector<16x16xbf16>
    %368 = arith.truncf %351 : vector<16x8xf32> to vector<16x8xbf16>
    %cst_138 = arith.constant dense<0.000000e+00> : vector<16x8xf32>
    %369 = tpu.matmul %367, %368, %cst_138 {dimension_numbers = #tpu.dot_dimension_numbers<[1], [0], [0], [1], [0, 0, 1, 1], [], []>} : vector<16x16xbf16>, vector<16x8xbf16>, vector<16x8xf32> -> vector<16x8xf32>
    %c1024 = arith.constant 1024 : index
    %c0_139 = arith.constant 0 : index
    %370 = vector.load %arg5[%c1024, %c0_139] : memref<2712x128xf32, #tpu.memory_space<vmem>>, vector<8x32xf32>
    %371 = arith.truncf %369 : vector<16x8xf32> to vector<16x8xbf16>
    %372 = arith.truncf %370 : vector<8x32xf32> to vector<8x32xbf16>
    %cst_140 = arith.constant dense<0.000000e+00> : vector<16x32xf32>
    %373 = tpu.matmul %371, %372, %cst_140 {dimension_numbers = #tpu.dot_dimension_numbers<[1], [0], [0], [1], [0, 0, 1, 1], [], []>} : vector<16x8xbf16>, vector<8x32xbf16>, vector<16x32xf32> -> vector<16x32xf32>
    %374 = arith.addf %330, %373 : vector<16x32xf32>
    %c1032 = arith.constant 1032 : index
    %c0_141 = arith.constant 0 : index
    %375 = vector.load %arg5[%c1032, %c0_141] : memref<2712x128xf32, #tpu.memory_space<vmem>>, vector<32x8xf32>
    %376 = arith.truncf %287 : vector<16x32xf32> to vector<16x32xbf16>
    %377 = arith.truncf %375 : vector<32x8xf32> to vector<32x8xbf16>
    %cst_142 = arith.constant dense<0.000000e+00> : vector<16x8xf32>
    %378 = tpu.matmul %376, %377, %cst_142 {dimension_numbers = #tpu.dot_dimension_numbers<[1], [0], [0], [1], [0, 0, 1, 1], [], []>} : vector<16x32xbf16>, vector<32x8xbf16>, vector<16x8xf32> -> vector<16x8xf32>
    %c1064 = arith.constant 1064 : index
    %c0_143 = arith.constant 0 : index
    %379 = vector.load %arg5[%c1064, %c0_143] : memref<2712x128xf32, #tpu.memory_space<vmem>>, vector<1x8xf32>
    %380 = vector.broadcast %379 : vector<1x8xf32> to vector<16x8xf32>
    %381 = arith.addf %378, %380 : vector<16x8xf32>
    %c1072 = arith.constant 1072 : index
    %c0_144 = arith.constant 0 : index
    %382 = vector.load %arg5[%c1072, %c0_144] : memref<2712x128xf32, #tpu.memory_space<vmem>>, vector<32x8xf32>
    %383 = arith.truncf %287 : vector<16x32xf32> to vector<16x32xbf16>
    %384 = arith.truncf %382 : vector<32x8xf32> to vector<32x8xbf16>
    %cst_145 = arith.constant dense<0.000000e+00> : vector<16x8xf32>
    %385 = tpu.matmul %383, %384, %cst_145 {dimension_numbers = #tpu.dot_dimension_numbers<[1], [0], [0], [1], [0, 0, 1, 1], [], []>} : vector<16x32xbf16>, vector<32x8xbf16>, vector<16x8xf32> -> vector<16x8xf32>
    %c1104 = arith.constant 1104 : index
    %c0_146 = arith.constant 0 : index
    %386 = vector.load %arg5[%c1104, %c0_146] : memref<2712x128xf32, #tpu.memory_space<vmem>>, vector<1x8xf32>
    %387 = vector.broadcast %386 : vector<1x8xf32> to vector<16x8xf32>
    %388 = arith.addf %385, %387 : vector<16x8xf32>
    %c1112 = arith.constant 1112 : index
    %c0_147 = arith.constant 0 : index
    %389 = vector.load %arg5[%c1112, %c0_147] : memref<2712x128xf32, #tpu.memory_space<vmem>>, vector<32x8xf32>
    %390 = arith.truncf %287 : vector<16x32xf32> to vector<16x32xbf16>
    %391 = arith.truncf %389 : vector<32x8xf32> to vector<32x8xbf16>
    %cst_148 = arith.constant dense<0.000000e+00> : vector<16x8xf32>
    %392 = tpu.matmul %390, %391, %cst_148 {dimension_numbers = #tpu.dot_dimension_numbers<[1], [0], [0], [1], [0, 0, 1, 1], [], []>} : vector<16x32xbf16>, vector<32x8xbf16>, vector<16x8xf32> -> vector<16x8xf32>
    %c1144 = arith.constant 1144 : index
    %c0_149 = arith.constant 0 : index
    %393 = vector.load %arg5[%c1144, %c0_149] : memref<2712x128xf32, #tpu.memory_space<vmem>>, vector<1x8xf32>
    %394 = vector.broadcast %393 : vector<1x8xf32> to vector<16x8xf32>
    %395 = arith.addf %392, %394 : vector<16x8xf32>
    %396 = arith.truncf %381 : vector<16x8xf32> to vector<16x8xbf16>
    %397 = arith.truncf %388 : vector<16x8xf32> to vector<16x8xbf16>
    %cst_150 = arith.constant dense<0.000000e+00> : vector<16x16xf32>
    %398 = tpu.matmul %396, %397, %cst_150 {dimension_numbers = #tpu.dot_dimension_numbers<[1], [1], [0], [0], [0, 0, 1, 0], [], []>} : vector<16x8xbf16>, vector<16x8xbf16>, vector<16x16xf32> -> vector<16x16xf32>
    %cst_151 = arith.constant 0.353553385 : f32
    %399 = vector.broadcast %cst_151 : f32 to vector<16x16xf32>
    %400 = arith.mulf %398, %399 : vector<16x16xf32>
    %cst_152 = arith.constant dense<0xFF800000> : vector<16xf32>
    %401 = vector.multi_reduction <maximumf>, %400, %cst_152 [1] : vector<16x16xf32> to vector<16xf32>
    %402 = vector.shape_cast %401 : vector<16xf32> to vector<16x1xf32>
    %403 = vector.broadcast %402 : vector<16x1xf32> to vector<16x16xf32>
    %404 = arith.subf %400, %403 : vector<16x16xf32>
    %405 = math.exp %404 : vector<16x16xf32>
    %cst_153 = arith.constant dense<0.000000e+00> : vector<16xf32>
    %406 = vector.multi_reduction <add>, %405, %cst_153 [1] : vector<16x16xf32> to vector<16xf32>
    %407 = vector.shape_cast %406 : vector<16xf32> to vector<16x1xf32>
    %408 = tpu.reciprocal %407 {approx = true} : vector<16x1xf32> -> vector<16x1xf32>
    %409 = vector.broadcast %408 : vector<16x1xf32> to vector<16x16xf32>
    %410 = arith.mulf %405, %409 : vector<16x16xf32>
    %411 = arith.truncf %410 : vector<16x16xf32> to vector<16x16xbf16>
    %412 = arith.truncf %395 : vector<16x8xf32> to vector<16x8xbf16>
    %cst_154 = arith.constant dense<0.000000e+00> : vector<16x8xf32>
    %413 = tpu.matmul %411, %412, %cst_154 {dimension_numbers = #tpu.dot_dimension_numbers<[1], [0], [0], [1], [0, 0, 1, 1], [], []>} : vector<16x16xbf16>, vector<16x8xbf16>, vector<16x8xf32> -> vector<16x8xf32>
    %c1152 = arith.constant 1152 : index
    %c0_155 = arith.constant 0 : index
    %414 = vector.load %arg5[%c1152, %c0_155] : memref<2712x128xf32, #tpu.memory_space<vmem>>, vector<8x32xf32>
    %415 = arith.truncf %413 : vector<16x8xf32> to vector<16x8xbf16>
    %416 = arith.truncf %414 : vector<8x32xf32> to vector<8x32xbf16>
    %cst_156 = arith.constant dense<0.000000e+00> : vector<16x32xf32>
    %417 = tpu.matmul %415, %416, %cst_156 {dimension_numbers = #tpu.dot_dimension_numbers<[1], [0], [0], [1], [0, 0, 1, 1], [], []>} : vector<16x8xbf16>, vector<8x32xbf16>, vector<16x32xf32> -> vector<16x32xf32>
    %418 = arith.addf %374, %417 : vector<16x32xf32>
    %c1160 = arith.constant 1160 : index
    %c0_157 = arith.constant 0 : index
    %419 = vector.load %arg5[%c1160, %c0_157] : memref<2712x128xf32, #tpu.memory_space<vmem>>, vector<32x8xf32>
    %420 = arith.truncf %287 : vector<16x32xf32> to vector<16x32xbf16>
    %421 = arith.truncf %419 : vector<32x8xf32> to vector<32x8xbf16>
    %cst_158 = arith.constant dense<0.000000e+00> : vector<16x8xf32>
    %422 = tpu.matmul %420, %421, %cst_158 {dimension_numbers = #tpu.dot_dimension_numbers<[1], [0], [0], [1], [0, 0, 1, 1], [], []>} : vector<16x32xbf16>, vector<32x8xbf16>, vector<16x8xf32> -> vector<16x8xf32>
    %c1192 = arith.constant 1192 : index
    %c0_159 = arith.constant 0 : index
    %423 = vector.load %arg5[%c1192, %c0_159] : memref<2712x128xf32, #tpu.memory_space<vmem>>, vector<1x8xf32>
    %424 = vector.broadcast %423 : vector<1x8xf32> to vector<16x8xf32>
    %425 = arith.addf %422, %424 : vector<16x8xf32>
    %c1200 = arith.constant 1200 : index
    %c0_160 = arith.constant 0 : index
    %426 = vector.load %arg5[%c1200, %c0_160] : memref<2712x128xf32, #tpu.memory_space<vmem>>, vector<32x8xf32>
    %427 = arith.truncf %287 : vector<16x32xf32> to vector<16x32xbf16>
    %428 = arith.truncf %426 : vector<32x8xf32> to vector<32x8xbf16>
    %cst_161 = arith.constant dense<0.000000e+00> : vector<16x8xf32>
    %429 = tpu.matmul %427, %428, %cst_161 {dimension_numbers = #tpu.dot_dimension_numbers<[1], [0], [0], [1], [0, 0, 1, 1], [], []>} : vector<16x32xbf16>, vector<32x8xbf16>, vector<16x8xf32> -> vector<16x8xf32>
    %c1232 = arith.constant 1232 : index
    %c0_162 = arith.constant 0 : index
    %430 = vector.load %arg5[%c1232, %c0_162] : memref<2712x128xf32, #tpu.memory_space<vmem>>, vector<1x8xf32>
    %431 = vector.broadcast %430 : vector<1x8xf32> to vector<16x8xf32>
    %432 = arith.addf %429, %431 : vector<16x8xf32>
    %c1240 = arith.constant 1240 : index
    %c0_163 = arith.constant 0 : index
    %433 = vector.load %arg5[%c1240, %c0_163] : memref<2712x128xf32, #tpu.memory_space<vmem>>, vector<32x8xf32>
    %434 = arith.truncf %287 : vector<16x32xf32> to vector<16x32xbf16>
    %435 = arith.truncf %433 : vector<32x8xf32> to vector<32x8xbf16>
    %cst_164 = arith.constant dense<0.000000e+00> : vector<16x8xf32>
    %436 = tpu.matmul %434, %435, %cst_164 {dimension_numbers = #tpu.dot_dimension_numbers<[1], [0], [0], [1], [0, 0, 1, 1], [], []>} : vector<16x32xbf16>, vector<32x8xbf16>, vector<16x8xf32> -> vector<16x8xf32>
    %c1272 = arith.constant 1272 : index
    %c0_165 = arith.constant 0 : index
    %437 = vector.load %arg5[%c1272, %c0_165] : memref<2712x128xf32, #tpu.memory_space<vmem>>, vector<1x8xf32>
    %438 = vector.broadcast %437 : vector<1x8xf32> to vector<16x8xf32>
    %439 = arith.addf %436, %438 : vector<16x8xf32>
    %440 = arith.truncf %425 : vector<16x8xf32> to vector<16x8xbf16>
    %441 = arith.truncf %432 : vector<16x8xf32> to vector<16x8xbf16>
    %cst_166 = arith.constant dense<0.000000e+00> : vector<16x16xf32>
    %442 = tpu.matmul %440, %441, %cst_166 {dimension_numbers = #tpu.dot_dimension_numbers<[1], [1], [0], [0], [0, 0, 1, 0], [], []>} : vector<16x8xbf16>, vector<16x8xbf16>, vector<16x16xf32> -> vector<16x16xf32>
    %cst_167 = arith.constant 0.353553385 : f32
    %443 = vector.broadcast %cst_167 : f32 to vector<16x16xf32>
    %444 = arith.mulf %442, %443 : vector<16x16xf32>
    %cst_168 = arith.constant dense<0xFF800000> : vector<16xf32>
    %445 = vector.multi_reduction <maximumf>, %444, %cst_168 [1] : vector<16x16xf32> to vector<16xf32>
    %446 = vector.shape_cast %445 : vector<16xf32> to vector<16x1xf32>
    %447 = vector.broadcast %446 : vector<16x1xf32> to vector<16x16xf32>
    %448 = arith.subf %444, %447 : vector<16x16xf32>
    %449 = math.exp %448 : vector<16x16xf32>
    %cst_169 = arith.constant dense<0.000000e+00> : vector<16xf32>
    %450 = vector.multi_reduction <add>, %449, %cst_169 [1] : vector<16x16xf32> to vector<16xf32>
    %451 = vector.shape_cast %450 : vector<16xf32> to vector<16x1xf32>
    %452 = tpu.reciprocal %451 {approx = true} : vector<16x1xf32> -> vector<16x1xf32>
    %453 = vector.broadcast %452 : vector<16x1xf32> to vector<16x16xf32>
    %454 = arith.mulf %449, %453 : vector<16x16xf32>
    %455 = arith.truncf %454 : vector<16x16xf32> to vector<16x16xbf16>
    %456 = arith.truncf %439 : vector<16x8xf32> to vector<16x8xbf16>
    %cst_170 = arith.constant dense<0.000000e+00> : vector<16x8xf32>
    %457 = tpu.matmul %455, %456, %cst_170 {dimension_numbers = #tpu.dot_dimension_numbers<[1], [0], [0], [1], [0, 0, 1, 1], [], []>} : vector<16x16xbf16>, vector<16x8xbf16>, vector<16x8xf32> -> vector<16x8xf32>
    %c1280 = arith.constant 1280 : index
    %c0_171 = arith.constant 0 : index
    %458 = vector.load %arg5[%c1280, %c0_171] : memref<2712x128xf32, #tpu.memory_space<vmem>>, vector<8x32xf32>
    %459 = arith.truncf %457 : vector<16x8xf32> to vector<16x8xbf16>
    %460 = arith.truncf %458 : vector<8x32xf32> to vector<8x32xbf16>
    %cst_172 = arith.constant dense<0.000000e+00> : vector<16x32xf32>
    %461 = tpu.matmul %459, %460, %cst_172 {dimension_numbers = #tpu.dot_dimension_numbers<[1], [0], [0], [1], [0, 0, 1, 1], [], []>} : vector<16x8xbf16>, vector<8x32xbf16>, vector<16x32xf32> -> vector<16x32xf32>
    %462 = arith.addf %418, %461 : vector<16x32xf32>
    %c1288 = arith.constant 1288 : index
    %c0_173 = arith.constant 0 : index
    %463 = vector.load %arg5[%c1288, %c0_173] : memref<2712x128xf32, #tpu.memory_space<vmem>>, vector<1x32xf32>
    %464 = vector.broadcast %463 : vector<1x32xf32> to vector<16x32xf32>
    %465 = arith.addf %462, %464 : vector<16x32xf32>
    %466 = arith.addf %287, %465 : vector<16x32xf32>
    %cst_174 = arith.constant dense<0.000000e+00> : vector<16xf32>
    %467 = vector.multi_reduction <add>, %466, %cst_174 [1] : vector<16x32xf32> to vector<16xf32>
    %468 = vector.shape_cast %467 : vector<16xf32> to vector<16x1xf32>
    %cst_175 = arith.constant 3.200000e+01 : f32
    %469 = vector.broadcast %cst_175 : f32 to vector<16x1xf32>
    %470 = arith.divf %468, %469 : vector<16x1xf32>
    %471 = vector.broadcast %470 : vector<16x1xf32> to vector<16x32xf32>
    %472 = arith.subf %466, %471 : vector<16x32xf32>
    %473 = arith.mulf %472, %472 : vector<16x32xf32>
    %cst_176 = arith.constant dense<0.000000e+00> : vector<16xf32>
    %474 = vector.multi_reduction <add>, %473, %cst_176 [1] : vector<16x32xf32> to vector<16xf32>
    %475 = vector.shape_cast %474 : vector<16xf32> to vector<16x1xf32>
    %cst_177 = arith.constant 3.200000e+01 : f32
    %476 = vector.broadcast %cst_177 : f32 to vector<16x1xf32>
    %477 = arith.divf %475, %476 : vector<16x1xf32>
    %478 = vector.broadcast %470 : vector<16x1xf32> to vector<16x32xf32>
    %479 = arith.subf %466, %478 : vector<16x32xf32>
    %cst_178 = arith.constant 9.99999974E-6 : f32
    %480 = vector.broadcast %cst_178 : f32 to vector<16x1xf32>
    %481 = arith.addf %477, %480 : vector<16x1xf32>
    %482 = math.rsqrt %481 : vector<16x1xf32>
    %483 = vector.broadcast %482 : vector<16x1xf32> to vector<16x32xf32>
    %484 = arith.mulf %479, %483 : vector<16x32xf32>
    %c1408 = arith.constant 1408 : index
    %c0_179 = arith.constant 0 : index
    %485 = vector.load %arg5[%c1408, %c0_179] : memref<2712x128xf32, #tpu.memory_space<vmem>>, vector<1x32xf32>
    %486 = vector.broadcast %485 : vector<1x32xf32> to vector<16x32xf32>
    %487 = arith.mulf %484, %486 : vector<16x32xf32>
    %c1416 = arith.constant 1416 : index
    %c0_180 = arith.constant 0 : index
    %488 = vector.load %arg5[%c1416, %c0_180] : memref<2712x128xf32, #tpu.memory_space<vmem>>, vector<1x32xf32>
    %489 = vector.broadcast %488 : vector<1x32xf32> to vector<16x32xf32>
    %490 = arith.addf %487, %489 : vector<16x32xf32>
    %c1296 = arith.constant 1296 : index
    %c0_181 = arith.constant 0 : index
    %491 = vector.load %arg5[%c1296, %c0_181] : memref<2712x128xf32, #tpu.memory_space<vmem>>, vector<32x64xf32>
    %492 = arith.truncf %490 : vector<16x32xf32> to vector<16x32xbf16>
    %493 = arith.truncf %491 : vector<32x64xf32> to vector<32x64xbf16>
    %cst_182 = arith.constant dense<0.000000e+00> : vector<16x64xf32>
    %494 = tpu.matmul %492, %493, %cst_182 {dimension_numbers = #tpu.dot_dimension_numbers<[1], [0], [0], [1], [0, 0, 1, 1], [], []>} : vector<16x32xbf16>, vector<32x64xbf16>, vector<16x64xf32> -> vector<16x64xf32>
    %c1328 = arith.constant 1328 : index
    %c0_183 = arith.constant 0 : index
    %495 = vector.load %arg5[%c1328, %c0_183] : memref<2712x128xf32, #tpu.memory_space<vmem>>, vector<1x64xf32>
    %496 = vector.broadcast %495 : vector<1x64xf32> to vector<16x64xf32>
    %497 = arith.addf %494, %496 : vector<16x64xf32>
    %cst_184 = arith.constant 0.000000e+00 : f32
    %498 = vector.broadcast %cst_184 : f32 to vector<16x64xf32>
    %499 = arith.maximumf %497, %498 : vector<16x64xf32>
    %c1336 = arith.constant 1336 : index
    %c0_185 = arith.constant 0 : index
    %500 = vector.load %arg5[%c1336, %c0_185] : memref<2712x128xf32, #tpu.memory_space<vmem>>, vector<64x32xf32>
    %501 = arith.truncf %499 : vector<16x64xf32> to vector<16x64xbf16>
    %502 = arith.truncf %500 : vector<64x32xf32> to vector<64x32xbf16>
    %cst_186 = arith.constant dense<0.000000e+00> : vector<16x32xf32>
    %503 = tpu.matmul %501, %502, %cst_186 {dimension_numbers = #tpu.dot_dimension_numbers<[1], [0], [0], [1], [0, 0, 1, 1], [], []>} : vector<16x64xbf16>, vector<64x32xbf16>, vector<16x32xf32> -> vector<16x32xf32>
    %c1400 = arith.constant 1400 : index
    %c0_187 = arith.constant 0 : index
    %504 = vector.load %arg5[%c1400, %c0_187] : memref<2712x128xf32, #tpu.memory_space<vmem>>, vector<1x32xf32>
    %505 = vector.broadcast %504 : vector<1x32xf32> to vector<16x32xf32>
    %506 = arith.addf %503, %505 : vector<16x32xf32>
    %507 = arith.addf %490, %506 : vector<16x32xf32>
    %cst_188 = arith.constant dense<0.000000e+00> : vector<16xf32>
    %508 = vector.multi_reduction <add>, %507, %cst_188 [1] : vector<16x32xf32> to vector<16xf32>
    %509 = vector.shape_cast %508 : vector<16xf32> to vector<16x1xf32>
    %cst_189 = arith.constant 3.200000e+01 : f32
    %510 = vector.broadcast %cst_189 : f32 to vector<16x1xf32>
    %511 = arith.divf %509, %510 : vector<16x1xf32>
    %512 = vector.broadcast %511 : vector<16x1xf32> to vector<16x32xf32>
    %513 = arith.subf %507, %512 : vector<16x32xf32>
    %514 = arith.mulf %513, %513 : vector<16x32xf32>
    %cst_190 = arith.constant dense<0.000000e+00> : vector<16xf32>
    %515 = vector.multi_reduction <add>, %514, %cst_190 [1] : vector<16x32xf32> to vector<16xf32>
    %516 = vector.shape_cast %515 : vector<16xf32> to vector<16x1xf32>
    %cst_191 = arith.constant 3.200000e+01 : f32
    %517 = vector.broadcast %cst_191 : f32 to vector<16x1xf32>
    %518 = arith.divf %516, %517 : vector<16x1xf32>
    %519 = vector.broadcast %511 : vector<16x1xf32> to vector<16x32xf32>
    %520 = arith.subf %507, %519 : vector<16x32xf32>
    %cst_192 = arith.constant 9.99999974E-6 : f32
    %521 = vector.broadcast %cst_192 : f32 to vector<16x1xf32>
    %522 = arith.addf %518, %521 : vector<16x1xf32>
    %523 = math.rsqrt %522 : vector<16x1xf32>
    %524 = vector.broadcast %523 : vector<16x1xf32> to vector<16x32xf32>
    %525 = arith.mulf %520, %524 : vector<16x32xf32>
    %c1424 = arith.constant 1424 : index
    %c0_193 = arith.constant 0 : index
    %526 = vector.load %arg5[%c1424, %c0_193] : memref<2712x128xf32, #tpu.memory_space<vmem>>, vector<1x32xf32>
    %527 = vector.broadcast %526 : vector<1x32xf32> to vector<16x32xf32>
    %528 = arith.mulf %525, %527 : vector<16x32xf32>
    %c1432 = arith.constant 1432 : index
    %c0_194 = arith.constant 0 : index
    %529 = vector.load %arg5[%c1432, %c0_194] : memref<2712x128xf32, #tpu.memory_space<vmem>>, vector<1x32xf32>
    %530 = vector.broadcast %529 : vector<1x32xf32> to vector<16x32xf32>
    %531 = arith.addf %528, %530 : vector<16x32xf32>
    %cst_195 = arith.constant dense<0.000000e+00> : vector<16xf32>
    %532 = vector.multi_reduction <add>, %531, %cst_195 [1] : vector<16x32xf32> to vector<16xf32>
    %533 = vector.shape_cast %532 : vector<16xf32> to vector<16x1xf32>
    %cst_196 = arith.constant 3.200000e+01 : f32
    %534 = vector.broadcast %cst_196 : f32 to vector<16x1xf32>
    %535 = arith.divf %533, %534 : vector<16x1xf32>
    %536 = vector.broadcast %535 : vector<16x1xf32> to vector<16x32xf32>
    %537 = arith.subf %531, %536 : vector<16x32xf32>
    %538 = arith.mulf %537, %537 : vector<16x32xf32>
    %cst_197 = arith.constant dense<0.000000e+00> : vector<16xf32>
    %539 = vector.multi_reduction <add>, %538, %cst_197 [1] : vector<16x32xf32> to vector<16xf32>
    %540 = vector.shape_cast %539 : vector<16xf32> to vector<16x1xf32>
    %cst_198 = arith.constant 3.200000e+01 : f32
    %541 = vector.broadcast %cst_198 : f32 to vector<16x1xf32>
    %542 = arith.divf %540, %541 : vector<16x1xf32>
    %543 = vector.broadcast %535 : vector<16x1xf32> to vector<16x32xf32>
    %544 = arith.subf %531, %543 : vector<16x32xf32>
    %cst_199 = arith.constant 9.99999974E-6 : f32
    %545 = vector.broadcast %cst_199 : f32 to vector<16x1xf32>
    %546 = arith.addf %542, %545 : vector<16x1xf32>
    %547 = math.rsqrt %546 : vector<16x1xf32>
    %548 = vector.broadcast %547 : vector<16x1xf32> to vector<16x32xf32>
    %549 = arith.mulf %544, %548 : vector<16x32xf32>
    %c1440 = arith.constant 1440 : index
    %c0_200 = arith.constant 0 : index
    %550 = vector.load %arg5[%c1440, %c0_200] : memref<2712x128xf32, #tpu.memory_space<vmem>>, vector<1x32xf32>
    %551 = vector.broadcast %550 : vector<1x32xf32> to vector<16x32xf32>
    %552 = arith.mulf %549, %551 : vector<16x32xf32>
    %c1448 = arith.constant 1448 : index
    %c0_201 = arith.constant 0 : index
    %553 = vector.load %arg5[%c1448, %c0_201] : memref<2712x128xf32, #tpu.memory_space<vmem>>, vector<1x32xf32>
    %554 = vector.broadcast %553 : vector<1x32xf32> to vector<16x32xf32>
    %555 = arith.addf %552, %554 : vector<16x32xf32>
    %556 = vector.extract_strided_slice %11 {offsets = [11, 0], sizes = [1, 4], strides = [1, 1]} : vector<12x4xf32> to vector<1x4xf32>
    %557 = vector.extract_strided_slice %11 {offsets = [0, 0], sizes = [11, 4], strides = [1, 1]} : vector<12x4xf32> to vector<11x4xf32>
    %558 = tpu.concatenate %556, %557 in 0 : vector<1x4xf32>, vector<11x4xf32> -> vector<12x4xf32>
    %559 = vector.extract_strided_slice %11 {offsets = [1, 0], sizes = [11, 4], strides = [1, 1]} : vector<12x4xf32> to vector<11x4xf32>
    %560 = vector.extract_strided_slice %11 {offsets = [0, 0], sizes = [1, 4], strides = [1, 1]} : vector<12x4xf32> to vector<1x4xf32>
    %561 = tpu.concatenate %559, %560 in 0 : vector<11x4xf32>, vector<1x4xf32> -> vector<12x4xf32>
    %c56 = arith.constant 56 : index
    %c0_202 = arith.constant 0 : index
    %562 = vector.load %arg5[%c56, %c0_202] : memref<2712x128xf32, #tpu.memory_space<vmem>>, vector<4x32xf32>
    %563 = arith.truncf %558 : vector<12x4xf32> to vector<12x4xbf16>
    %564 = arith.truncf %562 : vector<4x32xf32> to vector<4x32xbf16>
    %cst_203 = arith.constant dense<0.000000e+00> : vector<12x32xf32>
    %565 = tpu.matmul %563, %564, %cst_203 {dimension_numbers = #tpu.dot_dimension_numbers<[1], [0], [0], [1], [0, 0, 1, 1], [], []>} : vector<12x4xbf16>, vector<4x32xbf16>, vector<12x32xf32> -> vector<12x32xf32>
    %c64 = arith.constant 64 : index
    %c0_204 = arith.constant 0 : index
    %566 = vector.load %arg5[%c64, %c0_204] : memref<2712x128xf32, #tpu.memory_space<vmem>>, vector<4x32xf32>
    %567 = arith.truncf %11 : vector<12x4xf32> to vector<12x4xbf16>
    %568 = arith.truncf %566 : vector<4x32xf32> to vector<4x32xbf16>
    %cst_205 = arith.constant dense<0.000000e+00> : vector<12x32xf32>
    %569 = tpu.matmul %567, %568, %cst_205 {dimension_numbers = #tpu.dot_dimension_numbers<[1], [0], [0], [1], [0, 0, 1, 1], [], []>} : vector<12x4xbf16>, vector<4x32xbf16>, vector<12x32xf32> -> vector<12x32xf32>
    %570 = arith.addf %565, %569 : vector<12x32xf32>
    %c72 = arith.constant 72 : index
    %c0_206 = arith.constant 0 : index
    %571 = vector.load %arg5[%c72, %c0_206] : memref<2712x128xf32, #tpu.memory_space<vmem>>, vector<4x32xf32>
    %572 = arith.truncf %561 : vector<12x4xf32> to vector<12x4xbf16>
    %573 = arith.truncf %571 : vector<4x32xf32> to vector<4x32xbf16>
    %cst_207 = arith.constant dense<0.000000e+00> : vector<12x32xf32>
    %574 = tpu.matmul %572, %573, %cst_207 {dimension_numbers = #tpu.dot_dimension_numbers<[1], [0], [0], [1], [0, 0, 1, 1], [], []>} : vector<12x4xbf16>, vector<4x32xbf16>, vector<12x32xf32> -> vector<12x32xf32>
    %575 = arith.addf %570, %574 : vector<12x32xf32>
    %c80 = arith.constant 80 : index
    %c0_208 = arith.constant 0 : index
    %576 = vector.load %arg5[%c80, %c0_208] : memref<2712x128xf32, #tpu.memory_space<vmem>>, vector<4x32xf32>
    %577 = arith.truncf %13 : vector<12x4xf32> to vector<12x4xbf16>
    %578 = arith.truncf %576 : vector<4x32xf32> to vector<4x32xbf16>
    %cst_209 = arith.constant dense<0.000000e+00> : vector<12x32xf32>
    %579 = tpu.matmul %577, %578, %cst_209 {dimension_numbers = #tpu.dot_dimension_numbers<[1], [0], [0], [1], [0, 0, 1, 1], [], []>} : vector<12x4xbf16>, vector<4x32xbf16>, vector<12x32xf32> -> vector<12x32xf32>
    %c88 = arith.constant 88 : index
    %c0_210 = arith.constant 0 : index
    %580 = vector.load %arg5[%c88, %c0_210] : memref<2712x128xf32, #tpu.memory_space<vmem>>, vector<1x32xf32>
    %581 = vector.broadcast %580 : vector<1x32xf32> to vector<12x32xf32>
    %582 = arith.addf %579, %581 : vector<12x32xf32>
    %583 = arith.addf %575, %582 : vector<12x32xf32>
    %c96 = arith.constant 96 : index
    %c0_211 = arith.constant 0 : index
    %584 = vector.load %arg5[%c96, %c0_211] : memref<2712x128xf32, #tpu.memory_space<vmem>>, vector<12x32xf32>
    %585 = arith.addf %583, %584 : vector<12x32xf32>
    %c1456 = arith.constant 1456 : index
    %c0_212 = arith.constant 0 : index
    %586 = vector.load %arg5[%c1456, %c0_212] : memref<2712x128xf32, #tpu.memory_space<vmem>>, vector<32x8xf32>
    %587 = arith.truncf %585 : vector<12x32xf32> to vector<12x32xbf16>
    %588 = arith.truncf %586 : vector<32x8xf32> to vector<32x8xbf16>
    %cst_213 = arith.constant dense<0.000000e+00> : vector<12x8xf32>
    %589 = tpu.matmul %587, %588, %cst_213 {dimension_numbers = #tpu.dot_dimension_numbers<[1], [0], [0], [1], [0, 0, 1, 1], [], []>} : vector<12x32xbf16>, vector<32x8xbf16>, vector<12x8xf32> -> vector<12x8xf32>
    %c1488 = arith.constant 1488 : index
    %c0_214 = arith.constant 0 : index
    %590 = vector.load %arg5[%c1488, %c0_214] : memref<2712x128xf32, #tpu.memory_space<vmem>>, vector<1x8xf32>
    %591 = vector.broadcast %590 : vector<1x8xf32> to vector<12x8xf32>
    %592 = arith.addf %589, %591 : vector<12x8xf32>
    %c1496 = arith.constant 1496 : index
    %c0_215 = arith.constant 0 : index
    %593 = vector.load %arg5[%c1496, %c0_215] : memref<2712x128xf32, #tpu.memory_space<vmem>>, vector<32x8xf32>
    %594 = arith.truncf %585 : vector<12x32xf32> to vector<12x32xbf16>
    %595 = arith.truncf %593 : vector<32x8xf32> to vector<32x8xbf16>
    %cst_216 = arith.constant dense<0.000000e+00> : vector<12x8xf32>
    %596 = tpu.matmul %594, %595, %cst_216 {dimension_numbers = #tpu.dot_dimension_numbers<[1], [0], [0], [1], [0, 0, 1, 1], [], []>} : vector<12x32xbf16>, vector<32x8xbf16>, vector<12x8xf32> -> vector<12x8xf32>
    %c1528 = arith.constant 1528 : index
    %c0_217 = arith.constant 0 : index
    %597 = vector.load %arg5[%c1528, %c0_217] : memref<2712x128xf32, #tpu.memory_space<vmem>>, vector<1x8xf32>
    %598 = vector.broadcast %597 : vector<1x8xf32> to vector<12x8xf32>
    %599 = arith.addf %596, %598 : vector<12x8xf32>
    %c1536 = arith.constant 1536 : index
    %c0_218 = arith.constant 0 : index
    %600 = vector.load %arg5[%c1536, %c0_218] : memref<2712x128xf32, #tpu.memory_space<vmem>>, vector<32x8xf32>
    %601 = arith.truncf %585 : vector<12x32xf32> to vector<12x32xbf16>
    %602 = arith.truncf %600 : vector<32x8xf32> to vector<32x8xbf16>
    %cst_219 = arith.constant dense<0.000000e+00> : vector<12x8xf32>
    %603 = tpu.matmul %601, %602, %cst_219 {dimension_numbers = #tpu.dot_dimension_numbers<[1], [0], [0], [1], [0, 0, 1, 1], [], []>} : vector<12x32xbf16>, vector<32x8xbf16>, vector<12x8xf32> -> vector<12x8xf32>
    %c1568 = arith.constant 1568 : index
    %c0_220 = arith.constant 0 : index
    %604 = vector.load %arg5[%c1568, %c0_220] : memref<2712x128xf32, #tpu.memory_space<vmem>>, vector<1x8xf32>
    %605 = vector.broadcast %604 : vector<1x8xf32> to vector<12x8xf32>
    %606 = arith.addf %603, %605 : vector<12x8xf32>
    %607 = arith.truncf %592 : vector<12x8xf32> to vector<12x8xbf16>
    %608 = arith.truncf %599 : vector<12x8xf32> to vector<12x8xbf16>
    %cst_221 = arith.constant dense<0.000000e+00> : vector<12x12xf32>
    %609 = tpu.matmul %607, %608, %cst_221 {dimension_numbers = #tpu.dot_dimension_numbers<[1], [1], [0], [0], [0, 0, 1, 0], [], []>} : vector<12x8xbf16>, vector<12x8xbf16>, vector<12x12xf32> -> vector<12x12xf32>
    %cst_222 = arith.constant 0.353553385 : f32
    %610 = vector.broadcast %cst_222 : f32 to vector<12x12xf32>
    %611 = arith.mulf %609, %610 : vector<12x12xf32>
    %612 = arith.addf %611, %5 : vector<12x12xf32>
    %cst_223 = arith.constant dense<0xFF800000> : vector<12xf32>
    %613 = vector.multi_reduction <maximumf>, %612, %cst_223 [1] : vector<12x12xf32> to vector<12xf32>
    %614 = vector.shape_cast %613 : vector<12xf32> to vector<12x1xf32>
    %615 = vector.broadcast %614 : vector<12x1xf32> to vector<12x12xf32>
    %616 = arith.subf %612, %615 : vector<12x12xf32>
    %617 = math.exp %616 : vector<12x12xf32>
    %cst_224 = arith.constant dense<0.000000e+00> : vector<12xf32>
    %618 = vector.multi_reduction <add>, %617, %cst_224 [1] : vector<12x12xf32> to vector<12xf32>
    %619 = vector.shape_cast %618 : vector<12xf32> to vector<12x1xf32>
    %620 = tpu.reciprocal %619 {approx = true} : vector<12x1xf32> -> vector<12x1xf32>
    %621 = vector.broadcast %620 : vector<12x1xf32> to vector<12x12xf32>
    %622 = arith.mulf %617, %621 : vector<12x12xf32>
    %623 = arith.truncf %622 : vector<12x12xf32> to vector<12x12xbf16>
    %624 = arith.truncf %606 : vector<12x8xf32> to vector<12x8xbf16>
    %cst_225 = arith.constant dense<0.000000e+00> : vector<12x8xf32>
    %625 = tpu.matmul %623, %624, %cst_225 {dimension_numbers = #tpu.dot_dimension_numbers<[1], [0], [0], [1], [0, 0, 1, 1], [], []>} : vector<12x12xbf16>, vector<12x8xbf16>, vector<12x8xf32> -> vector<12x8xf32>
    %c1576 = arith.constant 1576 : index
    %c0_226 = arith.constant 0 : index
    %626 = vector.load %arg5[%c1576, %c0_226] : memref<2712x128xf32, #tpu.memory_space<vmem>>, vector<8x32xf32>
    %627 = arith.truncf %625 : vector<12x8xf32> to vector<12x8xbf16>
    %628 = arith.truncf %626 : vector<8x32xf32> to vector<8x32xbf16>
    %cst_227 = arith.constant dense<0.000000e+00> : vector<12x32xf32>
    %629 = tpu.matmul %627, %628, %cst_227 {dimension_numbers = #tpu.dot_dimension_numbers<[1], [0], [0], [1], [0, 0, 1, 1], [], []>} : vector<12x8xbf16>, vector<8x32xbf16>, vector<12x32xf32> -> vector<12x32xf32>
    %c1584 = arith.constant 1584 : index
    %c0_228 = arith.constant 0 : index
    %630 = vector.load %arg5[%c1584, %c0_228] : memref<2712x128xf32, #tpu.memory_space<vmem>>, vector<32x8xf32>
    %631 = arith.truncf %585 : vector<12x32xf32> to vector<12x32xbf16>
    %632 = arith.truncf %630 : vector<32x8xf32> to vector<32x8xbf16>
    %cst_229 = arith.constant dense<0.000000e+00> : vector<12x8xf32>
    %633 = tpu.matmul %631, %632, %cst_229 {dimension_numbers = #tpu.dot_dimension_numbers<[1], [0], [0], [1], [0, 0, 1, 1], [], []>} : vector<12x32xbf16>, vector<32x8xbf16>, vector<12x8xf32> -> vector<12x8xf32>
    %c1616 = arith.constant 1616 : index
    %c0_230 = arith.constant 0 : index
    %634 = vector.load %arg5[%c1616, %c0_230] : memref<2712x128xf32, #tpu.memory_space<vmem>>, vector<1x8xf32>
    %635 = vector.broadcast %634 : vector<1x8xf32> to vector<12x8xf32>
    %636 = arith.addf %633, %635 : vector<12x8xf32>
    %c1624 = arith.constant 1624 : index
    %c0_231 = arith.constant 0 : index
    %637 = vector.load %arg5[%c1624, %c0_231] : memref<2712x128xf32, #tpu.memory_space<vmem>>, vector<32x8xf32>
    %638 = arith.truncf %585 : vector<12x32xf32> to vector<12x32xbf16>
    %639 = arith.truncf %637 : vector<32x8xf32> to vector<32x8xbf16>
    %cst_232 = arith.constant dense<0.000000e+00> : vector<12x8xf32>
    %640 = tpu.matmul %638, %639, %cst_232 {dimension_numbers = #tpu.dot_dimension_numbers<[1], [0], [0], [1], [0, 0, 1, 1], [], []>} : vector<12x32xbf16>, vector<32x8xbf16>, vector<12x8xf32> -> vector<12x8xf32>
    %c1656 = arith.constant 1656 : index
    %c0_233 = arith.constant 0 : index
    %641 = vector.load %arg5[%c1656, %c0_233] : memref<2712x128xf32, #tpu.memory_space<vmem>>, vector<1x8xf32>
    %642 = vector.broadcast %641 : vector<1x8xf32> to vector<12x8xf32>
    %643 = arith.addf %640, %642 : vector<12x8xf32>
    %c1664 = arith.constant 1664 : index
    %c0_234 = arith.constant 0 : index
    %644 = vector.load %arg5[%c1664, %c0_234] : memref<2712x128xf32, #tpu.memory_space<vmem>>, vector<32x8xf32>
    %645 = arith.truncf %585 : vector<12x32xf32> to vector<12x32xbf16>
    %646 = arith.truncf %644 : vector<32x8xf32> to vector<32x8xbf16>
    %cst_235 = arith.constant dense<0.000000e+00> : vector<12x8xf32>
    %647 = tpu.matmul %645, %646, %cst_235 {dimension_numbers = #tpu.dot_dimension_numbers<[1], [0], [0], [1], [0, 0, 1, 1], [], []>} : vector<12x32xbf16>, vector<32x8xbf16>, vector<12x8xf32> -> vector<12x8xf32>
    %c1696 = arith.constant 1696 : index
    %c0_236 = arith.constant 0 : index
    %648 = vector.load %arg5[%c1696, %c0_236] : memref<2712x128xf32, #tpu.memory_space<vmem>>, vector<1x8xf32>
    %649 = vector.broadcast %648 : vector<1x8xf32> to vector<12x8xf32>
    %650 = arith.addf %647, %649 : vector<12x8xf32>
    %651 = arith.truncf %636 : vector<12x8xf32> to vector<12x8xbf16>
    %652 = arith.truncf %643 : vector<12x8xf32> to vector<12x8xbf16>
    %cst_237 = arith.constant dense<0.000000e+00> : vector<12x12xf32>
    %653 = tpu.matmul %651, %652, %cst_237 {dimension_numbers = #tpu.dot_dimension_numbers<[1], [1], [0], [0], [0, 0, 1, 0], [], []>} : vector<12x8xbf16>, vector<12x8xbf16>, vector<12x12xf32> -> vector<12x12xf32>
    %cst_238 = arith.constant 0.353553385 : f32
    %654 = vector.broadcast %cst_238 : f32 to vector<12x12xf32>
    %655 = arith.mulf %653, %654 : vector<12x12xf32>
    %656 = arith.addf %655, %5 : vector<12x12xf32>
    %cst_239 = arith.constant dense<0xFF800000> : vector<12xf32>
    %657 = vector.multi_reduction <maximumf>, %656, %cst_239 [1] : vector<12x12xf32> to vector<12xf32>
    %658 = vector.shape_cast %657 : vector<12xf32> to vector<12x1xf32>
    %659 = vector.broadcast %658 : vector<12x1xf32> to vector<12x12xf32>
    %660 = arith.subf %656, %659 : vector<12x12xf32>
    %661 = math.exp %660 : vector<12x12xf32>
    %cst_240 = arith.constant dense<0.000000e+00> : vector<12xf32>
    %662 = vector.multi_reduction <add>, %661, %cst_240 [1] : vector<12x12xf32> to vector<12xf32>
    %663 = vector.shape_cast %662 : vector<12xf32> to vector<12x1xf32>
    %664 = tpu.reciprocal %663 {approx = true} : vector<12x1xf32> -> vector<12x1xf32>
    %665 = vector.broadcast %664 : vector<12x1xf32> to vector<12x12xf32>
    %666 = arith.mulf %661, %665 : vector<12x12xf32>
    %667 = arith.truncf %666 : vector<12x12xf32> to vector<12x12xbf16>
    %668 = arith.truncf %650 : vector<12x8xf32> to vector<12x8xbf16>
    %cst_241 = arith.constant dense<0.000000e+00> : vector<12x8xf32>
    %669 = tpu.matmul %667, %668, %cst_241 {dimension_numbers = #tpu.dot_dimension_numbers<[1], [0], [0], [1], [0, 0, 1, 1], [], []>} : vector<12x12xbf16>, vector<12x8xbf16>, vector<12x8xf32> -> vector<12x8xf32>
    %c1704 = arith.constant 1704 : index
    %c0_242 = arith.constant 0 : index
    %670 = vector.load %arg5[%c1704, %c0_242] : memref<2712x128xf32, #tpu.memory_space<vmem>>, vector<8x32xf32>
    %671 = arith.truncf %669 : vector<12x8xf32> to vector<12x8xbf16>
    %672 = arith.truncf %670 : vector<8x32xf32> to vector<8x32xbf16>
    %cst_243 = arith.constant dense<0.000000e+00> : vector<12x32xf32>
    %673 = tpu.matmul %671, %672, %cst_243 {dimension_numbers = #tpu.dot_dimension_numbers<[1], [0], [0], [1], [0, 0, 1, 1], [], []>} : vector<12x8xbf16>, vector<8x32xbf16>, vector<12x32xf32> -> vector<12x32xf32>
    %674 = arith.addf %629, %673 : vector<12x32xf32>
    %c1712 = arith.constant 1712 : index
    %c0_244 = arith.constant 0 : index
    %675 = vector.load %arg5[%c1712, %c0_244] : memref<2712x128xf32, #tpu.memory_space<vmem>>, vector<32x8xf32>
    %676 = arith.truncf %585 : vector<12x32xf32> to vector<12x32xbf16>
    %677 = arith.truncf %675 : vector<32x8xf32> to vector<32x8xbf16>
    %cst_245 = arith.constant dense<0.000000e+00> : vector<12x8xf32>
    %678 = tpu.matmul %676, %677, %cst_245 {dimension_numbers = #tpu.dot_dimension_numbers<[1], [0], [0], [1], [0, 0, 1, 1], [], []>} : vector<12x32xbf16>, vector<32x8xbf16>, vector<12x8xf32> -> vector<12x8xf32>
    %c1744 = arith.constant 1744 : index
    %c0_246 = arith.constant 0 : index
    %679 = vector.load %arg5[%c1744, %c0_246] : memref<2712x128xf32, #tpu.memory_space<vmem>>, vector<1x8xf32>
    %680 = vector.broadcast %679 : vector<1x8xf32> to vector<12x8xf32>
    %681 = arith.addf %678, %680 : vector<12x8xf32>
    %c1752 = arith.constant 1752 : index
    %c0_247 = arith.constant 0 : index
    %682 = vector.load %arg5[%c1752, %c0_247] : memref<2712x128xf32, #tpu.memory_space<vmem>>, vector<32x8xf32>
    %683 = arith.truncf %585 : vector<12x32xf32> to vector<12x32xbf16>
    %684 = arith.truncf %682 : vector<32x8xf32> to vector<32x8xbf16>
    %cst_248 = arith.constant dense<0.000000e+00> : vector<12x8xf32>
    %685 = tpu.matmul %683, %684, %cst_248 {dimension_numbers = #tpu.dot_dimension_numbers<[1], [0], [0], [1], [0, 0, 1, 1], [], []>} : vector<12x32xbf16>, vector<32x8xbf16>, vector<12x8xf32> -> vector<12x8xf32>
    %c1784 = arith.constant 1784 : index
    %c0_249 = arith.constant 0 : index
    %686 = vector.load %arg5[%c1784, %c0_249] : memref<2712x128xf32, #tpu.memory_space<vmem>>, vector<1x8xf32>
    %687 = vector.broadcast %686 : vector<1x8xf32> to vector<12x8xf32>
    %688 = arith.addf %685, %687 : vector<12x8xf32>
    %c1792 = arith.constant 1792 : index
    %c0_250 = arith.constant 0 : index
    %689 = vector.load %arg5[%c1792, %c0_250] : memref<2712x128xf32, #tpu.memory_space<vmem>>, vector<32x8xf32>
    %690 = arith.truncf %585 : vector<12x32xf32> to vector<12x32xbf16>
    %691 = arith.truncf %689 : vector<32x8xf32> to vector<32x8xbf16>
    %cst_251 = arith.constant dense<0.000000e+00> : vector<12x8xf32>
    %692 = tpu.matmul %690, %691, %cst_251 {dimension_numbers = #tpu.dot_dimension_numbers<[1], [0], [0], [1], [0, 0, 1, 1], [], []>} : vector<12x32xbf16>, vector<32x8xbf16>, vector<12x8xf32> -> vector<12x8xf32>
    %c1824 = arith.constant 1824 : index
    %c0_252 = arith.constant 0 : index
    %693 = vector.load %arg5[%c1824, %c0_252] : memref<2712x128xf32, #tpu.memory_space<vmem>>, vector<1x8xf32>
    %694 = vector.broadcast %693 : vector<1x8xf32> to vector<12x8xf32>
    %695 = arith.addf %692, %694 : vector<12x8xf32>
    %696 = arith.truncf %681 : vector<12x8xf32> to vector<12x8xbf16>
    %697 = arith.truncf %688 : vector<12x8xf32> to vector<12x8xbf16>
    %cst_253 = arith.constant dense<0.000000e+00> : vector<12x12xf32>
    %698 = tpu.matmul %696, %697, %cst_253 {dimension_numbers = #tpu.dot_dimension_numbers<[1], [1], [0], [0], [0, 0, 1, 0], [], []>} : vector<12x8xbf16>, vector<12x8xbf16>, vector<12x12xf32> -> vector<12x12xf32>
    %cst_254 = arith.constant 0.353553385 : f32
    %699 = vector.broadcast %cst_254 : f32 to vector<12x12xf32>
    %700 = arith.mulf %698, %699 : vector<12x12xf32>
    %701 = arith.addf %700, %5 : vector<12x12xf32>
    %cst_255 = arith.constant dense<0xFF800000> : vector<12xf32>
    %702 = vector.multi_reduction <maximumf>, %701, %cst_255 [1] : vector<12x12xf32> to vector<12xf32>
    %703 = vector.shape_cast %702 : vector<12xf32> to vector<12x1xf32>
    %704 = vector.broadcast %703 : vector<12x1xf32> to vector<12x12xf32>
    %705 = arith.subf %701, %704 : vector<12x12xf32>
    %706 = math.exp %705 : vector<12x12xf32>
    %cst_256 = arith.constant dense<0.000000e+00> : vector<12xf32>
    %707 = vector.multi_reduction <add>, %706, %cst_256 [1] : vector<12x12xf32> to vector<12xf32>
    %708 = vector.shape_cast %707 : vector<12xf32> to vector<12x1xf32>
    %709 = tpu.reciprocal %708 {approx = true} : vector<12x1xf32> -> vector<12x1xf32>
    %710 = vector.broadcast %709 : vector<12x1xf32> to vector<12x12xf32>
    %711 = arith.mulf %706, %710 : vector<12x12xf32>
    %712 = arith.truncf %711 : vector<12x12xf32> to vector<12x12xbf16>
    %713 = arith.truncf %695 : vector<12x8xf32> to vector<12x8xbf16>
    %cst_257 = arith.constant dense<0.000000e+00> : vector<12x8xf32>
    %714 = tpu.matmul %712, %713, %cst_257 {dimension_numbers = #tpu.dot_dimension_numbers<[1], [0], [0], [1], [0, 0, 1, 1], [], []>} : vector<12x12xbf16>, vector<12x8xbf16>, vector<12x8xf32> -> vector<12x8xf32>
    %c1832 = arith.constant 1832 : index
    %c0_258 = arith.constant 0 : index
    %715 = vector.load %arg5[%c1832, %c0_258] : memref<2712x128xf32, #tpu.memory_space<vmem>>, vector<8x32xf32>
    %716 = arith.truncf %714 : vector<12x8xf32> to vector<12x8xbf16>
    %717 = arith.truncf %715 : vector<8x32xf32> to vector<8x32xbf16>
    %cst_259 = arith.constant dense<0.000000e+00> : vector<12x32xf32>
    %718 = tpu.matmul %716, %717, %cst_259 {dimension_numbers = #tpu.dot_dimension_numbers<[1], [0], [0], [1], [0, 0, 1, 1], [], []>} : vector<12x8xbf16>, vector<8x32xbf16>, vector<12x32xf32> -> vector<12x32xf32>
    %719 = arith.addf %674, %718 : vector<12x32xf32>
    %c1840 = arith.constant 1840 : index
    %c0_260 = arith.constant 0 : index
    %720 = vector.load %arg5[%c1840, %c0_260] : memref<2712x128xf32, #tpu.memory_space<vmem>>, vector<32x8xf32>
    %721 = arith.truncf %585 : vector<12x32xf32> to vector<12x32xbf16>
    %722 = arith.truncf %720 : vector<32x8xf32> to vector<32x8xbf16>
    %cst_261 = arith.constant dense<0.000000e+00> : vector<12x8xf32>
    %723 = tpu.matmul %721, %722, %cst_261 {dimension_numbers = #tpu.dot_dimension_numbers<[1], [0], [0], [1], [0, 0, 1, 1], [], []>} : vector<12x32xbf16>, vector<32x8xbf16>, vector<12x8xf32> -> vector<12x8xf32>
    %c1872 = arith.constant 1872 : index
    %c0_262 = arith.constant 0 : index
    %724 = vector.load %arg5[%c1872, %c0_262] : memref<2712x128xf32, #tpu.memory_space<vmem>>, vector<1x8xf32>
    %725 = vector.broadcast %724 : vector<1x8xf32> to vector<12x8xf32>
    %726 = arith.addf %723, %725 : vector<12x8xf32>
    %c1880 = arith.constant 1880 : index
    %c0_263 = arith.constant 0 : index
    %727 = vector.load %arg5[%c1880, %c0_263] : memref<2712x128xf32, #tpu.memory_space<vmem>>, vector<32x8xf32>
    %728 = arith.truncf %585 : vector<12x32xf32> to vector<12x32xbf16>
    %729 = arith.truncf %727 : vector<32x8xf32> to vector<32x8xbf16>
    %cst_264 = arith.constant dense<0.000000e+00> : vector<12x8xf32>
    %730 = tpu.matmul %728, %729, %cst_264 {dimension_numbers = #tpu.dot_dimension_numbers<[1], [0], [0], [1], [0, 0, 1, 1], [], []>} : vector<12x32xbf16>, vector<32x8xbf16>, vector<12x8xf32> -> vector<12x8xf32>
    %c1912 = arith.constant 1912 : index
    %c0_265 = arith.constant 0 : index
    %731 = vector.load %arg5[%c1912, %c0_265] : memref<2712x128xf32, #tpu.memory_space<vmem>>, vector<1x8xf32>
    %732 = vector.broadcast %731 : vector<1x8xf32> to vector<12x8xf32>
    %733 = arith.addf %730, %732 : vector<12x8xf32>
    %c1920 = arith.constant 1920 : index
    %c0_266 = arith.constant 0 : index
    %734 = vector.load %arg5[%c1920, %c0_266] : memref<2712x128xf32, #tpu.memory_space<vmem>>, vector<32x8xf32>
    %735 = arith.truncf %585 : vector<12x32xf32> to vector<12x32xbf16>
    %736 = arith.truncf %734 : vector<32x8xf32> to vector<32x8xbf16>
    %cst_267 = arith.constant dense<0.000000e+00> : vector<12x8xf32>
    %737 = tpu.matmul %735, %736, %cst_267 {dimension_numbers = #tpu.dot_dimension_numbers<[1], [0], [0], [1], [0, 0, 1, 1], [], []>} : vector<12x32xbf16>, vector<32x8xbf16>, vector<12x8xf32> -> vector<12x8xf32>
    %c1952 = arith.constant 1952 : index
    %c0_268 = arith.constant 0 : index
    %738 = vector.load %arg5[%c1952, %c0_268] : memref<2712x128xf32, #tpu.memory_space<vmem>>, vector<1x8xf32>
    %739 = vector.broadcast %738 : vector<1x8xf32> to vector<12x8xf32>
    %740 = arith.addf %737, %739 : vector<12x8xf32>
    %741 = arith.truncf %726 : vector<12x8xf32> to vector<12x8xbf16>
    %742 = arith.truncf %733 : vector<12x8xf32> to vector<12x8xbf16>
    %cst_269 = arith.constant dense<0.000000e+00> : vector<12x12xf32>
    %743 = tpu.matmul %741, %742, %cst_269 {dimension_numbers = #tpu.dot_dimension_numbers<[1], [1], [0], [0], [0, 0, 1, 0], [], []>} : vector<12x8xbf16>, vector<12x8xbf16>, vector<12x12xf32> -> vector<12x12xf32>
    %cst_270 = arith.constant 0.353553385 : f32
    %744 = vector.broadcast %cst_270 : f32 to vector<12x12xf32>
    %745 = arith.mulf %743, %744 : vector<12x12xf32>
    %746 = arith.addf %745, %5 : vector<12x12xf32>
    %cst_271 = arith.constant dense<0xFF800000> : vector<12xf32>
    %747 = vector.multi_reduction <maximumf>, %746, %cst_271 [1] : vector<12x12xf32> to vector<12xf32>
    %748 = vector.shape_cast %747 : vector<12xf32> to vector<12x1xf32>
    %749 = vector.broadcast %748 : vector<12x1xf32> to vector<12x12xf32>
    %750 = arith.subf %746, %749 : vector<12x12xf32>
    %751 = math.exp %750 : vector<12x12xf32>
    %cst_272 = arith.constant dense<0.000000e+00> : vector<12xf32>
    %752 = vector.multi_reduction <add>, %751, %cst_272 [1] : vector<12x12xf32> to vector<12xf32>
    %753 = vector.shape_cast %752 : vector<12xf32> to vector<12x1xf32>
    %754 = tpu.reciprocal %753 {approx = true} : vector<12x1xf32> -> vector<12x1xf32>
    %755 = vector.broadcast %754 : vector<12x1xf32> to vector<12x12xf32>
    %756 = arith.mulf %751, %755 : vector<12x12xf32>
    %757 = arith.truncf %756 : vector<12x12xf32> to vector<12x12xbf16>
    %758 = arith.truncf %740 : vector<12x8xf32> to vector<12x8xbf16>
    %cst_273 = arith.constant dense<0.000000e+00> : vector<12x8xf32>
    %759 = tpu.matmul %757, %758, %cst_273 {dimension_numbers = #tpu.dot_dimension_numbers<[1], [0], [0], [1], [0, 0, 1, 1], [], []>} : vector<12x12xbf16>, vector<12x8xbf16>, vector<12x8xf32> -> vector<12x8xf32>
    %c1960 = arith.constant 1960 : index
    %c0_274 = arith.constant 0 : index
    %760 = vector.load %arg5[%c1960, %c0_274] : memref<2712x128xf32, #tpu.memory_space<vmem>>, vector<8x32xf32>
    %761 = arith.truncf %759 : vector<12x8xf32> to vector<12x8xbf16>
    %762 = arith.truncf %760 : vector<8x32xf32> to vector<8x32xbf16>
    %cst_275 = arith.constant dense<0.000000e+00> : vector<12x32xf32>
    %763 = tpu.matmul %761, %762, %cst_275 {dimension_numbers = #tpu.dot_dimension_numbers<[1], [0], [0], [1], [0, 0, 1, 1], [], []>} : vector<12x8xbf16>, vector<8x32xbf16>, vector<12x32xf32> -> vector<12x32xf32>
    %764 = arith.addf %719, %763 : vector<12x32xf32>
    %c1968 = arith.constant 1968 : index
    %c0_276 = arith.constant 0 : index
    %765 = vector.load %arg5[%c1968, %c0_276] : memref<2712x128xf32, #tpu.memory_space<vmem>>, vector<1x32xf32>
    %766 = vector.broadcast %765 : vector<1x32xf32> to vector<12x32xf32>
    %767 = arith.addf %764, %766 : vector<12x32xf32>
    %768 = arith.addf %585, %767 : vector<12x32xf32>
    %cst_277 = arith.constant dense<0.000000e+00> : vector<12xf32>
    %769 = vector.multi_reduction <add>, %768, %cst_277 [1] : vector<12x32xf32> to vector<12xf32>
    %770 = vector.shape_cast %769 : vector<12xf32> to vector<12x1xf32>
    %cst_278 = arith.constant 3.200000e+01 : f32
    %771 = vector.broadcast %cst_278 : f32 to vector<12x1xf32>
    %772 = arith.divf %770, %771 : vector<12x1xf32>
    %773 = vector.broadcast %772 : vector<12x1xf32> to vector<12x32xf32>
    %774 = arith.subf %768, %773 : vector<12x32xf32>
    %775 = arith.mulf %774, %774 : vector<12x32xf32>
    %cst_279 = arith.constant dense<0.000000e+00> : vector<12xf32>
    %776 = vector.multi_reduction <add>, %775, %cst_279 [1] : vector<12x32xf32> to vector<12xf32>
    %777 = vector.shape_cast %776 : vector<12xf32> to vector<12x1xf32>
    %cst_280 = arith.constant 3.200000e+01 : f32
    %778 = vector.broadcast %cst_280 : f32 to vector<12x1xf32>
    %779 = arith.divf %777, %778 : vector<12x1xf32>
    %780 = vector.broadcast %772 : vector<12x1xf32> to vector<12x32xf32>
    %781 = arith.subf %768, %780 : vector<12x32xf32>
    %cst_281 = arith.constant 9.99999974E-6 : f32
    %782 = vector.broadcast %cst_281 : f32 to vector<12x1xf32>
    %783 = arith.addf %779, %782 : vector<12x1xf32>
    %784 = math.rsqrt %783 : vector<12x1xf32>
    %785 = vector.broadcast %784 : vector<12x1xf32> to vector<12x32xf32>
    %786 = arith.mulf %781, %785 : vector<12x32xf32>
    %c2608 = arith.constant 2608 : index
    %c0_282 = arith.constant 0 : index
    %787 = vector.load %arg5[%c2608, %c0_282] : memref<2712x128xf32, #tpu.memory_space<vmem>>, vector<1x32xf32>
    %788 = vector.broadcast %787 : vector<1x32xf32> to vector<12x32xf32>
    %789 = arith.mulf %786, %788 : vector<12x32xf32>
    %c2616 = arith.constant 2616 : index
    %c0_283 = arith.constant 0 : index
    %790 = vector.load %arg5[%c2616, %c0_283] : memref<2712x128xf32, #tpu.memory_space<vmem>>, vector<1x32xf32>
    %791 = vector.broadcast %790 : vector<1x32xf32> to vector<12x32xf32>
    %792 = arith.addf %789, %791 : vector<12x32xf32>
    %c1976 = arith.constant 1976 : index
    %c0_284 = arith.constant 0 : index
    %793 = vector.load %arg5[%c1976, %c0_284] : memref<2712x128xf32, #tpu.memory_space<vmem>>, vector<32x8xf32>
    %794 = arith.truncf %792 : vector<12x32xf32> to vector<12x32xbf16>
    %795 = arith.truncf %793 : vector<32x8xf32> to vector<32x8xbf16>
    %cst_285 = arith.constant dense<0.000000e+00> : vector<12x8xf32>
    %796 = tpu.matmul %794, %795, %cst_285 {dimension_numbers = #tpu.dot_dimension_numbers<[1], [0], [0], [1], [0, 0, 1, 1], [], []>} : vector<12x32xbf16>, vector<32x8xbf16>, vector<12x8xf32> -> vector<12x8xf32>
    %c2008 = arith.constant 2008 : index
    %c0_286 = arith.constant 0 : index
    %797 = vector.load %arg5[%c2008, %c0_286] : memref<2712x128xf32, #tpu.memory_space<vmem>>, vector<1x8xf32>
    %798 = vector.broadcast %797 : vector<1x8xf32> to vector<12x8xf32>
    %799 = arith.addf %796, %798 : vector<12x8xf32>
    %c2016 = arith.constant 2016 : index
    %c0_287 = arith.constant 0 : index
    %800 = vector.load %arg5[%c2016, %c0_287] : memref<2712x128xf32, #tpu.memory_space<vmem>>, vector<32x8xf32>
    %801 = arith.truncf %555 : vector<16x32xf32> to vector<16x32xbf16>
    %802 = arith.truncf %800 : vector<32x8xf32> to vector<32x8xbf16>
    %cst_288 = arith.constant dense<0.000000e+00> : vector<16x8xf32>
    %803 = tpu.matmul %801, %802, %cst_288 {dimension_numbers = #tpu.dot_dimension_numbers<[1], [0], [0], [1], [0, 0, 1, 1], [], []>} : vector<16x32xbf16>, vector<32x8xbf16>, vector<16x8xf32> -> vector<16x8xf32>
    %c2048 = arith.constant 2048 : index
    %c0_289 = arith.constant 0 : index
    %804 = vector.load %arg5[%c2048, %c0_289] : memref<2712x128xf32, #tpu.memory_space<vmem>>, vector<1x8xf32>
    %805 = vector.broadcast %804 : vector<1x8xf32> to vector<16x8xf32>
    %806 = arith.addf %803, %805 : vector<16x8xf32>
    %c2056 = arith.constant 2056 : index
    %c0_290 = arith.constant 0 : index
    %807 = vector.load %arg5[%c2056, %c0_290] : memref<2712x128xf32, #tpu.memory_space<vmem>>, vector<32x8xf32>
    %808 = arith.truncf %555 : vector<16x32xf32> to vector<16x32xbf16>
    %809 = arith.truncf %807 : vector<32x8xf32> to vector<32x8xbf16>
    %cst_291 = arith.constant dense<0.000000e+00> : vector<16x8xf32>
    %810 = tpu.matmul %808, %809, %cst_291 {dimension_numbers = #tpu.dot_dimension_numbers<[1], [0], [0], [1], [0, 0, 1, 1], [], []>} : vector<16x32xbf16>, vector<32x8xbf16>, vector<16x8xf32> -> vector<16x8xf32>
    %c2088 = arith.constant 2088 : index
    %c0_292 = arith.constant 0 : index
    %811 = vector.load %arg5[%c2088, %c0_292] : memref<2712x128xf32, #tpu.memory_space<vmem>>, vector<1x8xf32>
    %812 = vector.broadcast %811 : vector<1x8xf32> to vector<16x8xf32>
    %813 = arith.addf %810, %812 : vector<16x8xf32>
    %814 = arith.truncf %799 : vector<12x8xf32> to vector<12x8xbf16>
    %815 = arith.truncf %806 : vector<16x8xf32> to vector<16x8xbf16>
    %cst_293 = arith.constant dense<0.000000e+00> : vector<12x16xf32>
    %816 = tpu.matmul %814, %815, %cst_293 {dimension_numbers = #tpu.dot_dimension_numbers<[1], [1], [0], [0], [0, 0, 1, 0], [], []>} : vector<12x8xbf16>, vector<16x8xbf16>, vector<12x16xf32> -> vector<12x16xf32>
    %cst_294 = arith.constant 0.353553385 : f32
    %817 = vector.broadcast %cst_294 : f32 to vector<12x16xf32>
    %818 = arith.mulf %816, %817 : vector<12x16xf32>
    %cst_295 = arith.constant dense<0xFF800000> : vector<12xf32>
    %819 = vector.multi_reduction <maximumf>, %818, %cst_295 [1] : vector<12x16xf32> to vector<12xf32>
    %820 = vector.shape_cast %819 : vector<12xf32> to vector<12x1xf32>
    %821 = vector.broadcast %820 : vector<12x1xf32> to vector<12x16xf32>
    %822 = arith.subf %818, %821 : vector<12x16xf32>
    %823 = math.exp %822 : vector<12x16xf32>
    %cst_296 = arith.constant dense<0.000000e+00> : vector<12xf32>
    %824 = vector.multi_reduction <add>, %823, %cst_296 [1] : vector<12x16xf32> to vector<12xf32>
    %825 = vector.shape_cast %824 : vector<12xf32> to vector<12x1xf32>
    %826 = tpu.reciprocal %825 {approx = true} : vector<12x1xf32> -> vector<12x1xf32>
    %827 = vector.broadcast %826 : vector<12x1xf32> to vector<12x16xf32>
    %828 = arith.mulf %823, %827 : vector<12x16xf32>
    %829 = arith.truncf %828 : vector<12x16xf32> to vector<12x16xbf16>
    %830 = arith.truncf %813 : vector<16x8xf32> to vector<16x8xbf16>
    %cst_297 = arith.constant dense<0.000000e+00> : vector<12x8xf32>
    %831 = tpu.matmul %829, %830, %cst_297 {dimension_numbers = #tpu.dot_dimension_numbers<[1], [0], [0], [1], [0, 0, 1, 1], [], []>} : vector<12x16xbf16>, vector<16x8xbf16>, vector<12x8xf32> -> vector<12x8xf32>
    %c2096 = arith.constant 2096 : index
    %c0_298 = arith.constant 0 : index
    %832 = vector.load %arg5[%c2096, %c0_298] : memref<2712x128xf32, #tpu.memory_space<vmem>>, vector<8x32xf32>
    %833 = arith.truncf %831 : vector<12x8xf32> to vector<12x8xbf16>
    %834 = arith.truncf %832 : vector<8x32xf32> to vector<8x32xbf16>
    %cst_299 = arith.constant dense<0.000000e+00> : vector<12x32xf32>
    %835 = tpu.matmul %833, %834, %cst_299 {dimension_numbers = #tpu.dot_dimension_numbers<[1], [0], [0], [1], [0, 0, 1, 1], [], []>} : vector<12x8xbf16>, vector<8x32xbf16>, vector<12x32xf32> -> vector<12x32xf32>
    %c2104 = arith.constant 2104 : index
    %c0_300 = arith.constant 0 : index
    %836 = vector.load %arg5[%c2104, %c0_300] : memref<2712x128xf32, #tpu.memory_space<vmem>>, vector<32x8xf32>
    %837 = arith.truncf %792 : vector<12x32xf32> to vector<12x32xbf16>
    %838 = arith.truncf %836 : vector<32x8xf32> to vector<32x8xbf16>
    %cst_301 = arith.constant dense<0.000000e+00> : vector<12x8xf32>
    %839 = tpu.matmul %837, %838, %cst_301 {dimension_numbers = #tpu.dot_dimension_numbers<[1], [0], [0], [1], [0, 0, 1, 1], [], []>} : vector<12x32xbf16>, vector<32x8xbf16>, vector<12x8xf32> -> vector<12x8xf32>
    %c2136 = arith.constant 2136 : index
    %c0_302 = arith.constant 0 : index
    %840 = vector.load %arg5[%c2136, %c0_302] : memref<2712x128xf32, #tpu.memory_space<vmem>>, vector<1x8xf32>
    %841 = vector.broadcast %840 : vector<1x8xf32> to vector<12x8xf32>
    %842 = arith.addf %839, %841 : vector<12x8xf32>
    %c2144 = arith.constant 2144 : index
    %c0_303 = arith.constant 0 : index
    %843 = vector.load %arg5[%c2144, %c0_303] : memref<2712x128xf32, #tpu.memory_space<vmem>>, vector<32x8xf32>
    %844 = arith.truncf %555 : vector<16x32xf32> to vector<16x32xbf16>
    %845 = arith.truncf %843 : vector<32x8xf32> to vector<32x8xbf16>
    %cst_304 = arith.constant dense<0.000000e+00> : vector<16x8xf32>
    %846 = tpu.matmul %844, %845, %cst_304 {dimension_numbers = #tpu.dot_dimension_numbers<[1], [0], [0], [1], [0, 0, 1, 1], [], []>} : vector<16x32xbf16>, vector<32x8xbf16>, vector<16x8xf32> -> vector<16x8xf32>
    %c2176 = arith.constant 2176 : index
    %c0_305 = arith.constant 0 : index
    %847 = vector.load %arg5[%c2176, %c0_305] : memref<2712x128xf32, #tpu.memory_space<vmem>>, vector<1x8xf32>
    %848 = vector.broadcast %847 : vector<1x8xf32> to vector<16x8xf32>
    %849 = arith.addf %846, %848 : vector<16x8xf32>
    %c2184 = arith.constant 2184 : index
    %c0_306 = arith.constant 0 : index
    %850 = vector.load %arg5[%c2184, %c0_306] : memref<2712x128xf32, #tpu.memory_space<vmem>>, vector<32x8xf32>
    %851 = arith.truncf %555 : vector<16x32xf32> to vector<16x32xbf16>
    %852 = arith.truncf %850 : vector<32x8xf32> to vector<32x8xbf16>
    %cst_307 = arith.constant dense<0.000000e+00> : vector<16x8xf32>
    %853 = tpu.matmul %851, %852, %cst_307 {dimension_numbers = #tpu.dot_dimension_numbers<[1], [0], [0], [1], [0, 0, 1, 1], [], []>} : vector<16x32xbf16>, vector<32x8xbf16>, vector<16x8xf32> -> vector<16x8xf32>
    %c2216 = arith.constant 2216 : index
    %c0_308 = arith.constant 0 : index
    %854 = vector.load %arg5[%c2216, %c0_308] : memref<2712x128xf32, #tpu.memory_space<vmem>>, vector<1x8xf32>
    %855 = vector.broadcast %854 : vector<1x8xf32> to vector<16x8xf32>
    %856 = arith.addf %853, %855 : vector<16x8xf32>
    %857 = arith.truncf %842 : vector<12x8xf32> to vector<12x8xbf16>
    %858 = arith.truncf %849 : vector<16x8xf32> to vector<16x8xbf16>
    %cst_309 = arith.constant dense<0.000000e+00> : vector<12x16xf32>
    %859 = tpu.matmul %857, %858, %cst_309 {dimension_numbers = #tpu.dot_dimension_numbers<[1], [1], [0], [0], [0, 0, 1, 0], [], []>} : vector<12x8xbf16>, vector<16x8xbf16>, vector<12x16xf32> -> vector<12x16xf32>
    %cst_310 = arith.constant 0.353553385 : f32
    %860 = vector.broadcast %cst_310 : f32 to vector<12x16xf32>
    %861 = arith.mulf %859, %860 : vector<12x16xf32>
    %cst_311 = arith.constant dense<0xFF800000> : vector<12xf32>
    %862 = vector.multi_reduction <maximumf>, %861, %cst_311 [1] : vector<12x16xf32> to vector<12xf32>
    %863 = vector.shape_cast %862 : vector<12xf32> to vector<12x1xf32>
    %864 = vector.broadcast %863 : vector<12x1xf32> to vector<12x16xf32>
    %865 = arith.subf %861, %864 : vector<12x16xf32>
    %866 = math.exp %865 : vector<12x16xf32>
    %cst_312 = arith.constant dense<0.000000e+00> : vector<12xf32>
    %867 = vector.multi_reduction <add>, %866, %cst_312 [1] : vector<12x16xf32> to vector<12xf32>
    %868 = vector.shape_cast %867 : vector<12xf32> to vector<12x1xf32>
    %869 = tpu.reciprocal %868 {approx = true} : vector<12x1xf32> -> vector<12x1xf32>
    %870 = vector.broadcast %869 : vector<12x1xf32> to vector<12x16xf32>
    %871 = arith.mulf %866, %870 : vector<12x16xf32>
    %872 = arith.truncf %871 : vector<12x16xf32> to vector<12x16xbf16>
    %873 = arith.truncf %856 : vector<16x8xf32> to vector<16x8xbf16>
    %cst_313 = arith.constant dense<0.000000e+00> : vector<12x8xf32>
    %874 = tpu.matmul %872, %873, %cst_313 {dimension_numbers = #tpu.dot_dimension_numbers<[1], [0], [0], [1], [0, 0, 1, 1], [], []>} : vector<12x16xbf16>, vector<16x8xbf16>, vector<12x8xf32> -> vector<12x8xf32>
    %c2224 = arith.constant 2224 : index
    %c0_314 = arith.constant 0 : index
    %875 = vector.load %arg5[%c2224, %c0_314] : memref<2712x128xf32, #tpu.memory_space<vmem>>, vector<8x32xf32>
    %876 = arith.truncf %874 : vector<12x8xf32> to vector<12x8xbf16>
    %877 = arith.truncf %875 : vector<8x32xf32> to vector<8x32xbf16>
    %cst_315 = arith.constant dense<0.000000e+00> : vector<12x32xf32>
    %878 = tpu.matmul %876, %877, %cst_315 {dimension_numbers = #tpu.dot_dimension_numbers<[1], [0], [0], [1], [0, 0, 1, 1], [], []>} : vector<12x8xbf16>, vector<8x32xbf16>, vector<12x32xf32> -> vector<12x32xf32>
    %879 = arith.addf %835, %878 : vector<12x32xf32>
    %c2232 = arith.constant 2232 : index
    %c0_316 = arith.constant 0 : index
    %880 = vector.load %arg5[%c2232, %c0_316] : memref<2712x128xf32, #tpu.memory_space<vmem>>, vector<32x8xf32>
    %881 = arith.truncf %792 : vector<12x32xf32> to vector<12x32xbf16>
    %882 = arith.truncf %880 : vector<32x8xf32> to vector<32x8xbf16>
    %cst_317 = arith.constant dense<0.000000e+00> : vector<12x8xf32>
    %883 = tpu.matmul %881, %882, %cst_317 {dimension_numbers = #tpu.dot_dimension_numbers<[1], [0], [0], [1], [0, 0, 1, 1], [], []>} : vector<12x32xbf16>, vector<32x8xbf16>, vector<12x8xf32> -> vector<12x8xf32>
    %c2264 = arith.constant 2264 : index
    %c0_318 = arith.constant 0 : index
    %884 = vector.load %arg5[%c2264, %c0_318] : memref<2712x128xf32, #tpu.memory_space<vmem>>, vector<1x8xf32>
    %885 = vector.broadcast %884 : vector<1x8xf32> to vector<12x8xf32>
    %886 = arith.addf %883, %885 : vector<12x8xf32>
    %c2272 = arith.constant 2272 : index
    %c0_319 = arith.constant 0 : index
    %887 = vector.load %arg5[%c2272, %c0_319] : memref<2712x128xf32, #tpu.memory_space<vmem>>, vector<32x8xf32>
    %888 = arith.truncf %555 : vector<16x32xf32> to vector<16x32xbf16>
    %889 = arith.truncf %887 : vector<32x8xf32> to vector<32x8xbf16>
    %cst_320 = arith.constant dense<0.000000e+00> : vector<16x8xf32>
    %890 = tpu.matmul %888, %889, %cst_320 {dimension_numbers = #tpu.dot_dimension_numbers<[1], [0], [0], [1], [0, 0, 1, 1], [], []>} : vector<16x32xbf16>, vector<32x8xbf16>, vector<16x8xf32> -> vector<16x8xf32>
    %c2304 = arith.constant 2304 : index
    %c0_321 = arith.constant 0 : index
    %891 = vector.load %arg5[%c2304, %c0_321] : memref<2712x128xf32, #tpu.memory_space<vmem>>, vector<1x8xf32>
    %892 = vector.broadcast %891 : vector<1x8xf32> to vector<16x8xf32>
    %893 = arith.addf %890, %892 : vector<16x8xf32>
    %c2312 = arith.constant 2312 : index
    %c0_322 = arith.constant 0 : index
    %894 = vector.load %arg5[%c2312, %c0_322] : memref<2712x128xf32, #tpu.memory_space<vmem>>, vector<32x8xf32>
    %895 = arith.truncf %555 : vector<16x32xf32> to vector<16x32xbf16>
    %896 = arith.truncf %894 : vector<32x8xf32> to vector<32x8xbf16>
    %cst_323 = arith.constant dense<0.000000e+00> : vector<16x8xf32>
    %897 = tpu.matmul %895, %896, %cst_323 {dimension_numbers = #tpu.dot_dimension_numbers<[1], [0], [0], [1], [0, 0, 1, 1], [], []>} : vector<16x32xbf16>, vector<32x8xbf16>, vector<16x8xf32> -> vector<16x8xf32>
    %c2344 = arith.constant 2344 : index
    %c0_324 = arith.constant 0 : index
    %898 = vector.load %arg5[%c2344, %c0_324] : memref<2712x128xf32, #tpu.memory_space<vmem>>, vector<1x8xf32>
    %899 = vector.broadcast %898 : vector<1x8xf32> to vector<16x8xf32>
    %900 = arith.addf %897, %899 : vector<16x8xf32>
    %901 = arith.truncf %886 : vector<12x8xf32> to vector<12x8xbf16>
    %902 = arith.truncf %893 : vector<16x8xf32> to vector<16x8xbf16>
    %cst_325 = arith.constant dense<0.000000e+00> : vector<12x16xf32>
    %903 = tpu.matmul %901, %902, %cst_325 {dimension_numbers = #tpu.dot_dimension_numbers<[1], [1], [0], [0], [0, 0, 1, 0], [], []>} : vector<12x8xbf16>, vector<16x8xbf16>, vector<12x16xf32> -> vector<12x16xf32>
    %cst_326 = arith.constant 0.353553385 : f32
    %904 = vector.broadcast %cst_326 : f32 to vector<12x16xf32>
    %905 = arith.mulf %903, %904 : vector<12x16xf32>
    %cst_327 = arith.constant dense<0xFF800000> : vector<12xf32>
    %906 = vector.multi_reduction <maximumf>, %905, %cst_327 [1] : vector<12x16xf32> to vector<12xf32>
    %907 = vector.shape_cast %906 : vector<12xf32> to vector<12x1xf32>
    %908 = vector.broadcast %907 : vector<12x1xf32> to vector<12x16xf32>
    %909 = arith.subf %905, %908 : vector<12x16xf32>
    %910 = math.exp %909 : vector<12x16xf32>
    %cst_328 = arith.constant dense<0.000000e+00> : vector<12xf32>
    %911 = vector.multi_reduction <add>, %910, %cst_328 [1] : vector<12x16xf32> to vector<12xf32>
    %912 = vector.shape_cast %911 : vector<12xf32> to vector<12x1xf32>
    %913 = tpu.reciprocal %912 {approx = true} : vector<12x1xf32> -> vector<12x1xf32>
    %914 = vector.broadcast %913 : vector<12x1xf32> to vector<12x16xf32>
    %915 = arith.mulf %910, %914 : vector<12x16xf32>
    %916 = arith.truncf %915 : vector<12x16xf32> to vector<12x16xbf16>
    %917 = arith.truncf %900 : vector<16x8xf32> to vector<16x8xbf16>
    %cst_329 = arith.constant dense<0.000000e+00> : vector<12x8xf32>
    %918 = tpu.matmul %916, %917, %cst_329 {dimension_numbers = #tpu.dot_dimension_numbers<[1], [0], [0], [1], [0, 0, 1, 1], [], []>} : vector<12x16xbf16>, vector<16x8xbf16>, vector<12x8xf32> -> vector<12x8xf32>
    %c2352 = arith.constant 2352 : index
    %c0_330 = arith.constant 0 : index
    %919 = vector.load %arg5[%c2352, %c0_330] : memref<2712x128xf32, #tpu.memory_space<vmem>>, vector<8x32xf32>
    %920 = arith.truncf %918 : vector<12x8xf32> to vector<12x8xbf16>
    %921 = arith.truncf %919 : vector<8x32xf32> to vector<8x32xbf16>
    %cst_331 = arith.constant dense<0.000000e+00> : vector<12x32xf32>
    %922 = tpu.matmul %920, %921, %cst_331 {dimension_numbers = #tpu.dot_dimension_numbers<[1], [0], [0], [1], [0, 0, 1, 1], [], []>} : vector<12x8xbf16>, vector<8x32xbf16>, vector<12x32xf32> -> vector<12x32xf32>
    %923 = arith.addf %879, %922 : vector<12x32xf32>
    %c2360 = arith.constant 2360 : index
    %c0_332 = arith.constant 0 : index
    %924 = vector.load %arg5[%c2360, %c0_332] : memref<2712x128xf32, #tpu.memory_space<vmem>>, vector<32x8xf32>
    %925 = arith.truncf %792 : vector<12x32xf32> to vector<12x32xbf16>
    %926 = arith.truncf %924 : vector<32x8xf32> to vector<32x8xbf16>
    %cst_333 = arith.constant dense<0.000000e+00> : vector<12x8xf32>
    %927 = tpu.matmul %925, %926, %cst_333 {dimension_numbers = #tpu.dot_dimension_numbers<[1], [0], [0], [1], [0, 0, 1, 1], [], []>} : vector<12x32xbf16>, vector<32x8xbf16>, vector<12x8xf32> -> vector<12x8xf32>
    %c2392 = arith.constant 2392 : index
    %c0_334 = arith.constant 0 : index
    %928 = vector.load %arg5[%c2392, %c0_334] : memref<2712x128xf32, #tpu.memory_space<vmem>>, vector<1x8xf32>
    %929 = vector.broadcast %928 : vector<1x8xf32> to vector<12x8xf32>
    %930 = arith.addf %927, %929 : vector<12x8xf32>
    %c2400 = arith.constant 2400 : index
    %c0_335 = arith.constant 0 : index
    %931 = vector.load %arg5[%c2400, %c0_335] : memref<2712x128xf32, #tpu.memory_space<vmem>>, vector<32x8xf32>
    %932 = arith.truncf %555 : vector<16x32xf32> to vector<16x32xbf16>
    %933 = arith.truncf %931 : vector<32x8xf32> to vector<32x8xbf16>
    %cst_336 = arith.constant dense<0.000000e+00> : vector<16x8xf32>
    %934 = tpu.matmul %932, %933, %cst_336 {dimension_numbers = #tpu.dot_dimension_numbers<[1], [0], [0], [1], [0, 0, 1, 1], [], []>} : vector<16x32xbf16>, vector<32x8xbf16>, vector<16x8xf32> -> vector<16x8xf32>
    %c2432 = arith.constant 2432 : index
    %c0_337 = arith.constant 0 : index
    %935 = vector.load %arg5[%c2432, %c0_337] : memref<2712x128xf32, #tpu.memory_space<vmem>>, vector<1x8xf32>
    %936 = vector.broadcast %935 : vector<1x8xf32> to vector<16x8xf32>
    %937 = arith.addf %934, %936 : vector<16x8xf32>
    %c2440 = arith.constant 2440 : index
    %c0_338 = arith.constant 0 : index
    %938 = vector.load %arg5[%c2440, %c0_338] : memref<2712x128xf32, #tpu.memory_space<vmem>>, vector<32x8xf32>
    %939 = arith.truncf %555 : vector<16x32xf32> to vector<16x32xbf16>
    %940 = arith.truncf %938 : vector<32x8xf32> to vector<32x8xbf16>
    %cst_339 = arith.constant dense<0.000000e+00> : vector<16x8xf32>
    %941 = tpu.matmul %939, %940, %cst_339 {dimension_numbers = #tpu.dot_dimension_numbers<[1], [0], [0], [1], [0, 0, 1, 1], [], []>} : vector<16x32xbf16>, vector<32x8xbf16>, vector<16x8xf32> -> vector<16x8xf32>
    %c2472 = arith.constant 2472 : index
    %c0_340 = arith.constant 0 : index
    %942 = vector.load %arg5[%c2472, %c0_340] : memref<2712x128xf32, #tpu.memory_space<vmem>>, vector<1x8xf32>
    %943 = vector.broadcast %942 : vector<1x8xf32> to vector<16x8xf32>
    %944 = arith.addf %941, %943 : vector<16x8xf32>
    %945 = arith.truncf %930 : vector<12x8xf32> to vector<12x8xbf16>
    %946 = arith.truncf %937 : vector<16x8xf32> to vector<16x8xbf16>
    %cst_341 = arith.constant dense<0.000000e+00> : vector<12x16xf32>
    %947 = tpu.matmul %945, %946, %cst_341 {dimension_numbers = #tpu.dot_dimension_numbers<[1], [1], [0], [0], [0, 0, 1, 0], [], []>} : vector<12x8xbf16>, vector<16x8xbf16>, vector<12x16xf32> -> vector<12x16xf32>
    %cst_342 = arith.constant 0.353553385 : f32
    %948 = vector.broadcast %cst_342 : f32 to vector<12x16xf32>
    %949 = arith.mulf %947, %948 : vector<12x16xf32>
    %cst_343 = arith.constant dense<0xFF800000> : vector<12xf32>
    %950 = vector.multi_reduction <maximumf>, %949, %cst_343 [1] : vector<12x16xf32> to vector<12xf32>
    %951 = vector.shape_cast %950 : vector<12xf32> to vector<12x1xf32>
    %952 = vector.broadcast %951 : vector<12x1xf32> to vector<12x16xf32>
    %953 = arith.subf %949, %952 : vector<12x16xf32>
    %954 = math.exp %953 : vector<12x16xf32>
    %cst_344 = arith.constant dense<0.000000e+00> : vector<12xf32>
    %955 = vector.multi_reduction <add>, %954, %cst_344 [1] : vector<12x16xf32> to vector<12xf32>
    %956 = vector.shape_cast %955 : vector<12xf32> to vector<12x1xf32>
    %957 = tpu.reciprocal %956 {approx = true} : vector<12x1xf32> -> vector<12x1xf32>
    %958 = vector.broadcast %957 : vector<12x1xf32> to vector<12x16xf32>
    %959 = arith.mulf %954, %958 : vector<12x16xf32>
    %960 = arith.truncf %959 : vector<12x16xf32> to vector<12x16xbf16>
    %961 = arith.truncf %944 : vector<16x8xf32> to vector<16x8xbf16>
    %cst_345 = arith.constant dense<0.000000e+00> : vector<12x8xf32>
    %962 = tpu.matmul %960, %961, %cst_345 {dimension_numbers = #tpu.dot_dimension_numbers<[1], [0], [0], [1], [0, 0, 1, 1], [], []>} : vector<12x16xbf16>, vector<16x8xbf16>, vector<12x8xf32> -> vector<12x8xf32>
    %c2480 = arith.constant 2480 : index
    %c0_346 = arith.constant 0 : index
    %963 = vector.load %arg5[%c2480, %c0_346] : memref<2712x128xf32, #tpu.memory_space<vmem>>, vector<8x32xf32>
    %964 = arith.truncf %962 : vector<12x8xf32> to vector<12x8xbf16>
    %965 = arith.truncf %963 : vector<8x32xf32> to vector<8x32xbf16>
    %cst_347 = arith.constant dense<0.000000e+00> : vector<12x32xf32>
    %966 = tpu.matmul %964, %965, %cst_347 {dimension_numbers = #tpu.dot_dimension_numbers<[1], [0], [0], [1], [0, 0, 1, 1], [], []>} : vector<12x8xbf16>, vector<8x32xbf16>, vector<12x32xf32> -> vector<12x32xf32>
    %967 = arith.addf %923, %966 : vector<12x32xf32>
    %c2488 = arith.constant 2488 : index
    %c0_348 = arith.constant 0 : index
    %968 = vector.load %arg5[%c2488, %c0_348] : memref<2712x128xf32, #tpu.memory_space<vmem>>, vector<1x32xf32>
    %969 = vector.broadcast %968 : vector<1x32xf32> to vector<12x32xf32>
    %970 = arith.addf %967, %969 : vector<12x32xf32>
    %971 = arith.addf %792, %970 : vector<12x32xf32>
    %cst_349 = arith.constant dense<0.000000e+00> : vector<12xf32>
    %972 = vector.multi_reduction <add>, %971, %cst_349 [1] : vector<12x32xf32> to vector<12xf32>
    %973 = vector.shape_cast %972 : vector<12xf32> to vector<12x1xf32>
    %cst_350 = arith.constant 3.200000e+01 : f32
    %974 = vector.broadcast %cst_350 : f32 to vector<12x1xf32>
    %975 = arith.divf %973, %974 : vector<12x1xf32>
    %976 = vector.broadcast %975 : vector<12x1xf32> to vector<12x32xf32>
    %977 = arith.subf %971, %976 : vector<12x32xf32>
    %978 = arith.mulf %977, %977 : vector<12x32xf32>
    %cst_351 = arith.constant dense<0.000000e+00> : vector<12xf32>
    %979 = vector.multi_reduction <add>, %978, %cst_351 [1] : vector<12x32xf32> to vector<12xf32>
    %980 = vector.shape_cast %979 : vector<12xf32> to vector<12x1xf32>
    %cst_352 = arith.constant 3.200000e+01 : f32
    %981 = vector.broadcast %cst_352 : f32 to vector<12x1xf32>
    %982 = arith.divf %980, %981 : vector<12x1xf32>
    %983 = vector.broadcast %975 : vector<12x1xf32> to vector<12x32xf32>
    %984 = arith.subf %971, %983 : vector<12x32xf32>
    %cst_353 = arith.constant 9.99999974E-6 : f32
    %985 = vector.broadcast %cst_353 : f32 to vector<12x1xf32>
    %986 = arith.addf %982, %985 : vector<12x1xf32>
    %987 = math.rsqrt %986 : vector<12x1xf32>
    %988 = vector.broadcast %987 : vector<12x1xf32> to vector<12x32xf32>
    %989 = arith.mulf %984, %988 : vector<12x32xf32>
    %c2624 = arith.constant 2624 : index
    %c0_354 = arith.constant 0 : index
    %990 = vector.load %arg5[%c2624, %c0_354] : memref<2712x128xf32, #tpu.memory_space<vmem>>, vector<1x32xf32>
    %991 = vector.broadcast %990 : vector<1x32xf32> to vector<12x32xf32>
    %992 = arith.mulf %989, %991 : vector<12x32xf32>
    %c2632 = arith.constant 2632 : index
    %c0_355 = arith.constant 0 : index
    %993 = vector.load %arg5[%c2632, %c0_355] : memref<2712x128xf32, #tpu.memory_space<vmem>>, vector<1x32xf32>
    %994 = vector.broadcast %993 : vector<1x32xf32> to vector<12x32xf32>
    %995 = arith.addf %992, %994 : vector<12x32xf32>
    %c2496 = arith.constant 2496 : index
    %c0_356 = arith.constant 0 : index
    %996 = vector.load %arg5[%c2496, %c0_356] : memref<2712x128xf32, #tpu.memory_space<vmem>>, vector<32x64xf32>
    %997 = arith.truncf %995 : vector<12x32xf32> to vector<12x32xbf16>
    %998 = arith.truncf %996 : vector<32x64xf32> to vector<32x64xbf16>
    %cst_357 = arith.constant dense<0.000000e+00> : vector<12x64xf32>
    %999 = tpu.matmul %997, %998, %cst_357 {dimension_numbers = #tpu.dot_dimension_numbers<[1], [0], [0], [1], [0, 0, 1, 1], [], []>} : vector<12x32xbf16>, vector<32x64xbf16>, vector<12x64xf32> -> vector<12x64xf32>
    %c2528 = arith.constant 2528 : index
    %c0_358 = arith.constant 0 : index
    %1000 = vector.load %arg5[%c2528, %c0_358] : memref<2712x128xf32, #tpu.memory_space<vmem>>, vector<1x64xf32>
    %1001 = vector.broadcast %1000 : vector<1x64xf32> to vector<12x64xf32>
    %1002 = arith.addf %999, %1001 : vector<12x64xf32>
    %cst_359 = arith.constant 0.000000e+00 : f32
    %1003 = vector.broadcast %cst_359 : f32 to vector<12x64xf32>
    %1004 = arith.maximumf %1002, %1003 : vector<12x64xf32>
    %c2536 = arith.constant 2536 : index
    %c0_360 = arith.constant 0 : index
    %1005 = vector.load %arg5[%c2536, %c0_360] : memref<2712x128xf32, #tpu.memory_space<vmem>>, vector<64x32xf32>
    %1006 = arith.truncf %1004 : vector<12x64xf32> to vector<12x64xbf16>
    %1007 = arith.truncf %1005 : vector<64x32xf32> to vector<64x32xbf16>
    %cst_361 = arith.constant dense<0.000000e+00> : vector<12x32xf32>
    %1008 = tpu.matmul %1006, %1007, %cst_361 {dimension_numbers = #tpu.dot_dimension_numbers<[1], [0], [0], [1], [0, 0, 1, 1], [], []>} : vector<12x64xbf16>, vector<64x32xbf16>, vector<12x32xf32> -> vector<12x32xf32>
    %c2600 = arith.constant 2600 : index
    %c0_362 = arith.constant 0 : index
    %1009 = vector.load %arg5[%c2600, %c0_362] : memref<2712x128xf32, #tpu.memory_space<vmem>>, vector<1x32xf32>
    %1010 = vector.broadcast %1009 : vector<1x32xf32> to vector<12x32xf32>
    %1011 = arith.addf %1008, %1010 : vector<12x32xf32>
    %1012 = arith.addf %995, %1011 : vector<12x32xf32>
    %cst_363 = arith.constant dense<0.000000e+00> : vector<12xf32>
    %1013 = vector.multi_reduction <add>, %1012, %cst_363 [1] : vector<12x32xf32> to vector<12xf32>
    %1014 = vector.shape_cast %1013 : vector<12xf32> to vector<12x1xf32>
    %cst_364 = arith.constant 3.200000e+01 : f32
    %1015 = vector.broadcast %cst_364 : f32 to vector<12x1xf32>
    %1016 = arith.divf %1014, %1015 : vector<12x1xf32>
    %1017 = vector.broadcast %1016 : vector<12x1xf32> to vector<12x32xf32>
    %1018 = arith.subf %1012, %1017 : vector<12x32xf32>
    %1019 = arith.mulf %1018, %1018 : vector<12x32xf32>
    %cst_365 = arith.constant dense<0.000000e+00> : vector<12xf32>
    %1020 = vector.multi_reduction <add>, %1019, %cst_365 [1] : vector<12x32xf32> to vector<12xf32>
    %1021 = vector.shape_cast %1020 : vector<12xf32> to vector<12x1xf32>
    %cst_366 = arith.constant 3.200000e+01 : f32
    %1022 = vector.broadcast %cst_366 : f32 to vector<12x1xf32>
    %1023 = arith.divf %1021, %1022 : vector<12x1xf32>
    %1024 = vector.broadcast %1016 : vector<12x1xf32> to vector<12x32xf32>
    %1025 = arith.subf %1012, %1024 : vector<12x32xf32>
    %cst_367 = arith.constant 9.99999974E-6 : f32
    %1026 = vector.broadcast %cst_367 : f32 to vector<12x1xf32>
    %1027 = arith.addf %1023, %1026 : vector<12x1xf32>
    %1028 = math.rsqrt %1027 : vector<12x1xf32>
    %1029 = vector.broadcast %1028 : vector<12x1xf32> to vector<12x32xf32>
    %1030 = arith.mulf %1025, %1029 : vector<12x32xf32>
    %c2640 = arith.constant 2640 : index
    %c0_368 = arith.constant 0 : index
    %1031 = vector.load %arg5[%c2640, %c0_368] : memref<2712x128xf32, #tpu.memory_space<vmem>>, vector<1x32xf32>
    %1032 = vector.broadcast %1031 : vector<1x32xf32> to vector<12x32xf32>
    %1033 = arith.mulf %1030, %1032 : vector<12x32xf32>
    %c2648 = arith.constant 2648 : index
    %c0_369 = arith.constant 0 : index
    %1034 = vector.load %arg5[%c2648, %c0_369] : memref<2712x128xf32, #tpu.memory_space<vmem>>, vector<1x32xf32>
    %1035 = vector.broadcast %1034 : vector<1x32xf32> to vector<12x32xf32>
    %1036 = arith.addf %1033, %1035 : vector<12x32xf32>
    %cst_370 = arith.constant dense<0.000000e+00> : vector<12xf32>
    %1037 = vector.multi_reduction <add>, %1036, %cst_370 [1] : vector<12x32xf32> to vector<12xf32>
    %1038 = vector.shape_cast %1037 : vector<12xf32> to vector<12x1xf32>
    %cst_371 = arith.constant 3.200000e+01 : f32
    %1039 = vector.broadcast %cst_371 : f32 to vector<12x1xf32>
    %1040 = arith.divf %1038, %1039 : vector<12x1xf32>
    %1041 = vector.broadcast %1040 : vector<12x1xf32> to vector<12x32xf32>
    %1042 = arith.subf %1036, %1041 : vector<12x32xf32>
    %1043 = arith.mulf %1042, %1042 : vector<12x32xf32>
    %cst_372 = arith.constant dense<0.000000e+00> : vector<12xf32>
    %1044 = vector.multi_reduction <add>, %1043, %cst_372 [1] : vector<12x32xf32> to vector<12xf32>
    %1045 = vector.shape_cast %1044 : vector<12xf32> to vector<12x1xf32>
    %cst_373 = arith.constant 3.200000e+01 : f32
    %1046 = vector.broadcast %cst_373 : f32 to vector<12x1xf32>
    %1047 = arith.divf %1045, %1046 : vector<12x1xf32>
    %1048 = vector.broadcast %1040 : vector<12x1xf32> to vector<12x32xf32>
    %1049 = arith.subf %1036, %1048 : vector<12x32xf32>
    %cst_374 = arith.constant 9.99999974E-6 : f32
    %1050 = vector.broadcast %cst_374 : f32 to vector<12x1xf32>
    %1051 = arith.addf %1047, %1050 : vector<12x1xf32>
    %1052 = math.rsqrt %1051 : vector<12x1xf32>
    %1053 = vector.broadcast %1052 : vector<12x1xf32> to vector<12x32xf32>
    %1054 = arith.mulf %1049, %1053 : vector<12x32xf32>
    %c2656 = arith.constant 2656 : index
    %c0_375 = arith.constant 0 : index
    %1055 = vector.load %arg5[%c2656, %c0_375] : memref<2712x128xf32, #tpu.memory_space<vmem>>, vector<1x32xf32>
    %1056 = vector.broadcast %1055 : vector<1x32xf32> to vector<12x32xf32>
    %1057 = arith.mulf %1054, %1056 : vector<12x32xf32>
    %c2664 = arith.constant 2664 : index
    %c0_376 = arith.constant 0 : index
    %1058 = vector.load %arg5[%c2664, %c0_376] : memref<2712x128xf32, #tpu.memory_space<vmem>>, vector<1x32xf32>
    %1059 = vector.broadcast %1058 : vector<1x32xf32> to vector<12x32xf32>
    %1060 = arith.addf %1057, %1059 : vector<12x32xf32>
    %c2672 = arith.constant 2672 : index
    %c0_377 = arith.constant 0 : index
    %1061 = vector.load %arg5[%c2672, %c0_377] : memref<2712x128xf32, #tpu.memory_space<vmem>>, vector<32x4xf32>
    %1062 = arith.truncf %1060 : vector<12x32xf32> to vector<12x32xbf16>
    %1063 = arith.truncf %1061 : vector<32x4xf32> to vector<32x4xbf16>
    %cst_378 = arith.constant dense<0.000000e+00> : vector<12x4xf32>
    %1064 = tpu.matmul %1062, %1063, %cst_378 {dimension_numbers = #tpu.dot_dimension_numbers<[1], [0], [0], [1], [0, 0, 1, 1], [], []>} : vector<12x32xbf16>, vector<32x4xbf16>, vector<12x4xf32> -> vector<12x4xf32>
    %c2704 = arith.constant 2704 : index
    %c0_379 = arith.constant 0 : index
    %1065 = vector.load %arg5[%c2704, %c0_379] : memref<2712x128xf32, #tpu.memory_space<vmem>>, vector<1x4xf32>
    %1066 = vector.broadcast %1065 : vector<1x4xf32> to vector<12x4xf32>
    %1067 = arith.addf %1064, %1066 : vector<12x4xf32>
    %1068 = vector.extract_strided_slice %1067 {offsets = [4, 0], sizes = [8, 4], strides = [1, 1]} : vector<12x4xf32> to vector<8x4xf32>
    %c0_380 = arith.constant 0 : index
    %c0_381 = arith.constant 0 : index
    %c0_382 = arith.constant 0 : index
    %1069 = vector.load %arg6[%c0_380, %c0_381, %c0_382] : memref<1x8x4xf32, #tpu.memory_space<vmem>>, vector<1x8x4xf32>
    %1070 = vector.shape_cast %1069 : vector<1x8x4xf32> to vector<8x4xf32>
    %1071 = vector.shape_cast %1068 : vector<8x4xf32> to vector<1x8x4xf32>
    tpu.vector_store %arg6[%c0_380, %c0_381, %c0_382], %1071 {strides = array<i32>} : memref<1x8x4xf32, #tpu.memory_space<vmem>>, vector<1x8x4xf32>,
    return
  }
  func.func @transform_0(%arg0: i32) -> (i32, i32, i32) {
    %c0_i32 = arith.constant 0 : i32
    %c0_i32_0 = arith.constant 0 : i32
    %c0_i32_1 = arith.constant 0 : i32
    return %arg0, %c0_i32, %c0_i32_0 : i32, i32, i32
  }
  func.func @transform_1(%arg0: i32) -> (i32, i32, i32) {
    %c0_i32 = arith.constant 0 : i32
    %c0_i32_0 = arith.constant 0 : i32
    %c0_i32_1 = arith.constant 0 : i32
    return %arg0, %c0_i32, %c0_i32_0 : i32, i32, i32
  }
  func.func @transform_2(%arg0: i32) -> (i32, i32, i32) {
    %c0_i32 = arith.constant 0 : i32
    %c0_i32_0 = arith.constant 0 : i32
    %c0_i32_1 = arith.constant 0 : i32
    return %arg0, %c0_i32, %c0_i32_0 : i32, i32, i32
  }
  func.func @transform_3(%arg0: i32) -> (i32, i32, i32) {
    %c0_i32 = arith.constant 0 : i32
    %c0_i32_0 = arith.constant 0 : i32
    %c0_i32_1 = arith.constant 0 : i32
    return %arg0, %c0_i32, %c0_i32_0 : i32, i32, i32
  }
  func.func @transform_4(%arg0: i32) -> (i32, i32) {
    %c0_i32 = arith.constant 0 : i32
    %c0_i32_0 = arith.constant 0 : i32
    %c0_i32_1 = arith.constant 0 : i32
    return %c0_i32, %c0_i32_0 : i32, i32
  }
  func.func @transform_5(%arg0: i32) -> (i32, i32, i32) {
    %c0_i32 = arith.constant 0 : i32
    %c0_i32_0 = arith.constant 0 : i32
    %c0_i32_1 = arith.constant 0 : i32
    return %arg0, %c0_i32, %c0_i32_0 : i32, i32, i32
  }
}

</mosaic_0001>

<llo_original>
// kernel: informer_forward.1
$region0: #{informer_forward.1}
  #allocation0 [shape = 'u32[]', space=smem, size = 0x4, offset = 0x4, fixed_abs, tag = 'smem constant byte address 0x4 - core index']
  #allocation1 [shape = 'u32[144,128]{1,0:T(1,128)}', space=vmem, size = 0x12000, scoped, tag = 'internal scratch']
  %s0 = inlined_call_operand.vmem [shape: f32[2,16,4], index: 0, kind: input, shape index: {}]
  %s1 = inlined_call_operand.vmem [shape: f32[2,16,4], index: 1, kind: input, shape index: {}]
  %s2 = inlined_call_operand.vmem [shape: f32[2,12,4], index: 2, kind: input, shape index: {}]
  %s3 = inlined_call_operand.vmem [shape: f32[2,12,4], index: 3, kind: input, shape index: {}]
  %s4 = inlined_call_operand.vmem [shape: f32[2712,128], index: 4, kind: input, shape index: {}]
  %s5 = inlined_call_operand.vmem [shape: f32[2,8,4], index: 5, kind: output, shape index: {}]
  %s6 = sld [smem:[#allocation0]]
  $region53: #{informer_forward.1} parent=0
    _
  %s8 = ssub.s32 1, %s6
  %s9 = scalar_select 0, %s8, %s6
  loop: start=0, step=1, limit=4
  $region2: #{informer_forward.1} parent=0 // loop_pre_header
    _
  $region3: #{informer_forward.1} parent=0 // loop_header
    %s11 = sphi 0, %s15
    %p12 = scmp.ge.s32.totalorder %s11, 4
    %s21 = sphi 0, %s23
    %s24 = sphi 0, %s21
    %s25 = sphi 0, %s24
    %s41 = sphi 0, %s25
    %s47 = sphi 0, %s49
    %s50 = sphi 0, %s47
    %s51 = sphi 0, %s50
    %s67 = sphi 0, %s51
    %s73 = sphi 0, %s75
    %s76 = sphi 0, %s73
    %s77 = sphi 0, %s76
    %s93 = sphi 0, %s77
    %s99 = sphi 0, %s101
    %s102 = sphi 0, %s99
    %s103 = sphi 0, %s102
    %s119 = sphi 0, %s103
    %s123 = sphi 0, %s123
    %s125 = sphi 0, %s123
    %s126 = sphi 0, %s125
    %s140 = sphi 0, %s126
    %s146 = sphi 0, %s148
    %s149 = sphi 0, %s146
    %s150 = sphi 0, %s149
    %s166 = sphi 0, %s150
  $region4: #{informer_forward.1} parent=0 // loop_header_branch
    %14 = sbr.rel (%p12) target = $region8
  $region5: #{informer_forward.1} parent=0 // loop_body
    %s16 = ssub.s32 %s11, 1
    %s17 = ssub.s32 %s11, 2
    %s18 = sadd.s32 %s11, 1
    %s19 = ssub.s32 %s11, %s18
    %p20 = scmp.eq.s32.totalorder %s19, 0
    %s22 = sadd.s32 %s21, 1
    %s23 = scalar_select %p20, %s21, %s22
    %p26 = pneg %p20
    %p27 = scmp.eq.s32.totalorder %s11, 1
    %p28 = por %p26, %p27
    %p29 = scmp.ne.s32.totalorder %s21, %s24
    %p30 = scmp.eq.s32.totalorder %s11, 0
    %p31 = por %p29, %p30
    %p32 = scmp.ne.s32.totalorder %s21, %s24
    %p33 = scmp.eq.s32.totalorder %s16, 1
    %p34 = por %p32, %p33
    %p35 = scmp.ne.s32.totalorder %s24, %s25
    %p36 = scmp.eq.s32.totalorder %s16, 0
    %p37 = por %p35, %p36
    %p38 = scmp.ne.s32.totalorder %s24, %s25
    %p39 = scmp.eq.s32.totalorder %s17, 1
    %p40 = por %p38, %p39
    %p42 = scmp.ne.s32.totalorder %s25, %s41
    %p43 = scmp.eq.s32.totalorder %s17, 0
    %p44 = por %p42, %p43
    %s45 = ssub.s32 %s11, %s18
    %p46 = scmp.eq.s32.totalorder %s45, 0
    %s48 = sadd.s32 %s47, 1
    %s49 = scalar_select %p46, %s47, %s48
    %p52 = pneg %p46
    %p53 = scmp.eq.s32.totalorder %s11, 1
    %p54 = por %p52, %p53
    %p55 = scmp.ne.s32.totalorder %s47, %s50
    %p56 = scmp.eq.s32.totalorder %s11, 0
    %p57 = por %p55, %p56
    %p58 = scmp.ne.s32.totalorder %s47, %s50
    %p59 = scmp.eq.s32.totalorder %s16, 1
    %p60 = por %p58, %p59
    %p61 = scmp.ne.s32.totalorder %s50, %s51
    %p62 = scmp.eq.s32.totalorder %s16, 0
    %p63 = por %p61, %p62
    %p64 = scmp.ne.s32.totalorder %s50, %s51
    %p65 = scmp.eq.s32.totalorder %s17, 1
    %p66 = por %p64, %p65
    %p68 = scmp.ne.s32.totalorder %s51, %s67
    %p69 = scmp.eq.s32.totalorder %s17, 0
    %p70 = por %p68, %p69
    %s71 = ssub.s32 %s11, %s18
    %p72 = scmp.eq.s32.totalorder %s71, 0
    %s74 = sadd.s32 %s73, 1
    %s75 = scalar_select %p72, %s73, %s74
    %p78 = pneg %p72
    %p79 = scmp.eq.s32.totalorder %s11, 1
    %p80 = por %p78, %p79
    %p81 = scmp.ne.s32.totalorder %s73, %s76
    %p82 = scmp.eq.s32.totalorder %s11, 0
    %p83 = por %p81, %p82
    %p84 = scmp.ne.s32.totalorder %s73, %s76
    %p85 = scmp.eq.s32.totalorder %s16, 1
    %p86 = por %p84, %p85
    %p87 = scmp.ne.s32.totalorder %s76, %s77
    %p88 = scmp.eq.s32.totalorder %s16, 0
    %p89 = por %p87, %p88
    %p90 = scmp.ne.s32.totalorder %s76, %s77
    %p91 = scmp.eq.s32.totalorder %s17, 1
    %p92 = por %p90, %p91
    %p94 = scmp.ne.s32.totalorder %s77, %s93
    %p95 = scmp.eq.s32.totalorder %s17, 0
    %p96 = por %p94, %p95
    %s97 = ssub.s32 %s11, %s18
    %p98 = scmp.eq.s32.totalorder %s97, 0
    %s100 = sadd.s32 %s99, 1
    %s101 = scalar_select %p98, %s99, %s100
    %p104 = pneg %p98
    %p105 = scmp.eq.s32.totalorder %s11, 1
    %p106 = por %p104, %p105
    %p107 = scmp.ne.s32.totalorder %s99, %s102
    %p108 = scmp.eq.s32.totalorder %s11, 0
    %p109 = por %p107, %p108
    %p110 = scmp.ne.s32.totalorder %s99, %s102
    %p111 = scmp.eq.s32.totalorder %s16, 1
    %p112 = por %p110, %p111
    %p113 = scmp.ne.s32.totalorder %s102, %s103
    %p114 = scmp.eq.s32.totalorder %s16, 0
    %p115 = por %p113, %p114
    %p116 = scmp.ne.s32.totalorder %s102, %s103
    %p117 = scmp.eq.s32.totalorder %s17, 1
    %p118 = por %p116, %p117
    %p120 = scmp.ne.s32.totalorder %s103, %s119
    %p121 = scmp.eq.s32.totalorder %s17, 0
    %p122 = por %p120, %p121
    %s124 = sadd.s32 %s123, 1
    %p127 = scmp.eq.s32.totalorder %s11, 1
    %p128 = scmp.ne.s32.totalorder %s123, %s125
    %p129 = scmp.eq.s32.totalorder %s11, 0
    %p130 = por %p128, %p129
    %p131 = scmp.ne.s32.totalorder %s123, %s125
    %p132 = scmp.eq.s32.totalorder %s16, 1
    %p133 = por %p131, %p132
    %p134 = scmp.ne.s32.totalorder %s125, %s126
    %p135 = scmp.eq.s32.totalorder %s16, 0
    %p136 = por %p134, %p135
    %p137 = scmp.ne.s32.totalorder %s125, %s126
    %p138 = scmp.eq.s32.totalorder %s17, 1
    %p139 = por %p137, %p138
    %p141 = scmp.ne.s32.totalorder %s126, %s140
    %p142 = scmp.eq.s32.totalorder %s17, 0
    %p143 = por %p141, %p142
    %s144 = ssub.s32 %s11, %s18
    %p145 = scmp.eq.s32.totalorder %s144, 0
    %s147 = sadd.s32 %s146, 1
    %s148 = scalar_select %p145, %s146, %s147
    %p151 = pneg %p145
    %p152 = scmp.eq.s32.totalorder %s11, 1
    %p153 = por %p151, %p152
    %p154 = scmp.ne.s32.totalorder %s146, %s149
    %p155 = scmp.eq.s32.totalorder %s11, 0
    %p156 = por %p154, %p155
    %p157 = scmp.ne.s32.totalorder %s146, %s149
    %p158 = scmp.eq.s32.totalorder %s16, 1
    %p159 = por %p157, %p158
    %p160 = scmp.ne.s32.totalorder %s149, %s150
    %p161 = scmp.eq.s32.totalorder %s16, 0
    %p162 = por %p160, %p161
    %p163 = scmp.ne.s32.totalorder %s149, %s150
    %p164 = scmp.eq.s32.totalorder %s17, 1
    %p165 = por %p163, %p164
    %p167 = scmp.ne.s32.totalorder %s150, %s166
    %p168 = scmp.eq.s32.totalorder %s17, 0
    %p169 = por %p167, %p168
    %p170 = scmp.le.s32.totalorder 1, %s11
    %p171 = scmp.lt.s32.totalorder %s11, 3
    %p172 = pnand %p170, %p171
    %p173 = pneg %p172
    // Predicated region
    $region9: #{informer_forward.1} parent=5 // pred_check
      _
    $region10: #{informer_forward.1} parent=5 // pred_check_branch
      %175 = sbr.rel (%p172) target = $region12
    $region11: #{informer_forward.1} parent=5 // pred_region
      %s176 = ssub.s32 %s11, 1
      // Predicated region
      $region13: #{informer_forward.1} parent=11 // pred_check
        %p177 = pneg %p136
      $region14: #{informer_forward.1} parent=11 // pred_check_branch
        %179 = sbr.rel (%p177) target = $region16
      $region15: #{informer_forward.1} parent=11 // pred_region
        _
      $region16: #{informer_forward.1} parent=11 // pred_fallthru
        _
    $region12: #{informer_forward.1} parent=5 // pred_fallthru
      _
    %p180 = scmp.lt.s32.totalorder %s11, 2
    // Predicated region
    $region17: #{informer_forward.1} parent=5 // pred_check
      %p181 = pneg %p180
    $region18: #{informer_forward.1} parent=5 // pred_check_branch
      %183 = sbr.rel (%p181) target = $region20
    $region19: #{informer_forward.1} parent=5 // pred_region
      // Predicated region
      $region21: #{informer_forward.1} parent=19 // pred_check
        %p184 = pneg %p31
      $region22: #{informer_forward.1} parent=19 // pred_check_branch
        %186 = sbr.rel (%p184) target = $region24
      $region23: #{informer_forward.1} parent=19 // pred_region
        %p187 = scmp.lt.s32.totalorder %s11, 1
        %s188 = scalar_select %p187, %s11, 1
        %s189 = smul.addr %s188, 2
        %s190 = smul.addr %s189, 8
        %s191 = scalar_lea.vmem %s0, %s190
      $region24: #{informer_forward.1} parent=19 // pred_fallthru
        _
      // Predicated region
      $region25: #{informer_forward.1} parent=19 // pred_check
        %p192 = pneg %p57
      $region26: #{informer_forward.1} parent=19 // pred_check_branch
        %194 = sbr.rel (%p192) target = $region28
      $region27: #{informer_forward.1} parent=19 // pred_region
        %p195 = scmp.lt.s32.totalorder %s11, 1
        %s196 = scalar_select %p195, %s11, 1
        %s197 = smul.addr %s196, 2
        %s198 = smul.addr %s197, 8
        %s199 = scalar_lea.vmem %s1, %s198
      $region28: #{informer_forward.1} parent=19 // pred_fallthru
        _
      // Predicated region
      $region29: #{informer_forward.1} parent=19 // pred_check
        %p200 = pneg %p83
      $region30: #{informer_forward.1} parent=19 // pred_check_branch
        %202 = sbr.rel (%p200) target = $region32
      $region31: #{informer_forward.1} parent=19 // pred_region
        %p203 = scmp.lt.s32.totalorder %s11, 1
        %s204 = scalar_select %p203, %s11, 1
        %s205 = smul.addr %s204, 2
        %s206 = smul.addr %s205, 8
        %s207 = scalar_lea.vmem %s2, %s206
      $region32: #{informer_forward.1} parent=19 // pred_fallthru
        _
      // Predicated region
      $region33: #{informer_forward.1} parent=19 // pred_check
        %p208 = pneg %p109
      $region34: #{informer_forward.1} parent=19 // pred_check_branch
        %210 = sbr.rel (%p208) target = $region36
      $region35: #{informer_forward.1} parent=19 // pred_region
        %p211 = scmp.lt.s32.totalorder %s11, 1
        %s212 = scalar_select %p211, %s11, 1
        %s213 = smul.addr %s212, 2
        %s214 = smul.addr %s213, 8
        %s215 = scalar_lea.vmem %s3, %s214
      $region36: #{informer_forward.1} parent=19 // pred_fallthru
        _
    $region20: #{informer_forward.1} parent=5 // pred_fallthru
      _
    %p216 = scmp.le.s32.totalorder 1, %s11
    %p217 = scmp.lt.s32.totalorder %s11, 3
    %p218 = pnand %p216, %p217
    %p219 = pneg %p218
    // Predicated region
    $region37: #{informer_forward.1} parent=5 // pred_check
      _
    $region38: #{informer_forward.1} parent=5 // pred_check_branch
      %221 = sbr.rel (%p218) target = $region40
    $region39: #{informer_forward.1} parent=5 // pred_region
      %s222 = ssub.s32 %s11, 1
      %p223 = scmp.lt.s32.totalorder %s16, 1
      %s224 = scalar_select %p223, %s16, 1
      %s225 = smul.addr %s224, 2
      %s226 = smul.addr %s225, 8
      %s227 = scalar_lea.vmem %s0, %s226
      %p228 = pneg %p37
      %p229 = pneg %p34
      %p230 = scmp.lt.s32.totalorder %s16, 1
      %s231 = scalar_select %p230, %s16, 1
      %s232 = smul.addr %s231, 2
      %s233 = smul.addr %s232, 8
      %s234 = scalar_lea.vmem %s1, %s233
      %p235 = pneg %p63
      %p236 = pneg %p60
      %p237 = scmp.lt.s32.totalorder %s16, 1
      %s238 = scalar_select %p237, %s16, 1
      %s239 = smul.addr %s238, 2
      %s240 = smul.addr %s239, 8
      %s241 = scalar_lea.vmem %s2, %s240
      %p242 = pneg %p89
      %p243 = pneg %p86
      %p244 = scmp.lt.s32.totalorder %s16, 1
      %s245 = scalar_select %p244, %s16, 1
      %s246 = smul.addr %s245, 2
      %s247 = smul.addr %s246, 8
      %s248 = scalar_lea.vmem %s3, %s247
      %p249 = pneg %p115
      %p250 = pneg %p112
      %p251 = pneg %p136
      %p252 = pneg %p133
      %p253 = pneg %p162
      %p254 = pneg %p159
      %p255 = scmp.lt.s32.totalorder %s16, 1
      %s256 = scalar_select %p255, %s16, 1
      %s257 = smul.addr %s256, 8
      %s258 = scalar_lea.vmem %s5, %s257
      %p259 = scmp.lt.s32.totalorder %s16, 1
      %s260 = scalar_select %p259, %s16, 1
      %s261 = smul.addr %s260, 2
      %s262 = smul.addr %s261, 8
      %s263 = scalar_lea.vmem %s0, %s262
      %p264 = scmp.lt.s32.totalorder %s16, 1
      %s265 = scalar_select %p264, %s16, 1
      %s266 = smul.addr %s265, 2
      %s267 = smul.addr %s266, 8
      %s268 = scalar_lea.vmem %s1, %s267
      %p269 = scmp.lt.s32.totalorder %s16, 1
      %s270 = scalar_select %p269, %s16, 1
      %s271 = smul.addr %s270, 2
      %s272 = smul.addr %s271, 8
      %s273 = scalar_lea.vmem %s2, %s272
      %p274 = scmp.lt.s32.totalorder %s16, 1
      %s275 = scalar_select %p274, %s16, 1
      %s276 = smul.addr %s275, 2
      %s277 = smul.addr %s276, 8
      %s278 = scalar_lea.vmem %s3, %s277
      %p279 = scmp.lt.s32.totalorder %s16, 1
      %s280 = scalar_select %p279, %s16, 1
      %s281 = smul.addr %s280, 8
      %s282 = scalar_lea.vmem %s5, %s281
      %v284 = vlaneseq
      %v285 = vshrl.u32 %v284, 7
      %v286 = vadd.s32 %v285, 8
      %v287 = vlaneseq
      %v288 = vand.u32 %v287, 127
      %vm289 = vcmp.le.s32.totalorder %v288, %v285
      %vm290 = vcmp.le.s32.totalorder %v288, %v286
      %v291 = vsel %vm289, 0.0, -1e+30
      %v292 = vsel %vm290, 0.0, -1e+30
      %v293 = vld [vmem:[%s263] sm:$0xff]
      %v294 = vld [vmem:[%s263 + $0x8] sm:$0xff]
      %v295 = vld [vmem:[%s268] sm:$0xff]
      %v296 = vld [vmem:[%s268 + $0x8] sm:$0xff]
      %v297 = vld [vmem:[%s273] sm:$0xff]
      %v298 = vld [vmem:[%s273 + $0x8] sm:$0xf]
      %v299 = vld [vmem:[%s278] sm:$0xff]
      %v300 = vld [vmem:[%s278 + $0x8] sm:$0xf]
      %v302 = vrot.slane %v294, 7
      %vm305 = vcmask 1040384
      %v306 = vrot.slane %v293, 7
      %v307 = vsel %vm305, %v306, %v302
      %v310 = vsel %vm305, %v302, %v306
      %vm311 = vcmask 1046528
      %v312 = vrot.slane %v293, 1
      %v313 = vrot.slane %v294, 1
      %v314 = vsel %vm311, %v312, %v313
      %v318 = vsel %vm311, %v313, %v312
      %v319 = vld [vmem:[%s4] sm:$0xf]
      %v320 = vpack.c.bf16 %v307, %v310
      %v321 = vpack.c.bf16 %v319, %v319
      %v322 = vld [vmem:[%s4 + $0x8] sm:$0xf]
      %v323 = vpack.c.bf16 %v294, %v293
      %v324 = vpack.c.bf16 %v322, %v322
      %vm325 = vcmask 31744
      %v327 = vsel %vm325, %v323, 0
      %vm329 = vcmask 1041408
      %v331 = vsel %vm329, %v324, 0
      %333 = vmatprep.subr.bf16.mxu0 0
      %334 = vmatpush1.bf16.msra.mxu0 0
      %335 = vmatprep.subr.bf16.mxu0 0
      %336 = vmatpush1.bf16.msra.mxu0 0
      %337 = vmatprep.subr.bf16.mxu0 0
      %338 = vmatpush1.bf16.msra.mxu0 0
      %339 = vmatprep.subr.bf16.mxu0 0
      %340 = vmatpush1.bf16.msra.mxu0 0
      %341 = vmatprep.subr.bf16.mxu0 0
      %342 = vmatpush1.bf16.msra.mxu0 0
      %343 = vmatprep.subr.bf16.mxu0 0
      %344 = vmatpush1.bf16.msra.mxu0 0
      %345 = vmatprep.subr.bf16.mxu0 0
      %346 = vmatpush1.bf16.msra.mxu0 0
      %347 = vmatprep.subr.bf16.mxu0 0
      %348 = vmatpush1.bf16.msra.mxu0 %v331
      %349 = vmatprep.subr.bf16.mxu0 0
      %350 = vmatpush2.bf16.msra.mxu0 0
      %351 = vmatprep.subr.bf16.mxu0 0
      %352 = vmatpush2.bf16.msra.mxu0 0
      %353 = vmatprep.subr.bf16.mxu0 0
      %354 = vmatpush2.bf16.msra.mxu0 0
      %355 = vmatprep.subr.bf16.mxu0 0
      %356 = vmatpush2.bf16.msra.mxu0 0
      %357 = vmatprep.subr.bf16.mxu0 0
      %358 = vmatpush2.bf16.msra.mxu0 0
      %359 = vmatprep.subr.bf16.mxu0 0
      %360 = vmatpush2.bf16.msra.mxu0 0
      %361 = vmatprep.subr.bf16.mxu0 0
      %362 = vmatpush2.bf16.msra.mxu0 0
      %363 = vmatprep.subr.bf16.mxu0 0
      %364 = vmatpush2.bf16.msra.mxu0 0
      %365 = vmatprep.mubr.bf16.mxu0 0
      %366 = vmatmul.mubr.bf16.gmra.mxu0 %v327
      %v367 = vpop.f32.mrf.mxu0
      %v368 = vadd.f32 0.0, %v367
      %v369 = vpop.f32.mrf.mxu0
      %v370 = vpop.f32.mrf.mxu0
      %v371 = vadd.f32 0.0, %v370
      %v372 = vpop.f32.mrf.mxu0
      %373 = vdwg.mxu0
      %v375 = vsel %vm325, %v320, 0
      %v378 = vsel %vm329, %v321, 0
      %380 = vmatprep.subr.bf16.mxu0 0
      %381 = vmatpush1.bf16.msra.mxu0 0
      %382 = vmatprep.subr.bf16.mxu0 0
      %383 = vmatpush1.bf16.msra.mxu0 0
      %384 = vmatprep.subr.bf16.mxu0 0
      %385 = vmatpush1.bf16.msra.mxu0 0
      %386 = vmatprep.subr.bf16.mxu0 0
      %387 = vmatpush1.bf16.msra.mxu0 0
      %388 = vmatprep.subr.bf16.mxu0 0
      %389 = vmatpush1.bf16.msra.mxu0 0
      %390 = vmatprep.subr.bf16.mxu0 0
      %391 = vmatpush1.bf16.msra.mxu0 0
      %392 = vmatprep.subr.bf16.mxu0 0
      %393 = vmatpush1.bf16.msra.mxu0 0
      %394 = vmatprep.subr.bf16.mxu0 0
      %395 = vmatpush1.bf16.msra.mxu0 %v378
      %396 = vmatprep.subr.bf16.mxu0 0
      %397 = vmatpush2.bf16.msra.mxu0 0
      %398 = vmatprep.subr.bf16.mxu0 0
      %399 = vmatpush2.bf16.msra.mxu0 0
      %400 = vmatprep.subr.bf16.mxu0 0
      %401 = vmatpush2.bf16.msra.mxu0 0
      %402 = vmatprep.subr.bf16.mxu0 0
      %403 = vmatpush2.bf16.msra.mxu0 0
      %404 = vmatprep.subr.bf16.mxu0 0
      %405 = vmatpush2.bf16.msra.mxu0 0
      %406 = vmatprep.subr.bf16.mxu0 0
      %407 = vmatpush2.bf16.msra.mxu0 0
      %408 = vmatprep.subr.bf16.mxu0 0
      %409 = vmatpush2.bf16.msra.mxu0 0
      %410 = vmatprep.subr.bf16.mxu0 0
      %411 = vmatpush2.bf16.msra.mxu0 0
      %412 = vmatprep.mubr.bf16.mxu0 0
      %413 = vmatmul.mubr.bf16.gmra.mxu0 %v375
      %v414 = vpop.f32.mrf.mxu0
      %v415 = vadd.f32 %v368, %v414
      %v416 = vpop.f32.mrf.mxu0
      %v417 = vpop.f32.mrf.mxu0
      %v418 = vadd.f32 %v371, %v417
      %v419 = vpop.f32.mrf.mxu0
      %420 = vdwg.mxu0
      %v421 = vld [vmem:[%s4 + $0x10] sm:$0xf]
      %v422 = vpack.c.bf16 %v318, %v314
      %v423 = vpack.c.bf16 %v421, %v421
      %v425 = vsel %vm325, %v422, 0
      %v428 = vsel %vm329, %v423, 0
      %430 = vmatprep.subr.bf16.mxu0 0
      %431 = vmatpush1.bf16.msra.mxu0 0
      %432 = vmatprep.subr.bf16.mxu0 0
      %433 = vmatpush1.bf16.msra.mxu0 0
      %434 = vmatprep.subr.bf16.mxu0 0
      %435 = vmatpush1.bf16.msra.mxu0 0
      %436 = vmatprep.subr.bf16.mxu0 0
      %437 = vmatpush1.bf16.msra.mxu0 0
      %438 = vmatprep.subr.bf16.mxu0 0
      %439 = vmatpush1.bf16.msra.mxu0 0
      %440 = vmatprep.subr.bf16.mxu0 0
      %441 = vmatpush1.bf16.msra.mxu0 0
      %442 = vmatprep.subr.bf16.mxu0 0
      %443 = vmatpush1.bf16.msra.mxu0 0
      %444 = vmatprep.subr.bf16.mxu0 0
      %445 = vmatpush1.bf16.msra.mxu0 %v428
      %446 = vmatprep.subr.bf16.mxu0 0
      %447 = vmatpush2.bf16.msra.mxu0 0
      %448 = vmatprep.subr.bf16.mxu0 0
      %449 = vmatpush2.bf16.msra.mxu0 0
      %450 = vmatprep.subr.bf16.mxu0 0
      %451 = vmatpush2.bf16.msra.mxu0 0
      %452 = vmatprep.subr.bf16.mxu0 0
      %453 = vmatpush2.bf16.msra.mxu0 0
      %454 = vmatprep.subr.bf16.mxu0 0
      %455 = vmatpush2.bf16.msra.mxu0 0
      %456 = vmatprep.subr.bf16.mxu0 0
      %457 = vmatpush2.bf16.msra.mxu0 0
      %458 = vmatprep.subr.bf16.mxu0 0
      %459 = vmatpush2.bf16.msra.mxu0 0
      %460 = vmatprep.subr.bf16.mxu0 0
      %461 = vmatpush2.bf16.msra.mxu0 0
      %462 = vmatprep.mubr.bf16.mxu0 0
      %463 = vmatmul.mubr.bf16.gmra.mxu0 %v425
      %v464 = vpop.f32.mrf.mxu0
      %v465 = vadd.f32 0.0, %v464
      %v466 = vpop.f32.mrf.mxu0
      %v467 = vpop.f32.mrf.mxu0
      %v468 = vadd.f32 0.0, %v467
      %v469 = vpop.f32.mrf.mxu0
      %470 = vdwg.mxu0
      %v471 = vadd.f32 %v415, %v465
      %v472 = vadd.f32 %v418, %v468
      %v473 = vld [vmem:[%s4 + $0x18] sm:$0xf]
      %v474 = vpack.c.bf16 %v296, %v295
      %v475 = vpack.c.bf16 %v473, %v473
      %v476 = vld [vmem:[%s4 + $0x20] sm:$0x1]
      %v477 = vlaneseq
      %v478 = vshrl.u32 %v477, 7
      %v479 = vsub.s32 0, %v478
      %v480 = vrot.slane %v476, %v479
      %v482 = vsel %vm325, %v474, 0
      %v485 = vsel %vm329, %v475, 0
      %487 = vmatprep.subr.bf16.mxu0 0
      %488 = vmatpush1.bf16.msra.mxu0 0
      %489 = vmatprep.subr.bf16.mxu0 0
      %490 = vmatpush1.bf16.msra.mxu0 0
      %491 = vmatprep.subr.bf16.mxu0 0
      %492 = vmatpush1.bf16.msra.mxu0 0
      %493 = vmatprep.subr.bf16.mxu0 0
      %494 = vmatpush1.bf16.msra.mxu0 0
      %495 = vmatprep.subr.bf16.mxu0 0
      %496 = vmatpush1.bf16.msra.mxu0 0
      %497 = vmatprep.subr.bf16.mxu0 0
      %498 = vmatpush1.bf16.msra.mxu0 0
      %499 = vmatprep.subr.bf16.mxu0 0
      %500 = vmatpush1.bf16.msra.mxu0 0
      %501 = vmatprep.subr.bf16.mxu0 0
      %502 = vmatpush1.bf16.msra.mxu0 %v485
      %503 = vmatprep.subr.bf16.mxu0 0
      %504 = vmatpush2.bf16.msra.mxu0 0
      %505 = vmatprep.subr.bf16.mxu0 0
      %506 = vmatpush2.bf16.msra.mxu0 0
      %507 = vmatprep.subr.bf16.mxu0 0
      %508 = vmatpush2.bf16.msra.mxu0 0
      %509 = vmatprep.subr.bf16.mxu0 0
      %510 = vmatpush2.bf16.msra.mxu0 0
      %511 = vmatprep.subr.bf16.mxu0 0
      %512 = vmatpush2.bf16.msra.mxu0 0
      %513 = vmatprep.subr.bf16.mxu0 0
      %514 = vmatpush2.bf16.msra.mxu0 0
      %515 = vmatprep.subr.bf16.mxu0 0
      %516 = vmatpush2.bf16.msra.mxu0 0
      %517 = vmatprep.subr.bf16.mxu0 0
      %518 = vmatpush2.bf16.msra.mxu0 0
      %519 = vmatprep.mubr.bf16.mxu0 0
      %520 = vmatmul.mubr.bf16.gmra.mxu0 %v482
      %v521 = vpop.f32.mrf.mxu0
      %v522 = vadd.f32 %v480, %v521
      %v523 = vpop.f32.mrf.mxu0
      %v524 = vpop.f32.mrf.mxu0
      %v525 = vadd.f32 %v480, %v524
      %v526 = vpop.f32.mrf.mxu0
      %527 = vdwg.mxu0
      %v528 = vadd.f32 %v471, %v522
      %v529 = vadd.f32 %v472, %v525
      %v530 = vld [vmem:[%s4 + $0x28] sm:$0xff]
      %v531 = vld [vmem:[%s4 + $0x30] sm:$0xff]
      %v532 = vadd.f32 %v528, %v530
      %v533 = vadd.f32 %v529, %v531
      %v534 = vld [vmem:[%s4 + $0x70] sm:$0xff]
      %v535 = vld [vmem:[%s4 + $0x78] sm:$0xff]
      %v536 = vld [vmem:[%s4 + $0x80] sm:$0xff]
      %v537 = vld [vmem:[%s4 + $0x88] sm:$0xff]
      %v538 = vpack.c.bf16 %v533, %v532
      %v539 = vpack.c.bf16 %v535, %v534
      %v540 = vpack.c.bf16 %v537, %v536
      %v541 = vld [vmem:[%s4 + $0x90] sm:$0x1]
      %v542 = vlaneseq
      %v543 = vshrl.u32 %v542, 7
      %v544 = vsub.s32 0, %v543
      %v545 = vrot.slane %v541, %v544
      %vm546 = vcmask 261120
      %v548 = vsel %vm546, %v538, 0
      %550 = vmatprep.subr.bf16.mxu0 0
      %551 = vmatpush1.bf16.msra.mxu0 0
      %552 = vmatprep.subr.bf16.mxu0 0
      %553 = vmatpush1.bf16.msra.mxu0 0
      %554 = vmatprep.subr.bf16.mxu0 0
      %555 = vmatpush1.bf16.msra.mxu0 0
      %556 = vmatprep.subr.bf16.mxu0 0
      %557 = vmatpush1.bf16.msra.mxu0 0
      %558 = vmatprep.subr.bf16.mxu0 0
      %559 = vmatpush1.bf16.msra.mxu0 0
      %560 = vmatprep.subr.bf16.mxu0 0
      %561 = vmatpush1.bf16.msra.mxu0 0
      %562 = vmatprep.subr.bf16.mxu0 0
      %563 = vmatpush1.bf16.msra.mxu0 %v540
      %564 = vmatprep.subr.bf16.mxu0 0
      %565 = vmatpush1.bf16.msra.mxu0 %v539
      %566 = vmatprep.subr.bf16.mxu0 0
      %567 = vmatpush2.bf16.msra.mxu0 0
      %568 = vmatprep.subr.bf16.mxu0 0
      %569 = vmatpush2.bf16.msra.mxu0 0
      %570 = vmatprep.subr.bf16.mxu0 0
      %571 = vmatpush2.bf16.msra.mxu0 0
      %572 = vmatprep.subr.bf16.mxu0 0
      %573 = vmatpush2.bf16.msra.mxu0 0
      %574 = vmatprep.subr.bf16.mxu0 0
      %575 = vmatpush2.bf16.msra.mxu0 0
      %576 = vmatprep.subr.bf16.mxu0 0
      %577 = vmatpush2.bf16.msra.mxu0 0
      %578 = vmatprep.subr.bf16.mxu0 0
      %579 = vmatpush2.bf16.msra.mxu0 0
      %580 = vmatprep.subr.bf16.mxu0 0
      %581 = vmatpush2.bf16.msra.mxu0 0
      %582 = vmatprep.mubr.bf16.mxu0 0
      %583 = vmatmul.mubr.bf16.gmra.mxu0 %v548
      %v584 = vpop.f32.mrf.mxu0
      %v585 = vadd.f32 %v545, %v584
      %v586 = vpop.f32.mrf.mxu0
      %v587 = vpop.f32.mrf.mxu0
      %v588 = vadd.f32 %v545, %v587
      %v589 = vpop.f32.mrf.mxu0
      %590 = vdwg.mxu0
      %v591 = vld [vmem:[%s4 + $0x98] sm:$0xff]
      %v592 = vld [vmem:[%s4 + $0xa0] sm:$0xff]
      %v593 = vld [vmem:[%s4 + $0xa8] sm:$0xff]
      %v594 = vld [vmem:[%s4 + $0xb0] sm:$0xff]
      %v595 = vpack.c.bf16 %v592, %v591
      %v596 = vpack.c.bf16 %v594, %v593
      %v597 = vld [vmem:[%s4 + $0xb8] sm:$0x1]
      %v598 = vlaneseq
      %v599 = vshrl.u32 %v598, 7
      %v600 = vsub.s32 0, %v599
      %v601 = vrot.slane %v597, %v600
      %602 = vmatprep.subr.bf16.mxu0 0
      %603 = vmatpush1.bf16.msra.mxu0 0
      %604 = vmatprep.subr.bf16.mxu0 0
      %605 = vmatpush1.bf16.msra.mxu0 0
      %606 = vmatprep.subr.bf16.mxu0 0
      %607 = vmatpush1.bf16.msra.mxu0 0
      %608 = vmatprep.subr.bf16.mxu0 0
      %609 = vmatpush1.bf16.msra.mxu0 0
      %610 = vmatprep.subr.bf16.mxu0 0
      %611 = vmatpush1.bf16.msra.mxu0 0
      %612 = vmatprep.subr.bf16.mxu0 0
      %613 = vmatpush1.bf16.msra.mxu0 0
      %614 = vmatprep.subr.bf16.mxu0 0
      %615 = vmatpush1.bf16.msra.mxu0 %v596
      %616 = vmatprep.subr.bf16.mxu0 0
      %617 = vmatpush1.bf16.msra.mxu0 %v595
      %618 = vmatprep.subr.bf16.mxu0 0
      %619 = vmatpush2.bf16.msra.mxu0 0
      %620 = vmatprep.subr.bf16.mxu0 0
      %621 = vmatpush2.bf16.msra.mxu0 0
      %622 = vmatprep.subr.bf16.mxu0 0
      %623 = vmatpush2.bf16.msra.mxu0 0
      %624 = vmatprep.subr.bf16.mxu0 0
      %625 = vmatpush2.bf16.msra.mxu0 0
      %626 = vmatprep.subr.bf16.mxu0 0
      %627 = vmatpush2.bf16.msra.mxu0 0
      %628 = vmatprep.subr.bf16.mxu0 0
      %629 = vmatpush2.bf16.msra.mxu0 0
      %630 = vmatprep.subr.bf16.mxu0 0
      %631 = vmatpush2.bf16.msra.mxu0 0
      %632 = vmatprep.subr.bf16.mxu0 0
      %633 = vmatpush2.bf16.msra.mxu0 0
      %634 = vmatprep.mubr.bf16.mxu0 0
      %635 = vmatmul.mubr.bf16.gmra.mxu0 %v548
      %v636 = vpop.f32.mrf.mxu0
      %v637 = vadd.f32 %v601, %v636
      %v638 = vpop.f32.mrf.mxu0
      %v639 = vpop.f32.mrf.mxu0
      %v640 = vadd.f32 %v601, %v639
      %v641 = vpop.f32.mrf.mxu0
      %642 = vdwg.mxu0
      %v643 = vld [vmem:[%s4 + $0xc0] sm:$0xff]
      %v644 = vld [vmem:[%s4 + $0xc8] sm:$0xff]
      %v645 = vld [vmem:[%s4 + $0xd0] sm:$0xff]
      %v646 = vld [vmem:[%s4 + $0xd8] sm:$0xff]
      %v647 = vpack.c.bf16 %v644, %v643
      %v648 = vpack.c.bf16 %v646, %v645
      %v649 = vld [vmem:[%s4 + $0xe0] sm:$0x1]
      %v650 = vlaneseq
      %v651 = vshrl.u32 %v650, 7
      %v652 = vsub.s32 0, %v651
      %v653 = vrot.slane %v649, %v652
      %654 = vmatprep.subr.bf16.mxu0 0
      %655 = vmatpush1.bf16.msra.mxu0 0
      %656 = vmatprep.subr.bf16.mxu0 0
      %657 = vmatpush1.bf16.msra.mxu0 0
      %658 = vmatprep.subr.bf16.mxu0 0
      %659 = vmatpush1.bf16.msra.mxu0 0
      %660 = vmatprep.subr.bf16.mxu0 0
      %661 = vmatpush1.bf16.msra.mxu0 0
      %662 = vmatprep.subr.bf16.mxu0 0
      %663 = vmatpush1.bf16.msra.mxu0 0
      %664 = vmatprep.subr.bf16.mxu0 0
      %665 = vmatpush1.bf16.msra.mxu0 0
      %666 = vmatprep.subr.bf16.mxu0 0
      %667 = vmatpush1.bf16.msra.mxu0 %v648
      %668 = vmatprep.subr.bf16.mxu0 0
      %669 = vmatpush1.bf16.msra.mxu0 %v647
      %670 = vmatprep.subr.bf16.mxu0 0
      %671 = vmatpush2.bf16.msra.mxu0 0
      %672 = vmatprep.subr.bf16.mxu0 0
      %673 = vmatpush2.bf16.msra.mxu0 0
      %674 = vmatprep.subr.bf16.mxu0 0
      %675 = vmatpush2.bf16.msra.mxu0 0
      %676 = vmatprep.subr.bf16.mxu0 0
      %677 = vmatpush2.bf16.msra.mxu0 0
      %678 = vmatprep.subr.bf16.mxu0 0
      %679 = vmatpush2.bf16.msra.mxu0 0
      %680 = vmatprep.subr.bf16.mxu0 0
      %681 = vmatpush2.bf16.msra.mxu0 0
      %682 = vmatprep.subr.bf16.mxu0 0
      %683 = vmatpush2.bf16.msra.mxu0 0
      %684 = vmatprep.subr.bf16.mxu0 0
      %685 = vmatpush2.bf16.msra.mxu0 0
      %686 = vmatprep.mubr.bf16.mxu0 0
      %687 = vmatmul.mubr.bf16.gmra.mxu0 %v548
      %v688 = vpop.f32.mrf.mxu0
      %v689 = vadd.f32 %v653, %v688
      %v690 = vpop.f32.mrf.mxu0
      %v691 = vpop.f32.mrf.mxu0
      %v692 = vadd.f32 %v653, %v691
      %v693 = vpop.f32.mrf.mxu0
      %694 = vdwg.mxu0
      %v695 = vpack.c.bf16 %v588, %v585
      %v696 = vpack.c.bf16 %v640, %v637
      %vm697 = vcmask 64512
      %v699 = vsel %vm697, %v695, 0
      %v702 = vsel %vm697, %v696, 0
      %704 = vmatprep.subr.bf16.mxu0 0
      %705 = vmatpush1.bf16.xpose.msra.mxu0 0
      %706 = vmatprep.subr.bf16.mxu0 0
      %707 = vmatpush1.bf16.xpose.msra.mxu0 0
      %708 = vmatprep.subr.bf16.mxu0 0
      %709 = vmatpush1.bf16.xpose.msra.mxu0 0
      %710 = vmatprep.subr.bf16.mxu0 0
      %711 = vmatpush1.bf16.xpose.msra.mxu0 0
      %712 = vmatprep.subr.bf16.mxu0 0
      %713 = vmatpush1.bf16.xpose.msra.mxu0 0
      %714 = vmatprep.subr.bf16.mxu0 0
      %715 = vmatpush1.bf16.xpose.msra.mxu0 0
      %716 = vmatprep.subr.bf16.mxu0 0
      %717 = vmatpush1.bf16.xpose.msra.mxu0 0
      %718 = vmatprep.subr.bf16.mxu0 0
      %719 = vmatpush1.bf16.xpose.msra.mxu0 %v702
      %720 = vmatprep.subr.bf16.mxu0 0
      %721 = vmatpush2.bf16.xpose.msra.mxu0 0
      %722 = vmatprep.subr.bf16.mxu0 0
      %723 = vmatpush2.bf16.xpose.msra.mxu0 0
      %724 = vmatprep.subr.bf16.mxu0 0
      %725 = vmatpush2.bf16.xpose.msra.mxu0 0
      %726 = vmatprep.subr.bf16.mxu0 0
      %727 = vmatpush2.bf16.xpose.msra.mxu0 0
      %728 = vmatprep.subr.bf16.mxu0 0
      %729 = vmatpush2.bf16.xpose.msra.mxu0 0
      %730 = vmatprep.subr.bf16.mxu0 0
      %731 = vmatpush2.bf16.xpose.msra.mxu0 0
      %732 = vmatprep.subr.bf16.mxu0 0
      %733 = vmatpush2.bf16.xpose.msra.mxu0 0
      %734 = vmatprep.subr.bf16.mxu0 0
      %735 = vmatpush2.bf16.xpose.msra.mxu0 0
      %736 = vmatprep.mubr.bf16.mxu0 0
      %737 = vmatmul.mubr.bf16.gmra.mxu0 %v699
      %v738 = vpop.f32.mrf.mxu0
      %v739 = vadd.f32 0.0, %v738
      %v740 = vpop.f32.mrf.mxu0
      %v741 = vpop.f32.mrf.mxu0
      %v742 = vadd.f32 0.0, %v741
      %v743 = vpop.f32.mrf.mxu0
      %744 = vdwg.mxu0
      %v745 = vmul.f32 %v739, 0.35355338
      %v746 = vmul.f32 %v742, 0.35355338
      %vm747 = vcmask 130048
      %v748 = vsel %vm747, %v745, -inf
      %749 = vmax.xlane.f32.xlu0 %v748
      %v750 = vpop.xlane.xlu0 %749
      %v751 = vsel %vm747, %v746, -inf
      %752 = vmax.xlane.f32.xlu0 %v751
      %v753 = vpop.xlane.xlu0 %752
      %v754 = vsub.f32 %v745, %v750
      %v755 = vsub.f32 %v746, %v753
      %v756 = vmul.f32 %v754, 1.442695
      %v757 = vpow.pop %v756
      %v758 = vmul.f32 %v755, 1.442695
      %v759 = vpow.pop %v758
      %v760 = vsel %vm747, %v757, 0.0
      %761 = vadd.xlane.f32.xlu0 %v760
      %v762 = vpop.xlane.xlu0 %761
      %v763 = vsel %vm747, %v759, 0.0
      %764 = vadd.xlane.f32.xlu0 %v763
      %v765 = vpop.xlane.xlu0 %764
      %v766 = vrcp.pop %v762
      %v767 = vrcp.pop %v765
      %v768 = vmul.f32 %v757, %v766
      %v769 = vmul.f32 %v759, %v767
      %v770 = vpack.c.bf16 %v769, %v768
      %v771 = vpack.c.bf16 %v692, %v689
      %v773 = vsel %vm747, %v770, 0
      %775 = vmatprep.subr.bf16.mxu0 0
      %776 = vmatpush1.bf16.msra.mxu0 0
      %777 = vmatprep.subr.bf16.mxu0 0
      %778 = vmatpush1.bf16.msra.mxu0 0
      %779 = vmatprep.subr.bf16.mxu0 0
      %780 = vmatpush1.bf16.msra.mxu0 0
      %781 = vmatprep.subr.bf16.mxu0 0
      %782 = vmatpush1.bf16.msra.mxu0 0
      %783 = vmatprep.subr.bf16.mxu0 0
      %784 = vmatpush1.bf16.msra.mxu0 0
      %785 = vmatprep.subr.bf16.mxu0 0
      %786 = vmatpush1.bf16.msra.mxu0 0
      %787 = vmatprep.subr.bf16.mxu0 0
      %788 = vmatpush1.bf16.msra.mxu0 0
      %789 = vmatprep.subr.bf16.mxu0 0
      %790 = vmatpush1.bf16.msra.mxu0 %v771
      %791 = vmatprep.subr.bf16.mxu0 0
      %792 = vmatpush2.bf16.msra.mxu0 0
      %793 = vmatprep.subr.bf16.mxu0 0
      %794 = vmatpush2.bf16.msra.mxu0 0
      %795 = vmatprep.subr.bf16.mxu0 0
      %796 = vmatpush2.bf16.msra.mxu0 0
      %797 = vmatprep.subr.bf16.mxu0 0
      %798 = vmatpush2.bf16.msra.mxu0 0
      %799 = vmatprep.subr.bf16.mxu0 0
      %800 = vmatpush2.bf16.msra.mxu0 0
      %801 = vmatprep.subr.bf16.mxu0 0
      %802 = vmatpush2.bf16.msra.mxu0 0
      %803 = vmatprep.subr.bf16.mxu0 0
      %804 = vmatpush2.bf16.msra.mxu0 0
      %805 = vmatprep.subr.bf16.mxu0 0
      %806 = vmatpush2.bf16.msra.mxu0 0
      %807 = vmatprep.mubr.bf16.mxu0 0
      %808 = vmatmul.mubr.bf16.gmra.mxu0 %v773
      %v809 = vpop.f32.mrf.mxu0
      %v810 = vadd.f32 0.0, %v809
      %v811 = vpop.f32.mrf.mxu0
      %v812 = vpop.f32.mrf.mxu0
      %v813 = vadd.f32 0.0, %v812
      %v814 = vpop.f32.mrf.mxu0
      %815 = vdwg.mxu0
      %v816 = vld [vmem:[%s4 + $0xe8] sm:$0xff]
      %v817 = vpack.c.bf16 %v813, %v810
      %v818 = vpack.c.bf16 %v816, %v816
      %v819 = vld [vmem:[%s4 + $0xf0] sm:$0xff]
      %v820 = vld [vmem:[%s4 + $0xf8] sm:$0xff]
      %v821 = vld [vmem:[%s4 + $0x100] sm:$0xff]
      %v822 = vld [vmem:[%s4 + $0x108] sm:$0xff]
      %v823 = vpack.c.bf16 %v820, %v819
      %v824 = vpack.c.bf16 %v822, %v821
      %v825 = vld [vmem:[%s4 + $0x110] sm:$0x1]
      %v826 = vlaneseq
      %v827 = vshrl.u32 %v826, 7
      %v828 = vsub.s32 0, %v827
      %v829 = vrot.slane %v825, %v828
      %830 = vmatprep.subr.bf16.mxu0 0
      %831 = vmatpush1.bf16.msra.mxu0 0
      %832 = vmatprep.subr.bf16.mxu0 0
      %833 = vmatpush1.bf16.msra.mxu0 0
      %834 = vmatprep.subr.bf16.mxu0 0
      %835 = vmatpush1.bf16.msra.mxu0 0
      %836 = vmatprep.subr.bf16.mxu0 0
      %837 = vmatpush1.bf16.msra.mxu0 0
      %838 = vmatprep.subr.bf16.mxu0 0
      %839 = vmatpush1.bf16.msra.mxu0 0
      %840 = vmatprep.subr.bf16.mxu0 0
      %841 = vmatpush1.bf16.msra.mxu0 0
      %842 = vmatprep.subr.bf16.mxu0 0
      %843 = vmatpush1.bf16.msra.mxu0 %v824
      %844 = vmatprep.subr.bf16.mxu0 0
      %845 = vmatpush1.bf16.msra.mxu0 %v823
      %846 = vmatprep.subr.bf16.mxu0 0
      %847 = vmatpush2.bf16.msra.mxu0 0
      %848 = vmatprep.subr.bf16.mxu0 0
      %849 = vmatpush2.bf16.msra.mxu0 0
      %850 = vmatprep.subr.bf16.mxu0 0
      %851 = vmatpush2.bf16.msra.mxu0 0
      %852 = vmatprep.subr.bf16.mxu0 0
      %853 = vmatpush2.bf16.msra.mxu0 0
      %854 = vmatprep.subr.bf16.mxu0 0
      %855 = vmatpush2.bf16.msra.mxu0 0
      %856 = vmatprep.subr.bf16.mxu0 0
      %857 = vmatpush2.bf16.msra.mxu0 0
      %858 = vmatprep.subr.bf16.mxu0 0
      %859 = vmatpush2.bf16.msra.mxu0 0
      %860 = vmatprep.subr.bf16.mxu0 0
      %861 = vmatpush2.bf16.msra.mxu0 0
      %862 = vmatprep.mubr.bf16.mxu0 0
      %863 = vmatmul.mubr.bf16.gmra.mxu0 %v548
      %v864 = vpop.f32.mrf.mxu0
      %v865 = vadd.f32 %v829, %v864
      %v866 = vpop.f32.mrf.mxu0
      %v867 = vpop.f32.mrf.mxu0
      %v868 = vadd.f32 %v829, %v867
      %v869 = vpop.f32.mrf.mxu0
      %870 = vdwg.mxu0
      %v871 = vld [vmem:[%s4 + $0x118] sm:$0xff]
      %v872 = vld [vmem:[%s4 + $0x120] sm:$0xff]
      %v873 = vld [vmem:[%s4 + $0x128] sm:$0xff]
      %v874 = vld [vmem:[%s4 + $0x130] sm:$0xff]
      %v875 = vpack.c.bf16 %v872, %v871
      %v876 = vpack.c.bf16 %v874, %v873
      %v877 = vld [vmem:[%s4 + $0x138] sm:$0x1]
      %v878 = vlaneseq
      %v879 = vshrl.u32 %v878, 7
      %v880 = vsub.s32 0, %v879
      %v881 = vrot.slane %v877, %v880
      %882 = vmatprep.subr.bf16.mxu0 0
      %883 = vmatpush1.bf16.msra.mxu0 0
      %884 = vmatprep.subr.bf16.mxu0 0
      %885 = vmatpush1.bf16.msra.mxu0 0
      %886 = vmatprep.subr.bf16.mxu0 0
      %887 = vmatpush1.bf16.msra.mxu0 0
      %888 = vmatprep.subr.bf16.mxu0 0
      %889 = vmatpush1.bf16.msra.mxu0 0
      %890 = vmatprep.subr.bf16.mxu0 0
      %891 = vmatpush1.bf16.msra.mxu0 0
      %892 = vmatprep.subr.bf16.mxu0 0
      %893 = vmatpush1.bf16.msra.mxu0 0
      %894 = vmatprep.subr.bf16.mxu0 0
      %895 = vmatpush1.bf16.msra.mxu0 %v876
      %896 = vmatprep.subr.bf16.mxu0 0
      %897 = vmatpush1.bf16.msra.mxu0 %v875
      %898 = vmatprep.subr.bf16.mxu0 0
      %899 = vmatpush2.bf16.msra.mxu0 0
      %900 = vmatprep.subr.bf16.mxu0 0
      %901 = vmatpush2.bf16.msra.mxu0 0
      %902 = vmatprep.subr.bf16.mxu0 0
      %903 = vmatpush2.bf16.msra.mxu0 0
      %904 = vmatprep.subr.bf16.mxu0 0
      %905 = vmatpush2.bf16.msra.mxu0 0
      %906 = vmatprep.subr.bf16.mxu0 0
      %907 = vmatpush2.bf16.msra.mxu0 0
      %908 = vmatprep.subr.bf16.mxu0 0
      %909 = vmatpush2.bf16.msra.mxu0 0
      %910 = vmatprep.subr.bf16.mxu0 0
      %911 = vmatpush2.bf16.msra.mxu0 0
      %912 = vmatprep.subr.bf16.mxu0 0
      %913 = vmatpush2.bf16.msra.mxu0 0
      %914 = vmatprep.mubr.bf16.mxu0 0
      %915 = vmatmul.mubr.bf16.gmra.mxu0 %v548
      %v916 = vpop.f32.mrf.mxu0
      %v917 = vadd.f32 %v881, %v916
      %v918 = vpop.f32.mrf.mxu0
      %v919 = vpop.f32.mrf.mxu0
      %v920 = vadd.f32 %v881, %v919
      %v921 = vpop.f32.mrf.mxu0
      %922 = vdwg.mxu0
      %v923 = vld [vmem:[%s4 + $0x140] sm:$0xff]
      %v924 = vld [vmem:[%s4 + $0x148] sm:$0xff]
      %v925 = vld [vmem:[%s4 + $0x150] sm:$0xff]
      %v926 = vld [vmem:[%s4 + $0x158] sm:$0xff]
      %v927 = vpack.c.bf16 %v924, %v923
      %v928 = vpack.c.bf16 %v926, %v925
      %v929 = vld [vmem:[%s4 + $0x160] sm:$0x1]
      %v930 = vlaneseq
      %v931 = vshrl.u32 %v930, 7
      %v932 = vsub.s32 0, %v931
      %v933 = vrot.slane %v929, %v932
      %934 = vmatprep.subr.bf16.mxu0 0
      %935 = vmatpush1.bf16.msra.mxu0 0
      %936 = vmatprep.subr.bf16.mxu0 0
      %937 = vmatpush1.bf16.msra.mxu0 0
      %938 = vmatprep.subr.bf16.mxu0 0
      %939 = vmatpush1.bf16.msra.mxu0 0
      %940 = vmatprep.subr.bf16.mxu0 0
      %941 = vmatpush1.bf16.msra.mxu0 0
      %942 = vmatprep.subr.bf16.mxu0 0
      %943 = vmatpush1.bf16.msra.mxu0 0
      %944 = vmatprep.subr.bf16.mxu0 0
      %945 = vmatpush1.bf16.msra.mxu0 0
      %946 = vmatprep.subr.bf16.mxu0 0
      %947 = vmatpush1.bf16.msra.mxu0 %v928
      %948 = vmatprep.subr.bf16.mxu0 0
      %949 = vmatpush1.bf16.msra.mxu0 %v927
      %950 = vmatprep.subr.bf16.mxu0 0
      %951 = vmatpush2.bf16.msra.mxu0 0
      %952 = vmatprep.subr.bf16.mxu0 0
      %953 = vmatpush2.bf16.msra.mxu0 0
      %954 = vmatprep.subr.bf16.mxu0 0
      %955 = vmatpush2.bf16.msra.mxu0 0
      %956 = vmatprep.subr.bf16.mxu0 0
      %957 = vmatpush2.bf16.msra.mxu0 0
      %958 = vmatprep.subr.bf16.mxu0 0
      %959 = vmatpush2.bf16.msra.mxu0 0
      %960 = vmatprep.subr.bf16.mxu0 0
      %961 = vmatpush2.bf16.msra.mxu0 0
      %962 = vmatprep.subr.bf16.mxu0 0
      %963 = vmatpush2.bf16.msra.mxu0 0
      %964 = vmatprep.subr.bf16.mxu0 0
      %965 = vmatpush2.bf16.msra.mxu0 0
      %966 = vmatprep.mubr.bf16.mxu0 0
      %967 = vmatmul.mubr.bf16.gmra.mxu0 %v548
      %v968 = vpop.f32.mrf.mxu0
      %v969 = vadd.f32 %v933, %v968
      %v970 = vpop.f32.mrf.mxu0
      %v971 = vpop.f32.mrf.mxu0
      %v972 = vadd.f32 %v933, %v971
      %v973 = vpop.f32.mrf.mxu0
      %974 = vdwg.mxu0
      %v975 = vpack.c.bf16 %v868, %v865
      %v976 = vpack.c.bf16 %v920, %v917
      %v978 = vsel %vm697, %v975, 0
      %v981 = vsel %vm697, %v976, 0
      %983 = vmatprep.subr.bf16.mxu0 0
      %984 = vmatpush1.bf16.xpose.msra.mxu0 0
      %985 = vmatprep.subr.bf16.mxu0 0
      %986 = vmatpush1.bf16.xpose.msra.mxu0 0
      %987 = vmatprep.subr.bf16.mxu0 0
      %988 = vmatpush1.bf16.xpose.msra.mxu0 0
      %989 = vmatprep.subr.bf16.mxu0 0
      %990 = vmatpush1.bf16.xpose.msra.mxu0 0
      %991 = vmatprep.subr.bf16.mxu0 0
      %992 = vmatpush1.bf16.xpose.msra.mxu0 0
      %993 = vmatprep.subr.bf16.mxu0 0
      %994 = vmatpush1.bf16.xpose.msra.mxu0 0
      %995 = vmatprep.subr.bf16.mxu0 0
      %996 = vmatpush1.bf16.xpose.msra.mxu0 0
      %997 = vmatprep.subr.bf16.mxu0 0
      %998 = vmatpush1.bf16.xpose.msra.mxu0 %v981
      %999 = vmatprep.subr.bf16.mxu0 0
      %1000 = vmatpush2.bf16.xpose.msra.mxu0 0
      %1001 = vmatprep.subr.bf16.mxu0 0
      %1002 = vmatpush2.bf16.xpose.msra.mxu0 0
      %1003 = vmatprep.subr.bf16.mxu0 0
      %1004 = vmatpush2.bf16.xpose.msra.mxu0 0
      %1005 = vmatprep.subr.bf16.mxu0 0
      %1006 = vmatpush2.bf16.xpose.msra.mxu0 0
      %1007 = vmatprep.subr.bf16.mxu0 0
      %1008 = vmatpush2.bf16.xpose.msra.mxu0 0
      %1009 = vmatprep.subr.bf16.mxu0 0
      %1010 = vmatpush2.bf16.xpose.msra.mxu0 0
      %1011 = vmatprep.subr.bf16.mxu0 0
      %1012 = vmatpush2.bf16.xpose.msra.mxu0 0
      %1013 = vmatprep.subr.bf16.mxu0 0
      %1014 = vmatpush2.bf16.xpose.msra.mxu0 0
      %1015 = vmatprep.mubr.bf16.mxu0 0
      %1016 = vmatmul.mubr.bf16.gmra.mxu0 %v978
      %v1017 = vpop.f32.mrf.mxu0
      %v1018 = vadd.f32 0.0, %v1017
      %v1019 = vpop.f32.mrf.mxu0
      %v1020 = vpop.f32.mrf.mxu0
      %v1021 = vadd.f32 0.0, %v1020
      %v1022 = vpop.f32.mrf.mxu0
      %1023 = vdwg.mxu0
      %v1024 = vmul.f32 %v1018, 0.35355338
      %v1025 = vmul.f32 %v1021, 0.35355338
      %v1026 = vsel %vm747, %v1024, -inf
      %1027 = vmax.xlane.f32.xlu0 %v1026
      %v1028 = vpop.xlane.xlu0 %1027
      %v1029 = vsel %vm747, %v1025, -inf
      %1030 = vmax.xlane.f32.xlu0 %v1029
      %v1031 = vpop.xlane.xlu0 %1030
      %v1032 = vsub.f32 %v1024, %v1028
      %v1033 = vsub.f32 %v1025, %v1031
      %v1034 = vmul.f32 %v1032, 1.442695
      %v1035 = vpow.pop %v1034
      %v1036 = vmul.f32 %v1033, 1.442695
      %v1037 = vpow.pop %v1036
      %v1038 = vsel %vm747, %v1035, 0.0
      %1039 = vadd.xlane.f32.xlu0 %v1038
      %v1040 = vpop.xlane.xlu0 %1039
      %v1041 = vsel %vm747, %v1037, 0.0
      %1042 = vadd.xlane.f32.xlu0 %v1041
      %v1043 = vpop.xlane.xlu0 %1042
      %v1044 = vrcp.pop %v1040
      %v1045 = vrcp.pop %v1043
      %v1046 = vmul.f32 %v1035, %v1044
      %v1047 = vmul.f32 %v1037, %v1045
      %v1048 = vpack.c.bf16 %v1047, %v1046
      %v1049 = vpack.c.bf16 %v972, %v969
      %v1051 = vsel %vm747, %v1048, 0
      %1053 = vmatprep.subr.bf16.mxu0 0
      %1054 = vmatpush1.bf16.msra.mxu0 0
      %1055 = vmatprep.subr.bf16.mxu0 0
      %1056 = vmatpush1.bf16.msra.mxu0 0
      %1057 = vmatprep.subr.bf16.mxu0 0
      %1058 = vmatpush1.bf16.msra.mxu0 0
      %1059 = vmatprep.subr.bf16.mxu0 0
      %1060 = vmatpush1.bf16.msra.mxu0 0
      %1061 = vmatprep.subr.bf16.mxu0 0
      %1062 = vmatpush1.bf16.msra.mxu0 0
      %1063 = vmatprep.subr.bf16.mxu0 0
      %1064 = vmatpush1.bf16.msra.mxu0 0
      %1065 = vmatprep.subr.bf16.mxu0 0
      %1066 = vmatpush1.bf16.msra.mxu0 0
      %1067 = vmatprep.subr.bf16.mxu0 0
      %1068 = vmatpush1.bf16.msra.mxu0 %v1049
      %1069 = vmatprep.subr.bf16.mxu0 0
      %1070 = vmatpush2.bf16.msra.mxu0 0
      %1071 = vmatprep.subr.bf16.mxu0 0
      %1072 = vmatpush2.bf16.msra.mxu0 0
      %1073 = vmatprep.subr.bf16.mxu0 0
      %1074 = vmatpush2.bf16.msra.mxu0 0
      %1075 = vmatprep.subr.bf16.mxu0 0
      %1076 = vmatpush2.bf16.msra.mxu0 0
      %1077 = vmatprep.subr.bf16.mxu0 0
      %1078 = vmatpush2.bf16.msra.mxu0 0
      %1079 = vmatprep.subr.bf16.mxu0 0
      %1080 = vmatpush2.bf16.msra.mxu0 0
      %1081 = vmatprep.subr.bf16.mxu0 0
      %1082 = vmatpush2.bf16.msra.mxu0 0
      %1083 = vmatprep.subr.bf16.mxu0 0
      %1084 = vmatpush2.bf16.msra.mxu0 0
      %1085 = vmatprep.mubr.bf16.mxu0 0
      %1086 = vmatmul.mubr.bf16.gmra.mxu0 %v1051
      %v1087 = vpop.f32.mrf.mxu0
      %v1088 = vadd.f32 0.0, %v1087
      %v1089 = vpop.f32.mrf.mxu0
      %v1090 = vpop.f32.mrf.mxu0
      %v1091 = vadd.f32 0.0, %v1090
      %v1092 = vpop.f32.mrf.mxu0
      %1093 = vdwg.mxu0
      %v1094 = vld [vmem:[%s4 + $0x168] sm:$0xff]
      %v1095 = vpack.c.bf16 %v1091, %v1088
      %v1096 = vpack.c.bf16 %v1094, %v1094
      %v1098 = vsel %vm697, %v1095, 0
      %vm1100 = vcmask 1043456
      %v1102 = vsel %vm1100, %v1096, 0
      %1104 = vmatprep.subr.bf16.mxu0 0
      %1105 = vmatpush1.bf16.msra.mxu0 0
      %1106 = vmatprep.subr.bf16.mxu0 0
      %1107 = vmatpush1.bf16.msra.mxu0 0
      %1108 = vmatprep.subr.bf16.mxu0 0
      %1109 = vmatpush1.bf16.msra.mxu0 0
      %1110 = vmatprep.subr.bf16.mxu0 0
      %1111 = vmatpush1.bf16.msra.mxu0 0
      %1112 = vmatprep.subr.bf16.mxu0 0
      %1113 = vmatpush1.bf16.msra.mxu0 0
      %1114 = vmatprep.subr.bf16.mxu0 0
      %1115 = vmatpush1.bf16.msra.mxu0 0
      %1116 = vmatprep.subr.bf16.mxu0 0
      %1117 = vmatpush1.bf16.msra.mxu0 0
      %1118 = vmatprep.subr.bf16.mxu0 0
      %1119 = vmatpush1.bf16.msra.mxu0 %v1102
      %1120 = vmatprep.subr.bf16.mxu0 0
      %1121 = vmatpush2.bf16.msra.mxu0 0
      %1122 = vmatprep.subr.bf16.mxu0 0
      %1123 = vmatpush2.bf16.msra.mxu0 0
      %1124 = vmatprep.subr.bf16.mxu0 0
      %1125 = vmatpush2.bf16.msra.mxu0 0
      %1126 = vmatprep.subr.bf16.mxu0 0
      %1127 = vmatpush2.bf16.msra.mxu0 0
      %1128 = vmatprep.subr.bf16.mxu0 0
      %1129 = vmatpush2.bf16.msra.mxu0 0
      %1130 = vmatprep.subr.bf16.mxu0 0
      %1131 = vmatpush2.bf16.msra.mxu0 0
      %1132 = vmatprep.subr.bf16.mxu0 0
      %1133 = vmatpush2.bf16.msra.mxu0 0
      %1134 = vmatprep.subr.bf16.mxu0 0
      %1135 = vmatpush2.bf16.msra.mxu0 0
      %1136 = vmatprep.mubr.bf16.mxu0 0
      %1137 = vmatmul.mubr.bf16.gmra.mxu0 %v1098
      %v1138 = vpop.f32.mrf.mxu0
      %v1139 = vadd.f32 0.0, %v1138
      %v1140 = vpop.f32.mrf.mxu0
      %v1141 = vpop.f32.mrf.mxu0
      %v1142 = vadd.f32 0.0, %v1141
      %v1143 = vpop.f32.mrf.mxu0
      %1144 = vdwg.mxu0
      %v1146 = vsel %vm697, %v817, 0
      %v1149 = vsel %vm1100, %v818, 0
      %1151 = vmatprep.subr.bf16.mxu0 0
      %1152 = vmatpush1.bf16.msra.mxu0 0
      %1153 = vmatprep.subr.bf16.mxu0 0
      %1154 = vmatpush1.bf16.msra.mxu0 0
      %1155 = vmatprep.subr.bf16.mxu0 0
      %1156 = vmatpush1.bf16.msra.mxu0 0
      %1157 = vmatprep.subr.bf16.mxu0 0
      %1158 = vmatpush1.bf16.msra.mxu0 0
      %1159 = vmatprep.subr.bf16.mxu0 0
      %1160 = vmatpush1.bf16.msra.mxu0 0
      %1161 = vmatprep.subr.bf16.mxu0 0
      %1162 = vmatpush1.bf16.msra.mxu0 0
      %1163 = vmatprep.subr.bf16.mxu0 0
      %1164 = vmatpush1.bf16.msra.mxu0 0
      %1165 = vmatprep.subr.bf16.mxu0 0
      %1166 = vmatpush1.bf16.msra.mxu0 %v1149
      %1167 = vmatprep.subr.bf16.mxu0 0
      %1168 = vmatpush2.bf16.msra.mxu0 0
      %1169 = vmatprep.subr.bf16.mxu0 0
      %1170 = vmatpush2.bf16.msra.mxu0 0
      %1171 = vmatprep.subr.bf16.mxu0 0
      %1172 = vmatpush2.bf16.msra.mxu0 0
      %1173 = vmatprep.subr.bf16.mxu0 0
      %1174 = vmatpush2.bf16.msra.mxu0 0
      %1175 = vmatprep.subr.bf16.mxu0 0
      %1176 = vmatpush2.bf16.msra.mxu0 0
      %1177 = vmatprep.subr.bf16.mxu0 0
      %1178 = vmatpush2.bf16.msra.mxu0 0
      %1179 = vmatprep.subr.bf16.mxu0 0
      %1180 = vmatpush2.bf16.msra.mxu0 0
      %1181 = vmatprep.subr.bf16.mxu0 0
      %1182 = vmatpush2.bf16.msra.mxu0 0
      %1183 = vmatprep.mubr.bf16.mxu0 0
      %1184 = vmatmul.mubr.bf16.gmra.mxu0 %v1146
      %v1185 = vpop.f32.mrf.mxu0
      %v1186 = vadd.f32 %v1139, %v1185
      %v1187 = vpop.f32.mrf.mxu0
      %v1188 = vpop.f32.mrf.mxu0
      %v1189 = vadd.f32 %v1142, %v1188
      %v1190 = vpop.f32.mrf.mxu0
      %1191 = vdwg.mxu0
      %v1192 = vld [vmem:[%s4 + $0x170] sm:$0xff]
      %v1193 = vld [vmem:[%s4 + $0x178] sm:$0xff]
      %v1194 = vld [vmem:[%s4 + $0x180] sm:$0xff]
      %v1195 = vld [vmem:[%s4 + $0x188] sm:$0xff]
      %v1196 = vpack.c.bf16 %v1193, %v1192
      %v1197 = vpack.c.bf16 %v1195, %v1194
      %v1198 = vld [vmem:[%s4 + $0x190] sm:$0x1]
      %v1199 = vlaneseq
      %v1200 = vshrl.u32 %v1199, 7
      %v1201 = vsub.s32 0, %v1200
      %v1202 = vrot.slane %v1198, %v1201
      %1203 = vmatprep.subr.bf16.mxu0 0
      %1204 = vmatpush1.bf16.msra.mxu0 0
      %1205 = vmatprep.subr.bf16.mxu0 0
      %1206 = vmatpush1.bf16.msra.mxu0 0
      %1207 = vmatprep.subr.bf16.mxu0 0
      %1208 = vmatpush1.bf16.msra.mxu0 0
      %1209 = vmatprep.subr.bf16.mxu0 0
      %1210 = vmatpush1.bf16.msra.mxu0 0
      %1211 = vmatprep.subr.bf16.mxu0 0
      %1212 = vmatpush1.bf16.msra.mxu0 0
      %1213 = vmatprep.subr.bf16.mxu0 0
      %1214 = vmatpush1.bf16.msra.mxu0 0
      %1215 = vmatprep.subr.bf16.mxu0 0
      %1216 = vmatpush1.bf16.msra.mxu0 %v1197
      %1217 = vmatprep.subr.bf16.mxu0 0
      %1218 = vmatpush1.bf16.msra.mxu0 %v1196
      %1219 = vmatprep.subr.bf16.mxu0 0
      %1220 = vmatpush2.bf16.msra.mxu0 0
      %1221 = vmatprep.subr.bf16.mxu0 0
      %1222 = vmatpush2.bf16.msra.mxu0 0
      %1223 = vmatprep.subr.bf16.mxu0 0
      %1224 = vmatpush2.bf16.msra.mxu0 0
      %1225 = vmatprep.subr.bf16.mxu0 0
      %1226 = vmatpush2.bf16.msra.mxu0 0
      %1227 = vmatprep.subr.bf16.mxu0 0
      %1228 = vmatpush2.bf16.msra.mxu0 0
      %1229 = vmatprep.subr.bf16.mxu0 0
      %1230 = vmatpush2.bf16.msra.mxu0 0
      %1231 = vmatprep.subr.bf16.mxu0 0
      %1232 = vmatpush2.bf16.msra.mxu0 0
      %1233 = vmatprep.subr.bf16.mxu0 0
      %1234 = vmatpush2.bf16.msra.mxu0 0
      %1235 = vmatprep.mubr.bf16.mxu0 0
      %1236 = vmatmul.mubr.bf16.gmra.mxu0 %v548
      %v1237 = vpop.f32.mrf.mxu0
      %v1238 = vadd.f32 %v1202, %v1237
      %v1239 = vpop.f32.mrf.mxu0
      %v1240 = vpop.f32.mrf.mxu0
      %v1241 = vadd.f32 %v1202, %v1240
      %v1242 = vpop.f32.mrf.mxu0
      %1243 = vdwg.mxu0
      %v1244 = vld [vmem:[%s4 + $0x198] sm:$0xff]
      %v1245 = vld [vmem:[%s4 + $0x1a0] sm:$0xff]
      %v1246 = vld [vmem:[%s4 + $0x1a8] sm:$0xff]
      %v1247 = vld [vmem:[%s4 + $0x1b0] sm:$0xff]
      %v1248 = vpack.c.bf16 %v1245, %v1244
      %v1249 = vpack.c.bf16 %v1247, %v1246
      %v1250 = vld [vmem:[%s4 + $0x1b8] sm:$0x1]
      %v1251 = vlaneseq
      %v1252 = vshrl.u32 %v1251, 7
      %v1253 = vsub.s32 0, %v1252
      %v1254 = vrot.slane %v1250, %v1253
      %1255 = vmatprep.subr.bf16.mxu0 0
      %1256 = vmatpush1.bf16.msra.mxu0 0
      %1257 = vmatprep.subr.bf16.mxu0 0
      %1258 = vmatpush1.bf16.msra.mxu0 0
      %1259 = vmatprep.subr.bf16.mxu0 0
      %1260 = vmatpush1.bf16.msra.mxu0 0
      %1261 = vmatprep.subr.bf16.mxu0 0
      %1262 = vmatpush1.bf16.msra.mxu0 0
      %1263 = vmatprep.subr.bf16.mxu0 0
      %1264 = vmatpush1.bf16.msra.mxu0 0
      %1265 = vmatprep.subr.bf16.mxu0 0
      %1266 = vmatpush1.bf16.msra.mxu0 0
      %1267 = vmatprep.subr.bf16.mxu0 0
      %1268 = vmatpush1.bf16.msra.mxu0 %v1249
      %1269 = vmatprep.subr.bf16.mxu0 0
      %1270 = vmatpush1.bf16.msra.mxu0 %v1248
      %1271 = vmatprep.subr.bf16.mxu0 0
      %1272 = vmatpush2.bf16.msra.mxu0 0
      %1273 = vmatprep.subr.bf16.mxu0 0
      %1274 = vmatpush2.bf16.msra.mxu0 0
      %1275 = vmatprep.subr.bf16.mxu0 0
      %1276 = vmatpush2.bf16.msra.mxu0 0
      %1277 = vmatprep.subr.bf16.mxu0 0
      %1278 = vmatpush2.bf16.msra.mxu0 0
      %1279 = vmatprep.subr.bf16.mxu0 0
      %1280 = vmatpush2.bf16.msra.mxu0 0
      %1281 = vmatprep.subr.bf16.mxu0 0
      %1282 = vmatpush2.bf16.msra.mxu0 0
      %1283 = vmatprep.subr.bf16.mxu0 0
      %1284 = vmatpush2.bf16.msra.mxu0 0
      %1285 = vmatprep.subr.bf16.mxu0 0
      %1286 = vmatpush2.bf16.msra.mxu0 0
      %1287 = vmatprep.mubr.bf16.mxu0 0
      %1288 = vmatmul.mubr.bf16.gmra.mxu0 %v548
      %v1289 = vpop.f32.mrf.mxu0
      %v1290 = vadd.f32 %v1254, %v1289
      %v1291 = vpop.f32.mrf.mxu0
      %v1292 = vpop.f32.mrf.mxu0
      %v1293 = vadd.f32 %v1254, %v1292
      %v1294 = vpop.f32.mrf.mxu0
      %1295 = vdwg.mxu0
      %v1296 = vld [vmem:[%s4 + $0x1c0] sm:$0xff]
      %v1297 = vld [vmem:[%s4 + $0x1c8] sm:$0xff]
      %v1298 = vld [vmem:[%s4 + $0x1d0] sm:$0xff]
      %v1299 = vld [vmem:[%s4 + $0x1d8] sm:$0xff]
      %v1300 = vpack.c.bf16 %v1297, %v1296
      %v1301 = vpack.c.bf16 %v1299, %v1298
      %v1302 = vld [vmem:[%s4 + $0x1e0] sm:$0x1]
      %v1303 = vlaneseq
      %v1304 = vshrl.u32 %v1303, 7
      %v1305 = vsub.s32 0, %v1304
      %v1306 = vrot.slane %v1302, %v1305
      %1307 = vmatprep.subr.bf16.mxu0 0
      %1308 = vmatpush1.bf16.msra.mxu0 0
      %1309 = vmatprep.subr.bf16.mxu0 0
      %1310 = vmatpush1.bf16.msra.mxu0 0
      %1311 = vmatprep.subr.bf16.mxu0 0
      %1312 = vmatpush1.bf16.msra.mxu0 0
      %1313 = vmatprep.subr.bf16.mxu0 0
      %1314 = vmatpush1.bf16.msra.mxu0 0
      %1315 = vmatprep.subr.bf16.mxu0 0
      %1316 = vmatpush1.bf16.msra.mxu0 0
      %1317 = vmatprep.subr.bf16.mxu0 0
      %1318 = vmatpush1.bf16.msra.mxu0 0
      %1319 = vmatprep.subr.bf16.mxu0 0
      %1320 = vmatpush1.bf16.msra.mxu0 %v1301
      %1321 = vmatprep.subr.bf16.mxu0 0
      %1322 = vmatpush1.bf16.msra.mxu0 %v1300
      %1323 = vmatprep.subr.bf16.mxu0 0
      %1324 = vmatpush2.bf16.msra.mxu0 0
      %1325 = vmatprep.subr.bf16.mxu0 0
      %1326 = vmatpush2.bf16.msra.mxu0 0
      %1327 = vmatprep.subr.bf16.mxu0 0
      %1328 = vmatpush2.bf16.msra.mxu0 0
      %1329 = vmatprep.subr.bf16.mxu0 0
      %1330 = vmatpush2.bf16.msra.mxu0 0
      %1331 = vmatprep.subr.bf16.mxu0 0
      %1332 = vmatpush2.bf16.msra.mxu0 0
      %1333 = vmatprep.subr.bf16.mxu0 0
      %1334 = vmatpush2.bf16.msra.mxu0 0
      %1335 = vmatprep.subr.bf16.mxu0 0
      %1336 = vmatpush2.bf16.msra.mxu0 0
      %1337 = vmatprep.subr.bf16.mxu0 0
      %1338 = vmatpush2.bf16.msra.mxu0 0
      %1339 = vmatprep.mubr.bf16.mxu0 0
      %1340 = vmatmul.mubr.bf16.gmra.mxu0 %v548
      %v1341 = vpop.f32.mrf.mxu0
      %v1342 = vadd.f32 %v1306, %v1341
      %v1343 = vpop.f32.mrf.mxu0
      %v1344 = vpop.f32.mrf.mxu0
      %v1345 = vadd.f32 %v1306, %v1344
      %v1346 = vpop.f32.mrf.mxu0
      %1347 = vdwg.mxu0
      %v1348 = vpack.c.bf16 %v1241, %v1238
      %v1349 = vpack.c.bf16 %v1293, %v1290
      %v1351 = vsel %vm697, %v1348, 0
      %v1354 = vsel %vm697, %v1349, 0
      %1356 = vmatprep.subr.bf16.mxu0 0
      %1357 = vmatpush1.bf16.xpose.msra.mxu0 0
      %1358 = vmatprep.subr.bf16.mxu0 0
      %1359 = vmatpush1.bf16.xpose.msra.mxu0 0
      %1360 = vmatprep.subr.bf16.mxu0 0
      %1361 = vmatpush1.bf16.xpose.msra.mxu0 0
      %1362 = vmatprep.subr.bf16.mxu0 0
      %1363 = vmatpush1.bf16.xpose.msra.mxu0 0
      %1364 = vmatprep.subr.bf16.mxu0 0
      %1365 = vmatpush1.bf16.xpose.msra.mxu0 0
      %1366 = vmatprep.subr.bf16.mxu0 0
      %1367 = vmatpush1.bf16.xpose.msra.mxu0 0
      %1368 = vmatprep.subr.bf16.mxu0 0
      %1369 = vmatpush1.bf16.xpose.msra.mxu0 0
      %1370 = vmatprep.subr.bf16.mxu0 0
      %1371 = vmatpush1.bf16.xpose.msra.mxu0 %v1354
      %1372 = vmatprep.subr.bf16.mxu0 0
      %1373 = vmatpush2.bf16.xpose.msra.mxu0 0
      %1374 = vmatprep.subr.bf16.mxu0 0
      %1375 = vmatpush2.bf16.xpose.msra.mxu0 0
      %1376 = vmatprep.subr.bf16.mxu0 0
      %1377 = vmatpush2.bf16.xpose.msra.mxu0 0
      %1378 = vmatprep.subr.bf16.mxu0 0
      %1379 = vmatpush2.bf16.xpose.msra.mxu0 0
      %1380 = vmatprep.subr.bf16.mxu0 0
      %1381 = vmatpush2.bf16.xpose.msra.mxu0 0
      %1382 = vmatprep.subr.bf16.mxu0 0
      %1383 = vmatpush2.bf16.xpose.msra.mxu0 0
      %1384 = vmatprep.subr.bf16.mxu0 0
      %1385 = vmatpush2.bf16.xpose.msra.mxu0 0
      %1386 = vmatprep.subr.bf16.mxu0 0
      %1387 = vmatpush2.bf16.xpose.msra.mxu0 0
      %1388 = vmatprep.mubr.bf16.mxu0 0
      %1389 = vmatmul.mubr.bf16.gmra.mxu0 %v1351
      %v1390 = vpop.f32.mrf.mxu0
      %v1391 = vadd.f32 0.0, %v1390
      %v1392 = vpop.f32.mrf.mxu0
      %v1393 = vpop.f32.mrf.mxu0
      %v1394 = vadd.f32 0.0, %v1393
      %v1395 = vpop.f32.mrf.mxu0
      %1396 = vdwg.mxu0
      %v1397 = vmul.f32 %v1391, 0.35355338
      %v1398 = vmul.f32 %v1394, 0.35355338
      %v1399 = vsel %vm747, %v1397, -inf
      %1400 = vmax.xlane.f32.xlu0 %v1399
      %v1401 = vpop.xlane.xlu0 %1400
      %v1402 = vsel %vm747, %v1398, -inf
      %1403 = vmax.xlane.f32.xlu0 %v1402
      %v1404 = vpop.xlane.xlu0 %1403
      %v1405 = vsub.f32 %v1397, %v1401
      %v1406 = vsub.f32 %v1398, %v1404
      %v1407 = vmul.f32 %v1405, 1.442695
      %v1408 = vpow.pop %v1407
      %v1409 = vmul.f32 %v1406, 1.442695
      %v1410 = vpow.pop %v1409
      %v1411 = vsel %vm747, %v1408, 0.0
      %1412 = vadd.xlane.f32.xlu0 %v1411
      %v1413 = vpop.xlane.xlu0 %1412
      %v1414 = vsel %vm747, %v1410, 0.0
      %1415 = vadd.xlane.f32.xlu0 %v1414
      %v1416 = vpop.xlane.xlu0 %1415
      %v1417 = vrcp.pop %v1413
      %v1418 = vrcp.pop %v1416
      %v1419 = vmul.f32 %v1408, %v1417
      %v1420 = vmul.f32 %v1410, %v1418
      %v1421 = vpack.c.bf16 %v1420, %v1419
      %v1422 = vpack.c.bf16 %v1345, %v1342
      %v1424 = vsel %vm747, %v1421, 0
      %1426 = vmatprep.subr.bf16.mxu0 0
      %1427 = vmatpush1.bf16.msra.mxu0 0
      %1428 = vmatprep.subr.bf16.mxu0 0
      %1429 = vmatpush1.bf16.msra.mxu0 0
      %1430 = vmatprep.subr.bf16.mxu0 0
      %1431 = vmatpush1.bf16.msra.mxu0 0
      %1432 = vmatprep.subr.bf16.mxu0 0
      %1433 = vmatpush1.bf16.msra.mxu0 0
      %1434 = vmatprep.subr.bf16.mxu0 0
      %1435 = vmatpush1.bf16.msra.mxu0 0
      %1436 = vmatprep.subr.bf16.mxu0 0
      %1437 = vmatpush1.bf16.msra.mxu0 0
      %1438 = vmatprep.subr.bf16.mxu0 0
      %1439 = vmatpush1.bf16.msra.mxu0 0
      %1440 = vmatprep.subr.bf16.mxu0 0
      %1441 = vmatpush1.bf16.msra.mxu0 %v1422
      %1442 = vmatprep.subr.bf16.mxu0 0
      %1443 = vmatpush2.bf16.msra.mxu0 0
      %1444 = vmatprep.subr.bf16.mxu0 0
      %1445 = vmatpush2.bf16.msra.mxu0 0
      %1446 = vmatprep.subr.bf16.mxu0 0
      %1447 = vmatpush2.bf16.msra.mxu0 0
      %1448 = vmatprep.subr.bf16.mxu0 0
      %1449 = vmatpush2.bf16.msra.mxu0 0
      %1450 = vmatprep.subr.bf16.mxu0 0
      %1451 = vmatpush2.bf16.msra.mxu0 0
      %1452 = vmatprep.subr.bf16.mxu0 0
      %1453 = vmatpush2.bf16.msra.mxu0 0
      %1454 = vmatprep.subr.bf16.mxu0 0
      %1455 = vmatpush2.bf16.msra.mxu0 0
      %1456 = vmatprep.subr.bf16.mxu0 0
      %1457 = vmatpush2.bf16.msra.mxu0 0
      %1458 = vmatprep.mubr.bf16.mxu0 0
      %1459 = vmatmul.mubr.bf16.gmra.mxu0 %v1424
      %v1460 = vpop.f32.mrf.mxu0
      %v1461 = vadd.f32 0.0, %v1460
      %v1462 = vpop.f32.mrf.mxu0
      %v1463 = vpop.f32.mrf.mxu0
      %v1464 = vadd.f32 0.0, %v1463
      %v1465 = vpop.f32.mrf.mxu0
      %1466 = vdwg.mxu0
      %v1467 = vld [vmem:[%s4 + $0x1e8] sm:$0xff]
      %v1468 = vpack.c.bf16 %v1464, %v1461
      %v1469 = vpack.c.bf16 %v1467, %v1467
      %v1471 = vsel %vm697, %v1468, 0
      %v1474 = vsel %vm1100, %v1469, 0
      %1476 = vmatprep.subr.bf16.mxu0 0
      %1477 = vmatpush1.bf16.msra.mxu0 0
      %1478 = vmatprep.subr.bf16.mxu0 0
      %1479 = vmatpush1.bf16.msra.mxu0 0
      %1480 = vmatprep.subr.bf16.mxu0 0
      %1481 = vmatpush1.bf16.msra.mxu0 0
      %1482 = vmatprep.subr.bf16.mxu0 0
      %1483 = vmatpush1.bf16.msra.mxu0 0
      %1484 = vmatprep.subr.bf16.mxu0 0
      %1485 = vmatpush1.bf16.msra.mxu0 0
      %1486 = vmatprep.subr.bf16.mxu0 0
      %1487 = vmatpush1.bf16.msra.mxu0 0
      %1488 = vmatprep.subr.bf16.mxu0 0
      %1489 = vmatpush1.bf16.msra.mxu0 0
      %1490 = vmatprep.subr.bf16.mxu0 0
      %1491 = vmatpush1.bf16.msra.mxu0 %v1474
      %1492 = vmatprep.subr.bf16.mxu0 0
      %1493 = vmatpush2.bf16.msra.mxu0 0
      %1494 = vmatprep.subr.bf16.mxu0 0
      %1495 = vmatpush2.bf16.msra.mxu0 0
      %1496 = vmatprep.subr.bf16.mxu0 0
      %1497 = vmatpush2.bf16.msra.mxu0 0
      %1498 = vmatprep.subr.bf16.mxu0 0
      %1499 = vmatpush2.bf16.msra.mxu0 0
      %1500 = vmatprep.subr.bf16.mxu0 0
      %1501 = vmatpush2.bf16.msra.mxu0 0
      %1502 = vmatprep.subr.bf16.mxu0 0
      %1503 = vmatpush2.bf16.msra.mxu0 0
      %1504 = vmatprep.subr.bf16.mxu0 0
      %1505 = vmatpush2.bf16.msra.mxu0 0
      %1506 = vmatprep.subr.bf16.mxu0 0
      %1507 = vmatpush2.bf16.msra.mxu0 0
      %1508 = vmatprep.mubr.bf16.mxu0 0
      %1509 = vmatmul.mubr.bf16.gmra.mxu0 %v1471
      %v1510 = vpop.f32.mrf.mxu0
      %v1511 = vadd.f32 0.0, %v1510
      %v1512 = vpop.f32.mrf.mxu0
      %v1513 = vpop.f32.mrf.mxu0
      %v1514 = vadd.f32 0.0, %v1513
      %v1515 = vpop.f32.mrf.mxu0
      %1516 = vdwg.mxu0
      %v1517 = vadd.f32 %v1186, %v1511
      %v1518 = vadd.f32 %v1189, %v1514
      %v1519 = vld [vmem:[%s4 + $0x1f0] sm:$0xff]
      %v1520 = vld [vmem:[%s4 + $0x1f8] sm:$0xff]
      %v1521 = vld [vmem:[%s4 + $0x200] sm:$0xff]
      %v1522 = vld [vmem:[%s4 + $0x208] sm:$0xff]
      %v1523 = vpack.c.bf16 %v1520, %v1519
      %v1524 = vpack.c.bf16 %v1522, %v1521
      %v1525 = vld [vmem:[%s4 + $0x210] sm:$0x1]
      %v1526 = vlaneseq
      %v1527 = vshrl.u32 %v1526, 7
      %v1528 = vsub.s32 0, %v1527
      %v1529 = vrot.slane %v1525, %v1528
      %1530 = vmatprep.subr.bf16.mxu0 0
      %1531 = vmatpush1.bf16.msra.mxu0 0
      %1532 = vmatprep.subr.bf16.mxu0 0
      %1533 = vmatpush1.bf16.msra.mxu0 0
      %1534 = vmatprep.subr.bf16.mxu0 0
      %1535 = vmatpush1.bf16.msra.mxu0 0
      %1536 = vmatprep.subr.bf16.mxu0 0
      %1537 = vmatpush1.bf16.msra.mxu0 0
      %1538 = vmatprep.subr.bf16.mxu0 0
      %1539 = vmatpush1.bf16.msra.mxu0 0
      %1540 = vmatprep.subr.bf16.mxu0 0
      %1541 = vmatpush1.bf16.msra.mxu0 0
      %1542 = vmatprep.subr.bf16.mxu0 0
      %1543 = vmatpush1.bf16.msra.mxu0 %v1524
      %1544 = vmatprep.subr.bf16.mxu0 0
      %1545 = vmatpush1.bf16.msra.mxu0 %v1523
      %1546 = vmatprep.subr.bf16.mxu0 0
      %1547 = vmatpush2.bf16.msra.mxu0 0
      %1548 = vmatprep.subr.bf16.mxu0 0
      %1549 = vmatpush2.bf16.msra.mxu0 0
      %1550 = vmatprep.subr.bf16.mxu0 0
      %1551 = vmatpush2.bf16.msra.mxu0 0
      %1552 = vmatprep.subr.bf16.mxu0 0
      %1553 = vmatpush2.bf16.msra.mxu0 0
      %1554 = vmatprep.subr.bf16.mxu0 0
      %1555 = vmatpush2.bf16.msra.mxu0 0
      %1556 = vmatprep.subr.bf16.mxu0 0
      %1557 = vmatpush2.bf16.msra.mxu0 0
      %1558 = vmatprep.subr.bf16.mxu0 0
      %1559 = vmatpush2.bf16.msra.mxu0 0
      %1560 = vmatprep.subr.bf16.mxu0 0
      %1561 = vmatpush2.bf16.msra.mxu0 0
      %1562 = vmatprep.mubr.bf16.mxu0 0
      %1563 = vmatmul.mubr.bf16.gmra.mxu0 %v548
      %v1564 = vpop.f32.mrf.mxu0
      %v1565 = vadd.f32 %v1529, %v1564
      %v1566 = vpop.f32.mrf.mxu0
      %v1567 = vpop.f32.mrf.mxu0
      %v1568 = vadd.f32 %v1529, %v1567
      %v1569 = vpop.f32.mrf.mxu0
      %1570 = vdwg.mxu0
      %v1571 = vld [vmem:[%s4 + $0x218] sm:$0xff]
      %v1572 = vld [vmem:[%s4 + $0x220] sm:$0xff]
      %v1573 = vld [vmem:[%s4 + $0x228] sm:$0xff]
      %v1574 = vld [vmem:[%s4 + $0x230] sm:$0xff]
      %v1575 = vpack.c.bf16 %v1572, %v1571
      %v1576 = vpack.c.bf16 %v1574, %v1573
      %v1577 = vld [vmem:[%s4 + $0x238] sm:$0x1]
      %v1578 = vlaneseq
      %v1579 = vshrl.u32 %v1578, 7
      %v1580 = vsub.s32 0, %v1579
      %v1581 = vrot.slane %v1577, %v1580
      %1582 = vmatprep.subr.bf16.mxu0 0
      %1583 = vmatpush1.bf16.msra.mxu0 0
      %1584 = vmatprep.subr.bf16.mxu0 0
      %1585 = vmatpush1.bf16.msra.mxu0 0
      %1586 = vmatprep.subr.bf16.mxu0 0
      %1587 = vmatpush1.bf16.msra.mxu0 0
      %1588 = vmatprep.subr.bf16.mxu0 0
      %1589 = vmatpush1.bf16.msra.mxu0 0
      %1590 = vmatprep.subr.bf16.mxu0 0
      %1591 = vmatpush1.bf16.msra.mxu0 0
      %1592 = vmatprep.subr.bf16.mxu0 0
      %1593 = vmatpush1.bf16.msra.mxu0 0
      %1594 = vmatprep.subr.bf16.mxu0 0
      %1595 = vmatpush1.bf16.msra.mxu0 %v1576
      %1596 = vmatprep.subr.bf16.mxu0 0
      %1597 = vmatpush1.bf16.msra.mxu0 %v1575
      %1598 = vmatprep.subr.bf16.mxu0 0
      %1599 = vmatpush2.bf16.msra.mxu0 0
      %1600 = vmatprep.subr.bf16.mxu0 0
      %1601 = vmatpush2.bf16.msra.mxu0 0
      %1602 = vmatprep.subr.bf16.mxu0 0
      %1603 = vmatpush2.bf16.msra.mxu0 0
      %1604 = vmatprep.subr.bf16.mxu0 0
      %1605 = vmatpush2.bf16.msra.mxu0 0
      %1606 = vmatprep.subr.bf16.mxu0 0
      %1607 = vmatpush2.bf16.msra.mxu0 0
      %1608 = vmatprep.subr.bf16.mxu0 0
      %1609 = vmatpush2.bf16.msra.mxu0 0
      %1610 = vmatprep.subr.bf16.mxu0 0
      %1611 = vmatpush2.bf16.msra.mxu0 0
      %1612 = vmatprep.subr.bf16.mxu0 0
      %1613 = vmatpush2.bf16.msra.mxu0 0
      %1614 = vmatprep.mubr.bf16.mxu0 0
      %1615 = vmatmul.mubr.bf16.gmra.mxu0 %v548
      %v1616 = vpop.f32.mrf.mxu0
      %v1617 = vadd.f32 %v1581, %v1616
      %v1618 = vpop.f32.mrf.mxu0
      %v1619 = vpop.f32.mrf.mxu0
      %v1620 = vadd.f32 %v1581, %v1619
      %v1621 = vpop.f32.mrf.mxu0
      %1622 = vdwg.mxu0
      %v1623 = vld [vmem:[%s4 + $0x240] sm:$0xff]
      %v1624 = vld [vmem:[%s4 + $0x248] sm:$0xff]
      %v1625 = vld [vmem:[%s4 + $0x250] sm:$0xff]
      %v1626 = vld [vmem:[%s4 + $0x258] sm:$0xff]
      %v1627 = vpack.c.bf16 %v1624, %v1623
      %v1628 = vpack.c.bf16 %v1626, %v1625
      %v1629 = vld [vmem:[%s4 + $0x260] sm:$0x1]
      %v1630 = vlaneseq
      %v1631 = vshrl.u32 %v1630, 7
      %v1632 = vsub.s32 0, %v1631
      %v1633 = vrot.slane %v1629, %v1632
      %1634 = vmatprep.subr.bf16.mxu0 0
      %1635 = vmatpush1.bf16.msra.mxu0 0
      %1636 = vmatprep.subr.bf16.mxu0 0
      %1637 = vmatpush1.bf16.msra.mxu0 0
      %1638 = vmatprep.subr.bf16.mxu0 0
      %1639 = vmatpush1.bf16.msra.mxu0 0
      %1640 = vmatprep.subr.bf16.mxu0 0
      %1641 = vmatpush1.bf16.msra.mxu0 0
      %1642 = vmatprep.subr.bf16.mxu0 0
      %1643 = vmatpush1.bf16.msra.mxu0 0
      %1644 = vmatprep.subr.bf16.mxu0 0
      %1645 = vmatpush1.bf16.msra.mxu0 0
      %1646 = vmatprep.subr.bf16.mxu0 0
      %1647 = vmatpush1.bf16.msra.mxu0 %v1628
      %1648 = vmatprep.subr.bf16.mxu0 0
      %1649 = vmatpush1.bf16.msra.mxu0 %v1627
      %1650 = vmatprep.subr.bf16.mxu0 0
      %1651 = vmatpush2.bf16.msra.mxu0 0
      %1652 = vmatprep.subr.bf16.mxu0 0
      %1653 = vmatpush2.bf16.msra.mxu0 0
      %1654 = vmatprep.subr.bf16.mxu0 0
      %1655 = vmatpush2.bf16.msra.mxu0 0
      %1656 = vmatprep.subr.bf16.mxu0 0
      %1657 = vmatpush2.bf16.msra.mxu0 0
      %1658 = vmatprep.subr.bf16.mxu0 0
      %1659 = vmatpush2.bf16.msra.mxu0 0
      %1660 = vmatprep.subr.bf16.mxu0 0
      %1661 = vmatpush2.bf16.msra.mxu0 0
      %1662 = vmatprep.subr.bf16.mxu0 0
      %1663 = vmatpush2.bf16.msra.mxu0 0
      %1664 = vmatprep.subr.bf16.mxu0 0
      %1665 = vmatpush2.bf16.msra.mxu0 0
      %1666 = vmatprep.mubr.bf16.mxu0 0
      %1667 = vmatmul.mubr.bf16.gmra.mxu0 %v548
      %v1668 = vpop.f32.mrf.mxu0
      %v1669 = vadd.f32 %v1633, %v1668
      %v1670 = vpop.f32.mrf.mxu0
      %v1671 = vpop.f32.mrf.mxu0
      %v1672 = vadd.f32 %v1633, %v1671
      %v1673 = vpop.f32.mrf.mxu0
      %1674 = vdwg.mxu0
      %v1675 = vpack.c.bf16 %v1568, %v1565
      %v1676 = vpack.c.bf16 %v1620, %v1617
      %v1678 = vsel %vm697, %v1675, 0
      %v1681 = vsel %vm697, %v1676, 0
      %1683 = vmatprep.subr.bf16.mxu0 0
      %1684 = vmatpush1.bf16.xpose.msra.mxu0 0
      %1685 = vmatprep.subr.bf16.mxu0 0
      %1686 = vmatpush1.bf16.xpose.msra.mxu0 0
      %1687 = vmatprep.subr.bf16.mxu0 0
      %1688 = vmatpush1.bf16.xpose.msra.mxu0 0
      %1689 = vmatprep.subr.bf16.mxu0 0
      %1690 = vmatpush1.bf16.xpose.msra.mxu0 0
      %1691 = vmatprep.subr.bf16.mxu0 0
      %1692 = vmatpush1.bf16.xpose.msra.mxu0 0
      %1693 = vmatprep.subr.bf16.mxu0 0
      %1694 = vmatpush1.bf16.xpose.msra.mxu0 0
      %1695 = vmatprep.subr.bf16.mxu0 0
      %1696 = vmatpush1.bf16.xpose.msra.mxu0 0
      %1697 = vmatprep.subr.bf16.mxu0 0
      %1698 = vmatpush1.bf16.xpose.msra.mxu0 %v1681
      %1699 = vmatprep.subr.bf16.mxu0 0
      %1700 = vmatpush2.bf16.xpose.msra.mxu0 0
      %1701 = vmatprep.subr.bf16.mxu0 0
      %1702 = vmatpush2.bf16.xpose.msra.mxu0 0
      %1703 = vmatprep.subr.bf16.mxu0 0
      %1704 = vmatpush2.bf16.xpose.msra.mxu0 0
      %1705 = vmatprep.subr.bf16.mxu0 0
      %1706 = vmatpush2.bf16.xpose.msra.mxu0 0
      %1707 = vmatprep.subr.bf16.mxu0 0
      %1708 = vmatpush2.bf16.xpose.msra.mxu0 0
      %1709 = vmatprep.subr.bf16.mxu0 0
      %1710 = vmatpush2.bf16.xpose.msra.mxu0 0
      %1711 = vmatprep.subr.bf16.mxu0 0
      %1712 = vmatpush2.bf16.xpose.msra.mxu0 0
      %1713 = vmatprep.subr.bf16.mxu0 0
      %1714 = vmatpush2.bf16.xpose.msra.mxu0 0
      %1715 = vmatprep.mubr.bf16.mxu0 0
      %1716 = vmatmul.mubr.bf16.gmra.mxu0 %v1678
      %v1717 = vpop.f32.mrf.mxu0
      %v1718 = vadd.f32 0.0, %v1717
      %v1719 = vpop.f32.mrf.mxu0
      %v1720 = vpop.f32.mrf.mxu0
      %v1721 = vadd.f32 0.0, %v1720
      %v1722 = vpop.f32.mrf.mxu0
      %1723 = vdwg.mxu0
      %v1724 = vmul.f32 %v1718, 0.35355338
      %v1725 = vmul.f32 %v1721, 0.35355338
      %v1726 = vsel %vm747, %v1724, -inf
      %1727 = vmax.xlane.f32.xlu0 %v1726
      %v1728 = vpop.xlane.xlu0 %1727
      %v1729 = vsel %vm747, %v1725, -inf
      %1730 = vmax.xlane.f32.xlu0 %v1729
      %v1731 = vpop.xlane.xlu0 %1730
      %v1732 = vsub.f32 %v1724, %v1728
      %v1733 = vsub.f32 %v1725, %v1731
      %v1734 = vmul.f32 %v1732, 1.442695
      %v1735 = vpow.pop %v1734
      %v1736 = vmul.f32 %v1733, 1.442695
      %v1737 = vpow.pop %v1736
      %v1738 = vsel %vm747, %v1735, 0.0
      %1739 = vadd.xlane.f32.xlu0 %v1738
      %v1740 = vpop.xlane.xlu0 %1739
      %v1741 = vsel %vm747, %v1737, 0.0
      %1742 = vadd.xlane.f32.xlu0 %v1741
      %v1743 = vpop.xlane.xlu0 %1742
      %v1744 = vrcp.pop %v1740
      %v1745 = vrcp.pop %v1743
      %v1746 = vmul.f32 %v1735, %v1744
      %v1747 = vmul.f32 %v1737, %v1745
      %v1748 = vpack.c.bf16 %v1747, %v1746
      %v1749 = vpack.c.bf16 %v1672, %v1669
      %v1751 = vsel %vm747, %v1748, 0
      %1753 = vmatprep.subr.bf16.mxu0 0
      %1754 = vmatpush1.bf16.msra.mxu0 0
      %1755 = vmatprep.subr.bf16.mxu0 0
      %1756 = vmatpush1.bf16.msra.mxu0 0
      %1757 = vmatprep.subr.bf16.mxu0 0
      %1758 = vmatpush1.bf16.msra.mxu0 0
      %1759 = vmatprep.subr.bf16.mxu0 0
      %1760 = vmatpush1.bf16.msra.mxu0 0
      %1761 = vmatprep.subr.bf16.mxu0 0
      %1762 = vmatpush1.bf16.msra.mxu0 0
      %1763 = vmatprep.subr.bf16.mxu0 0
      %1764 = vmatpush1.bf16.msra.mxu0 0
      %1765 = vmatprep.subr.bf16.mxu0 0
      %1766 = vmatpush1.bf16.msra.mxu0 0
      %1767 = vmatprep.subr.bf16.mxu0 0
      %1768 = vmatpush1.bf16.msra.mxu0 %v1749
      %1769 = vmatprep.subr.bf16.mxu0 0
      %1770 = vmatpush2.bf16.msra.mxu0 0
      %1771 = vmatprep.subr.bf16.mxu0 0
      %1772 = vmatpush2.bf16.msra.mxu0 0
      %1773 = vmatprep.subr.bf16.mxu0 0
      %1774 = vmatpush2.bf16.msra.mxu0 0
      %1775 = vmatprep.subr.bf16.mxu0 0
      %1776 = vmatpush2.bf16.msra.mxu0 0
      %1777 = vmatprep.subr.bf16.mxu0 0
      %1778 = vmatpush2.bf16.msra.mxu0 0
      %1779 = vmatprep.subr.bf16.mxu0 0
      %1780 = vmatpush2.bf16.msra.mxu0 0
      %1781 = vmatprep.subr.bf16.mxu0 0
      %1782 = vmatpush2.bf16.msra.mxu0 0
      %1783 = vmatprep.subr.bf16.mxu0 0
      %1784 = vmatpush2.bf16.msra.mxu0 0
      %1785 = vmatprep.mubr.bf16.mxu0 0
      %1786 = vmatmul.mubr.bf16.gmra.mxu0 %v1751
      %v1787 = vpop.f32.mrf.mxu0
      %v1788 = vadd.f32 0.0, %v1787
      %v1789 = vpop.f32.mrf.mxu0
      %v1790 = vpop.f32.mrf.mxu0
      %v1791 = vadd.f32 0.0, %v1790
      %v1792 = vpop.f32.mrf.mxu0
      %1793 = vdwg.mxu0
      %v1794 = vld [vmem:[%s4 + $0x268] sm:$0xff]
      %v1795 = vpack.c.bf16 %v1791, %v1788
      %v1796 = vpack.c.bf16 %v1794, %v1794
      %v1798 = vsel %vm697, %v1795, 0
      %v1801 = vsel %vm1100, %v1796, 0
      %1803 = vmatprep.subr.bf16.mxu0 0
      %1804 = vmatpush1.bf16.msra.mxu0 0
      %1805 = vmatprep.subr.bf16.mxu0 0
      %1806 = vmatpush1.bf16.msra.mxu0 0
      %1807 = vmatprep.subr.bf16.mxu0 0
      %1808 = vmatpush1.bf16.msra.mxu0 0
      %1809 = vmatprep.subr.bf16.mxu0 0
      %1810 = vmatpush1.bf16.msra.mxu0 0
      %1811 = vmatprep.subr.bf16.mxu0 0
      %1812 = vmatpush1.bf16.msra.mxu0 0
      %1813 = vmatprep.subr.bf16.mxu0 0
      %1814 = vmatpush1.bf16.msra.mxu0 0
      %1815 = vmatprep.subr.bf16.mxu0 0
      %1816 = vmatpush1.bf16.msra.mxu0 0
      %1817 = vmatprep.subr.bf16.mxu0 0
      %1818 = vmatpush1.bf16.msra.mxu0 %v1801
      %1819 = vmatprep.subr.bf16.mxu0 0
      %1820 = vmatpush2.bf16.msra.mxu0 0
      %1821 = vmatprep.subr.bf16.mxu0 0
      %1822 = vmatpush2.bf16.msra.mxu0 0
      %1823 = vmatprep.subr.bf16.mxu0 0
      %1824 = vmatpush2.bf16.msra.mxu0 0
      %1825 = vmatprep.subr.bf16.mxu0 0
      %1826 = vmatpush2.bf16.msra.mxu0 0
      %1827 = vmatprep.subr.bf16.mxu0 0
      %1828 = vmatpush2.bf16.msra.mxu0 0
      %1829 = vmatprep.subr.bf16.mxu0 0
      %1830 = vmatpush2.bf16.msra.mxu0 0
      %1831 = vmatprep.subr.bf16.mxu0 0
      %1832 = vmatpush2.bf16.msra.mxu0 0
      %1833 = vmatprep.subr.bf16.mxu0 0
      %1834 = vmatpush2.bf16.msra.mxu0 0
      %1835 = vmatprep.mubr.bf16.mxu0 0
      %1836 = vmatmul.mubr.bf16.gmra.mxu0 %v1798
      %v1837 = vpop.f32.mrf.mxu0
      %v1838 = vadd.f32 0.0, %v1837
      %v1839 = vpop.f32.mrf.mxu0
      %v1840 = vpop.f32.mrf.mxu0
      %v1841 = vadd.f32 0.0, %v1840
      %v1842 = vpop.f32.mrf.mxu0
      %1843 = vdwg.mxu0
      %v1844 = vadd.f32 %v1517, %v1838
      %v1845 = vadd.f32 %v1518, %v1841
      %v1846 = vld [vmem:[%s4 + $0x270] sm:$0x1]
      %v1847 = vlaneseq
      %v1848 = vshrl.u32 %v1847, 7
      %v1849 = vsub.s32 0, %v1848
      %v1850 = vrot.slane %v1846, %v1849
      %v1851 = vadd.f32 %v1844, %v1850
      %v1852 = vadd.f32 %v1845, %v1850
      %v1853 = vadd.f32 %v532, %v1851
      %v1854 = vadd.f32 %v533, %v1852
      %v1855 = vsel %vm546, %v1853, 0.0
      %1856 = vadd.xlane.f32.xlu0 %v1855
      %v1857 = vpop.xlane.xlu0 %1856
      %v1858 = vsel %vm546, %v1854, 0.0
      %1859 = vadd.xlane.f32.xlu0 %v1858
      %v1860 = vpop.xlane.xlu0 %1859
      %v1861 = vrcp.pop 32.0
      %v1862 = vmul.f32 %v1857, %v1861
      %v1863 = vmul.f32 %v1860, %v1861
      %v1864 = vsub.f32 %v1853, %v1862
      %v1865 = vsub.f32 %v1854, %v1863
      %v1866 = vmul.f32 %v1864, %v1864
      %v1867 = vmul.f32 %v1865, %v1865
      %v1868 = vsel %vm546, %v1866, 0.0
      %1869 = vadd.xlane.f32.xlu0 %v1868
      %v1870 = vpop.xlane.xlu0 %1869
      %v1871 = vsel %vm546, %v1867, 0.0
      %1872 = vadd.xlane.f32.xlu0 %v1871
      %v1873 = vpop.xlane.xlu0 %1872
      %v1874 = vmul.f32 %v1870, %v1861
      %v1875 = vmul.f32 %v1873, %v1861
      %v1876 = vadd.f32 %v1874, 1e-05
      %v1877 = vadd.f32 %v1875, 1e-05
      %v1878 = vrsqrt.pop %v1876
      %v1879 = vrsqrt.pop %v1877
      %v1880 = vmul.f32 %v1864, %v1878
      %v1881 = vmul.f32 %v1865, %v1879
      %v1882 = vld [vmem:[%s4 + $0x2e8] sm:$0x1]
      %v1883 = vlaneseq
      %v1884 = vshrl.u32 %v1883, 7
      %v1885 = vsub.s32 0, %v1884
      %v1886 = vrot.slane %v1882, %v1885
      %v1887 = vmul.f32 %v1880, %v1886
      %v1888 = vmul.f32 %v1881, %v1886
      %v1889 = vld [vmem:[%s4 + $0x2f0] sm:$0x1]
      %v1890 = vlaneseq
      %v1891 = vshrl.u32 %v1890, 7
      %v1892 = vsub.s32 0, %v1891
      %v1893 = vrot.slane %v1889, %v1892
      %v1894 = vadd.f32 %v1887, %v1893
      %v1895 = vadd.f32 %v1888, %v1893
      %v1896 = vld [vmem:[%s4 + $0x278] sm:$0xff]
      %v1897 = vld [vmem:[%s4 + $0x280] sm:$0xff]
      %v1898 = vld [vmem:[%s4 + $0x288] sm:$0xff]
      %v1899 = vld [vmem:[%s4 + $0x290] sm:$0xff]
      %v1900 = vpack.c.bf16 %v1895, %v1894
      %v1901 = vpack.c.bf16 %v1897, %v1896
      %v1902 = vpack.c.bf16 %v1899, %v1898
      %v1903 = vld [vmem:[%s4 + $0x298] sm:$0x1]
      %v1904 = vlaneseq
      %v1905 = vshrl.u32 %v1904, 7
      %v1906 = vsub.s32 0, %v1905
      %v1907 = vrot.slane %v1903, %v1906
      %v1909 = vsel %vm546, %v1900, 0
      %1911 = vmatprep.subr.bf16.mxu0 0
      %1912 = vmatpush1.bf16.msra.mxu0 0
      %1913 = vmatprep.subr.bf16.mxu0 0
      %1914 = vmatpush1.bf16.msra.mxu0 0
      %1915 = vmatprep.subr.bf16.mxu0 0
      %1916 = vmatpush1.bf16.msra.mxu0 0
      %1917 = vmatprep.subr.bf16.mxu0 0
      %1918 = vmatpush1.bf16.msra.mxu0 0
      %1919 = vmatprep.subr.bf16.mxu0 0
      %1920 = vmatpush1.bf16.msra.mxu0 0
      %1921 = vmatprep.subr.bf16.mxu0 0
      %1922 = vmatpush1.bf16.msra.mxu0 0
      %1923 = vmatprep.subr.bf16.mxu0 0
      %1924 = vmatpush1.bf16.msra.mxu0 %v1902
      %1925 = vmatprep.subr.bf16.mxu0 0
      %1926 = vmatpush1.bf16.msra.mxu0 %v1901
      %1927 = vmatprep.subr.bf16.mxu0 0
      %1928 = vmatpush2.bf16.msra.mxu0 0
      %1929 = vmatprep.subr.bf16.mxu0 0
      %1930 = vmatpush2.bf16.msra.mxu0 0
      %1931 = vmatprep.subr.bf16.mxu0 0
      %1932 = vmatpush2.bf16.msra.mxu0 0
      %1933 = vmatprep.subr.bf16.mxu0 0
      %1934 = vmatpush2.bf16.msra.mxu0 0
      %1935 = vmatprep.subr.bf16.mxu0 0
      %1936 = vmatpush2.bf16.msra.mxu0 0
      %1937 = vmatprep.subr.bf16.mxu0 0
      %1938 = vmatpush2.bf16.msra.mxu0 0
      %1939 = vmatprep.subr.bf16.mxu0 0
      %1940 = vmatpush2.bf16.msra.mxu0 0
      %1941 = vmatprep.subr.bf16.mxu0 0
      %1942 = vmatpush2.bf16.msra.mxu0 0
      %1943 = vmatprep.mubr.bf16.mxu0 0
      %1944 = vmatmul.mubr.bf16.gmra.mxu0 %v1909
      %v1945 = vpop.f32.mrf.mxu0
      %v1946 = vadd.f32 %v1907, %v1945
      %v1947 = vpop.f32.mrf.mxu0
      %v1948 = vpop.f32.mrf.mxu0
      %v1949 = vadd.f32 %v1907, %v1948
      %v1950 = vpop.f32.mrf.mxu0
      %1951 = vdwg.mxu0
      %v1952 = vmax.f32 %v1946, 0.0
      %v1953 = vmax.f32 %v1949, 0.0
      %v1954 = vld [vmem:[%s4 + $0x2a0] sm:$0xff]
      %v1955 = vld [vmem:[%s4 + $0x2a8] sm:$0xff]
      %v1956 = vld [vmem:[%s4 + $0x2b0] sm:$0xff]
      %v1957 = vld [vmem:[%s4 + $0x2b8] sm:$0xff]
      %v1958 = vld [vmem:[%s4 + $0x2c0] sm:$0xff]
      %v1959 = vld [vmem:[%s4 + $0x2c8] sm:$0xff]
      %v1960 = vld [vmem:[%s4 + $0x2d0] sm:$0xff]
      %v1961 = vld [vmem:[%s4 + $0x2d8] sm:$0xff]
      %v1962 = vpack.c.bf16 %v1953, %v1952
      %v1963 = vpack.c.bf16 %v1955, %v1954
      %v1964 = vpack.c.bf16 %v1957, %v1956
      %v1965 = vpack.c.bf16 %v1959, %v1958
      %v1966 = vpack.c.bf16 %v1961, %v1960
      %v1967 = vld [vmem:[%s4 + $0x2e0] sm:$0x1]
      %v1968 = vlaneseq
      %v1969 = vshrl.u32 %v1968, 7
      %v1970 = vsub.s32 0, %v1969
      %v1971 = vrot.slane %v1967, %v1970
      %vm1972 = vcmask 523264
      %v1974 = vsel %vm1972, %v1962, 0
      %1976 = vmatprep.subr.bf16.mxu0 0
      %1977 = vmatpush1.bf16.msra.mxu0 0
      %1978 = vmatprep.subr.bf16.mxu0 0
      %1979 = vmatpush1.bf16.msra.mxu0 0
      %1980 = vmatprep.subr.bf16.mxu0 0
      %1981 = vmatpush1.bf16.msra.mxu0 0
      %1982 = vmatprep.subr.bf16.mxu0 0
      %1983 = vmatpush1.bf16.msra.mxu0 0
      %1984 = vmatprep.subr.bf16.mxu0 0
      %1985 = vmatpush1.bf16.msra.mxu0 %v1966
      %1986 = vmatprep.subr.bf16.mxu0 0
      %1987 = vmatpush1.bf16.msra.mxu0 %v1965
      %1988 = vmatprep.subr.bf16.mxu0 0
      %1989 = vmatpush1.bf16.msra.mxu0 %v1964
      %1990 = vmatprep.subr.bf16.mxu0 0
      %1991 = vmatpush1.bf16.msra.mxu0 %v1963
      %1992 = vmatprep.subr.bf16.mxu0 0
      %1993 = vmatpush2.bf16.msra.mxu0 0
      %1994 = vmatprep.subr.bf16.mxu0 0
      %1995 = vmatpush2.bf16.msra.mxu0 0
      %1996 = vmatprep.subr.bf16.mxu0 0
      %1997 = vmatpush2.bf16.msra.mxu0 0
      %1998 = vmatprep.subr.bf16.mxu0 0
      %1999 = vmatpush2.bf16.msra.mxu0 0
      %2000 = vmatprep.subr.bf16.mxu0 0
      %2001 = vmatpush2.bf16.msra.mxu0 0
      %2002 = vmatprep.subr.bf16.mxu0 0
      %2003 = vmatpush2.bf16.msra.mxu0 0
      %2004 = vmatprep.subr.bf16.mxu0 0
      %2005 = vmatpush2.bf16.msra.mxu0 0
      %2006 = vmatprep.subr.bf16.mxu0 0
      %2007 = vmatpush2.bf16.msra.mxu0 0
      %2008 = vmatprep.mubr.bf16.mxu0 0
      %2009 = vmatmul.mubr.bf16.gmra.mxu0 %v1974
      %v2010 = vpop.f32.mrf.mxu0
      %v2011 = vadd.f32 %v1971, %v2010
      %v2012 = vpop.f32.mrf.mxu0
      %v2013 = vpop.f32.mrf.mxu0
      %v2014 = vadd.f32 %v1971, %v2013
      %v2015 = vpop.f32.mrf.mxu0
      %2016 = vdwg.mxu0
      %v2017 = vadd.f32 %v1894, %v2011
      %v2018 = vadd.f32 %v1895, %v2014
      %v2019 = vsel %vm546, %v2017, 0.0
      %2020 = vadd.xlane.f32.xlu0 %v2019
      %v2021 = vpop.xlane.xlu0 %2020
      %v2022 = vsel %vm546, %v2018, 0.0
      %2023 = vadd.xlane.f32.xlu0 %v2022
      %v2024 = vpop.xlane.xlu0 %2023
      %v2025 = vmul.f32 %v2021, %v1861
      %v2026 = vmul.f32 %v2024, %v1861
      %v2027 = vsub.f32 %v2017, %v2025
      %v2028 = vsub.f32 %v2018, %v2026
      %v2029 = vmul.f32 %v2027, %v2027
      %v2030 = vmul.f32 %v2028, %v2028
      %v2031 = vsel %vm546, %v2029, 0.0
      %2032 = vadd.xlane.f32.xlu0 %v2031
      %v2033 = vpop.xlane.xlu0 %2032
      %v2034 = vsel %vm546, %v2030, 0.0
      %2035 = vadd.xlane.f32.xlu0 %v2034
      %v2036 = vpop.xlane.xlu0 %2035
      %v2037 = vmul.f32 %v2033, %v1861
      %v2038 = vmul.f32 %v2036, %v1861
      %v2039 = vadd.f32 %v2037, 1e-05
      %v2040 = vadd.f32 %v2038, 1e-05
      %v2041 = vrsqrt.pop %v2039
      %v2042 = vrsqrt.pop %v2040
      %v2043 = vmul.f32 %v2027, %v2041
      %v2044 = vmul.f32 %v2028, %v2042
      %v2045 = vld [vmem:[%s4 + $0x2f8] sm:$0x1]
      %v2046 = vlaneseq
      %v2047 = vshrl.u32 %v2046, 7
      %v2048 = vsub.s32 0, %v2047
      %v2049 = vrot.slane %v2045, %v2048
      %v2050 = vmul.f32 %v2043, %v2049
      %v2051 = vmul.f32 %v2044, %v2049
      %v2052 = vld [vmem:[%s4 + $0x300] sm:$0x1]
      %v2053 = vlaneseq
      %v2054 = vshrl.u32 %v2053, 7
      %v2055 = vsub.s32 0, %v2054
      %v2056 = vrot.slane %v2052, %v2055
      %v2057 = vadd.f32 %v2050, %v2056
      %v2058 = vadd.f32 %v2051, %v2056
      %v2059 = vld [vmem:[%s4 + $0x308] sm:$0xff]
      %v2060 = vld [vmem:[%s4 + $0x310] sm:$0xff]
      %v2061 = vld [vmem:[%s4 + $0x318] sm:$0xff]
      %v2062 = vld [vmem:[%s4 + $0x320] sm:$0xff]
      %v2063 = vpack.c.bf16 %v2058, %v2057
      %v2064 = vpack.c.bf16 %v2060, %v2059
      %v2065 = vpack.c.bf16 %v2062, %v2061
      %v2066 = vld [vmem:[%s4 + $0x328] sm:$0x1]
      %v2067 = vlaneseq
      %v2068 = vshrl.u32 %v2067, 7
      %v2069 = vsub.s32 0, %v2068
      %v2070 = vrot.slane %v2066, %v2069
      %v2072 = vsel %vm546, %v2063, 0
      %2074 = vmatprep.subr.bf16.mxu0 0
      %2075 = vmatpush1.bf16.msra.mxu0 0
      %2076 = vmatprep.subr.bf16.mxu0 0
      %2077 = vmatpush1.bf16.msra.mxu0 0
      %2078 = vmatprep.subr.bf16.mxu0 0
      %2079 = vmatpush1.bf16.msra.mxu0 0
      %2080 = vmatprep.subr.bf16.mxu0 0
      %2081 = vmatpush1.bf16.msra.mxu0 0
      %2082 = vmatprep.subr.bf16.mxu0 0
      %2083 = vmatpush1.bf16.msra.mxu0 0
      %2084 = vmatprep.subr.bf16.mxu0 0
      %2085 = vmatpush1.bf16.msra.mxu0 0
      %2086 = vmatprep.subr.bf16.mxu0 0
      %2087 = vmatpush1.bf16.msra.mxu0 %v2065
      %2088 = vmatprep.subr.bf16.mxu0 0
      %2089 = vmatpush1.bf16.msra.mxu0 %v2064
      %2090 = vmatprep.subr.bf16.mxu0 0
      %2091 = vmatpush2.bf16.msra.mxu0 0
      %2092 = vmatprep.subr.bf16.mxu0 0
      %2093 = vmatpush2.bf16.msra.mxu0 0
      %2094 = vmatprep.subr.bf16.mxu0 0
      %2095 = vmatpush2.bf16.msra.mxu0 0
      %2096 = vmatprep.subr.bf16.mxu0 0
      %2097 = vmatpush2.bf16.msra.mxu0 0
      %2098 = vmatprep.subr.bf16.mxu0 0
      %2099 = vmatpush2.bf16.msra.mxu0 0
      %2100 = vmatprep.subr.bf16.mxu0 0
      %2101 = vmatpush2.bf16.msra.mxu0 0
      %2102 = vmatprep.subr.bf16.mxu0 0
      %2103 = vmatpush2.bf16.msra.mxu0 0
      %2104 = vmatprep.subr.bf16.mxu0 0
      %2105 = vmatpush2.bf16.msra.mxu0 0
      %2106 = vmatprep.mubr.bf16.mxu0 0
      %2107 = vmatmul.mubr.bf16.gmra.mxu0 %v2072
      %v2108 = vpop.f32.mrf.mxu0
      %v2109 = vadd.f32 %v2070, %v2108
      %v2110 = vpop.f32.mrf.mxu0
      %v2111 = vpop.f32.mrf.mxu0
      %v2112 = vadd.f32 %v2070, %v2111
      %v2113 = vpop.f32.mrf.mxu0
      %2114 = vdwg.mxu0
      %v2115 = vld [vmem:[%s4 + $0x330] sm:$0xff]
      %v2116 = vld [vmem:[%s4 + $0x338] sm:$0xff]
      %v2117 = vld [vmem:[%s4 + $0x340] sm:$0xff]
      %v2118 = vld [vmem:[%s4 + $0x348] sm:$0xff]
      %v2119 = vpack.c.bf16 %v2116, %v2115
      %v2120 = vpack.c.bf16 %v2118, %v2117
      %v2121 = vld [vmem:[%s4 + $0x350] sm:$0x1]
      %v2122 = vlaneseq
      %v2123 = vshrl.u32 %v2122, 7
      %v2124 = vsub.s32 0, %v2123
      %v2125 = vrot.slane %v2121, %v2124
      %2126 = vmatprep.subr.bf16.mxu0 0
      %2127 = vmatpush1.bf16.msra.mxu0 0
      %2128 = vmatprep.subr.bf16.mxu0 0
      %2129 = vmatpush1.bf16.msra.mxu0 0
      %2130 = vmatprep.subr.bf16.mxu0 0
      %2131 = vmatpush1.bf16.msra.mxu0 0
      %2132 = vmatprep.subr.bf16.mxu0 0
      %2133 = vmatpush1.bf16.msra.mxu0 0
      %2134 = vmatprep.subr.bf16.mxu0 0
      %2135 = vmatpush1.bf16.msra.mxu0 0
      %2136 = vmatprep.subr.bf16.mxu0 0
      %2137 = vmatpush1.bf16.msra.mxu0 0
      %2138 = vmatprep.subr.bf16.mxu0 0
      %2139 = vmatpush1.bf16.msra.mxu0 %v2120
      %2140 = vmatprep.subr.bf16.mxu0 0
      %2141 = vmatpush1.bf16.msra.mxu0 %v2119
      %2142 = vmatprep.subr.bf16.mxu0 0
      %2143 = vmatpush2.bf16.msra.mxu0 0
      %2144 = vmatprep.subr.bf16.mxu0 0
      %2145 = vmatpush2.bf16.msra.mxu0 0
      %2146 = vmatprep.subr.bf16.mxu0 0
      %2147 = vmatpush2.bf16.msra.mxu0 0
      %2148 = vmatprep.subr.bf16.mxu0 0
      %2149 = vmatpush2.bf16.msra.mxu0 0
      %2150 = vmatprep.subr.bf16.mxu0 0
      %2151 = vmatpush2.bf16.msra.mxu0 0
      %2152 = vmatprep.subr.bf16.mxu0 0
      %2153 = vmatpush2.bf16.msra.mxu0 0
      %2154 = vmatprep.subr.bf16.mxu0 0
      %2155 = vmatpush2.bf16.msra.mxu0 0
      %2156 = vmatprep.subr.bf16.mxu0 0
      %2157 = vmatpush2.bf16.msra.mxu0 0
      %2158 = vmatprep.mubr.bf16.mxu0 0
      %2159 = vmatmul.mubr.bf16.gmra.mxu0 %v2072
      %v2160 = vpop.f32.mrf.mxu0
      %v2161 = vadd.f32 %v2125, %v2160
      %v2162 = vpop.f32.mrf.mxu0
      %v2163 = vpop.f32.mrf.mxu0
      %v2164 = vadd.f32 %v2125, %v2163
      %v2165 = vpop.f32.mrf.mxu0
      %2166 = vdwg.mxu0
      %v2167 = vld [vmem:[%s4 + $0x358] sm:$0xff]
      %v2168 = vld [vmem:[%s4 + $0x360] sm:$0xff]
      %v2169 = vld [vmem:[%s4 + $0x368] sm:$0xff]
      %v2170 = vld [vmem:[%s4 + $0x370] sm:$0xff]
      %v2171 = vpack.c.bf16 %v2168, %v2167
      %v2172 = vpack.c.bf16 %v2170, %v2169
      %v2173 = vld [vmem:[%s4 + $0x378] sm:$0x1]
      %v2174 = vlaneseq
      %v2175 = vshrl.u32 %v2174, 7
      %v2176 = vsub.s32 0, %v2175
      %v2177 = vrot.slane %v2173, %v2176
      %2178 = vmatprep.subr.bf16.mxu0 0
      %2179 = vmatpush1.bf16.msra.mxu0 0
      %2180 = vmatprep.subr.bf16.mxu0 0
      %2181 = vmatpush1.bf16.msra.mxu0 0
      %2182 = vmatprep.subr.bf16.mxu0 0
      %2183 = vmatpush1.bf16.msra.mxu0 0
      %2184 = vmatprep.subr.bf16.mxu0 0
      %2185 = vmatpush1.bf16.msra.mxu0 0
      %2186 = vmatprep.subr.bf16.mxu0 0
      %2187 = vmatpush1.bf16.msra.mxu0 0
      %2188 = vmatprep.subr.bf16.mxu0 0
      %2189 = vmatpush1.bf16.msra.mxu0 0
      %2190 = vmatprep.subr.bf16.mxu0 0
      %2191 = vmatpush1.bf16.msra.mxu0 %v2172
      %2192 = vmatprep.subr.bf16.mxu0 0
      %2193 = vmatpush1.bf16.msra.mxu0 %v2171
      %2194 = vmatprep.subr.bf16.mxu0 0
      %2195 = vmatpush2.bf16.msra.mxu0 0
      %2196 = vmatprep.subr.bf16.mxu0 0
      %2197 = vmatpush2.bf16.msra.mxu0 0
      %2198 = vmatprep.subr.bf16.mxu0 0
      %2199 = vmatpush2.bf16.msra.mxu0 0
      %2200 = vmatprep.subr.bf16.mxu0 0
      %2201 = vmatpush2.bf16.msra.mxu0 0
      %2202 = vmatprep.subr.bf16.mxu0 0
      %2203 = vmatpush2.bf16.msra.mxu0 0
      %2204 = vmatprep.subr.bf16.mxu0 0
      %2205 = vmatpush2.bf16.msra.mxu0 0
      %2206 = vmatprep.subr.bf16.mxu0 0
      %2207 = vmatpush2.bf16.msra.mxu0 0
      %2208 = vmatprep.subr.bf16.mxu0 0
      %2209 = vmatpush2.bf16.msra.mxu0 0
      %2210 = vmatprep.mubr.bf16.mxu0 0
      %2211 = vmatmul.mubr.bf16.gmra.mxu0 %v2072
      %v2212 = vpop.f32.mrf.mxu0
      %v2213 = vadd.f32 %v2177, %v2212
      %v2214 = vpop.f32.mrf.mxu0
      %v2215 = vpop.f32.mrf.mxu0
      %v2216 = vadd.f32 %v2177, %v2215
      %v2217 = vpop.f32.mrf.mxu0
      %2218 = vdwg.mxu0
      %v2219 = vpack.c.bf16 %v2112, %v2109
      %v2220 = vpack.c.bf16 %v2164, %v2161
      %v2222 = vsel %vm697, %v2219, 0
      %v2225 = vsel %vm697, %v2220, 0
      %2227 = vmatprep.subr.bf16.mxu0 0
      %2228 = vmatpush1.bf16.xpose.msra.mxu0 0
      %2229 = vmatprep.subr.bf16.mxu0 0
      %2230 = vmatpush1.bf16.xpose.msra.mxu0 0
      %2231 = vmatprep.subr.bf16.mxu0 0
      %2232 = vmatpush1.bf16.xpose.msra.mxu0 0
      %2233 = vmatprep.subr.bf16.mxu0 0
      %2234 = vmatpush1.bf16.xpose.msra.mxu0 0
      %2235 = vmatprep.subr.bf16.mxu0 0
      %2236 = vmatpush1.bf16.xpose.msra.mxu0 0
      %2237 = vmatprep.subr.bf16.mxu0 0
      %2238 = vmatpush1.bf16.xpose.msra.mxu0 0
      %2239 = vmatprep.subr.bf16.mxu0 0
      %2240 = vmatpush1.bf16.xpose.msra.mxu0 0
      %2241 = vmatprep.subr.bf16.mxu0 0
      %2242 = vmatpush1.bf16.xpose.msra.mxu0 %v2225
      %2243 = vmatprep.subr.bf16.mxu0 0
      %2244 = vmatpush2.bf16.xpose.msra.mxu0 0
      %2245 = vmatprep.subr.bf16.mxu0 0
      %2246 = vmatpush2.bf16.xpose.msra.mxu0 0
      %2247 = vmatprep.subr.bf16.mxu0 0
      %2248 = vmatpush2.bf16.xpose.msra.mxu0 0
      %2249 = vmatprep.subr.bf16.mxu0 0
      %2250 = vmatpush2.bf16.xpose.msra.mxu0 0
      %2251 = vmatprep.subr.bf16.mxu0 0
      %2252 = vmatpush2.bf16.xpose.msra.mxu0 0
      %2253 = vmatprep.subr.bf16.mxu0 0
      %2254 = vmatpush2.bf16.xpose.msra.mxu0 0
      %2255 = vmatprep.subr.bf16.mxu0 0
      %2256 = vmatpush2.bf16.xpose.msra.mxu0 0
      %2257 = vmatprep.subr.bf16.mxu0 0
      %2258 = vmatpush2.bf16.xpose.msra.mxu0 0
      %2259 = vmatprep.mubr.bf16.mxu0 0
      %2260 = vmatmul.mubr.bf16.gmra.mxu0 %v2222
      %v2261 = vpop.f32.mrf.mxu0
      %v2262 = vadd.f32 0.0, %v2261
      %v2263 = vpop.f32.mrf.mxu0
      %v2264 = vpop.f32.mrf.mxu0
      %v2265 = vadd.f32 0.0, %v2264
      %v2266 = vpop.f32.mrf.mxu0
      %2267 = vdwg.mxu0
      %v2268 = vmul.f32 %v2262, 0.35355338
      %v2269 = vmul.f32 %v2265, 0.35355338
      %v2270 = vsel %vm747, %v2268, -inf
      %2271 = vmax.xlane.f32.xlu0 %v2270
      %v2272 = vpop.xlane.xlu0 %2271
      %v2273 = vsel %vm747, %v2269, -inf
      %2274 = vmax.xlane.f32.xlu0 %v2273
      %v2275 = vpop.xlane.xlu0 %2274
      %v2276 = vsub.f32 %v2268, %v2272
      %v2277 = vsub.f32 %v2269, %v2275
      %v2278 = vmul.f32 %v2276, 1.442695
      %v2279 = vpow.pop %v2278
      %v2280 = vmul.f32 %v2277, 1.442695
      %v2281 = vpow.pop %v2280
      %v2282 = vsel %vm747, %v2279, 0.0
      %2283 = vadd.xlane.f32.xlu0 %v2282
      %v2284 = vpop.xlane.xlu0 %2283
      %v2285 = vsel %vm747, %v2281, 0.0
      %2286 = vadd.xlane.f32.xlu0 %v2285
      %v2287 = vpop.xlane.xlu0 %2286
      %v2288 = vrcp.pop %v2284
      %v2289 = vrcp.pop %v2287
      %v2290 = vmul.f32 %v2279, %v2288
      %v2291 = vmul.f32 %v2281, %v2289
      %v2292 = vpack.c.bf16 %v2291, %v2290
      %v2293 = vpack.c.bf16 %v2216, %v2213
      %v2295 = vsel %vm747, %v2292, 0
      %2297 = vmatprep.subr.bf16.mxu0 0
      %2298 = vmatpush1.bf16.msra.mxu0 0
      %2299 = vmatprep.subr.bf16.mxu0 0
      %2300 = vmatpush1.bf16.msra.mxu0 0
      %2301 = vmatprep.subr.bf16.mxu0 0
      %2302 = vmatpush1.bf16.msra.mxu0 0
      %2303 = vmatprep.subr.bf16.mxu0 0
      %2304 = vmatpush1.bf16.msra.mxu0 0
      %2305 = vmatprep.subr.bf16.mxu0 0
      %2306 = vmatpush1.bf16.msra.mxu0 0
      %2307 = vmatprep.subr.bf16.mxu0 0
      %2308 = vmatpush1.bf16.msra.mxu0 0
      %2309 = vmatprep.subr.bf16.mxu0 0
      %2310 = vmatpush1.bf16.msra.mxu0 0
      %2311 = vmatprep.subr.bf16.mxu0 0
      %2312 = vmatpush1.bf16.msra.mxu0 %v2293
      %2313 = vmatprep.subr.bf16.mxu0 0
      %2314 = vmatpush2.bf16.msra.mxu0 0
      %2315 = vmatprep.subr.bf16.mxu0 0
      %2316 = vmatpush2.bf16.msra.mxu0 0
      %2317 = vmatprep.subr.bf16.mxu0 0
      %2318 = vmatpush2.bf16.msra.mxu0 0
      %2319 = vmatprep.subr.bf16.mxu0 0
      %2320 = vmatpush2.bf16.msra.mxu0 0
      %2321 = vmatprep.subr.bf16.mxu0 0
      %2322 = vmatpush2.bf16.msra.mxu0 0
      %2323 = vmatprep.subr.bf16.mxu0 0
      %2324 = vmatpush2.bf16.msra.mxu0 0
      %2325 = vmatprep.subr.bf16.mxu0 0
      %2326 = vmatpush2.bf16.msra.mxu0 0
      %2327 = vmatprep.subr.bf16.mxu0 0
      %2328 = vmatpush2.bf16.msra.mxu0 0
      %2329 = vmatprep.mubr.bf16.mxu0 0
      %2330 = vmatmul.mubr.bf16.gmra.mxu0 %v2295
      %v2331 = vpop.f32.mrf.mxu0
      %v2332 = vadd.f32 0.0, %v2331
      %v2333 = vpop.f32.mrf.mxu0
      %v2334 = vpop.f32.mrf.mxu0
      %v2335 = vadd.f32 0.0, %v2334
      %v2336 = vpop.f32.mrf.mxu0
      %2337 = vdwg.mxu0
      %v2338 = vld [vmem:[%s4 + $0x380] sm:$0xff]
      %v2339 = vpack.c.bf16 %v2335, %v2332
      %v2340 = vpack.c.bf16 %v2338, %v2338
      %v2341 = vld [vmem:[%s4 + $0x388] sm:$0xff]
      %v2342 = vld [vmem:[%s4 + $0x390] sm:$0xff]
      %v2343 = vld [vmem:[%s4 + $0x398] sm:$0xff]
      %v2344 = vld [vmem:[%s4 + $0x3a0] sm:$0xff]
      %v2345 = vpack.c.bf16 %v2342, %v2341
      %v2346 = vpack.c.bf16 %v2344, %v2343
      %v2347 = vld [vmem:[%s4 + $0x3a8] sm:$0x1]
      %v2348 = vlaneseq
      %v2349 = vshrl.u32 %v2348, 7
      %v2350 = vsub.s32 0, %v2349
      %v2351 = vrot.slane %v2347, %v2350
      %2352 = vmatprep.subr.bf16.mxu0 0
      %2353 = vmatpush1.bf16.msra.mxu0 0
      %2354 = vmatprep.subr.bf16.mxu0 0
      %2355 = vmatpush1.bf16.msra.mxu0 0
      %2356 = vmatprep.subr.bf16.mxu0 0
      %2357 = vmatpush1.bf16.msra.mxu0 0
      %2358 = vmatprep.subr.bf16.mxu0 0
      %2359 = vmatpush1.bf16.msra.mxu0 0
      %2360 = vmatprep.subr.bf16.mxu0 0
      %2361 = vmatpush1.bf16.msra.mxu0 0
      %2362 = vmatprep.subr.bf16.mxu0 0
      %2363 = vmatpush1.bf16.msra.mxu0 0
      %2364 = vmatprep.subr.bf16.mxu0 0
      %2365 = vmatpush1.bf16.msra.mxu0 %v2346
      %2366 = vmatprep.subr.bf16.mxu0 0
      %2367 = vmatpush1.bf16.msra.mxu0 %v2345
      %2368 = vmatprep.subr.bf16.mxu0 0
      %2369 = vmatpush2.bf16.msra.mxu0 0
      %2370 = vmatprep.subr.bf16.mxu0 0
      %2371 = vmatpush2.bf16.msra.mxu0 0
      %2372 = vmatprep.subr.bf16.mxu0 0
      %2373 = vmatpush2.bf16.msra.mxu0 0
      %2374 = vmatprep.subr.bf16.mxu0 0
      %2375 = vmatpush2.bf16.msra.mxu0 0
      %2376 = vmatprep.subr.bf16.mxu0 0
      %2377 = vmatpush2.bf16.msra.mxu0 0
      %2378 = vmatprep.subr.bf16.mxu0 0
      %2379 = vmatpush2.bf16.msra.mxu0 0
      %2380 = vmatprep.subr.bf16.mxu0 0
      %2381 = vmatpush2.bf16.msra.mxu0 0
      %2382 = vmatprep.subr.bf16.mxu0 0
      %2383 = vmatpush2.bf16.msra.mxu0 0
      %2384 = vmatprep.mubr.bf16.mxu0 0
      %2385 = vmatmul.mubr.bf16.gmra.mxu0 %v2072
      %v2386 = vpop.f32.mrf.mxu0
      %v2387 = vadd.f32 %v2351, %v2386
      %v2388 = vpop.f32.mrf.mxu0
      %v2389 = vpop.f32.mrf.mxu0
      %v2390 = vadd.f32 %v2351, %v2389
      %v2391 = vpop.f32.mrf.mxu0
      %2392 = vdwg.mxu0
      %v2393 = vld [vmem:[%s4 + $0x3b0] sm:$0xff]
      %v2394 = vld [vmem:[%s4 + $0x3b8] sm:$0xff]
      %v2395 = vld [vmem:[%s4 + $0x3c0] sm:$0xff]
      %v2396 = vld [vmem:[%s4 + $0x3c8] sm:$0xff]
      %v2397 = vpack.c.bf16 %v2394, %v2393
      %v2398 = vpack.c.bf16 %v2396, %v2395
      %v2399 = vld [vmem:[%s4 + $0x3d0] sm:$0x1]
      %v2400 = vlaneseq
      %v2401 = vshrl.u32 %v2400, 7
      %v2402 = vsub.s32 0, %v2401
      %v2403 = vrot.slane %v2399, %v2402
      %2404 = vmatprep.subr.bf16.mxu0 0
      %2405 = vmatpush1.bf16.msra.mxu0 0
      %2406 = vmatprep.subr.bf16.mxu0 0
      %2407 = vmatpush1.bf16.msra.mxu0 0
      %2408 = vmatprep.subr.bf16.mxu0 0
      %2409 = vmatpush1.bf16.msra.mxu0 0
      %2410 = vmatprep.subr.bf16.mxu0 0
      %2411 = vmatpush1.bf16.msra.mxu0 0
      %2412 = vmatprep.subr.bf16.mxu0 0
      %2413 = vmatpush1.bf16.msra.mxu0 0
      %2414 = vmatprep.subr.bf16.mxu0 0
      %2415 = vmatpush1.bf16.msra.mxu0 0
      %2416 = vmatprep.subr.bf16.mxu0 0
      %2417 = vmatpush1.bf16.msra.mxu0 %v2398
      %2418 = vmatprep.subr.bf16.mxu0 0
      %2419 = vmatpush1.bf16.msra.mxu0 %v2397
      %2420 = vmatprep.subr.bf16.mxu0 0
      %2421 = vmatpush2.bf16.msra.mxu0 0
      %2422 = vmatprep.subr.bf16.mxu0 0
      %2423 = vmatpush2.bf16.msra.mxu0 0
      %2424 = vmatprep.subr.bf16.mxu0 0
      %2425 = vmatpush2.bf16.msra.mxu0 0
      %2426 = vmatprep.subr.bf16.mxu0 0
      %2427 = vmatpush2.bf16.msra.mxu0 0
      %2428 = vmatprep.subr.bf16.mxu0 0
      %2429 = vmatpush2.bf16.msra.mxu0 0
      %2430 = vmatprep.subr.bf16.mxu0 0
      %2431 = vmatpush2.bf16.msra.mxu0 0
      %2432 = vmatprep.subr.bf16.mxu0 0
      %2433 = vmatpush2.bf16.msra.mxu0 0
      %2434 = vmatprep.subr.bf16.mxu0 0
      %2435 = vmatpush2.bf16.msra.mxu0 0
      %2436 = vmatprep.mubr.bf16.mxu0 0
      %2437 = vmatmul.mubr.bf16.gmra.mxu0 %v2072
      %v2438 = vpop.f32.mrf.mxu0
      %v2439 = vadd.f32 %v2403, %v2438
      %v2440 = vpop.f32.mrf.mxu0
      %v2441 = vpop.f32.mrf.mxu0
      %v2442 = vadd.f32 %v2403, %v2441
      %v2443 = vpop.f32.mrf.mxu0
      %2444 = vdwg.mxu0
      %v2445 = vld [vmem:[%s4 + $0x3d8] sm:$0xff]
      %v2446 = vld [vmem:[%s4 + $0x3e0] sm:$0xff]
      %v2447 = vld [vmem:[%s4 + $0x3e8] sm:$0xff]
      %v2448 = vld [vmem:[%s4 + $0x3f0] sm:$0xff]
      %v2449 = vpack.c.bf16 %v2446, %v2445
      %v2450 = vpack.c.bf16 %v2448, %v2447
      %v2451 = vld [vmem:[%s4 + $0x3f8] sm:$0x1]
      %v2452 = vlaneseq
      %v2453 = vshrl.u32 %v2452, 7
      %v2454 = vsub.s32 0, %v2453
      %v2455 = vrot.slane %v2451, %v2454
      %2456 = vmatprep.subr.bf16.mxu0 0
      %2457 = vmatpush1.bf16.msra.mxu0 0
      %2458 = vmatprep.subr.bf16.mxu0 0
      %2459 = vmatpush1.bf16.msra.mxu0 0
      %2460 = vmatprep.subr.bf16.mxu0 0
      %2461 = vmatpush1.bf16.msra.mxu0 0
      %2462 = vmatprep.subr.bf16.mxu0 0
      %2463 = vmatpush1.bf16.msra.mxu0 0
      %2464 = vmatprep.subr.bf16.mxu0 0
      %2465 = vmatpush1.bf16.msra.mxu0 0
      %2466 = vmatprep.subr.bf16.mxu0 0
      %2467 = vmatpush1.bf16.msra.mxu0 0
      %2468 = vmatprep.subr.bf16.mxu0 0
      %2469 = vmatpush1.bf16.msra.mxu0 %v2450
      %2470 = vmatprep.subr.bf16.mxu0 0
      %2471 = vmatpush1.bf16.msra.mxu0 %v2449
      %2472 = vmatprep.subr.bf16.mxu0 0
      %2473 = vmatpush2.bf16.msra.mxu0 0
      %2474 = vmatprep.subr.bf16.mxu0 0
      %2475 = vmatpush2.bf16.msra.mxu0 0
      %2476 = vmatprep.subr.bf16.mxu0 0
      %2477 = vmatpush2.bf16.msra.mxu0 0
      %2478 = vmatprep.subr.bf16.mxu0 0
      %2479 = vmatpush2.bf16.msra.mxu0 0
      %2480 = vmatprep.subr.bf16.mxu0 0
      %2481 = vmatpush2.bf16.msra.mxu0 0
      %2482 = vmatprep.subr.bf16.mxu0 0
      %2483 = vmatpush2.bf16.msra.mxu0 0
      %2484 = vmatprep.subr.bf16.mxu0 0
      %2485 = vmatpush2.bf16.msra.mxu0 0
      %2486 = vmatprep.subr.bf16.mxu0 0
      %2487 = vmatpush2.bf16.msra.mxu0 0
      %2488 = vmatprep.mubr.bf16.mxu0 0
      %2489 = vmatmul.mubr.bf16.gmra.mxu0 %v2072
      %v2490 = vpop.f32.mrf.mxu0
      %v2491 = vadd.f32 %v2455, %v2490
      %v2492 = vpop.f32.mrf.mxu0
      %v2493 = vpop.f32.mrf.mxu0
      %v2494 = vadd.f32 %v2455, %v2493
      %v2495 = vpop.f32.mrf.mxu0
      %2496 = vdwg.mxu0
      %v2497 = vpack.c.bf16 %v2390, %v2387
      %v2498 = vpack.c.bf16 %v2442, %v2439
      %v2500 = vsel %vm697, %v2497, 0
      %v2503 = vsel %vm697, %v2498, 0
      %2505 = vmatprep.subr.bf16.mxu0 0
      %2506 = vmatpush1.bf16.xpose.msra.mxu0 0
      %2507 = vmatprep.subr.bf16.mxu0 0
      %2508 = vmatpush1.bf16.xpose.msra.mxu0 0
      %2509 = vmatprep.subr.bf16.mxu0 0
      %2510 = vmatpush1.bf16.xpose.msra.mxu0 0
      %2511 = vmatprep.subr.bf16.mxu0 0
      %2512 = vmatpush1.bf16.xpose.msra.mxu0 0
      %2513 = vmatprep.subr.bf16.mxu0 0
      %2514 = vmatpush1.bf16.xpose.msra.mxu0 0
      %2515 = vmatprep.subr.bf16.mxu0 0
      %2516 = vmatpush1.bf16.xpose.msra.mxu0 0
      %2517 = vmatprep.subr.bf16.mxu0 0
      %2518 = vmatpush1.bf16.xpose.msra.mxu0 0
      %2519 = vmatprep.subr.bf16.mxu0 0
      %2520 = vmatpush1.bf16.xpose.msra.mxu0 %v2503
      %2521 = vmatprep.subr.bf16.mxu0 0
      %2522 = vmatpush2.bf16.xpose.msra.mxu0 0
      %2523 = vmatprep.subr.bf16.mxu0 0
      %2524 = vmatpush2.bf16.xpose.msra.mxu0 0
      %2525 = vmatprep.subr.bf16.mxu0 0
      %2526 = vmatpush2.bf16.xpose.msra.mxu0 0
      %2527 = vmatprep.subr.bf16.mxu0 0
      %2528 = vmatpush2.bf16.xpose.msra.mxu0 0
      %2529 = vmatprep.subr.bf16.mxu0 0
      %2530 = vmatpush2.bf16.xpose.msra.mxu0 0
      %2531 = vmatprep.subr.bf16.mxu0 0
      %2532 = vmatpush2.bf16.xpose.msra.mxu0 0
      %2533 = vmatprep.subr.bf16.mxu0 0
      %2534 = vmatpush2.bf16.xpose.msra.mxu0 0
      %2535 = vmatprep.subr.bf16.mxu0 0
      %2536 = vmatpush2.bf16.xpose.msra.mxu0 0
      %2537 = vmatprep.mubr.bf16.mxu0 0
      %2538 = vmatmul.mubr.bf16.gmra.mxu0 %v2500
      %v2539 = vpop.f32.mrf.mxu0
      %v2540 = vadd.f32 0.0, %v2539
      %v2541 = vpop.f32.mrf.mxu0
      %v2542 = vpop.f32.mrf.mxu0
      %v2543 = vadd.f32 0.0, %v2542
      %v2544 = vpop.f32.mrf.mxu0
      %2545 = vdwg.mxu0
      %v2546 = vmul.f32 %v2540, 0.35355338
      %v2547 = vmul.f32 %v2543, 0.35355338
      %v2548 = vsel %vm747, %v2546, -inf
      %2549 = vmax.xlane.f32.xlu0 %v2548
      %v2550 = vpop.xlane.xlu0 %2549
      %v2551 = vsel %vm747, %v2547, -inf
      %2552 = vmax.xlane.f32.xlu0 %v2551
      %v2553 = vpop.xlane.xlu0 %2552
      %v2554 = vsub.f32 %v2546, %v2550
      %v2555 = vsub.f32 %v2547, %v2553
      %v2556 = vmul.f32 %v2554, 1.442695
      %v2557 = vpow.pop %v2556
      %v2558 = vmul.f32 %v2555, 1.442695
      %v2559 = vpow.pop %v2558
      %v2560 = vsel %vm747, %v2557, 0.0
      %2561 = vadd.xlane.f32.xlu0 %v2560
      %v2562 = vpop.xlane.xlu0 %2561
      %v2563 = vsel %vm747, %v2559, 0.0
      %2564 = vadd.xlane.f32.xlu0 %v2563
      %v2565 = vpop.xlane.xlu0 %2564
      %v2566 = vrcp.pop %v2562
      %v2567 = vrcp.pop %v2565
      %v2568 = vmul.f32 %v2557, %v2566
      %v2569 = vmul.f32 %v2559, %v2567
      %v2570 = vpack.c.bf16 %v2569, %v2568
      %v2571 = vpack.c.bf16 %v2494, %v2491
      %v2573 = vsel %vm747, %v2570, 0
      %2575 = vmatprep.subr.bf16.mxu0 0
      %2576 = vmatpush1.bf16.msra.mxu0 0
      %2577 = vmatprep.subr.bf16.mxu0 0
      %2578 = vmatpush1.bf16.msra.mxu0 0
      %2579 = vmatprep.subr.bf16.mxu0 0
      %2580 = vmatpush1.bf16.msra.mxu0 0
      %2581 = vmatprep.subr.bf16.mxu0 0
      %2582 = vmatpush1.bf16.msra.mxu0 0
      %2583 = vmatprep.subr.bf16.mxu0 0
      %2584 = vmatpush1.bf16.msra.mxu0 0
      %2585 = vmatprep.subr.bf16.mxu0 0
      %2586 = vmatpush1.bf16.msra.mxu0 0
      %2587 = vmatprep.subr.bf16.mxu0 0
      %2588 = vmatpush1.bf16.msra.mxu0 0
      %2589 = vmatprep.subr.bf16.mxu0 0
      %2590 = vmatpush1.bf16.msra.mxu0 %v2571
      %2591 = vmatprep.subr.bf16.mxu0 0
      %2592 = vmatpush2.bf16.msra.mxu0 0
      %2593 = vmatprep.subr.bf16.mxu0 0
      %2594 = vmatpush2.bf16.msra.mxu0 0
      %2595 = vmatprep.subr.bf16.mxu0 0
      %2596 = vmatpush2.bf16.msra.mxu0 0
      %2597 = vmatprep.subr.bf16.mxu0 0
      %2598 = vmatpush2.bf16.msra.mxu0 0
      %2599 = vmatprep.subr.bf16.mxu0 0
      %2600 = vmatpush2.bf16.msra.mxu0 0
      %2601 = vmatprep.subr.bf16.mxu0 0
      %2602 = vmatpush2.bf16.msra.mxu0 0
      %2603 = vmatprep.subr.bf16.mxu0 0
      %2604 = vmatpush2.bf16.msra.mxu0 0
      %2605 = vmatprep.subr.bf16.mxu0 0
      %2606 = vmatpush2.bf16.msra.mxu0 0
      %2607 = vmatprep.mubr.bf16.mxu0 0
      %2608 = vmatmul.mubr.bf16.gmra.mxu0 %v2573
      %v2609 = vpop.f32.mrf.mxu0
      %v2610 = vadd.f32 0.0, %v2609
      %v2611 = vpop.f32.mrf.mxu0
      %v2612 = vpop.f32.mrf.mxu0
      %v2613 = vadd.f32 0.0, %v2612
      %v2614 = vpop.f32.mrf.mxu0
      %2615 = vdwg.mxu0
      %v2616 = vld [vmem:[%s4 + $0x400] sm:$0xff]
      %v2617 = vpack.c.bf16 %v2613, %v2610
      %v2618 = vpack.c.bf16 %v2616, %v2616
      %v2620 = vsel %vm697, %v2617, 0
      %v2623 = vsel %vm1100, %v2618, 0
      %2625 = vmatprep.subr.bf16.mxu0 0
      %2626 = vmatpush1.bf16.msra.mxu0 0
      %2627 = vmatprep.subr.bf16.mxu0 0
      %2628 = vmatpush1.bf16.msra.mxu0 0
      %2629 = vmatprep.subr.bf16.mxu0 0
      %2630 = vmatpush1.bf16.msra.mxu0 0
      %2631 = vmatprep.subr.bf16.mxu0 0
      %2632 = vmatpush1.bf16.msra.mxu0 0
      %2633 = vmatprep.subr.bf16.mxu0 0
      %2634 = vmatpush1.bf16.msra.mxu0 0
      %2635 = vmatprep.subr.bf16.mxu0 0
      %2636 = vmatpush1.bf16.msra.mxu0 0
      %2637 = vmatprep.subr.bf16.mxu0 0
      %2638 = vmatpush1.bf16.msra.mxu0 0
      %2639 = vmatprep.subr.bf16.mxu0 0
      %2640 = vmatpush1.bf16.msra.mxu0 %v2623
      %2641 = vmatprep.subr.bf16.mxu0 0
      %2642 = vmatpush2.bf16.msra.mxu0 0
      %2643 = vmatprep.subr.bf16.mxu0 0
      %2644 = vmatpush2.bf16.msra.mxu0 0
      %2645 = vmatprep.subr.bf16.mxu0 0
      %2646 = vmatpush2.bf16.msra.mxu0 0
      %2647 = vmatprep.subr.bf16.mxu0 0
      %2648 = vmatpush2.bf16.msra.mxu0 0
      %2649 = vmatprep.subr.bf16.mxu0 0
      %2650 = vmatpush2.bf16.msra.mxu0 0
      %2651 = vmatprep.subr.bf16.mxu0 0
      %2652 = vmatpush2.bf16.msra.mxu0 0
      %2653 = vmatprep.subr.bf16.mxu0 0
      %2654 = vmatpush2.bf16.msra.mxu0 0
      %2655 = vmatprep.subr.bf16.mxu0 0
      %2656 = vmatpush2.bf16.msra.mxu0 0
      %2657 = vmatprep.mubr.bf16.mxu0 0
      %2658 = vmatmul.mubr.bf16.gmra.mxu0 %v2620
      %v2659 = vpop.f32.mrf.mxu0
      %v2660 = vadd.f32 0.0, %v2659
      %v2661 = vpop.f32.mrf.mxu0
      %v2662 = vpop.f32.mrf.mxu0
      %v2663 = vadd.f32 0.0, %v2662
      %v2664 = vpop.f32.mrf.mxu0
      %2665 = vdwg.mxu0
      %v2667 = vsel %vm697, %v2339, 0
      %v2670 = vsel %vm1100, %v2340, 0
      %2672 = vmatprep.subr.bf16.mxu0 0
      %2673 = vmatpush1.bf16.msra.mxu0 0
      %2674 = vmatprep.subr.bf16.mxu0 0
      %2675 = vmatpush1.bf16.msra.mxu0 0
      %2676 = vmatprep.subr.bf16.mxu0 0
      %2677 = vmatpush1.bf16.msra.mxu0 0
      %2678 = vmatprep.subr.bf16.mxu0 0
      %2679 = vmatpush1.bf16.msra.mxu0 0
      %2680 = vmatprep.subr.bf16.mxu0 0
      %2681 = vmatpush1.bf16.msra.mxu0 0
      %2682 = vmatprep.subr.bf16.mxu0 0
      %2683 = vmatpush1.bf16.msra.mxu0 0
      %2684 = vmatprep.subr.bf16.mxu0 0
      %2685 = vmatpush1.bf16.msra.mxu0 0
      %2686 = vmatprep.subr.bf16.mxu0 0
      %2687 = vmatpush1.bf16.msra.mxu0 %v2670
      %2688 = vmatprep.subr.bf16.mxu0 0
      %2689 = vmatpush2.bf16.msra.mxu0 0
      %2690 = vmatprep.subr.bf16.mxu0 0
      %2691 = vmatpush2.bf16.msra.mxu0 0
      %2692 = vmatprep.subr.bf16.mxu0 0
      %2693 = vmatpush2.bf16.msra.mxu0 0
      %2694 = vmatprep.subr.bf16.mxu0 0
      %2695 = vmatpush2.bf16.msra.mxu0 0
      %2696 = vmatprep.subr.bf16.mxu0 0
      %2697 = vmatpush2.bf16.msra.mxu0 0
      %2698 = vmatprep.subr.bf16.mxu0 0
      %2699 = vmatpush2.bf16.msra.mxu0 0
      %2700 = vmatprep.subr.bf16.mxu0 0
      %2701 = vmatpush2.bf16.msra.mxu0 0
      %2702 = vmatprep.subr.bf16.mxu0 0
      %2703 = vmatpush2.bf16.msra.mxu0 0
      %2704 = vmatprep.mubr.bf16.mxu0 0
      %2705 = vmatmul.mubr.bf16.gmra.mxu0 %v2667
      %v2706 = vpop.f32.mrf.mxu0
      %v2707 = vadd.f32 %v2660, %v2706
      %v2708 = vpop.f32.mrf.mxu0
      %v2709 = vpop.f32.mrf.mxu0
      %v2710 = vadd.f32 %v2663, %v2709
      %v2711 = vpop.f32.mrf.mxu0
      %2712 = vdwg.mxu0
      %v2713 = vld [vmem:[%s4 + $0x408] sm:$0xff]
      %v2714 = vld [vmem:[%s4 + $0x410] sm:$0xff]
      %v2715 = vld [vmem:[%s4 + $0x418] sm:$0xff]
      %v2716 = vld [vmem:[%s4 + $0x420] sm:$0xff]
      %v2717 = vpack.c.bf16 %v2714, %v2713
      %v2718 = vpack.c.bf16 %v2716, %v2715
      %v2719 = vld [vmem:[%s4 + $0x428] sm:$0x1]
      %v2720 = vlaneseq
      %v2721 = vshrl.u32 %v2720, 7
      %v2722 = vsub.s32 0, %v2721
      %v2723 = vrot.slane %v2719, %v2722
      %2724 = vmatprep.subr.bf16.mxu0 0
      %2725 = vmatpush1.bf16.msra.mxu0 0
      %2726 = vmatprep.subr.bf16.mxu0 0
      %2727 = vmatpush1.bf16.msra.mxu0 0
      %2728 = vmatprep.subr.bf16.mxu0 0
      %2729 = vmatpush1.bf16.msra.mxu0 0
      %2730 = vmatprep.subr.bf16.mxu0 0
      %2731 = vmatpush1.bf16.msra.mxu0 0
      %2732 = vmatprep.subr.bf16.mxu0 0
      %2733 = vmatpush1.bf16.msra.mxu0 0
      %2734 = vmatprep.subr.bf16.mxu0 0
      %2735 = vmatpush1.bf16.msra.mxu0 0
      %2736 = vmatprep.subr.bf16.mxu0 0
      %2737 = vmatpush1.bf16.msra.mxu0 %v2718
      %2738 = vmatprep.subr.bf16.mxu0 0
      %2739 = vmatpush1.bf16.msra.mxu0 %v2717
      %2740 = vmatprep.subr.bf16.mxu0 0
      %2741 = vmatpush2.bf16.msra.mxu0 0
      %2742 = vmatprep.subr.bf16.mxu0 0
      %2743 = vmatpush2.bf16.msra.mxu0 0
      %2744 = vmatprep.subr.bf16.mxu0 0
      %2745 = vmatpush2.bf16.msra.mxu0 0
      %2746 = vmatprep.subr.bf16.mxu0 0
      %2747 = vmatpush2.bf16.msra.mxu0 0
      %2748 = vmatprep.subr.bf16.mxu0 0
      %2749 = vmatpush2.bf16.msra.mxu0 0
      %2750 = vmatprep.subr.bf16.mxu0 0
      %2751 = vmatpush2.bf16.msra.mxu0 0
      %2752 = vmatprep.subr.bf16.mxu0 0
      %2753 = vmatpush2.bf16.msra.mxu0 0
      %2754 = vmatprep.subr.bf16.mxu0 0
      %2755 = vmatpush2.bf16.msra.mxu0 0
      %2756 = vmatprep.mubr.bf16.mxu0 0
      %2757 = vmatmul.mubr.bf16.gmra.mxu0 %v2072
      %v2758 = vpop.f32.mrf.mxu0
      %v2759 = vadd.f32 %v2723, %v2758
      %v2760 = vpop.f32.mrf.mxu0
      %v2761 = vpop.f32.mrf.mxu0
      %v2762 = vadd.f32 %v2723, %v2761
      %v2763 = vpop.f32.mrf.mxu0
      %2764 = vdwg.mxu0
      %v2765 = vld [vmem:[%s4 + $0x430] sm:$0xff]
      %v2766 = vld [vmem:[%s4 + $0x438] sm:$0xff]
      %v2767 = vld [vmem:[%s4 + $0x440] sm:$0xff]
      %v2768 = vld [vmem:[%s4 + $0x448] sm:$0xff]
      %v2769 = vpack.c.bf16 %v2766, %v2765
      %v2770 = vpack.c.bf16 %v2768, %v2767
      %v2771 = vld [vmem:[%s4 + $0x450] sm:$0x1]
      %v2772 = vlaneseq
      %v2773 = vshrl.u32 %v2772, 7
      %v2774 = vsub.s32 0, %v2773
      %v2775 = vrot.slane %v2771, %v2774
      %2776 = vmatprep.subr.bf16.mxu0 0
      %2777 = vmatpush1.bf16.msra.mxu0 0
      %2778 = vmatprep.subr.bf16.mxu0 0
      %2779 = vmatpush1.bf16.msra.mxu0 0
      %2780 = vmatprep.subr.bf16.mxu0 0
      %2781 = vmatpush1.bf16.msra.mxu0 0
      %2782 = vmatprep.subr.bf16.mxu0 0
      %2783 = vmatpush1.bf16.msra.mxu0 0
      %2784 = vmatprep.subr.bf16.mxu0 0
      %2785 = vmatpush1.bf16.msra.mxu0 0
      %2786 = vmatprep.subr.bf16.mxu0 0
      %2787 = vmatpush1.bf16.msra.mxu0 0
      %2788 = vmatprep.subr.bf16.mxu0 0
      %2789 = vmatpush1.bf16.msra.mxu0 %v2770
      %2790 = vmatprep.subr.bf16.mxu0 0
      %2791 = vmatpush1.bf16.msra.mxu0 %v2769
      %2792 = vmatprep.subr.bf16.mxu0 0
      %2793 = vmatpush2.bf16.msra.mxu0 0
      %2794 = vmatprep.subr.bf16.mxu0 0
      %2795 = vmatpush2.bf16.msra.mxu0 0
      %2796 = vmatprep.subr.bf16.mxu0 0
      %2797 = vmatpush2.bf16.msra.mxu0 0
      %2798 = vmatprep.subr.bf16.mxu0 0
      %2799 = vmatpush2.bf16.msra.mxu0 0
      %2800 = vmatprep.subr.bf16.mxu0 0
      %2801 = vmatpush2.bf16.msra.mxu0 0
      %2802 = vmatprep.subr.bf16.mxu0 0
      %2803 = vmatpush2.bf16.msra.mxu0 0
      %2804 = vmatprep.subr.bf16.mxu0 0
      %2805 = vmatpush2.bf16.msra.mxu0 0
      %2806 = vmatprep.subr.bf16.mxu0 0
      %2807 = vmatpush2.bf16.msra.mxu0 0
      %2808 = vmatprep.mubr.bf16.mxu0 0
      %2809 = vmatmul.mubr.bf16.gmra.mxu0 %v2072
      %v2810 = vpop.f32.mrf.mxu0
      %v2811 = vadd.f32 %v2775, %v2810
      %v2812 = vpop.f32.mrf.mxu0
      %v2813 = vpop.f32.mrf.mxu0
      %v2814 = vadd.f32 %v2775, %v2813
      %v2815 = vpop.f32.mrf.mxu0
      %2816 = vdwg.mxu0
      %v2817 = vld [vmem:[%s4 + $0x458] sm:$0xff]
      %v2818 = vld [vmem:[%s4 + $0x460] sm:$0xff]
      %v2819 = vld [vmem:[%s4 + $0x468] sm:$0xff]
      %v2820 = vld [vmem:[%s4 + $0x470] sm:$0xff]
      %v2821 = vpack.c.bf16 %v2818, %v2817
      %v2822 = vpack.c.bf16 %v2820, %v2819
      %v2823 = vld [vmem:[%s4 + $0x478] sm:$0x1]
      %v2824 = vlaneseq
      %v2825 = vshrl.u32 %v2824, 7
      %v2826 = vsub.s32 0, %v2825
      %v2827 = vrot.slane %v2823, %v2826
      %2828 = vmatprep.subr.bf16.mxu0 0
      %2829 = vmatpush1.bf16.msra.mxu0 0
      %2830 = vmatprep.subr.bf16.mxu0 0
      %2831 = vmatpush1.bf16.msra.mxu0 0
      %2832 = vmatprep.subr.bf16.mxu0 0
      %2833 = vmatpush1.bf16.msra.mxu0 0
      %2834 = vmatprep.subr.bf16.mxu0 0
      %2835 = vmatpush1.bf16.msra.mxu0 0
      %2836 = vmatprep.subr.bf16.mxu0 0
      %2837 = vmatpush1.bf16.msra.mxu0 0
      %2838 = vmatprep.subr.bf16.mxu0 0
      %2839 = vmatpush1.bf16.msra.mxu0 0
      %2840 = vmatprep.subr.bf16.mxu0 0
      %2841 = vmatpush1.bf16.msra.mxu0 %v2822
      %2842 = vmatprep.subr.bf16.mxu0 0
      %2843 = vmatpush1.bf16.msra.mxu0 %v2821
      %2844 = vmatprep.subr.bf16.mxu0 0
      %2845 = vmatpush2.bf16.msra.mxu0 0
      %2846 = vmatprep.subr.bf16.mxu0 0
      %2847 = vmatpush2.bf16.msra.mxu0 0
      %2848 = vmatprep.subr.bf16.mxu0 0
      %2849 = vmatpush2.bf16.msra.mxu0 0
      %2850 = vmatprep.subr.bf16.mxu0 0
      %2851 = vmatpush2.bf16.msra.mxu0 0
      %2852 = vmatprep.subr.bf16.mxu0 0
      %2853 = vmatpush2.bf16.msra.mxu0 0
      %2854 = vmatprep.subr.bf16.mxu0 0
      %2855 = vmatpush2.bf16.msra.mxu0 0
      %2856 = vmatprep.subr.bf16.mxu0 0
      %2857 = vmatpush2.bf16.msra.mxu0 0
      %2858 = vmatprep.subr.bf16.mxu0 0
      %2859 = vmatpush2.bf16.msra.mxu0 0
      %2860 = vmatprep.mubr.bf16.mxu0 0
      %2861 = vmatmul.mubr.bf16.gmra.mxu0 %v2072
      %v2862 = vpop.f32.mrf.mxu0
      %v2863 = vadd.f32 %v2827, %v2862
      %v2864 = vpop.f32.mrf.mxu0
      %v2865 = vpop.f32.mrf.mxu0
      %v2866 = vadd.f32 %v2827, %v2865
      %v2867 = vpop.f32.mrf.mxu0
      %2868 = vdwg.mxu0
      %v2869 = vpack.c.bf16 %v2762, %v2759
      %v2870 = vpack.c.bf16 %v2814, %v2811
      %v2872 = vsel %vm697, %v2869, 0
      %v2875 = vsel %vm697, %v2870, 0
      %2877 = vmatprep.subr.bf16.mxu0 0
      %2878 = vmatpush1.bf16.xpose.msra.mxu0 0
      %2879 = vmatprep.subr.bf16.mxu0 0
      %2880 = vmatpush1.bf16.xpose.msra.mxu0 0
      %2881 = vmatprep.subr.bf16.mxu0 0
      %2882 = vmatpush1.bf16.xpose.msra.mxu0 0
      %2883 = vmatprep.subr.bf16.mxu0 0
      %2884 = vmatpush1.bf16.xpose.msra.mxu0 0
      %2885 = vmatprep.subr.bf16.mxu0 0
      %2886 = vmatpush1.bf16.xpose.msra.mxu0 0
      %2887 = vmatprep.subr.bf16.mxu0 0
      %2888 = vmatpush1.bf16.xpose.msra.mxu0 0
      %2889 = vmatprep.subr.bf16.mxu0 0
      %2890 = vmatpush1.bf16.xpose.msra.mxu0 0
      %2891 = vmatprep.subr.bf16.mxu0 0
      %2892 = vmatpush1.bf16.xpose.msra.mxu0 %v2875
      %2893 = vmatprep.subr.bf16.mxu0 0
      %2894 = vmatpush2.bf16.xpose.msra.mxu0 0
      %2895 = vmatprep.subr.bf16.mxu0 0
      %2896 = vmatpush2.bf16.xpose.msra.mxu0 0
      %2897 = vmatprep.subr.bf16.mxu0 0
      %2898 = vmatpush2.bf16.xpose.msra.mxu0 0
      %2899 = vmatprep.subr.bf16.mxu0 0
      %2900 = vmatpush2.bf16.xpose.msra.mxu0 0
      %2901 = vmatprep.subr.bf16.mxu0 0
      %2902 = vmatpush2.bf16.xpose.msra.mxu0 0
      %2903 = vmatprep.subr.bf16.mxu0 0
      %2904 = vmatpush2.bf16.xpose.msra.mxu0 0
      %2905 = vmatprep.subr.bf16.mxu0 0
      %2906 = vmatpush2.bf16.xpose.msra.mxu0 0
      %2907 = vmatprep.subr.bf16.mxu0 0
      %2908 = vmatpush2.bf16.xpose.msra.mxu0 0
      %2909 = vmatprep.mubr.bf16.mxu0 0
      %2910 = vmatmul.mubr.bf16.gmra.mxu0 %v2872
      %v2911 = vpop.f32.mrf.mxu0
      %v2912 = vadd.f32 0.0, %v2911
      %v2913 = vpop.f32.mrf.mxu0
      %v2914 = vpop.f32.mrf.mxu0
      %v2915 = vadd.f32 0.0, %v2914
      %v2916 = vpop.f32.mrf.mxu0
      %2917 = vdwg.mxu0
      %v2918 = vmul.f32 %v2912, 0.35355338
      %v2919 = vmul.f32 %v2915, 0.35355338
      %v2920 = vsel %vm747, %v2918, -inf
      %2921 = vmax.xlane.f32.xlu0 %v2920
      %v2922 = vpop.xlane.xlu0 %2921
      %v2923 = vsel %vm747, %v2919, -inf
      %2924 = vmax.xlane.f32.xlu0 %v2923
      %v2925 = vpop.xlane.xlu0 %2924
      %v2926 = vsub.f32 %v2918, %v2922
      %v2927 = vsub.f32 %v2919, %v2925
      %v2928 = vmul.f32 %v2926, 1.442695
      %v2929 = vpow.pop %v2928
      %v2930 = vmul.f32 %v2927, 1.442695
      %v2931 = vpow.pop %v2930
      %v2932 = vsel %vm747, %v2929, 0.0
      %2933 = vadd.xlane.f32.xlu0 %v2932
      %v2934 = vpop.xlane.xlu0 %2933
      %v2935 = vsel %vm747, %v2931, 0.0
      %2936 = vadd.xlane.f32.xlu0 %v2935
      %v2937 = vpop.xlane.xlu0 %2936
      %v2938 = vrcp.pop %v2934
      %v2939 = vrcp.pop %v2937
      %v2940 = vmul.f32 %v2929, %v2938
      %v2941 = vmul.f32 %v2931, %v2939
      %v2942 = vpack.c.bf16 %v2941, %v2940
      %v2943 = vpack.c.bf16 %v2866, %v2863
      %v2945 = vsel %vm747, %v2942, 0
      %2947 = vmatprep.subr.bf16.mxu0 0
      %2948 = vmatpush1.bf16.msra.mxu0 0
      %2949 = vmatprep.subr.bf16.mxu0 0
      %2950 = vmatpush1.bf16.msra.mxu0 0
      %2951 = vmatprep.subr.bf16.mxu0 0
      %2952 = vmatpush1.bf16.msra.mxu0 0
      %2953 = vmatprep.subr.bf16.mxu0 0
      %2954 = vmatpush1.bf16.msra.mxu0 0
      %2955 = vmatprep.subr.bf16.mxu0 0
      %2956 = vmatpush1.bf16.msra.mxu0 0
      %2957 = vmatprep.subr.bf16.mxu0 0
      %2958 = vmatpush1.bf16.msra.mxu0 0
      %2959 = vmatprep.subr.bf16.mxu0 0
      %2960 = vmatpush1.bf16.msra.mxu0 0
      %2961 = vmatprep.subr.bf16.mxu0 0
      %2962 = vmatpush1.bf16.msra.mxu0 %v2943
      %2963 = vmatprep.subr.bf16.mxu0 0
      %2964 = vmatpush2.bf16.msra.mxu0 0
      %2965 = vmatprep.subr.bf16.mxu0 0
      %2966 = vmatpush2.bf16.msra.mxu0 0
      %2967 = vmatprep.subr.bf16.mxu0 0
      %2968 = vmatpush2.bf16.msra.mxu0 0
      %2969 = vmatprep.subr.bf16.mxu0 0
      %2970 = vmatpush2.bf16.msra.mxu0 0
      %2971 = vmatprep.subr.bf16.mxu0 0
      %2972 = vmatpush2.bf16.msra.mxu0 0
      %2973 = vmatprep.subr.bf16.mxu0 0
      %2974 = vmatpush2.bf16.msra.mxu0 0
      %2975 = vmatprep.subr.bf16.mxu0 0
      %2976 = vmatpush2.bf16.msra.mxu0 0
      %2977 = vmatprep.subr.bf16.mxu0 0
      %2978 = vmatpush2.bf16.msra.mxu0 0
      %2979 = vmatprep.mubr.bf16.mxu0 0
      %2980 = vmatmul.mubr.bf16.gmra.mxu0 %v2945
      %v2981 = vpop.f32.mrf.mxu0
      %v2982 = vadd.f32 0.0, %v2981
      %v2983 = vpop.f32.mrf.mxu0
      %v2984 = vpop.f32.mrf.mxu0
      %v2985 = vadd.f32 0.0, %v2984
      %v2986 = vpop.f32.mrf.mxu0
      %2987 = vdwg.mxu0
      %v2988 = vld [vmem:[%s4 + $0x480] sm:$0xff]
      %v2989 = vpack.c.bf16 %v2985, %v2982
      %v2990 = vpack.c.bf16 %v2988, %v2988
      %v2992 = vsel %vm697, %v2989, 0
      %v2995 = vsel %vm1100, %v2990, 0
      %2997 = vmatprep.subr.bf16.mxu0 0
      %2998 = vmatpush1.bf16.msra.mxu0 0
      %2999 = vmatprep.subr.bf16.mxu0 0
      %3000 = vmatpush1.bf16.msra.mxu0 0
      %3001 = vmatprep.subr.bf16.mxu0 0
      %3002 = vmatpush1.bf16.msra.mxu0 0
      %3003 = vmatprep.subr.bf16.mxu0 0
      %3004 = vmatpush1.bf16.msra.mxu0 0
      %3005 = vmatprep.subr.bf16.mxu0 0
      %3006 = vmatpush1.bf16.msra.mxu0 0
      %3007 = vmatprep.subr.bf16.mxu0 0
      %3008 = vmatpush1.bf16.msra.mxu0 0
      %3009 = vmatprep.subr.bf16.mxu0 0
      %3010 = vmatpush1.bf16.msra.mxu0 0
      %3011 = vmatprep.subr.bf16.mxu0 0
      %3012 = vmatpush1.bf16.msra.mxu0 %v2995
      %3013 = vmatprep.subr.bf16.mxu0 0
      %3014 = vmatpush2.bf16.msra.mxu0 0
      %3015 = vmatprep.subr.bf16.mxu0 0
      %3016 = vmatpush2.bf16.msra.mxu0 0
      %3017 = vmatprep.subr.bf16.mxu0 0
      %3018 = vmatpush2.bf16.msra.mxu0 0
      %3019 = vmatprep.subr.bf16.mxu0 0
      %3020 = vmatpush2.bf16.msra.mxu0 0
      %3021 = vmatprep.subr.bf16.mxu0 0
      %3022 = vmatpush2.bf16.msra.mxu0 0
      %3023 = vmatprep.subr.bf16.mxu0 0
      %3024 = vmatpush2.bf16.msra.mxu0 0
      %3025 = vmatprep.subr.bf16.mxu0 0
      %3026 = vmatpush2.bf16.msra.mxu0 0
      %3027 = vmatprep.subr.bf16.mxu0 0
      %3028 = vmatpush2.bf16.msra.mxu0 0
      %3029 = vmatprep.mubr.bf16.mxu0 0
      %3030 = vmatmul.mubr.bf16.gmra.mxu0 %v2992
      %v3031 = vpop.f32.mrf.mxu0
      %v3032 = vadd.f32 0.0, %v3031
      %v3033 = vpop.f32.mrf.mxu0
      %v3034 = vpop.f32.mrf.mxu0
      %v3035 = vadd.f32 0.0, %v3034
      %v3036 = vpop.f32.mrf.mxu0
      %3037 = vdwg.mxu0
      %v3038 = vadd.f32 %v2707, %v3032
      %v3039 = vadd.f32 %v2710, %v3035
      %v3040 = vld [vmem:[%s4 + $0x488] sm:$0xff]
      %v3041 = vld [vmem:[%s4 + $0x490] sm:$0xff]
      %v3042 = vld [vmem:[%s4 + $0x498] sm:$0xff]
      %v3043 = vld [vmem:[%s4 + $0x4a0] sm:$0xff]
      %v3044 = vpack.c.bf16 %v3041, %v3040
      %v3045 = vpack.c.bf16 %v3043, %v3042
      %v3046 = vld [vmem:[%s4 + $0x4a8] sm:$0x1]
      %v3047 = vlaneseq
      %v3048 = vshrl.u32 %v3047, 7
      %v3049 = vsub.s32 0, %v3048
      %v3050 = vrot.slane %v3046, %v3049
      %3051 = vmatprep.subr.bf16.mxu0 0
      %3052 = vmatpush1.bf16.msra.mxu0 0
      %3053 = vmatprep.subr.bf16.mxu0 0
      %3054 = vmatpush1.bf16.msra.mxu0 0
      %3055 = vmatprep.subr.bf16.mxu0 0
      %3056 = vmatpush1.bf16.msra.mxu0 0
      %3057 = vmatprep.subr.bf16.mxu0 0
      %3058 = vmatpush1.bf16.msra.mxu0 0
      %3059 = vmatprep.subr.bf16.mxu0 0
      %3060 = vmatpush1.bf16.msra.mxu0 0
      %3061 = vmatprep.subr.bf16.mxu0 0
      %3062 = vmatpush1.bf16.msra.mxu0 0
      %3063 = vmatprep.subr.bf16.mxu0 0
      %3064 = vmatpush1.bf16.msra.mxu0 %v3045
      %3065 = vmatprep.subr.bf16.mxu0 0
      %3066 = vmatpush1.bf16.msra.mxu0 %v3044
      %3067 = vmatprep.subr.bf16.mxu0 0
      %3068 = vmatpush2.bf16.msra.mxu0 0
      %3069 = vmatprep.subr.bf16.mxu0 0
      %3070 = vmatpush2.bf16.msra.mxu0 0
      %3071 = vmatprep.subr.bf16.mxu0 0
      %3072 = vmatpush2.bf16.msra.mxu0 0
      %3073 = vmatprep.subr.bf16.mxu0 0
      %3074 = vmatpush2.bf16.msra.mxu0 0
      %3075 = vmatprep.subr.bf16.mxu0 0
      %3076 = vmatpush2.bf16.msra.mxu0 0
      %3077 = vmatprep.subr.bf16.mxu0 0
      %3078 = vmatpush2.bf16.msra.mxu0 0
      %3079 = vmatprep.subr.bf16.mxu0 0
      %3080 = vmatpush2.bf16.msra.mxu0 0
      %3081 = vmatprep.subr.bf16.mxu0 0
      %3082 = vmatpush2.bf16.msra.mxu0 0
      %3083 = vmatprep.mubr.bf16.mxu0 0
      %3084 = vmatmul.mubr.bf16.gmra.mxu0 %v2072
      %v3085 = vpop.f32.mrf.mxu0
      %v3086 = vadd.f32 %v3050, %v3085
      %v3087 = vpop.f32.mrf.mxu0
      %v3088 = vpop.f32.mrf.mxu0
      %v3089 = vadd.f32 %v3050, %v3088
      %v3090 = vpop.f32.mrf.mxu0
      %3091 = vdwg.mxu0
      %v3092 = vld [vmem:[%s4 + $0x4b0] sm:$0xff]
      %v3093 = vld [vmem:[%s4 + $0x4b8] sm:$0xff]
      %v3094 = vld [vmem:[%s4 + $0x4c0] sm:$0xff]
      %v3095 = vld [vmem:[%s4 + $0x4c8] sm:$0xff]
      %v3096 = vpack.c.bf16 %v3093, %v3092
      %v3097 = vpack.c.bf16 %v3095, %v3094
      %v3098 = vld [vmem:[%s4 + $0x4d0] sm:$0x1]
      %v3099 = vlaneseq
      %v3100 = vshrl.u32 %v3099, 7
      %v3101 = vsub.s32 0, %v3100
      %v3102 = vrot.slane %v3098, %v3101
      %3103 = vmatprep.subr.bf16.mxu0 0
      %3104 = vmatpush1.bf16.msra.mxu0 0
      %3105 = vmatprep.subr.bf16.mxu0 0
      %3106 = vmatpush1.bf16.msra.mxu0 0
      %3107 = vmatprep.subr.bf16.mxu0 0
      %3108 = vmatpush1.bf16.msra.mxu0 0
      %3109 = vmatprep.subr.bf16.mxu0 0
      %3110 = vmatpush1.bf16.msra.mxu0 0
      %3111 = vmatprep.subr.bf16.mxu0 0
      %3112 = vmatpush1.bf16.msra.mxu0 0
      %3113 = vmatprep.subr.bf16.mxu0 0
      %3114 = vmatpush1.bf16.msra.mxu0 0
      %3115 = vmatprep.subr.bf16.mxu0 0
      %3116 = vmatpush1.bf16.msra.mxu0 %v3097
      %3117 = vmatprep.subr.bf16.mxu0 0
      %3118 = vmatpush1.bf16.msra.mxu0 %v3096
      %3119 = vmatprep.subr.bf16.mxu0 0
      %3120 = vmatpush2.bf16.msra.mxu0 0
      %3121 = vmatprep.subr.bf16.mxu0 0
      %3122 = vmatpush2.bf16.msra.mxu0 0
      %3123 = vmatprep.subr.bf16.mxu0 0
      %3124 = vmatpush2.bf16.msra.mxu0 0
      %3125 = vmatprep.subr.bf16.mxu0 0
      %3126 = vmatpush2.bf16.msra.mxu0 0
      %3127 = vmatprep.subr.bf16.mxu0 0
      %3128 = vmatpush2.bf16.msra.mxu0 0
      %3129 = vmatprep.subr.bf16.mxu0 0
      %3130 = vmatpush2.bf16.msra.mxu0 0
      %3131 = vmatprep.subr.bf16.mxu0 0
      %3132 = vmatpush2.bf16.msra.mxu0 0
      %3133 = vmatprep.subr.bf16.mxu0 0
      %3134 = vmatpush2.bf16.msra.mxu0 0
      %3135 = vmatprep.mubr.bf16.mxu0 0
      %3136 = vmatmul.mubr.bf16.gmra.mxu0 %v2072
      %v3137 = vpop.f32.mrf.mxu0
      %v3138 = vadd.f32 %v3102, %v3137
      %v3139 = vpop.f32.mrf.mxu0
      %v3140 = vpop.f32.mrf.mxu0
      %v3141 = vadd.f32 %v3102, %v3140
      %v3142 = vpop.f32.mrf.mxu0
      %3143 = vdwg.mxu0
      %v3144 = vld [vmem:[%s4 + $0x4d8] sm:$0xff]
      %v3145 = vld [vmem:[%s4 + $0x4e0] sm:$0xff]
      %v3146 = vld [vmem:[%s4 + $0x4e8] sm:$0xff]
      %v3147 = vld [vmem:[%s4 + $0x4f0] sm:$0xff]
      %v3148 = vpack.c.bf16 %v3145, %v3144
      %v3149 = vpack.c.bf16 %v3147, %v3146
      %v3150 = vld [vmem:[%s4 + $0x4f8] sm:$0x1]
      %v3151 = vlaneseq
      %v3152 = vshrl.u32 %v3151, 7
      %v3153 = vsub.s32 0, %v3152
      %v3154 = vrot.slane %v3150, %v3153
      %3155 = vmatprep.subr.bf16.mxu0 0
      %3156 = vmatpush1.bf16.msra.mxu0 0
      %3157 = vmatprep.subr.bf16.mxu0 0
      %3158 = vmatpush1.bf16.msra.mxu0 0
      %3159 = vmatprep.subr.bf16.mxu0 0
      %3160 = vmatpush1.bf16.msra.mxu0 0
      %3161 = vmatprep.subr.bf16.mxu0 0
      %3162 = vmatpush1.bf16.msra.mxu0 0
      %3163 = vmatprep.subr.bf16.mxu0 0
      %3164 = vmatpush1.bf16.msra.mxu0 0
      %3165 = vmatprep.subr.bf16.mxu0 0
      %3166 = vmatpush1.bf16.msra.mxu0 0
      %3167 = vmatprep.subr.bf16.mxu0 0
      %3168 = vmatpush1.bf16.msra.mxu0 %v3149
      %3169 = vmatprep.subr.bf16.mxu0 0
      %3170 = vmatpush1.bf16.msra.mxu0 %v3148
      %3171 = vmatprep.subr.bf16.mxu0 0
      %3172 = vmatpush2.bf16.msra.mxu0 0
      %3173 = vmatprep.subr.bf16.mxu0 0
      %3174 = vmatpush2.bf16.msra.mxu0 0
      %3175 = vmatprep.subr.bf16.mxu0 0
      %3176 = vmatpush2.bf16.msra.mxu0 0
      %3177 = vmatprep.subr.bf16.mxu0 0
      %3178 = vmatpush2.bf16.msra.mxu0 0
      %3179 = vmatprep.subr.bf16.mxu0 0
      %3180 = vmatpush2.bf16.msra.mxu0 0
      %3181 = vmatprep.subr.bf16.mxu0 0
      %3182 = vmatpush2.bf16.msra.mxu0 0
      %3183 = vmatprep.subr.bf16.mxu0 0
      %3184 = vmatpush2.bf16.msra.mxu0 0
      %3185 = vmatprep.subr.bf16.mxu0 0
      %3186 = vmatpush2.bf16.msra.mxu0 0
      %3187 = vmatprep.mubr.bf16.mxu0 0
      %3188 = vmatmul.mubr.bf16.gmra.mxu0 %v2072
      %v3189 = vpop.f32.mrf.mxu0
      %v3190 = vadd.f32 %v3154, %v3189
      %v3191 = vpop.f32.mrf.mxu0
      %v3192 = vpop.f32.mrf.mxu0
      %v3193 = vadd.f32 %v3154, %v3192
      %v3194 = vpop.f32.mrf.mxu0
      %3195 = vdwg.mxu0
      %v3196 = vpack.c.bf16 %v3089, %v3086
      %v3197 = vpack.c.bf16 %v3141, %v3138
      %v3199 = vsel %vm697, %v3196, 0
      %v3202 = vsel %vm697, %v3197, 0
      %3204 = vmatprep.subr.bf16.mxu0 0
      %3205 = vmatpush1.bf16.xpose.msra.mxu0 0
      %3206 = vmatprep.subr.bf16.mxu0 0
      %3207 = vmatpush1.bf16.xpose.msra.mxu0 0
      %3208 = vmatprep.subr.bf16.mxu0 0
      %3209 = vmatpush1.bf16.xpose.msra.mxu0 0
      %3210 = vmatprep.subr.bf16.mxu0 0
      %3211 = vmatpush1.bf16.xpose.msra.mxu0 0
      %3212 = vmatprep.subr.bf16.mxu0 0
      %3213 = vmatpush1.bf16.xpose.msra.mxu0 0
      %3214 = vmatprep.subr.bf16.mxu0 0
      %3215 = vmatpush1.bf16.xpose.msra.mxu0 0
      %3216 = vmatprep.subr.bf16.mxu0 0
      %3217 = vmatpush1.bf16.xpose.msra.mxu0 0
      %3218 = vmatprep.subr.bf16.mxu0 0
      %3219 = vmatpush1.bf16.xpose.msra.mxu0 %v3202
      %3220 = vmatprep.subr.bf16.mxu0 0
      %3221 = vmatpush2.bf16.xpose.msra.mxu0 0
      %3222 = vmatprep.subr.bf16.mxu0 0
      %3223 = vmatpush2.bf16.xpose.msra.mxu0 0
      %3224 = vmatprep.subr.bf16.mxu0 0
      %3225 = vmatpush2.bf16.xpose.msra.mxu0 0
      %3226 = vmatprep.subr.bf16.mxu0 0
      %3227 = vmatpush2.bf16.xpose.msra.mxu0 0
      %3228 = vmatprep.subr.bf16.mxu0 0
      %3229 = vmatpush2.bf16.xpose.msra.mxu0 0
      %3230 = vmatprep.subr.bf16.mxu0 0
      %3231 = vmatpush2.bf16.xpose.msra.mxu0 0
      %3232 = vmatprep.subr.bf16.mxu0 0
      %3233 = vmatpush2.bf16.xpose.msra.mxu0 0
      %3234 = vmatprep.subr.bf16.mxu0 0
      %3235 = vmatpush2.bf16.xpose.msra.mxu0 0
      %3236 = vmatprep.mubr.bf16.mxu0 0
      %3237 = vmatmul.mubr.bf16.gmra.mxu0 %v3199
      %v3238 = vpop.f32.mrf.mxu0
      %v3239 = vadd.f32 0.0, %v3238
      %v3240 = vpop.f32.mrf.mxu0
      %v3241 = vpop.f32.mrf.mxu0
      %v3242 = vadd.f32 0.0, %v3241
      %v3243 = vpop.f32.mrf.mxu0
      %3244 = vdwg.mxu0
      %v3245 = vmul.f32 %v3239, 0.35355338
      %v3246 = vmul.f32 %v3242, 0.35355338
      %v3247 = vsel %vm747, %v3245, -inf
      %3248 = vmax.xlane.f32.xlu0 %v3247
      %v3249 = vpop.xlane.xlu0 %3248
      %v3250 = vsel %vm747, %v3246, -inf
      %3251 = vmax.xlane.f32.xlu0 %v3250
      %v3252 = vpop.xlane.xlu0 %3251
      %v3253 = vsub.f32 %v3245, %v3249
      %v3254 = vsub.f32 %v3246, %v3252
      %v3255 = vmul.f32 %v3253, 1.442695
      %v3256 = vpow.pop %v3255
      %v3257 = vmul.f32 %v3254, 1.442695
      %v3258 = vpow.pop %v3257
      %v3259 = vsel %vm747, %v3256, 0.0
      %3260 = vadd.xlane.f32.xlu0 %v3259
      %v3261 = vpop.xlane.xlu0 %3260
      %v3262 = vsel %vm747, %v3258, 0.0
      %3263 = vadd.xlane.f32.xlu0 %v3262
      %v3264 = vpop.xlane.xlu0 %3263
      %v3265 = vrcp.pop %v3261
      %v3266 = vrcp.pop %v3264
      %v3267 = vmul.f32 %v3256, %v3265
      %v3268 = vmul.f32 %v3258, %v3266
      %v3269 = vpack.c.bf16 %v3268, %v3267
      %v3270 = vpack.c.bf16 %v3193, %v3190
      %v3272 = vsel %vm747, %v3269, 0
      %3274 = vmatprep.subr.bf16.mxu0 0
      %3275 = vmatpush1.bf16.msra.mxu0 0
      %3276 = vmatprep.subr.bf16.mxu0 0
      %3277 = vmatpush1.bf16.msra.mxu0 0
      %3278 = vmatprep.subr.bf16.mxu0 0
      %3279 = vmatpush1.bf16.msra.mxu0 0
      %3280 = vmatprep.subr.bf16.mxu0 0
      %3281 = vmatpush1.bf16.msra.mxu0 0
      %3282 = vmatprep.subr.bf16.mxu0 0
      %3283 = vmatpush1.bf16.msra.mxu0 0
      %3284 = vmatprep.subr.bf16.mxu0 0
      %3285 = vmatpush1.bf16.msra.mxu0 0
      %3286 = vmatprep.subr.bf16.mxu0 0
      %3287 = vmatpush1.bf16.msra.mxu0 0
      %3288 = vmatprep.subr.bf16.mxu0 0
      %3289 = vmatpush1.bf16.msra.mxu0 %v3270
      %3290 = vmatprep.subr.bf16.mxu0 0
      %3291 = vmatpush2.bf16.msra.mxu0 0
      %3292 = vmatprep.subr.bf16.mxu0 0
      %3293 = vmatpush2.bf16.msra.mxu0 0
      %3294 = vmatprep.subr.bf16.mxu0 0
      %3295 = vmatpush2.bf16.msra.mxu0 0
      %3296 = vmatprep.subr.bf16.mxu0 0
      %3297 = vmatpush2.bf16.msra.mxu0 0
      %3298 = vmatprep.subr.bf16.mxu0 0
      %3299 = vmatpush2.bf16.msra.mxu0 0
      %3300 = vmatprep.subr.bf16.mxu0 0
      %3301 = vmatpush2.bf16.msra.mxu0 0
      %3302 = vmatprep.subr.bf16.mxu0 0
      %3303 = vmatpush2.bf16.msra.mxu0 0
      %3304 = vmatprep.subr.bf16.mxu0 0
      %3305 = vmatpush2.bf16.msra.mxu0 0
      %3306 = vmatprep.mubr.bf16.mxu0 0
      %3307 = vmatmul.mubr.bf16.gmra.mxu0 %v3272
      %v3308 = vpop.f32.mrf.mxu0
      %v3309 = vadd.f32 0.0, %v3308
      %v3310 = vpop.f32.mrf.mxu0
      %v3311 = vpop.f32.mrf.mxu0
      %v3312 = vadd.f32 0.0, %v3311
      %v3313 = vpop.f32.mrf.mxu0
      %3314 = vdwg.mxu0
      %v3315 = vld [vmem:[%s4 + $0x500] sm:$0xff]
      %v3316 = vpack.c.bf16 %v3312, %v3309
      %v3317 = vpack.c.bf16 %v3315, %v3315
      %v3319 = vsel %vm697, %v3316, 0
      %v3322 = vsel %vm1100, %v3317, 0
      %3324 = vmatprep.subr.bf16.mxu0 0
      %3325 = vmatpush1.bf16.msra.mxu0 0
      %3326 = vmatprep.subr.bf16.mxu0 0
      %3327 = vmatpush1.bf16.msra.mxu0 0
      %3328 = vmatprep.subr.bf16.mxu0 0
      %3329 = vmatpush1.bf16.msra.mxu0 0
      %3330 = vmatprep.subr.bf16.mxu0 0
      %3331 = vmatpush1.bf16.msra.mxu0 0
      %3332 = vmatprep.subr.bf16.mxu0 0
      %3333 = vmatpush1.bf16.msra.mxu0 0
      %3334 = vmatprep.subr.bf16.mxu0 0
      %3335 = vmatpush1.bf16.msra.mxu0 0
      %3336 = vmatprep.subr.bf16.mxu0 0
      %3337 = vmatpush1.bf16.msra.mxu0 0
      %3338 = vmatprep.subr.bf16.mxu0 0
      %3339 = vmatpush1.bf16.msra.mxu0 %v3322
      %3340 = vmatprep.subr.bf16.mxu0 0
      %3341 = vmatpush2.bf16.msra.mxu0 0
      %3342 = vmatprep.subr.bf16.mxu0 0
      %3343 = vmatpush2.bf16.msra.mxu0 0
      %3344 = vmatprep.subr.bf16.mxu0 0
      %3345 = vmatpush2.bf16.msra.mxu0 0
      %3346 = vmatprep.subr.bf16.mxu0 0
      %3347 = vmatpush2.bf16.msra.mxu0 0
      %3348 = vmatprep.subr.bf16.mxu0 0
      %3349 = vmatpush2.bf16.msra.mxu0 0
      %3350 = vmatprep.subr.bf16.mxu0 0
      %3351 = vmatpush2.bf16.msra.mxu0 0
      %3352 = vmatprep.subr.bf16.mxu0 0
      %3353 = vmatpush2.bf16.msra.mxu0 0
      %3354 = vmatprep.subr.bf16.mxu0 0
      %3355 = vmatpush2.bf16.msra.mxu0 0
      %3356 = vmatprep.mubr.bf16.mxu0 0
      %3357 = vmatmul.mubr.bf16.gmra.mxu0 %v3319
      %v3358 = vpop.f32.mrf.mxu0
      %v3359 = vadd.f32 0.0, %v3358
      %v3360 = vpop.f32.mrf.mxu0
      %v3361 = vpop.f32.mrf.mxu0
      %v3362 = vadd.f32 0.0, %v3361
      %v3363 = vpop.f32.mrf.mxu0
      %3364 = vdwg.mxu0
      %v3365 = vadd.f32 %v3038, %v3359
      %v3366 = vadd.f32 %v3039, %v3362
      %v3367 = vld [vmem:[%s4 + $0x508] sm:$0x1]
      %v3368 = vlaneseq
      %v3369 = vshrl.u32 %v3368, 7
      %v3370 = vsub.s32 0, %v3369
      %v3371 = vrot.slane %v3367, %v3370
      %v3372 = vadd.f32 %v3365, %v3371
      %v3373 = vadd.f32 %v3366, %v3371
      %v3374 = vadd.f32 %v2057, %v3372
      %v3375 = vadd.f32 %v2058, %v3373
      %v3376 = vsel %vm546, %v3374, 0.0
      %3377 = vadd.xlane.f32.xlu0 %v3376
      %v3378 = vpop.xlane.xlu0 %3377
      %v3379 = vsel %vm546, %v3375, 0.0
      %3380 = vadd.xlane.f32.xlu0 %v3379
      %v3381 = vpop.xlane.xlu0 %3380
      %v3382 = vmul.f32 %v3378, %v1861
      %v3383 = vmul.f32 %v3381, %v1861
      %v3384 = vsub.f32 %v3374, %v3382
      %v3385 = vsub.f32 %v3375, %v3383
      %v3386 = vmul.f32 %v3384, %v3384
      %v3387 = vmul.f32 %v3385, %v3385
      %v3388 = vsel %vm546, %v3386, 0.0
      %3389 = vadd.xlane.f32.xlu0 %v3388
      %v3390 = vpop.xlane.xlu0 %3389
      %v3391 = vsel %vm546, %v3387, 0.0
      %3392 = vadd.xlane.f32.xlu0 %v3391
      %v3393 = vpop.xlane.xlu0 %3392
      %v3394 = vmul.f32 %v3390, %v1861
      %v3395 = vmul.f32 %v3393, %v1861
      %v3396 = vadd.f32 %v3394, 1e-05
      %v3397 = vadd.f32 %v3395, 1e-05
      %v3398 = vrsqrt.pop %v3396
      %v3399 = vrsqrt.pop %v3397
      %v3400 = vmul.f32 %v3384, %v3398
      %v3401 = vmul.f32 %v3385, %v3399
      %v3402 = vld [vmem:[%s4 + $0x580] sm:$0x1]
      %v3403 = vlaneseq
      %v3404 = vshrl.u32 %v3403, 7
      %v3405 = vsub.s32 0, %v3404
      %v3406 = vrot.slane %v3402, %v3405
      %v3407 = vmul.f32 %v3400, %v3406
      %v3408 = vmul.f32 %v3401, %v3406
      %v3409 = vld [vmem:[%s4 + $0x588] sm:$0x1]
      %v3410 = vlaneseq
      %v3411 = vshrl.u32 %v3410, 7
      %v3412 = vsub.s32 0, %v3411
      %v3413 = vrot.slane %v3409, %v3412
      %v3414 = vadd.f32 %v3407, %v3413
      %v3415 = vadd.f32 %v3408, %v3413
      %v3416 = vld [vmem:[%s4 + $0x510] sm:$0xff]
      %v3417 = vld [vmem:[%s4 + $0x518] sm:$0xff]
      %v3418 = vld [vmem:[%s4 + $0x520] sm:$0xff]
      %v3419 = vld [vmem:[%s4 + $0x528] sm:$0xff]
      %v3420 = vpack.c.bf16 %v3415, %v3414
      %v3421 = vpack.c.bf16 %v3417, %v3416
      %v3422 = vpack.c.bf16 %v3419, %v3418
      %v3423 = vld [vmem:[%s4 + $0x530] sm:$0x1]
      %v3424 = vlaneseq
      %v3425 = vshrl.u32 %v3424, 7
      %v3426 = vsub.s32 0, %v3425
      %v3427 = vrot.slane %v3423, %v3426
      %v3429 = vsel %vm546, %v3420, 0
      %3431 = vmatprep.subr.bf16.mxu0 0
      %3432 = vmatpush1.bf16.msra.mxu0 0
      %3433 = vmatprep.subr.bf16.mxu0 0
      %3434 = vmatpush1.bf16.msra.mxu0 0
      %3435 = vmatprep.subr.bf16.mxu0 0
      %3436 = vmatpush1.bf16.msra.mxu0 0
      %3437 = vmatprep.subr.bf16.mxu0 0
      %3438 = vmatpush1.bf16.msra.mxu0 0
      %3439 = vmatprep.subr.bf16.mxu0 0
      %3440 = vmatpush1.bf16.msra.mxu0 0
      %3441 = vmatprep.subr.bf16.mxu0 0
      %3442 = vmatpush1.bf16.msra.mxu0 0
      %3443 = vmatprep.subr.bf16.mxu0 0
      %3444 = vmatpush1.bf16.msra.mxu0 %v3422
      %3445 = vmatprep.subr.bf16.mxu0 0
      %3446 = vmatpush1.bf16.msra.mxu0 %v3421
      %3447 = vmatprep.subr.bf16.mxu0 0
      %3448 = vmatpush2.bf16.msra.mxu0 0
      %3449 = vmatprep.subr.bf16.mxu0 0
      %3450 = vmatpush2.bf16.msra.mxu0 0
      %3451 = vmatprep.subr.bf16.mxu0 0
      %3452 = vmatpush2.bf16.msra.mxu0 0
      %3453 = vmatprep.subr.bf16.mxu0 0
      %3454 = vmatpush2.bf16.msra.mxu0 0
      %3455 = vmatprep.subr.bf16.mxu0 0
      %3456 = vmatpush2.bf16.msra.mxu0 0
      %3457 = vmatprep.subr.bf16.mxu0 0
      %3458 = vmatpush2.bf16.msra.mxu0 0
      %3459 = vmatprep.subr.bf16.mxu0 0
      %3460 = vmatpush2.bf16.msra.mxu0 0
      %3461 = vmatprep.subr.bf16.mxu0 0
      %3462 = vmatpush2.bf16.msra.mxu0 0
      %3463 = vmatprep.mubr.bf16.mxu0 0
      %3464 = vmatmul.mubr.bf16.gmra.mxu0 %v3429
      %v3465 = vpop.f32.mrf.mxu0
      %v3466 = vadd.f32 %v3427, %v3465
      %v3467 = vpop.f32.mrf.mxu0
      %v3468 = vpop.f32.mrf.mxu0
      %v3469 = vadd.f32 %v3427, %v3468
      %v3470 = vpop.f32.mrf.mxu0
      %3471 = vdwg.mxu0
      %v3472 = vmax.f32 %v3466, 0.0
      %v3473 = vmax.f32 %v3469, 0.0
      %v3474 = vld [vmem:[%s4 + $0x538] sm:$0xff]
      %v3475 = vld [vmem:[%s4 + $0x540] sm:$0xff]
      %v3476 = vld [vmem:[%s4 + $0x548] sm:$0xff]
      %v3477 = vld [vmem:[%s4 + $0x550] sm:$0xff]
      %v3478 = vld [vmem:[%s4 + $0x558] sm:$0xff]
      %v3479 = vld [vmem:[%s4 + $0x560] sm:$0xff]
      %v3480 = vld [vmem:[%s4 + $0x568] sm:$0xff]
      %v3481 = vld [vmem:[%s4 + $0x570] sm:$0xff]
      %v3482 = vpack.c.bf16 %v3473, %v3472
      %v3483 = vpack.c.bf16 %v3475, %v3474
      %v3484 = vpack.c.bf16 %v3477, %v3476
      %v3485 = vpack.c.bf16 %v3479, %v3478
      %v3486 = vpack.c.bf16 %v3481, %v3480
      %v3487 = vld [vmem:[%s4 + $0x578] sm:$0x1]
      %v3488 = vlaneseq
      %v3489 = vshrl.u32 %v3488, 7
      %v3490 = vsub.s32 0, %v3489
      %v3491 = vrot.slane %v3487, %v3490
      %v3493 = vsel %vm1972, %v3482, 0
      %3495 = vmatprep.subr.bf16.mxu0 0
      %3496 = vmatpush1.bf16.msra.mxu0 0
      %3497 = vmatprep.subr.bf16.mxu0 0
      %3498 = vmatpush1.bf16.msra.mxu0 0
      %3499 = vmatprep.subr.bf16.mxu0 0
      %3500 = vmatpush1.bf16.msra.mxu0 0
      %3501 = vmatprep.subr.bf16.mxu0 0
      %3502 = vmatpush1.bf16.msra.mxu0 0
      %3503 = vmatprep.subr.bf16.mxu0 0
      %3504 = vmatpush1.bf16.msra.mxu0 %v3486
      %3505 = vmatprep.subr.bf16.mxu0 0
      %3506 = vmatpush1.bf16.msra.mxu0 %v3485
      %3507 = vmatprep.subr.bf16.mxu0 0
      %3508 = vmatpush1.bf16.msra.mxu0 %v3484
      %3509 = vmatprep.subr.bf16.mxu0 0
      %3510 = vmatpush1.bf16.msra.mxu0 %v3483
      %3511 = vmatprep.subr.bf16.mxu0 0
      %3512 = vmatpush2.bf16.msra.mxu0 0
      %3513 = vmatprep.subr.bf16.mxu0 0
      %3514 = vmatpush2.bf16.msra.mxu0 0
      %3515 = vmatprep.subr.bf16.mxu0 0
      %3516 = vmatpush2.bf16.msra.mxu0 0
      %3517 = vmatprep.subr.bf16.mxu0 0
      %3518 = vmatpush2.bf16.msra.mxu0 0
      %3519 = vmatprep.subr.bf16.mxu0 0
      %3520 = vmatpush2.bf16.msra.mxu0 0
      %3521 = vmatprep.subr.bf16.mxu0 0
      %3522 = vmatpush2.bf16.msra.mxu0 0
      %3523 = vmatprep.subr.bf16.mxu0 0
      %3524 = vmatpush2.bf16.msra.mxu0 0
      %3525 = vmatprep.subr.bf16.mxu0 0
      %3526 = vmatpush2.bf16.msra.mxu0 0
      %3527 = vmatprep.mubr.bf16.mxu0 0
      %3528 = vmatmul.mubr.bf16.gmra.mxu0 %v3493
      %v3529 = vpop.f32.mrf.mxu0
      %v3530 = vadd.f32 %v3491, %v3529
      %v3531 = vpop.f32.mrf.mxu0
      %v3532 = vpop.f32.mrf.mxu0
      %v3533 = vadd.f32 %v3491, %v3532
      %v3534 = vpop.f32.mrf.mxu0
      %3535 = vdwg.mxu0
      %v3536 = vadd.f32 %v3414, %v3530
      %v3537 = vadd.f32 %v3415, %v3533
      %v3538 = vsel %vm546, %v3536, 0.0
      %3539 = vadd.xlane.f32.xlu0 %v3538
      %v3540 = vpop.xlane.xlu0 %3539
      %v3541 = vsel %vm546, %v3537, 0.0
      %3542 = vadd.xlane.f32.xlu0 %v3541
      %v3543 = vpop.xlane.xlu0 %3542
      %v3544 = vmul.f32 %v3540, %v1861
      %v3545 = vmul.f32 %v3543, %v1861
      %v3546 = vsub.f32 %v3536, %v3544
      %v3547 = vsub.f32 %v3537, %v3545
      %v3548 = vmul.f32 %v3546, %v3546
      %v3549 = vmul.f32 %v3547, %v3547
      %v3550 = vsel %vm546, %v3548, 0.0
      %3551 = vadd.xlane.f32.xlu0 %v3550
      %v3552 = vpop.xlane.xlu0 %3551
      %v3553 = vsel %vm546, %v3549, 0.0
      %3554 = vadd.xlane.f32.xlu0 %v3553
      %v3555 = vpop.xlane.xlu0 %3554
      %v3556 = vmul.f32 %v3552, %v1861
      %v3557 = vmul.f32 %v3555, %v1861
      %v3558 = vadd.f32 %v3556, 1e-05
      %v3559 = vadd.f32 %v3557, 1e-05
      %v3560 = vrsqrt.pop %v3558
      %v3561 = vrsqrt.pop %v3559
      %v3562 = vmul.f32 %v3546, %v3560
      %v3563 = vmul.f32 %v3547, %v3561
      %v3564 = vld [vmem:[%s4 + $0x590] sm:$0x1]
      %v3565 = vlaneseq
      %v3566 = vshrl.u32 %v3565, 7
      %v3567 = vsub.s32 0, %v3566
      %v3568 = vrot.slane %v3564, %v3567
      %v3569 = vmul.f32 %v3562, %v3568
      %v3570 = vmul.f32 %v3563, %v3568
      %v3571 = vld [vmem:[%s4 + $0x598] sm:$0x1]
      %v3572 = vlaneseq
      %v3573 = vshrl.u32 %v3572, 7
      %v3574 = vsub.s32 0, %v3573
      %v3575 = vrot.slane %v3571, %v3574
      %v3576 = vadd.f32 %v3569, %v3575
      %v3577 = vadd.f32 %v3570, %v3575
      %v3578 = vsel %vm546, %v3576, 0.0
      %3579 = vadd.xlane.f32.xlu0 %v3578
      %v3580 = vpop.xlane.xlu0 %3579
      %v3581 = vsel %vm546, %v3577, 0.0
      %3582 = vadd.xlane.f32.xlu0 %v3581
      %v3583 = vpop.xlane.xlu0 %3582
      %v3584 = vmul.f32 %v3580, %v1861
      %v3585 = vmul.f32 %v3583, %v1861
      %v3586 = vsub.f32 %v3576, %v3584
      %v3587 = vsub.f32 %v3577, %v3585
      %v3588 = vmul.f32 %v3586, %v3586
      %v3589 = vmul.f32 %v3587, %v3587
      %v3590 = vsel %vm546, %v3588, 0.0
      %3591 = vadd.xlane.f32.xlu0 %v3590
      %v3592 = vpop.xlane.xlu0 %3591
      %v3593 = vsel %vm546, %v3589, 0.0
      %3594 = vadd.xlane.f32.xlu0 %v3593
      %v3595 = vpop.xlane.xlu0 %3594
      %v3596 = vmul.f32 %v3592, %v1861
      %v3597 = vmul.f32 %v3595, %v1861
      %v3598 = vadd.f32 %v3596, 1e-05
      %v3599 = vadd.f32 %v3597, 1e-05
      %v3600 = vrsqrt.pop %v3598
      %v3601 = vrsqrt.pop %v3599
      %v3602 = vmul.f32 %v3586, %v3600
      %v3603 = vmul.f32 %v3587, %v3601
      %v3604 = vld [vmem:[%s4 + $0x5a0] sm:$0x1]
      %v3605 = vlaneseq
      %v3606 = vshrl.u32 %v3605, 7
      %v3607 = vsub.s32 0, %v3606
      %v3608 = vrot.slane %v3604, %v3607
      %v3609 = vmul.f32 %v3602, %v3608
      %v3610 = vmul.f32 %v3603, %v3608
      %v3611 = vld [vmem:[%s4 + $0x5a8] sm:$0x1]
      %v3612 = vlaneseq
      %v3613 = vshrl.u32 %v3612, 7
      %v3614 = vsub.s32 0, %v3613
      %v3615 = vrot.slane %v3611, %v3614
      %v3616 = vadd.f32 %v3609, %v3615
      %v3617 = vadd.f32 %v3610, %v3615
      %v3619 = vrot.slane %v298, 3
      %v3622 = vrot.slane %v297, 7
      %v3623 = vrot.slane %v298, 7
      %v3624 = vsel %vm305, %v3622, %v3623
      %v3627 = vsel %vm305, %v3619, %v3622
      %v3628 = vrot.slane %v297, 1
      %v3629 = vrot.slane %v298, 1
      %v3630 = vsel %vm311, %v3628, %v3629
      %v3633 = vrot.slane %v297, 5
      %vm3635 = vcmask 1042432
      %v3636 = vsel %vm3635, %v3629, %v3633
      %v3637 = vld [vmem:[%s4 + $0x38] sm:$0xf]
      %v3638 = vpack.c.bf16 %v3624, %v3627
      %v3639 = vpack.c.bf16 %v3637, %v3637
      %v3640 = vld [vmem:[%s4 + $0x40] sm:$0xf]
      %v3641 = vpack.c.bf16 %v298, %v297
      %v3642 = vpack.c.bf16 %v3640, %v3640
      %v3644 = vsel %vm325, %v3641, 0
      %v3647 = vsel %vm329, %v3642, 0
      %3649 = vmatprep.subr.bf16.mxu0 0
      %3650 = vmatpush1.bf16.msra.mxu0 0
      %3651 = vmatprep.subr.bf16.mxu0 0
      %3652 = vmatpush1.bf16.msra.mxu0 0
      %3653 = vmatprep.subr.bf16.mxu0 0
      %3654 = vmatpush1.bf16.msra.mxu0 0
      %3655 = vmatprep.subr.bf16.mxu0 0
      %3656 = vmatpush1.bf16.msra.mxu0 0
      %3657 = vmatprep.subr.bf16.mxu0 0
      %3658 = vmatpush1.bf16.msra.mxu0 0
      %3659 = vmatprep.subr.bf16.mxu0 0
      %3660 = vmatpush1.bf16.msra.mxu0 0
      %3661 = vmatprep.subr.bf16.mxu0 0
      %3662 = vmatpush1.bf16.msra.mxu0 0
      %3663 = vmatprep.subr.bf16.mxu0 0
      %3664 = vmatpush1.bf16.msra.mxu0 %v3647
      %3665 = vmatprep.subr.bf16.mxu0 0
      %3666 = vmatpush2.bf16.msra.mxu0 0
      %3667 = vmatprep.subr.bf16.mxu0 0
      %3668 = vmatpush2.bf16.msra.mxu0 0
      %3669 = vmatprep.subr.bf16.mxu0 0
      %3670 = vmatpush2.bf16.msra.mxu0 0
      %3671 = vmatprep.subr.bf16.mxu0 0
      %3672 = vmatpush2.bf16.msra.mxu0 0
      %3673 = vmatprep.subr.bf16.mxu0 0
      %3674 = vmatpush2.bf16.msra.mxu0 0
      %3675 = vmatprep.subr.bf16.mxu0 0
      %3676 = vmatpush2.bf16.msra.mxu0 0
      %3677 = vmatprep.subr.bf16.mxu0 0
      %3678 = vmatpush2.bf16.msra.mxu0 0
      %3679 = vmatprep.subr.bf16.mxu0 0
      %3680 = vmatpush2.bf16.msra.mxu0 0
      %3681 = vmatprep.mubr.bf16.mxu0 0
      %3682 = vmatmul.mubr.bf16.gmra.mxu0 %v3644
      %v3683 = vpop.f32.mrf.mxu0
      %v3684 = vadd.f32 0.0, %v3683
      %v3685 = vpop.f32.mrf.mxu0
      %v3686 = vpop.f32.mrf.mxu0
      %v3687 = vadd.f32 0.0, %v3686
      %v3688 = vpop.f32.mrf.mxu0
      %3689 = vdwg.mxu0
      %v3691 = vsel %vm325, %v3638, 0
      %v3694 = vsel %vm329, %v3639, 0
      %3696 = vmatprep.subr.bf16.mxu0 0
      %3697 = vmatpush1.bf16.msra.mxu0 0
      %3698 = vmatprep.subr.bf16.mxu0 0
      %3699 = vmatpush1.bf16.msra.mxu0 0
      %3700 = vmatprep.subr.bf16.mxu0 0
      %3701 = vmatpush1.bf16.msra.mxu0 0
      %3702 = vmatprep.subr.bf16.mxu0 0
      %3703 = vmatpush1.bf16.msra.mxu0 0
      %3704 = vmatprep.subr.bf16.mxu0 0
      %3705 = vmatpush1.bf16.msra.mxu0 0
      %3706 = vmatprep.subr.bf16.mxu0 0
      %3707 = vmatpush1.bf16.msra.mxu0 0
      %3708 = vmatprep.subr.bf16.mxu0 0
      %3709 = vmatpush1.bf16.msra.mxu0 0
      %3710 = vmatprep.subr.bf16.mxu0 0
      %3711 = vmatpush1.bf16.msra.mxu0 %v3694
      %3712 = vmatprep.subr.bf16.mxu0 0
      %3713 = vmatpush2.bf16.msra.mxu0 0
      %3714 = vmatprep.subr.bf16.mxu0 0
      %3715 = vmatpush2.bf16.msra.mxu0 0
      %3716 = vmatprep.subr.bf16.mxu0 0
      %3717 = vmatpush2.bf16.msra.mxu0 0
      %3718 = vmatprep.subr.bf16.mxu0 0
      %3719 = vmatpush2.bf16.msra.mxu0 0
      %3720 = vmatprep.subr.bf16.mxu0 0
      %3721 = vmatpush2.bf16.msra.mxu0 0
      %3722 = vmatprep.subr.bf16.mxu0 0
      %3723 = vmatpush2.bf16.msra.mxu0 0
      %3724 = vmatprep.subr.bf16.mxu0 0
      %3725 = vmatpush2.bf16.msra.mxu0 0
      %3726 = vmatprep.subr.bf16.mxu0 0
      %3727 = vmatpush2.bf16.msra.mxu0 0
      %3728 = vmatprep.mubr.bf16.mxu0 0
      %3729 = vmatmul.mubr.bf16.gmra.mxu0 %v3691
      %v3730 = vpop.f32.mrf.mxu0
      %v3731 = vadd.f32 %v3684, %v3730
      %v3732 = vpop.f32.mrf.mxu0
      %v3733 = vpop.f32.mrf.mxu0
      %v3734 = vadd.f32 %v3687, %v3733
      %v3735 = vpop.f32.mrf.mxu0
      %3736 = vdwg.mxu0
      %v3737 = vld [vmem:[%s4 + $0x48] sm:$0xf]
      %v3738 = vpack.c.bf16 %v3636, %v3630
      %v3739 = vpack.c.bf16 %v3737, %v3737
      %v3741 = vsel %vm325, %v3738, 0
      %v3744 = vsel %vm329, %v3739, 0
      %3746 = vmatprep.subr.bf16.mxu0 0
      %3747 = vmatpush1.bf16.msra.mxu0 0
      %3748 = vmatprep.subr.bf16.mxu0 0
      %3749 = vmatpush1.bf16.msra.mxu0 0
      %3750 = vmatprep.subr.bf16.mxu0 0
      %3751 = vmatpush1.bf16.msra.mxu0 0
      %3752 = vmatprep.subr.bf16.mxu0 0
      %3753 = vmatpush1.bf16.msra.mxu0 0
      %3754 = vmatprep.subr.bf16.mxu0 0
      %3755 = vmatpush1.bf16.msra.mxu0 0
      %3756 = vmatprep.subr.bf16.mxu0 0
      %3757 = vmatpush1.bf16.msra.mxu0 0
      %3758 = vmatprep.subr.bf16.mxu0 0
      %3759 = vmatpush1.bf16.msra.mxu0 0
      %3760 = vmatprep.subr.bf16.mxu0 0
      %3761 = vmatpush1.bf16.msra.mxu0 %v3744
      %3762 = vmatprep.subr.bf16.mxu0 0
      %3763 = vmatpush2.bf16.msra.mxu0 0
      %3764 = vmatprep.subr.bf16.mxu0 0
      %3765 = vmatpush2.bf16.msra.mxu0 0
      %3766 = vmatprep.subr.bf16.mxu0 0
      %3767 = vmatpush2.bf16.msra.mxu0 0
      %3768 = vmatprep.subr.bf16.mxu0 0
      %3769 = vmatpush2.bf16.msra.mxu0 0
      %3770 = vmatprep.subr.bf16.mxu0 0
      %3771 = vmatpush2.bf16.msra.mxu0 0
      %3772 = vmatprep.subr.bf16.mxu0 0
      %3773 = vmatpush2.bf16.msra.mxu0 0
      %3774 = vmatprep.subr.bf16.mxu0 0
      %3775 = vmatpush2.bf16.msra.mxu0 0
      %3776 = vmatprep.subr.bf16.mxu0 0
      %3777 = vmatpush2.bf16.msra.mxu0 0
      %3778 = vmatprep.mubr.bf16.mxu0 0
      %3779 = vmatmul.mubr.bf16.gmra.mxu0 %v3741
      %v3780 = vpop.f32.mrf.mxu0
      %v3781 = vadd.f32 0.0, %v3780
      %v3782 = vpop.f32.mrf.mxu0
      %v3783 = vpop.f32.mrf.mxu0
      %v3784 = vadd.f32 0.0, %v3783
      %v3785 = vpop.f32.mrf.mxu0
      %3786 = vdwg.mxu0
      %v3787 = vadd.f32 %v3731, %v3781
      %v3788 = vadd.f32 %v3734, %v3784
      %v3789 = vld [vmem:[%s4 + $0x50] sm:$0xf]
      %v3790 = vpack.c.bf16 %v300, %v299
      %v3791 = vpack.c.bf16 %v3789, %v3789
      %v3792 = vld [vmem:[%s4 + $0x58] sm:$0x1]
      %v3793 = vlaneseq
      %v3794 = vshrl.u32 %v3793, 7
      %v3795 = vsub.s32 0, %v3794
      %v3796 = vrot.slane %v3792, %v3795
      %v3798 = vsel %vm325, %v3790, 0
      %v3801 = vsel %vm329, %v3791, 0
      %3803 = vmatprep.subr.bf16.mxu0 0
      %3804 = vmatpush1.bf16.msra.mxu0 0
      %3805 = vmatprep.subr.bf16.mxu0 0
      %3806 = vmatpush1.bf16.msra.mxu0 0
      %3807 = vmatprep.subr.bf16.mxu0 0
      %3808 = vmatpush1.bf16.msra.mxu0 0
      %3809 = vmatprep.subr.bf16.mxu0 0
      %3810 = vmatpush1.bf16.msra.mxu0 0
      %3811 = vmatprep.subr.bf16.mxu0 0
      %3812 = vmatpush1.bf16.msra.mxu0 0
      %3813 = vmatprep.subr.bf16.mxu0 0
      %3814 = vmatpush1.bf16.msra.mxu0 0
      %3815 = vmatprep.subr.bf16.mxu0 0
      %3816 = vmatpush1.bf16.msra.mxu0 0
      %3817 = vmatprep.subr.bf16.mxu0 0
      %3818 = vmatpush1.bf16.msra.mxu0 %v3801
      %3819 = vmatprep.subr.bf16.mxu0 0
      %3820 = vmatpush2.bf16.msra.mxu0 0
      %3821 = vmatprep.subr.bf16.mxu0 0
      %3822 = vmatpush2.bf16.msra.mxu0 0
      %3823 = vmatprep.subr.bf16.mxu0 0
      %3824 = vmatpush2.bf16.msra.mxu0 0
      %3825 = vmatprep.subr.bf16.mxu0 0
      %3826 = vmatpush2.bf16.msra.mxu0 0
      %3827 = vmatprep.subr.bf16.mxu0 0
      %3828 = vmatpush2.bf16.msra.mxu0 0
      %3829 = vmatprep.subr.bf16.mxu0 0
      %3830 = vmatpush2.bf16.msra.mxu0 0
      %3831 = vmatprep.subr.bf16.mxu0 0
      %3832 = vmatpush2.bf16.msra.mxu0 0
      %3833 = vmatprep.subr.bf16.mxu0 0
      %3834 = vmatpush2.bf16.msra.mxu0 0
      %3835 = vmatprep.mubr.bf16.mxu0 0
      %3836 = vmatmul.mubr.bf16.gmra.mxu0 %v3798
      %v3837 = vpop.f32.mrf.mxu0
      %v3838 = vadd.f32 %v3796, %v3837
      %v3839 = vpop.f32.mrf.mxu0
      %v3840 = vpop.f32.mrf.mxu0
      %v3841 = vadd.f32 %v3796, %v3840
      %v3842 = vpop.f32.mrf.mxu0
      %3843 = vdwg.mxu0
      %v3844 = vadd.f32 %v3787, %v3838
      %v3845 = vadd.f32 %v3788, %v3841
      %v3846 = vld [vmem:[%s4 + $0x60] sm:$0xff]
      %v3847 = vld [vmem:[%s4 + $0x68] sm:$0xf]
      %v3848 = vadd.f32 %v3844, %v3846
      %v3849 = vadd.f32 %v3845, %v3847
      %v3850 = vld [vmem:[%s4 + $0x5b0] sm:$0xff]
      %v3851 = vld [vmem:[%s4 + $0x5b8] sm:$0xff]
      %v3852 = vld [vmem:[%s4 + $0x5c0] sm:$0xff]
      %v3853 = vld [vmem:[%s4 + $0x5c8] sm:$0xff]
      %v3854 = vpack.c.bf16 %v3849, %v3848
      %v3855 = vpack.c.bf16 %v3851, %v3850
      %v3856 = vpack.c.bf16 %v3853, %v3852
      %v3857 = vld [vmem:[%s4 + $0x5d0] sm:$0x1]
      %v3858 = vlaneseq
      %v3859 = vshrl.u32 %v3858, 7
      %v3860 = vsub.s32 0, %v3859
      %v3861 = vrot.slane %v3857, %v3860
      %v3863 = vsel %vm546, %v3854, 0
      %3865 = vmatprep.subr.bf16.mxu0 0
      %3866 = vmatpush1.bf16.msra.mxu0 0
      %3867 = vmatprep.subr.bf16.mxu0 0
      %3868 = vmatpush1.bf16.msra.mxu0 0
      %3869 = vmatprep.subr.bf16.mxu0 0
      %3870 = vmatpush1.bf16.msra.mxu0 0
      %3871 = vmatprep.subr.bf16.mxu0 0
      %3872 = vmatpush1.bf16.msra.mxu0 0
      %3873 = vmatprep.subr.bf16.mxu0 0
      %3874 = vmatpush1.bf16.msra.mxu0 0
      %3875 = vmatprep.subr.bf16.mxu0 0
      %3876 = vmatpush1.bf16.msra.mxu0 0
      %3877 = vmatprep.subr.bf16.mxu0 0
      %3878 = vmatpush1.bf16.msra.mxu0 %v3856
      %3879 = vmatprep.subr.bf16.mxu0 0
      %3880 = vmatpush1.bf16.msra.mxu0 %v3855
      %3881 = vmatprep.subr.bf16.mxu0 0
      %3882 = vmatpush2.bf16.msra.mxu0 0
      %3883 = vmatprep.subr.bf16.mxu0 0
      %3884 = vmatpush2.bf16.msra.mxu0 0
      %3885 = vmatprep.subr.bf16.mxu0 0
      %3886 = vmatpush2.bf16.msra.mxu0 0
      %3887 = vmatprep.subr.bf16.mxu0 0
      %3888 = vmatpush2.bf16.msra.mxu0 0
      %3889 = vmatprep.subr.bf16.mxu0 0
      %3890 = vmatpush2.bf16.msra.mxu0 0
      %3891 = vmatprep.subr.bf16.mxu0 0
      %3892 = vmatpush2.bf16.msra.mxu0 0
      %3893 = vmatprep.subr.bf16.mxu0 0
      %3894 = vmatpush2.bf16.msra.mxu0 0
      %3895 = vmatprep.subr.bf16.mxu0 0
      %3896 = vmatpush2.bf16.msra.mxu0 0
      %3897 = vmatprep.mubr.bf16.mxu0 0
      %3898 = vmatmul.mubr.bf16.gmra.mxu0 %v3863
      %v3899 = vpop.f32.mrf.mxu0
      %v3900 = vadd.f32 %v3861, %v3899
      %v3901 = vpop.f32.mrf.mxu0
      %v3902 = vpop.f32.mrf.mxu0
      %v3903 = vadd.f32 %v3861, %v3902
      %v3904 = vpop.f32.mrf.mxu0
      %3905 = vdwg.mxu0
      %v3906 = vld [vmem:[%s4 + $0x5d8] sm:$0xff]
      %v3907 = vld [vmem:[%s4 + $0x5e0] sm:$0xff]
      %v3908 = vld [vmem:[%s4 + $0x5e8] sm:$0xff]
      %v3909 = vld [vmem:[%s4 + $0x5f0] sm:$0xff]
      %v3910 = vpack.c.bf16 %v3907, %v3906
      %v3911 = vpack.c.bf16 %v3909, %v3908
      %v3912 = vld [vmem:[%s4 + $0x5f8] sm:$0x1]
      %v3913 = vlaneseq
      %v3914 = vshrl.u32 %v3913, 7
      %v3915 = vsub.s32 0, %v3914
      %v3916 = vrot.slane %v3912, %v3915
      %3917 = vmatprep.subr.bf16.mxu0 0
      %3918 = vmatpush1.bf16.msra.mxu0 0
      %3919 = vmatprep.subr.bf16.mxu0 0
      %3920 = vmatpush1.bf16.msra.mxu0 0
      %3921 = vmatprep.subr.bf16.mxu0 0
      %3922 = vmatpush1.bf16.msra.mxu0 0
      %3923 = vmatprep.subr.bf16.mxu0 0
      %3924 = vmatpush1.bf16.msra.mxu0 0
      %3925 = vmatprep.subr.bf16.mxu0 0
      %3926 = vmatpush1.bf16.msra.mxu0 0
      %3927 = vmatprep.subr.bf16.mxu0 0
      %3928 = vmatpush1.bf16.msra.mxu0 0
      %3929 = vmatprep.subr.bf16.mxu0 0
      %3930 = vmatpush1.bf16.msra.mxu0 %v3911
      %3931 = vmatprep.subr.bf16.mxu0 0
      %3932 = vmatpush1.bf16.msra.mxu0 %v3910
      %3933 = vmatprep.subr.bf16.mxu0 0
      %3934 = vmatpush2.bf16.msra.mxu0 0
      %3935 = vmatprep.subr.bf16.mxu0 0
      %3936 = vmatpush2.bf16.msra.mxu0 0
      %3937 = vmatprep.subr.bf16.mxu0 0
      %3938 = vmatpush2.bf16.msra.mxu0 0
      %3939 = vmatprep.subr.bf16.mxu0 0
      %3940 = vmatpush2.bf16.msra.mxu0 0
      %3941 = vmatprep.subr.bf16.mxu0 0
      %3942 = vmatpush2.bf16.msra.mxu0 0
      %3943 = vmatprep.subr.bf16.mxu0 0
      %3944 = vmatpush2.bf16.msra.mxu0 0
      %3945 = vmatprep.subr.bf16.mxu0 0
      %3946 = vmatpush2.bf16.msra.mxu0 0
      %3947 = vmatprep.subr.bf16.mxu0 0
      %3948 = vmatpush2.bf16.msra.mxu0 0
      %3949 = vmatprep.mubr.bf16.mxu0 0
      %3950 = vmatmul.mubr.bf16.gmra.mxu0 %v3863
      %v3951 = vpop.f32.mrf.mxu0
      %v3952 = vadd.f32 %v3916, %v3951
      %v3953 = vpop.f32.mrf.mxu0
      %v3954 = vpop.f32.mrf.mxu0
      %v3955 = vadd.f32 %v3916, %v3954
      %v3956 = vpop.f32.mrf.mxu0
      %3957 = vdwg.mxu0
      %v3958 = vld [vmem:[%s4 + $0x600] sm:$0xff]
      %v3959 = vld [vmem:[%s4 + $0x608] sm:$0xff]
      %v3960 = vld [vmem:[%s4 + $0x610] sm:$0xff]
      %v3961 = vld [vmem:[%s4 + $0x618] sm:$0xff]
      %v3962 = vpack.c.bf16 %v3959, %v3958
      %v3963 = vpack.c.bf16 %v3961, %v3960
      %v3964 = vld [vmem:[%s4 + $0x620] sm:$0x1]
      %v3965 = vlaneseq
      %v3966 = vshrl.u32 %v3965, 7
      %v3967 = vsub.s32 0, %v3966
      %v3968 = vrot.slane %v3964, %v3967
      %3969 = vmatprep.subr.bf16.mxu0 0
      %3970 = vmatpush1.bf16.msra.mxu0 0
      %3971 = vmatprep.subr.bf16.mxu0 0
      %3972 = vmatpush1.bf16.msra.mxu0 0
      %3973 = vmatprep.subr.bf16.mxu0 0
      %3974 = vmatpush1.bf16.msra.mxu0 0
      %3975 = vmatprep.subr.bf16.mxu0 0
      %3976 = vmatpush1.bf16.msra.mxu0 0
      %3977 = vmatprep.subr.bf16.mxu0 0
      %3978 = vmatpush1.bf16.msra.mxu0 0
      %3979 = vmatprep.subr.bf16.mxu0 0
      %3980 = vmatpush1.bf16.msra.mxu0 0
      %3981 = vmatprep.subr.bf16.mxu0 0
      %3982 = vmatpush1.bf16.msra.mxu0 %v3963
      %3983 = vmatprep.subr.bf16.mxu0 0
      %3984 = vmatpush1.bf16.msra.mxu0 %v3962
      %3985 = vmatprep.subr.bf16.mxu0 0
      %3986 = vmatpush2.bf16.msra.mxu0 0
      %3987 = vmatprep.subr.bf16.mxu0 0
      %3988 = vmatpush2.bf16.msra.mxu0 0
      %3989 = vmatprep.subr.bf16.mxu0 0
      %3990 = vmatpush2.bf16.msra.mxu0 0
      %3991 = vmatprep.subr.bf16.mxu0 0
      %3992 = vmatpush2.bf16.msra.mxu0 0
      %3993 = vmatprep.subr.bf16.mxu0 0
      %3994 = vmatpush2.bf16.msra.mxu0 0
      %3995 = vmatprep.subr.bf16.mxu0 0
      %3996 = vmatpush2.bf16.msra.mxu0 0
      %3997 = vmatprep.subr.bf16.mxu0 0
      %3998 = vmatpush2.bf16.msra.mxu0 0
      %3999 = vmatprep.subr.bf16.mxu0 0
      %4000 = vmatpush2.bf16.msra.mxu0 0
      %4001 = vmatprep.mubr.bf16.mxu0 0
      %4002 = vmatmul.mubr.bf16.gmra.mxu0 %v3863
      %v4003 = vpop.f32.mrf.mxu0
      %v4004 = vadd.f32 %v3968, %v4003
      %v4005 = vpop.f32.mrf.mxu0
      %v4006 = vpop.f32.mrf.mxu0
      %v4007 = vadd.f32 %v3968, %v4006
      %v4008 = vpop.f32.mrf.mxu0
      %4009 = vdwg.mxu0
      %v4010 = vpack.c.bf16 %v3903, %v3900
      %v4011 = vpack.c.bf16 %v3955, %v3952
      %v4013 = vsel %vm697, %v4010, 0
      %v4016 = vsel %vm697, %v4011, 0
      %4018 = vmatprep.subr.bf16.mxu0 0
      %4019 = vmatpush1.bf16.xpose.msra.mxu0 0
      %4020 = vmatprep.subr.bf16.mxu0 0
      %4021 = vmatpush1.bf16.xpose.msra.mxu0 0
      %4022 = vmatprep.subr.bf16.mxu0 0
      %4023 = vmatpush1.bf16.xpose.msra.mxu0 0
      %4024 = vmatprep.subr.bf16.mxu0 0
      %4025 = vmatpush1.bf16.xpose.msra.mxu0 0
      %4026 = vmatprep.subr.bf16.mxu0 0
      %4027 = vmatpush1.bf16.xpose.msra.mxu0 0
      %4028 = vmatprep.subr.bf16.mxu0 0
      %4029 = vmatpush1.bf16.xpose.msra.mxu0 0
      %4030 = vmatprep.subr.bf16.mxu0 0
      %4031 = vmatpush1.bf16.xpose.msra.mxu0 0
      %4032 = vmatprep.subr.bf16.mxu0 0
      %4033 = vmatpush1.bf16.xpose.msra.mxu0 %v4016
      %4034 = vmatprep.subr.bf16.mxu0 0
      %4035 = vmatpush2.bf16.xpose.msra.mxu0 0
      %4036 = vmatprep.subr.bf16.mxu0 0
      %4037 = vmatpush2.bf16.xpose.msra.mxu0 0
      %4038 = vmatprep.subr.bf16.mxu0 0
      %4039 = vmatpush2.bf16.xpose.msra.mxu0 0
      %4040 = vmatprep.subr.bf16.mxu0 0
      %4041 = vmatpush2.bf16.xpose.msra.mxu0 0
      %4042 = vmatprep.subr.bf16.mxu0 0
      %4043 = vmatpush2.bf16.xpose.msra.mxu0 0
      %4044 = vmatprep.subr.bf16.mxu0 0
      %4045 = vmatpush2.bf16.xpose.msra.mxu0 0
      %4046 = vmatprep.subr.bf16.mxu0 0
      %4047 = vmatpush2.bf16.xpose.msra.mxu0 0
      %4048 = vmatprep.subr.bf16.mxu0 0
      %4049 = vmatpush2.bf16.xpose.msra.mxu0 0
      %4050 = vmatprep.mubr.bf16.mxu0 0
      %4051 = vmatmul.mubr.bf16.gmra.mxu0 %v4013
      %v4052 = vpop.f32.mrf.mxu0
      %v4053 = vadd.f32 0.0, %v4052
      %v4054 = vpop.f32.mrf.mxu0
      %v4055 = vpop.f32.mrf.mxu0
      %v4056 = vadd.f32 0.0, %v4055
      %v4057 = vpop.f32.mrf.mxu0
      %4058 = vdwg.mxu0
      %v4059 = vmul.f32 %v4053, 0.35355338
      %v4060 = vmul.f32 %v4056, 0.35355338
      %v4061 = vadd.f32 %v4059, %v291
      %v4062 = vadd.f32 %v4060, %v292
      %vm4063 = vcmask 97280
      %v4064 = vsel %vm4063, %v4061, -inf
      %4065 = vmax.xlane.f32.xlu0 %v4064
      %v4066 = vpop.xlane.xlu0 %4065
      %vm4067 = vcmask 93184
      %v4068 = vsel %vm4067, %v4062, -inf
      %4069 = vmax.xlane.f32.xlu0 %v4068
      %v4070 = vpop.xlane.xlu0 %4069
      %v4071 = vsub.f32 %v4061, %v4066
      %v4072 = vsub.f32 %v4062, %v4070
      %v4073 = vmul.f32 %v4071, 1.442695
      %v4074 = vpow.pop %v4073
      %v4075 = vmul.f32 %v4072, 1.442695
      %v4076 = vpow.pop %v4075
      %v4077 = vsel %vm4063, %v4074, 0.0
      %4078 = vadd.xlane.f32.xlu0 %v4077
      %v4079 = vpop.xlane.xlu0 %4078
      %v4080 = vsel %vm4067, %v4076, 0.0
      %4081 = vadd.xlane.f32.xlu0 %v4080
      %v4082 = vpop.xlane.xlu0 %4081
      %v4083 = vrcp.pop %v4079
      %v4084 = vrcp.pop %v4082
      %v4085 = vmul.f32 %v4074, %v4083
      %v4086 = vmul.f32 %v4076, %v4084
      %v4087 = vpack.c.bf16 %v4086, %v4085
      %v4088 = vpack.c.bf16 %v4007, %v4004
      %v4090 = vsel %vm4063, %v4087, 0
      %vm4092 = vcmask 1045504
      %v4094 = vsel %vm4092, %v4088, 0
      %4096 = vmatprep.subr.bf16.mxu0 0
      %4097 = vmatpush1.bf16.msra.mxu0 0
      %4098 = vmatprep.subr.bf16.mxu0 0
      %4099 = vmatpush1.bf16.msra.mxu0 0
      %4100 = vmatprep.subr.bf16.mxu0 0
      %4101 = vmatpush1.bf16.msra.mxu0 0
      %4102 = vmatprep.subr.bf16.mxu0 0
      %4103 = vmatpush1.bf16.msra.mxu0 0
      %4104 = vmatprep.subr.bf16.mxu0 0
      %4105 = vmatpush1.bf16.msra.mxu0 0
      %4106 = vmatprep.subr.bf16.mxu0 0
      %4107 = vmatpush1.bf16.msra.mxu0 0
      %4108 = vmatprep.subr.bf16.mxu0 0
      %4109 = vmatpush1.bf16.msra.mxu0 0
      %4110 = vmatprep.subr.bf16.mxu0 0
      %4111 = vmatpush1.bf16.msra.mxu0 %v4094
      %4112 = vmatprep.subr.bf16.mxu0 0
      %4113 = vmatpush2.bf16.msra.mxu0 0
      %4114 = vmatprep.subr.bf16.mxu0 0
      %4115 = vmatpush2.bf16.msra.mxu0 0
      %4116 = vmatprep.subr.bf16.mxu0 0
      %4117 = vmatpush2.bf16.msra.mxu0 0
      %4118 = vmatprep.subr.bf16.mxu0 0
      %4119 = vmatpush2.bf16.msra.mxu0 0
      %4120 = vmatprep.subr.bf16.mxu0 0
      %4121 = vmatpush2.bf16.msra.mxu0 0
      %4122 = vmatprep.subr.bf16.mxu0 0
      %4123 = vmatpush2.bf16.msra.mxu0 0
      %4124 = vmatprep.subr.bf16.mxu0 0
      %4125 = vmatpush2.bf16.msra.mxu0 0
      %4126 = vmatprep.subr.bf16.mxu0 0
      %4127 = vmatpush2.bf16.msra.mxu0 0
      %4128 = vmatprep.mubr.bf16.mxu0 0
      %4129 = vmatmul.mubr.bf16.gmra.mxu0 %v4090
      %v4130 = vpop.f32.mrf.mxu0
      %v4131 = vadd.f32 0.0, %v4130
      %v4132 = vpop.f32.mrf.mxu0
      %v4133 = vpop.f32.mrf.mxu0
      %v4134 = vadd.f32 0.0, %v4133
      %v4135 = vpop.f32.mrf.mxu0
      %4136 = vdwg.mxu0
      %v4137 = vld [vmem:[%s4 + $0x628] sm:$0xff]
      %v4138 = vpack.c.bf16 %v4134, %v4131
      %v4139 = vpack.c.bf16 %v4137, %v4137
      %v4140 = vld [vmem:[%s4 + $0x630] sm:$0xff]
      %v4141 = vld [vmem:[%s4 + $0x638] sm:$0xff]
      %v4142 = vld [vmem:[%s4 + $0x640] sm:$0xff]
      %v4143 = vld [vmem:[%s4 + $0x648] sm:$0xff]
      %v4144 = vpack.c.bf16 %v4141, %v4140
      %v4145 = vpack.c.bf16 %v4143, %v4142
      %v4146 = vld [vmem:[%s4 + $0x650] sm:$0x1]
      %v4147 = vlaneseq
      %v4148 = vshrl.u32 %v4147, 7
      %v4149 = vsub.s32 0, %v4148
      %v4150 = vrot.slane %v4146, %v4149
      %4151 = vmatprep.subr.bf16.mxu0 0
      %4152 = vmatpush1.bf16.msra.mxu0 0
      %4153 = vmatprep.subr.bf16.mxu0 0
      %4154 = vmatpush1.bf16.msra.mxu0 0
      %4155 = vmatprep.subr.bf16.mxu0 0
      %4156 = vmatpush1.bf16.msra.mxu0 0
      %4157 = vmatprep.subr.bf16.mxu0 0
      %4158 = vmatpush1.bf16.msra.mxu0 0
      %4159 = vmatprep.subr.bf16.mxu0 0
      %4160 = vmatpush1.bf16.msra.mxu0 0
      %4161 = vmatprep.subr.bf16.mxu0 0
      %4162 = vmatpush1.bf16.msra.mxu0 0
      %4163 = vmatprep.subr.bf16.mxu0 0
      %4164 = vmatpush1.bf16.msra.mxu0 %v4145
      %4165 = vmatprep.subr.bf16.mxu0 0
      %4166 = vmatpush1.bf16.msra.mxu0 %v4144
      %4167 = vmatprep.subr.bf16.mxu0 0
      %4168 = vmatpush2.bf16.msra.mxu0 0
      %4169 = vmatprep.subr.bf16.mxu0 0
      %4170 = vmatpush2.bf16.msra.mxu0 0
      %4171 = vmatprep.subr.bf16.mxu0 0
      %4172 = vmatpush2.bf16.msra.mxu0 0
      %4173 = vmatprep.subr.bf16.mxu0 0
      %4174 = vmatpush2.bf16.msra.mxu0 0
      %4175 = vmatprep.subr.bf16.mxu0 0
      %4176 = vmatpush2.bf16.msra.mxu0 0
      %4177 = vmatprep.subr.bf16.mxu0 0
      %4178 = vmatpush2.bf16.msra.mxu0 0
      %4179 = vmatprep.subr.bf16.mxu0 0
      %4180 = vmatpush2.bf16.msra.mxu0 0
      %4181 = vmatprep.subr.bf16.mxu0 0
      %4182 = vmatpush2.bf16.msra.mxu0 0
      %4183 = vmatprep.mubr.bf16.mxu0 0
      %4184 = vmatmul.mubr.bf16.gmra.mxu0 %v3863
      %v4185 = vpop.f32.mrf.mxu0
      %v4186 = vadd.f32 %v4150, %v4185
      %v4187 = vpop.f32.mrf.mxu0
      %v4188 = vpop.f32.mrf.mxu0
      %v4189 = vadd.f32 %v4150, %v4188
      %v4190 = vpop.f32.mrf.mxu0
      %4191 = vdwg.mxu0
      %v4192 = vld [vmem:[%s4 + $0x658] sm:$0xff]
      %v4193 = vld [vmem:[%s4 + $0x660] sm:$0xff]
      %v4194 = vld [vmem:[%s4 + $0x668] sm:$0xff]
      %v4195 = vld [vmem:[%s4 + $0x670] sm:$0xff]
      %v4196 = vpack.c.bf16 %v4193, %v4192
      %v4197 = vpack.c.bf16 %v4195, %v4194
      %v4198 = vld [vmem:[%s4 + $0x678] sm:$0x1]
      %v4199 = vlaneseq
      %v4200 = vshrl.u32 %v4199, 7
      %v4201 = vsub.s32 0, %v4200
      %v4202 = vrot.slane %v4198, %v4201
      %4203 = vmatprep.subr.bf16.mxu0 0
      %4204 = vmatpush1.bf16.msra.mxu0 0
      %4205 = vmatprep.subr.bf16.mxu0 0
      %4206 = vmatpush1.bf16.msra.mxu0 0
      %4207 = vmatprep.subr.bf16.mxu0 0
      %4208 = vmatpush1.bf16.msra.mxu0 0
      %4209 = vmatprep.subr.bf16.mxu0 0
      %4210 = vmatpush1.bf16.msra.mxu0 0
      %4211 = vmatprep.subr.bf16.mxu0 0
      %4212 = vmatpush1.bf16.msra.mxu0 0
      %4213 = vmatprep.subr.bf16.mxu0 0
      %4214 = vmatpush1.bf16.msra.mxu0 0
      %4215 = vmatprep.subr.bf16.mxu0 0
      %4216 = vmatpush1.bf16.msra.mxu0 %v4197
      %4217 = vmatprep.subr.bf16.mxu0 0
      %4218 = vmatpush1.bf16.msra.mxu0 %v4196
      %4219 = vmatprep.subr.bf16.mxu0 0
      %4220 = vmatpush2.bf16.msra.mxu0 0
      %4221 = vmatprep.subr.bf16.mxu0 0
      %4222 = vmatpush2.bf16.msra.mxu0 0
      %4223 = vmatprep.subr.bf16.mxu0 0
      %4224 = vmatpush2.bf16.msra.mxu0 0
      %4225 = vmatprep.subr.bf16.mxu0 0
      %4226 = vmatpush2.bf16.msra.mxu0 0
      %4227 = vmatprep.subr.bf16.mxu0 0
      %4228 = vmatpush2.bf16.msra.mxu0 0
      %4229 = vmatprep.subr.bf16.mxu0 0
      %4230 = vmatpush2.bf16.msra.mxu0 0
      %4231 = vmatprep.subr.bf16.mxu0 0
      %4232 = vmatpush2.bf16.msra.mxu0 0
      %4233 = vmatprep.subr.bf16.mxu0 0
      %4234 = vmatpush2.bf16.msra.mxu0 0
      %4235 = vmatprep.mubr.bf16.mxu0 0
      %4236 = vmatmul.mubr.bf16.gmra.mxu0 %v3863
      %v4237 = vpop.f32.mrf.mxu0
      %v4238 = vadd.f32 %v4202, %v4237
      %v4239 = vpop.f32.mrf.mxu0
      %v4240 = vpop.f32.mrf.mxu0
      %v4241 = vadd.f32 %v4202, %v4240
      %v4242 = vpop.f32.mrf.mxu0
      %4243 = vdwg.mxu0
      %v4244 = vld [vmem:[%s4 + $0x680] sm:$0xff]
      %v4245 = vld [vmem:[%s4 + $0x688] sm:$0xff]
      %v4246 = vld [vmem:[%s4 + $0x690] sm:$0xff]
      %v4247 = vld [vmem:[%s4 + $0x698] sm:$0xff]
      %v4248 = vpack.c.bf16 %v4245, %v4244
      %v4249 = vpack.c.bf16 %v4247, %v4246
      %v4250 = vld [vmem:[%s4 + $0x6a0] sm:$0x1]
      %v4251 = vlaneseq
      %v4252 = vshrl.u32 %v4251, 7
      %v4253 = vsub.s32 0, %v4252
      %v4254 = vrot.slane %v4250, %v4253
      %4255 = vmatprep.subr.bf16.mxu0 0
      %4256 = vmatpush1.bf16.msra.mxu0 0
      %4257 = vmatprep.subr.bf16.mxu0 0
      %4258 = vmatpush1.bf16.msra.mxu0 0
      %4259 = vmatprep.subr.bf16.mxu0 0
      %4260 = vmatpush1.bf16.msra.mxu0 0
      %4261 = vmatprep.subr.bf16.mxu0 0
      %4262 = vmatpush1.bf16.msra.mxu0 0
      %4263 = vmatprep.subr.bf16.mxu0 0
      %4264 = vmatpush1.bf16.msra.mxu0 0
      %4265 = vmatprep.subr.bf16.mxu0 0
      %4266 = vmatpush1.bf16.msra.mxu0 0
      %4267 = vmatprep.subr.bf16.mxu0 0
      %4268 = vmatpush1.bf16.msra.mxu0 %v4249
      %4269 = vmatprep.subr.bf16.mxu0 0
      %4270 = vmatpush1.bf16.msra.mxu0 %v4248
      %4271 = vmatprep.subr.bf16.mxu0 0
      %4272 = vmatpush2.bf16.msra.mxu0 0
      %4273 = vmatprep.subr.bf16.mxu0 0
      %4274 = vmatpush2.bf16.msra.mxu0 0
      %4275 = vmatprep.subr.bf16.mxu0 0
      %4276 = vmatpush2.bf16.msra.mxu0 0
      %4277 = vmatprep.subr.bf16.mxu0 0
      %4278 = vmatpush2.bf16.msra.mxu0 0
      %4279 = vmatprep.subr.bf16.mxu0 0
      %4280 = vmatpush2.bf16.msra.mxu0 0
      %4281 = vmatprep.subr.bf16.mxu0 0
      %4282 = vmatpush2.bf16.msra.mxu0 0
      %4283 = vmatprep.subr.bf16.mxu0 0
      %4284 = vmatpush2.bf16.msra.mxu0 0
      %4285 = vmatprep.subr.bf16.mxu0 0
      %4286 = vmatpush2.bf16.msra.mxu0 0
      %4287 = vmatprep.mubr.bf16.mxu0 0
      %4288 = vmatmul.mubr.bf16.gmra.mxu0 %v3863
      %v4289 = vpop.f32.mrf.mxu0
      %v4290 = vadd.f32 %v4254, %v4289
      %v4291 = vpop.f32.mrf.mxu0
      %v4292 = vpop.f32.mrf.mxu0
      %v4293 = vadd.f32 %v4254, %v4292
      %v4294 = vpop.f32.mrf.mxu0
      %4295 = vdwg.mxu0
      %v4296 = vpack.c.bf16 %v4189, %v4186
      %v4297 = vpack.c.bf16 %v4241, %v4238
      %v4299 = vsel %vm697, %v4296, 0
      %v4302 = vsel %vm697, %v4297, 0
      %4304 = vmatprep.subr.bf16.mxu0 0
      %4305 = vmatpush1.bf16.xpose.msra.mxu0 0
      %4306 = vmatprep.subr.bf16.mxu0 0
      %4307 = vmatpush1.bf16.xpose.msra.mxu0 0
      %4308 = vmatprep.subr.bf16.mxu0 0
      %4309 = vmatpush1.bf16.xpose.msra.mxu0 0
      %4310 = vmatprep.subr.bf16.mxu0 0
      %4311 = vmatpush1.bf16.xpose.msra.mxu0 0
      %4312 = vmatprep.subr.bf16.mxu0 0
      %4313 = vmatpush1.bf16.xpose.msra.mxu0 0
      %4314 = vmatprep.subr.bf16.mxu0 0
      %4315 = vmatpush1.bf16.xpose.msra.mxu0 0
      %4316 = vmatprep.subr.bf16.mxu0 0
      %4317 = vmatpush1.bf16.xpose.msra.mxu0 0
      %4318 = vmatprep.subr.bf16.mxu0 0
      %4319 = vmatpush1.bf16.xpose.msra.mxu0 %v4302
      %4320 = vmatprep.subr.bf16.mxu0 0
      %4321 = vmatpush2.bf16.xpose.msra.mxu0 0
      %4322 = vmatprep.subr.bf16.mxu0 0
      %4323 = vmatpush2.bf16.xpose.msra.mxu0 0
      %4324 = vmatprep.subr.bf16.mxu0 0
      %4325 = vmatpush2.bf16.xpose.msra.mxu0 0
      %4326 = vmatprep.subr.bf16.mxu0 0
      %4327 = vmatpush2.bf16.xpose.msra.mxu0 0
      %4328 = vmatprep.subr.bf16.mxu0 0
      %4329 = vmatpush2.bf16.xpose.msra.mxu0 0
      %4330 = vmatprep.subr.bf16.mxu0 0
      %4331 = vmatpush2.bf16.xpose.msra.mxu0 0
      %4332 = vmatprep.subr.bf16.mxu0 0
      %4333 = vmatpush2.bf16.xpose.msra.mxu0 0
      %4334 = vmatprep.subr.bf16.mxu0 0
      %4335 = vmatpush2.bf16.xpose.msra.mxu0 0
      %4336 = vmatprep.mubr.bf16.mxu0 0
      %4337 = vmatmul.mubr.bf16.gmra.mxu0 %v4299
      %v4338 = vpop.f32.mrf.mxu0
      %v4339 = vadd.f32 0.0, %v4338
      %v4340 = vpop.f32.mrf.mxu0
      %v4341 = vpop.f32.mrf.mxu0
      %v4342 = vadd.f32 0.0, %v4341
      %v4343 = vpop.f32.mrf.mxu0
      %4344 = vdwg.mxu0
      %v4345 = vmul.f32 %v4339, 0.35355338
      %v4346 = vmul.f32 %v4342, 0.35355338
      %v4347 = vadd.f32 %v4345, %v291
      %v4348 = vadd.f32 %v4346, %v292
      %v4349 = vsel %vm4063, %v4347, -inf
      %4350 = vmax.xlane.f32.xlu0 %v4349
      %v4351 = vpop.xlane.xlu0 %4350
      %v4352 = vsel %vm4067, %v4348, -inf
      %4353 = vmax.xlane.f32.xlu0 %v4352
      %v4354 = vpop.xlane.xlu0 %4353
      %v4355 = vsub.f32 %v4347, %v4351
      %v4356 = vsub.f32 %v4348, %v4354
      %v4357 = vmul.f32 %v4355, 1.442695
      %v4358 = vpow.pop %v4357
      %v4359 = vmul.f32 %v4356, 1.442695
      %v4360 = vpow.pop %v4359
      %v4361 = vsel %vm4063, %v4358, 0.0
      %4362 = vadd.xlane.f32.xlu0 %v4361
      %v4363 = vpop.xlane.xlu0 %4362
      %v4364 = vsel %vm4067, %v4360, 0.0
      %4365 = vadd.xlane.f32.xlu0 %v4364
      %v4366 = vpop.xlane.xlu0 %4365
      %v4367 = vrcp.pop %v4363
      %v4368 = vrcp.pop %v4366
      %v4369 = vmul.f32 %v4358, %v4367
      %v4370 = vmul.f32 %v4360, %v4368
      %v4371 = vpack.c.bf16 %v4370, %v4369
      %v4372 = vpack.c.bf16 %v4293, %v4290
      %v4374 = vsel %vm4063, %v4371, 0
      %v4377 = vsel %vm4092, %v4372, 0
      %4379 = vmatprep.subr.bf16.mxu0 0
      %4380 = vmatpush1.bf16.msra.mxu0 0
      %4381 = vmatprep.subr.bf16.mxu0 0
      %4382 = vmatpush1.bf16.msra.mxu0 0
      %4383 = vmatprep.subr.bf16.mxu0 0
      %4384 = vmatpush1.bf16.msra.mxu0 0
      %4385 = vmatprep.subr.bf16.mxu0 0
      %4386 = vmatpush1.bf16.msra.mxu0 0
      %4387 = vmatprep.subr.bf16.mxu0 0
      %4388 = vmatpush1.bf16.msra.mxu0 0
      %4389 = vmatprep.subr.bf16.mxu0 0
      %4390 = vmatpush1.bf16.msra.mxu0 0
      %4391 = vmatprep.subr.bf16.mxu0 0
      %4392 = vmatpush1.bf16.msra.mxu0 0
      %4393 = vmatprep.subr.bf16.mxu0 0
      %4394 = vmatpush1.bf16.msra.mxu0 %v4377
      %4395 = vmatprep.subr.bf16.mxu0 0
      %4396 = vmatpush2.bf16.msra.mxu0 0
      %4397 = vmatprep.subr.bf16.mxu0 0
      %4398 = vmatpush2.bf16.msra.mxu0 0
      %4399 = vmatprep.subr.bf16.mxu0 0
      %4400 = vmatpush2.bf16.msra.mxu0 0
      %4401 = vmatprep.subr.bf16.mxu0 0
      %4402 = vmatpush2.bf16.msra.mxu0 0
      %4403 = vmatprep.subr.bf16.mxu0 0
      %4404 = vmatpush2.bf16.msra.mxu0 0
      %4405 = vmatprep.subr.bf16.mxu0 0
      %4406 = vmatpush2.bf16.msra.mxu0 0
      %4407 = vmatprep.subr.bf16.mxu0 0
      %4408 = vmatpush2.bf16.msra.mxu0 0
      %4409 = vmatprep.subr.bf16.mxu0 0
      %4410 = vmatpush2.bf16.msra.mxu0 0
      %4411 = vmatprep.mubr.bf16.mxu0 0
      %4412 = vmatmul.mubr.bf16.gmra.mxu0 %v4374
      %v4413 = vpop.f32.mrf.mxu0
      %v4414 = vadd.f32 0.0, %v4413
      %v4415 = vpop.f32.mrf.mxu0
      %v4416 = vpop.f32.mrf.mxu0
      %v4417 = vadd.f32 0.0, %v4416
      %v4418 = vpop.f32.mrf.mxu0
      %4419 = vdwg.mxu0
      %v4420 = vld [vmem:[%s4 + $0x6a8] sm:$0xff]
      %v4421 = vpack.c.bf16 %v4417, %v4414
      %v4422 = vpack.c.bf16 %v4420, %v4420
      %v4424 = vsel %vm697, %v4421, 0
      %v4427 = vsel %vm1100, %v4422, 0
      %4429 = vmatprep.subr.bf16.mxu0 0
      %4430 = vmatpush1.bf16.msra.mxu0 0
      %4431 = vmatprep.subr.bf16.mxu0 0
      %4432 = vmatpush1.bf16.msra.mxu0 0
      %4433 = vmatprep.subr.bf16.mxu0 0
      %4434 = vmatpush1.bf16.msra.mxu0 0
      %4435 = vmatprep.subr.bf16.mxu0 0
      %4436 = vmatpush1.bf16.msra.mxu0 0
      %4437 = vmatprep.subr.bf16.mxu0 0
      %4438 = vmatpush1.bf16.msra.mxu0 0
      %4439 = vmatprep.subr.bf16.mxu0 0
      %4440 = vmatpush1.bf16.msra.mxu0 0
      %4441 = vmatprep.subr.bf16.mxu0 0
      %4442 = vmatpush1.bf16.msra.mxu0 0
      %4443 = vmatprep.subr.bf16.mxu0 0
      %4444 = vmatpush1.bf16.msra.mxu0 %v4427
      %4445 = vmatprep.subr.bf16.mxu0 0
      %4446 = vmatpush2.bf16.msra.mxu0 0
      %4447 = vmatprep.subr.bf16.mxu0 0
      %4448 = vmatpush2.bf16.msra.mxu0 0
      %4449 = vmatprep.subr.bf16.mxu0 0
      %4450 = vmatpush2.bf16.msra.mxu0 0
      %4451 = vmatprep.subr.bf16.mxu0 0
      %4452 = vmatpush2.bf16.msra.mxu0 0
      %4453 = vmatprep.subr.bf16.mxu0 0
      %4454 = vmatpush2.bf16.msra.mxu0 0
      %4455 = vmatprep.subr.bf16.mxu0 0
      %4456 = vmatpush2.bf16.msra.mxu0 0
      %4457 = vmatprep.subr.bf16.mxu0 0
      %4458 = vmatpush2.bf16.msra.mxu0 0
      %4459 = vmatprep.subr.bf16.mxu0 0
      %4460 = vmatpush2.bf16.msra.mxu0 0
      %4461 = vmatprep.mubr.bf16.mxu0 0
      %4462 = vmatmul.mubr.bf16.gmra.mxu0 %v4424
      %v4463 = vpop.f32.mrf.mxu0
      %v4464 = vadd.f32 0.0, %v4463
      %v4465 = vpop.f32.mrf.mxu0
      %v4466 = vpop.f32.mrf.mxu0
      %v4467 = vadd.f32 0.0, %v4466
      %v4468 = vpop.f32.mrf.mxu0
      %4469 = vdwg.mxu0
      %v4471 = vsel %vm697, %v4138, 0
      %v4474 = vsel %vm1100, %v4139, 0
      %4476 = vmatprep.subr.bf16.mxu0 0
      %4477 = vmatpush1.bf16.msra.mxu0 0
      %4478 = vmatprep.subr.bf16.mxu0 0
      %4479 = vmatpush1.bf16.msra.mxu0 0
      %4480 = vmatprep.subr.bf16.mxu0 0
      %4481 = vmatpush1.bf16.msra.mxu0 0
      %4482 = vmatprep.subr.bf16.mxu0 0
      %4483 = vmatpush1.bf16.msra.mxu0 0
      %4484 = vmatprep.subr.bf16.mxu0 0
      %4485 = vmatpush1.bf16.msra.mxu0 0
      %4486 = vmatprep.subr.bf16.mxu0 0
      %4487 = vmatpush1.bf16.msra.mxu0 0
      %4488 = vmatprep.subr.bf16.mxu0 0
      %4489 = vmatpush1.bf16.msra.mxu0 0
      %4490 = vmatprep.subr.bf16.mxu0 0
      %4491 = vmatpush1.bf16.msra.mxu0 %v4474
      %4492 = vmatprep.subr.bf16.mxu0 0
      %4493 = vmatpush2.bf16.msra.mxu0 0
      %4494 = vmatprep.subr.bf16.mxu0 0
      %4495 = vmatpush2.bf16.msra.mxu0 0
      %4496 = vmatprep.subr.bf16.mxu0 0
      %4497 = vmatpush2.bf16.msra.mxu0 0
      %4498 = vmatprep.subr.bf16.mxu0 0
      %4499 = vmatpush2.bf16.msra.mxu0 0
      %4500 = vmatprep.subr.bf16.mxu0 0
      %4501 = vmatpush2.bf16.msra.mxu0 0
      %4502 = vmatprep.subr.bf16.mxu0 0
      %4503 = vmatpush2.bf16.msra.mxu0 0
      %4504 = vmatprep.subr.bf16.mxu0 0
      %4505 = vmatpush2.bf16.msra.mxu0 0
      %4506 = vmatprep.subr.bf16.mxu0 0
      %4507 = vmatpush2.bf16.msra.mxu0 0
      %4508 = vmatprep.mubr.bf16.mxu0 0
      %4509 = vmatmul.mubr.bf16.gmra.mxu0 %v4471
      %v4510 = vpop.f32.mrf.mxu0
      %v4511 = vadd.f32 %v4464, %v4510
      %v4512 = vpop.f32.mrf.mxu0
      %v4513 = vpop.f32.mrf.mxu0
      %v4514 = vadd.f32 %v4467, %v4513
      %v4515 = vpop.f32.mrf.mxu0
      %4516 = vdwg.mxu0
      %v4517 = vld [vmem:[%s4 + $0x6b0] sm:$0xff]
      %v4518 = vld [vmem:[%s4 + $0x6b8] sm:$0xff]
      %v4519 = vld [vmem:[%s4 + $0x6c0] sm:$0xff]
      %v4520 = vld [vmem:[%s4 + $0x6c8] sm:$0xff]
      %v4521 = vpack.c.bf16 %v4518, %v4517
      %v4522 = vpack.c.bf16 %v4520, %v4519
      %v4523 = vld [vmem:[%s4 + $0x6d0] sm:$0x1]
      %v4524 = vlaneseq
      %v4525 = vshrl.u32 %v4524, 7
      %v4526 = vsub.s32 0, %v4525
      %v4527 = vrot.slane %v4523, %v4526
      %4528 = vmatprep.subr.bf16.mxu0 0
      %4529 = vmatpush1.bf16.msra.mxu0 0
      %4530 = vmatprep.subr.bf16.mxu0 0
      %4531 = vmatpush1.bf16.msra.mxu0 0
      %4532 = vmatprep.subr.bf16.mxu0 0
      %4533 = vmatpush1.bf16.msra.mxu0 0
      %4534 = vmatprep.subr.bf16.mxu0 0
      %4535 = vmatpush1.bf16.msra.mxu0 0
      %4536 = vmatprep.subr.bf16.mxu0 0
      %4537 = vmatpush1.bf16.msra.mxu0 0
      %4538 = vmatprep.subr.bf16.mxu0 0
      %4539 = vmatpush1.bf16.msra.mxu0 0
      %4540 = vmatprep.subr.bf16.mxu0 0
      %4541 = vmatpush1.bf16.msra.mxu0 %v4522
      %4542 = vmatprep.subr.bf16.mxu0 0
      %4543 = vmatpush1.bf16.msra.mxu0 %v4521
      %4544 = vmatprep.subr.bf16.mxu0 0
      %4545 = vmatpush2.bf16.msra.mxu0 0
      %4546 = vmatprep.subr.bf16.mxu0 0
      %4547 = vmatpush2.bf16.msra.mxu0 0
      %4548 = vmatprep.subr.bf16.mxu0 0
      %4549 = vmatpush2.bf16.msra.mxu0 0
      %4550 = vmatprep.subr.bf16.mxu0 0
      %4551 = vmatpush2.bf16.msra.mxu0 0
      %4552 = vmatprep.subr.bf16.mxu0 0
      %4553 = vmatpush2.bf16.msra.mxu0 0
      %4554 = vmatprep.subr.bf16.mxu0 0
      %4555 = vmatpush2.bf16.msra.mxu0 0
      %4556 = vmatprep.subr.bf16.mxu0 0
      %4557 = vmatpush2.bf16.msra.mxu0 0
      %4558 = vmatprep.subr.bf16.mxu0 0
      %4559 = vmatpush2.bf16.msra.mxu0 0
      %4560 = vmatprep.mubr.bf16.mxu0 0
      %4561 = vmatmul.mubr.bf16.gmra.mxu0 %v3863
      %v4562 = vpop.f32.mrf.mxu0
      %v4563 = vadd.f32 %v4527, %v4562
      %v4564 = vpop.f32.mrf.mxu0
      %v4565 = vpop.f32.mrf.mxu0
      %v4566 = vadd.f32 %v4527, %v4565
      %v4567 = vpop.f32.mrf.mxu0
      %4568 = vdwg.mxu0
      %v4569 = vld [vmem:[%s4 + $0x6d8] sm:$0xff]
      %v4570 = vld [vmem:[%s4 + $0x6e0] sm:$0xff]
      %v4571 = vld [vmem:[%s4 + $0x6e8] sm:$0xff]
      %v4572 = vld [vmem:[%s4 + $0x6f0] sm:$0xff]
      %v4573 = vpack.c.bf16 %v4570, %v4569
      %v4574 = vpack.c.bf16 %v4572, %v4571
      %v4575 = vld [vmem:[%s4 + $0x6f8] sm:$0x1]
      %v4576 = vlaneseq
      %v4577 = vshrl.u32 %v4576, 7
      %v4578 = vsub.s32 0, %v4577
      %v4579 = vrot.slane %v4575, %v4578
      %4580 = vmatprep.subr.bf16.mxu0 0
      %4581 = vmatpush1.bf16.msra.mxu0 0
      %4582 = vmatprep.subr.bf16.mxu0 0
      %4583 = vmatpush1.bf16.msra.mxu0 0
      %4584 = vmatprep.subr.bf16.mxu0 0
      %4585 = vmatpush1.bf16.msra.mxu0 0
      %4586 = vmatprep.subr.bf16.mxu0 0
      %4587 = vmatpush1.bf16.msra.mxu0 0
      %4588 = vmatprep.subr.bf16.mxu0 0
      %4589 = vmatpush1.bf16.msra.mxu0 0
      %4590 = vmatprep.subr.bf16.mxu0 0
      %4591 = vmatpush1.bf16.msra.mxu0 0
      %4592 = vmatprep.subr.bf16.mxu0 0
      %4593 = vmatpush1.bf16.msra.mxu0 %v4574
      %4594 = vmatprep.subr.bf16.mxu0 0
      %4595 = vmatpush1.bf16.msra.mxu0 %v4573
      %4596 = vmatprep.subr.bf16.mxu0 0
      %4597 = vmatpush2.bf16.msra.mxu0 0
      %4598 = vmatprep.subr.bf16.mxu0 0
      %4599 = vmatpush2.bf16.msra.mxu0 0
      %4600 = vmatprep.subr.bf16.mxu0 0
      %4601 = vmatpush2.bf16.msra.mxu0 0
      %4602 = vmatprep.subr.bf16.mxu0 0
      %4603 = vmatpush2.bf16.msra.mxu0 0
      %4604 = vmatprep.subr.bf16.mxu0 0
      %4605 = vmatpush2.bf16.msra.mxu0 0
      %4606 = vmatprep.subr.bf16.mxu0 0
      %4607 = vmatpush2.bf16.msra.mxu0 0
      %4608 = vmatprep.subr.bf16.mxu0 0
      %4609 = vmatpush2.bf16.msra.mxu0 0
      %4610 = vmatprep.subr.bf16.mxu0 0
      %4611 = vmatpush2.bf16.msra.mxu0 0
      %4612 = vmatprep.mubr.bf16.mxu0 0
      %4613 = vmatmul.mubr.bf16.gmra.mxu0 %v3863
      %v4614 = vpop.f32.mrf.mxu0
      %v4615 = vadd.f32 %v4579, %v4614
      %v4616 = vpop.f32.mrf.mxu0
      %v4617 = vpop.f32.mrf.mxu0
      %v4618 = vadd.f32 %v4579, %v4617
      %v4619 = vpop.f32.mrf.mxu0
      %4620 = vdwg.mxu0
      %v4621 = vld [vmem:[%s4 + $0x700] sm:$0xff]
      %v4622 = vld [vmem:[%s4 + $0x708] sm:$0xff]
      %v4623 = vld [vmem:[%s4 + $0x710] sm:$0xff]
      %v4624 = vld [vmem:[%s4 + $0x718] sm:$0xff]
      %v4625 = vpack.c.bf16 %v4622, %v4621
      %v4626 = vpack.c.bf16 %v4624, %v4623
      %v4627 = vld [vmem:[%s4 + $0x720] sm:$0x1]
      %v4628 = vlaneseq
      %v4629 = vshrl.u32 %v4628, 7
      %v4630 = vsub.s32 0, %v4629
      %v4631 = vrot.slane %v4627, %v4630
      %4632 = vmatprep.subr.bf16.mxu0 0
      %4633 = vmatpush1.bf16.msra.mxu0 0
      %4634 = vmatprep.subr.bf16.mxu0 0
      %4635 = vmatpush1.bf16.msra.mxu0 0
      %4636 = vmatprep.subr.bf16.mxu0 0
      %4637 = vmatpush1.bf16.msra.mxu0 0
      %4638 = vmatprep.subr.bf16.mxu0 0
      %4639 = vmatpush1.bf16.msra.mxu0 0
      %4640 = vmatprep.subr.bf16.mxu0 0
      %4641 = vmatpush1.bf16.msra.mxu0 0
      %4642 = vmatprep.subr.bf16.mxu0 0
      %4643 = vmatpush1.bf16.msra.mxu0 0
      %4644 = vmatprep.subr.bf16.mxu0 0
      %4645 = vmatpush1.bf16.msra.mxu0 %v4626
      %4646 = vmatprep.subr.bf16.mxu0 0
      %4647 = vmatpush1.bf16.msra.mxu0 %v4625
      %4648 = vmatprep.subr.bf16.mxu0 0
      %4649 = vmatpush2.bf16.msra.mxu0 0
      %4650 = vmatprep.subr.bf16.mxu0 0
      %4651 = vmatpush2.bf16.msra.mxu0 0
      %4652 = vmatprep.subr.bf16.mxu0 0
      %4653 = vmatpush2.bf16.msra.mxu0 0
      %4654 = vmatprep.subr.bf16.mxu0 0
      %4655 = vmatpush2.bf16.msra.mxu0 0
      %4656 = vmatprep.subr.bf16.mxu0 0
      %4657 = vmatpush2.bf16.msra.mxu0 0
      %4658 = vmatprep.subr.bf16.mxu0 0
      %4659 = vmatpush2.bf16.msra.mxu0 0
      %4660 = vmatprep.subr.bf16.mxu0 0
      %4661 = vmatpush2.bf16.msra.mxu0 0
      %4662 = vmatprep.subr.bf16.mxu0 0
      %4663 = vmatpush2.bf16.msra.mxu0 0
      %4664 = vmatprep.mubr.bf16.mxu0 0
      %4665 = vmatmul.mubr.bf16.gmra.mxu0 %v3863
      %v4666 = vpop.f32.mrf.mxu0
      %v4667 = vadd.f32 %v4631, %v4666
      %v4668 = vpop.f32.mrf.mxu0
      %v4669 = vpop.f32.mrf.mxu0
      %v4670 = vadd.f32 %v4631, %v4669
      %v4671 = vpop.f32.mrf.mxu0
      %4672 = vdwg.mxu0
      %v4673 = vpack.c.bf16 %v4566, %v4563
      %v4674 = vpack.c.bf16 %v4618, %v4615
      %v4676 = vsel %vm697, %v4673, 0
      %v4679 = vsel %vm697, %v4674, 0
      %4681 = vmatprep.subr.bf16.mxu0 0
      %4682 = vmatpush1.bf16.xpose.msra.mxu0 0
      %4683 = vmatprep.subr.bf16.mxu0 0
      %4684 = vmatpush1.bf16.xpose.msra.mxu0 0
      %4685 = vmatprep.subr.bf16.mxu0 0
      %4686 = vmatpush1.bf16.xpose.msra.mxu0 0
      %4687 = vmatprep.subr.bf16.mxu0 0
      %4688 = vmatpush1.bf16.xpose.msra.mxu0 0
      %4689 = vmatprep.subr.bf16.mxu0 0
      %4690 = vmatpush1.bf16.xpose.msra.mxu0 0
      %4691 = vmatprep.subr.bf16.mxu0 0
      %4692 = vmatpush1.bf16.xpose.msra.mxu0 0
      %4693 = vmatprep.subr.bf16.mxu0 0
      %4694 = vmatpush1.bf16.xpose.msra.mxu0 0
      %4695 = vmatprep.subr.bf16.mxu0 0
      %4696 = vmatpush1.bf16.xpose.msra.mxu0 %v4679
      %4697 = vmatprep.subr.bf16.mxu0 0
      %4698 = vmatpush2.bf16.xpose.msra.mxu0 0
      %4699 = vmatprep.subr.bf16.mxu0 0
      %4700 = vmatpush2.bf16.xpose.msra.mxu0 0
      %4701 = vmatprep.subr.bf16.mxu0 0
      %4702 = vmatpush2.bf16.xpose.msra.mxu0 0
      %4703 = vmatprep.subr.bf16.mxu0 0
      %4704 = vmatpush2.bf16.xpose.msra.mxu0 0
      %4705 = vmatprep.subr.bf16.mxu0 0
      %4706 = vmatpush2.bf16.xpose.msra.mxu0 0
      %4707 = vmatprep.subr.bf16.mxu0 0
      %4708 = vmatpush2.bf16.xpose.msra.mxu0 0
      %4709 = vmatprep.subr.bf16.mxu0 0
      %4710 = vmatpush2.bf16.xpose.msra.mxu0 0
      %4711 = vmatprep.subr.bf16.mxu0 0
      %4712 = vmatpush2.bf16.xpose.msra.mxu0 0
      %4713 = vmatprep.mubr.bf16.mxu0 0
      %4714 = vmatmul.mubr.bf16.gmra.mxu0 %v4676
      %v4715 = vpop.f32.mrf.mxu0
      %v4716 = vadd.f32 0.0, %v4715
      %v4717 = vpop.f32.mrf.mxu0
      %v4718 = vpop.f32.mrf.mxu0
      %v4719 = vadd.f32 0.0, %v4718
      %v4720 = vpop.f32.mrf.mxu0
      %4721 = vdwg.mxu0
      %v4722 = vmul.f32 %v4716, 0.35355338
      %v4723 = vmul.f32 %v4719, 0.35355338
      %v4724 = vadd.f32 %v4722, %v291
      %v4725 = vadd.f32 %v4723, %v292
      %v4726 = vsel %vm4063, %v4724, -inf
      %4727 = vmax.xlane.f32.xlu0 %v4726
      %v4728 = vpop.xlane.xlu0 %4727
      %v4729 = vsel %vm4067, %v4725, -inf
      %4730 = vmax.xlane.f32.xlu0 %v4729
      %v4731 = vpop.xlane.xlu0 %4730
      %v4732 = vsub.f32 %v4724, %v4728
      %v4733 = vsub.f32 %v4725, %v4731
      %v4734 = vmul.f32 %v4732, 1.442695
      %v4735 = vpow.pop %v4734
      %v4736 = vmul.f32 %v4733, 1.442695
      %v4737 = vpow.pop %v4736
      %v4738 = vsel %vm4063, %v4735, 0.0
      %4739 = vadd.xlane.f32.xlu0 %v4738
      %v4740 = vpop.xlane.xlu0 %4739
      %v4741 = vsel %vm4067, %v4737, 0.0
      %4742 = vadd.xlane.f32.xlu0 %v4741
      %v4743 = vpop.xlane.xlu0 %4742
      %v4744 = vrcp.pop %v4740
      %v4745 = vrcp.pop %v4743
      %v4746 = vmul.f32 %v4735, %v4744
      %v4747 = vmul.f32 %v4737, %v4745
      %v4748 = vpack.c.bf16 %v4747, %v4746
      %v4749 = vpack.c.bf16 %v4670, %v4667
      %v4751 = vsel %vm4063, %v4748, 0
      %v4754 = vsel %vm4092, %v4749, 0
      %4756 = vmatprep.subr.bf16.mxu0 0
      %4757 = vmatpush1.bf16.msra.mxu0 0
      %4758 = vmatprep.subr.bf16.mxu0 0
      %4759 = vmatpush1.bf16.msra.mxu0 0
      %4760 = vmatprep.subr.bf16.mxu0 0
      %4761 = vmatpush1.bf16.msra.mxu0 0
      %4762 = vmatprep.subr.bf16.mxu0 0
      %4763 = vmatpush1.bf16.msra.mxu0 0
      %4764 = vmatprep.subr.bf16.mxu0 0
      %4765 = vmatpush1.bf16.msra.mxu0 0
      %4766 = vmatprep.subr.bf16.mxu0 0
      %4767 = vmatpush1.bf16.msra.mxu0 0
      %4768 = vmatprep.subr.bf16.mxu0 0
      %4769 = vmatpush1.bf16.msra.mxu0 0
      %4770 = vmatprep.subr.bf16.mxu0 0
      %4771 = vmatpush1.bf16.msra.mxu0 %v4754
      %4772 = vmatprep.subr.bf16.mxu0 0
      %4773 = vmatpush2.bf16.msra.mxu0 0
      %4774 = vmatprep.subr.bf16.mxu0 0
      %4775 = vmatpush2.bf16.msra.mxu0 0
      %4776 = vmatprep.subr.bf16.mxu0 0
      %4777 = vmatpush2.bf16.msra.mxu0 0
      %4778 = vmatprep.subr.bf16.mxu0 0
      %4779 = vmatpush2.bf16.msra.mxu0 0
      %4780 = vmatprep.subr.bf16.mxu0 0
      %4781 = vmatpush2.bf16.msra.mxu0 0
      %4782 = vmatprep.subr.bf16.mxu0 0
      %4783 = vmatpush2.bf16.msra.mxu0 0
      %4784 = vmatprep.subr.bf16.mxu0 0
      %4785 = vmatpush2.bf16.msra.mxu0 0
      %4786 = vmatprep.subr.bf16.mxu0 0
      %4787 = vmatpush2.bf16.msra.mxu0 0
      %4788 = vmatprep.mubr.bf16.mxu0 0
      %4789 = vmatmul.mubr.bf16.gmra.mxu0 %v4751
      %v4790 = vpop.f32.mrf.mxu0
      %v4791 = vadd.f32 0.0, %v4790
      %v4792 = vpop.f32.mrf.mxu0
      %v4793 = vpop.f32.mrf.mxu0
      %v4794 = vadd.f32 0.0, %v4793
      %v4795 = vpop.f32.mrf.mxu0
      %4796 = vdwg.mxu0
      %v4797 = vld [vmem:[%s4 + $0x728] sm:$0xff]
      %v4798 = vpack.c.bf16 %v4794, %v4791
      %v4799 = vpack.c.bf16 %v4797, %v4797
      %v4801 = vsel %vm697, %v4798, 0
      %v4804 = vsel %vm1100, %v4799, 0
      %4806 = vmatprep.subr.bf16.mxu0 0
      %4807 = vmatpush1.bf16.msra.mxu0 0
      %4808 = vmatprep.subr.bf16.mxu0 0
      %4809 = vmatpush1.bf16.msra.mxu0 0
      %4810 = vmatprep.subr.bf16.mxu0 0
      %4811 = vmatpush1.bf16.msra.mxu0 0
      %4812 = vmatprep.subr.bf16.mxu0 0
      %4813 = vmatpush1.bf16.msra.mxu0 0
      %4814 = vmatprep.subr.bf16.mxu0 0
      %4815 = vmatpush1.bf16.msra.mxu0 0
      %4816 = vmatprep.subr.bf16.mxu0 0
      %4817 = vmatpush1.bf16.msra.mxu0 0
      %4818 = vmatprep.subr.bf16.mxu0 0
      %4819 = vmatpush1.bf16.msra.mxu0 0
      %4820 = vmatprep.subr.bf16.mxu0 0
      %4821 = vmatpush1.bf16.msra.mxu0 %v4804
      %4822 = vmatprep.subr.bf16.mxu0 0
      %4823 = vmatpush2.bf16.msra.mxu0 0
      %4824 = vmatprep.subr.bf16.mxu0 0
      %4825 = vmatpush2.bf16.msra.mxu0 0
      %4826 = vmatprep.subr.bf16.mxu0 0
      %4827 = vmatpush2.bf16.msra.mxu0 0
      %4828 = vmatprep.subr.bf16.mxu0 0
      %4829 = vmatpush2.bf16.msra.mxu0 0
      %4830 = vmatprep.subr.bf16.mxu0 0
      %4831 = vmatpush2.bf16.msra.mxu0 0
      %4832 = vmatprep.subr.bf16.mxu0 0
      %4833 = vmatpush2.bf16.msra.mxu0 0
      %4834 = vmatprep.subr.bf16.mxu0 0
      %4835 = vmatpush2.bf16.msra.mxu0 0
      %4836 = vmatprep.subr.bf16.mxu0 0
      %4837 = vmatpush2.bf16.msra.mxu0 0
      %4838 = vmatprep.mubr.bf16.mxu0 0
      %4839 = vmatmul.mubr.bf16.gmra.mxu0 %v4801
      %v4840 = vpop.f32.mrf.mxu0
      %v4841 = vadd.f32 0.0, %v4840
      %v4842 = vpop.f32.mrf.mxu0
      %v4843 = vpop.f32.mrf.mxu0
      %v4844 = vadd.f32 0.0, %v4843
      %v4845 = vpop.f32.mrf.mxu0
      %4846 = vdwg.mxu0
      %v4847 = vadd.f32 %v4511, %v4841
      %v4848 = vadd.f32 %v4514, %v4844
      %v4849 = vld [vmem:[%s4 + $0x730] sm:$0xff]
      %v4850 = vld [vmem:[%s4 + $0x738] sm:$0xff]
      %v4851 = vld [vmem:[%s4 + $0x740] sm:$0xff]
      %v4852 = vld [vmem:[%s4 + $0x748] sm:$0xff]
      %v4853 = vpack.c.bf16 %v4850, %v4849
      %v4854 = vpack.c.bf16 %v4852, %v4851
      %v4855 = vld [vmem:[%s4 + $0x750] sm:$0x1]
      %v4856 = vlaneseq
      %v4857 = vshrl.u32 %v4856, 7
      %v4858 = vsub.s32 0, %v4857
      %v4859 = vrot.slane %v4855, %v4858
      %4860 = vmatprep.subr.bf16.mxu0 0
      %4861 = vmatpush1.bf16.msra.mxu0 0
      %4862 = vmatprep.subr.bf16.mxu0 0
      %4863 = vmatpush1.bf16.msra.mxu0 0
      %4864 = vmatprep.subr.bf16.mxu0 0
      %4865 = vmatpush1.bf16.msra.mxu0 0
      %4866 = vmatprep.subr.bf16.mxu0 0
      %4867 = vmatpush1.bf16.msra.mxu0 0
      %4868 = vmatprep.subr.bf16.mxu0 0
      %4869 = vmatpush1.bf16.msra.mxu0 0
      %4870 = vmatprep.subr.bf16.mxu0 0
      %4871 = vmatpush1.bf16.msra.mxu0 0
      %4872 = vmatprep.subr.bf16.mxu0 0
      %4873 = vmatpush1.bf16.msra.mxu0 %v4854
      %4874 = vmatprep.subr.bf16.mxu0 0
      %4875 = vmatpush1.bf16.msra.mxu0 %v4853
      %4876 = vmatprep.subr.bf16.mxu0 0
      %4877 = vmatpush2.bf16.msra.mxu0 0
      %4878 = vmatprep.subr.bf16.mxu0 0
      %4879 = vmatpush2.bf16.msra.mxu0 0
      %4880 = vmatprep.subr.bf16.mxu0 0
      %4881 = vmatpush2.bf16.msra.mxu0 0
      %4882 = vmatprep.subr.bf16.mxu0 0
      %4883 = vmatpush2.bf16.msra.mxu0 0
      %4884 = vmatprep.subr.bf16.mxu0 0
      %4885 = vmatpush2.bf16.msra.mxu0 0
      %4886 = vmatprep.subr.bf16.mxu0 0
      %4887 = vmatpush2.bf16.msra.mxu0 0
      %4888 = vmatprep.subr.bf16.mxu0 0
      %4889 = vmatpush2.bf16.msra.mxu0 0
      %4890 = vmatprep.subr.bf16.mxu0 0
      %4891 = vmatpush2.bf16.msra.mxu0 0
      %4892 = vmatprep.mubr.bf16.mxu0 0
      %4893 = vmatmul.mubr.bf16.gmra.mxu0 %v3863
      %v4894 = vpop.f32.mrf.mxu0
      %v4895 = vadd.f32 %v4859, %v4894
      %v4896 = vpop.f32.mrf.mxu0
      %v4897 = vpop.f32.mrf.mxu0
      %v4898 = vadd.f32 %v4859, %v4897
      %v4899 = vpop.f32.mrf.mxu0
      %4900 = vdwg.mxu0
      %v4901 = vld [vmem:[%s4 + $0x758] sm:$0xff]
      %v4902 = vld [vmem:[%s4 + $0x760] sm:$0xff]
      %v4903 = vld [vmem:[%s4 + $0x768] sm:$0xff]
      %v4904 = vld [vmem:[%s4 + $0x770] sm:$0xff]
      %v4905 = vpack.c.bf16 %v4902, %v4901
      %v4906 = vpack.c.bf16 %v4904, %v4903
      %v4907 = vld [vmem:[%s4 + $0x778] sm:$0x1]
      %v4908 = vlaneseq
      %v4909 = vshrl.u32 %v4908, 7
      %v4910 = vsub.s32 0, %v4909
      %v4911 = vrot.slane %v4907, %v4910
      %4912 = vmatprep.subr.bf16.mxu0 0
      %4913 = vmatpush1.bf16.msra.mxu0 0
      %4914 = vmatprep.subr.bf16.mxu0 0
      %4915 = vmatpush1.bf16.msra.mxu0 0
      %4916 = vmatprep.subr.bf16.mxu0 0
      %4917 = vmatpush1.bf16.msra.mxu0 0
      %4918 = vmatprep.subr.bf16.mxu0 0
      %4919 = vmatpush1.bf16.msra.mxu0 0
      %4920 = vmatprep.subr.bf16.mxu0 0
      %4921 = vmatpush1.bf16.msra.mxu0 0
      %4922 = vmatprep.subr.bf16.mxu0 0
      %4923 = vmatpush1.bf16.msra.mxu0 0
      %4924 = vmatprep.subr.bf16.mxu0 0
      %4925 = vmatpush1.bf16.msra.mxu0 %v4906
      %4926 = vmatprep.subr.bf16.mxu0 0
      %4927 = vmatpush1.bf16.msra.mxu0 %v4905
      %4928 = vmatprep.subr.bf16.mxu0 0
      %4929 = vmatpush2.bf16.msra.mxu0 0
      %4930 = vmatprep.subr.bf16.mxu0 0
      %4931 = vmatpush2.bf16.msra.mxu0 0
      %4932 = vmatprep.subr.bf16.mxu0 0
      %4933 = vmatpush2.bf16.msra.mxu0 0
      %4934 = vmatprep.subr.bf16.mxu0 0
      %4935 = vmatpush2.bf16.msra.mxu0 0
      %4936 = vmatprep.subr.bf16.mxu0 0
      %4937 = vmatpush2.bf16.msra.mxu0 0
      %4938 = vmatprep.subr.bf16.mxu0 0
      %4939 = vmatpush2.bf16.msra.mxu0 0
      %4940 = vmatprep.subr.bf16.mxu0 0
      %4941 = vmatpush2.bf16.msra.mxu0 0
      %4942 = vmatprep.subr.bf16.mxu0 0
      %4943 = vmatpush2.bf16.msra.mxu0 0
      %4944 = vmatprep.mubr.bf16.mxu0 0
      %4945 = vmatmul.mubr.bf16.gmra.mxu0 %v3863
      %v4946 = vpop.f32.mrf.mxu0
      %v4947 = vadd.f32 %v4911, %v4946
      %v4948 = vpop.f32.mrf.mxu0
      %v4949 = vpop.f32.mrf.mxu0
      %v4950 = vadd.f32 %v4911, %v4949
      %v4951 = vpop.f32.mrf.mxu0
      %4952 = vdwg.mxu0
      %v4953 = vld [vmem:[%s4 + $0x780] sm:$0xff]
      %v4954 = vld [vmem:[%s4 + $0x788] sm:$0xff]
      %v4955 = vld [vmem:[%s4 + $0x790] sm:$0xff]
      %v4956 = vld [vmem:[%s4 + $0x798] sm:$0xff]
      %v4957 = vpack.c.bf16 %v4954, %v4953
      %v4958 = vpack.c.bf16 %v4956, %v4955
      %v4959 = vld [vmem:[%s4 + $0x7a0] sm:$0x1]
      %v4960 = vlaneseq
      %v4961 = vshrl.u32 %v4960, 7
      %v4962 = vsub.s32 0, %v4961
      %v4963 = vrot.slane %v4959, %v4962
      %4964 = vmatprep.subr.bf16.mxu0 0
      %4965 = vmatpush1.bf16.msra.mxu0 0
      %4966 = vmatprep.subr.bf16.mxu0 0
      %4967 = vmatpush1.bf16.msra.mxu0 0
      %4968 = vmatprep.subr.bf16.mxu0 0
      %4969 = vmatpush1.bf16.msra.mxu0 0
      %4970 = vmatprep.subr.bf16.mxu0 0
      %4971 = vmatpush1.bf16.msra.mxu0 0
      %4972 = vmatprep.subr.bf16.mxu0 0
      %4973 = vmatpush1.bf16.msra.mxu0 0
      %4974 = vmatprep.subr.bf16.mxu0 0
      %4975 = vmatpush1.bf16.msra.mxu0 0
      %4976 = vmatprep.subr.bf16.mxu0 0
      %4977 = vmatpush1.bf16.msra.mxu0 %v4958
      %4978 = vmatprep.subr.bf16.mxu0 0
      %4979 = vmatpush1.bf16.msra.mxu0 %v4957
      %4980 = vmatprep.subr.bf16.mxu0 0
      %4981 = vmatpush2.bf16.msra.mxu0 0
      %4982 = vmatprep.subr.bf16.mxu0 0
      %4983 = vmatpush2.bf16.msra.mxu0 0
      %4984 = vmatprep.subr.bf16.mxu0 0
      %4985 = vmatpush2.bf16.msra.mxu0 0
      %4986 = vmatprep.subr.bf16.mxu0 0
      %4987 = vmatpush2.bf16.msra.mxu0 0
      %4988 = vmatprep.subr.bf16.mxu0 0
      %4989 = vmatpush2.bf16.msra.mxu0 0
      %4990 = vmatprep.subr.bf16.mxu0 0
      %4991 = vmatpush2.bf16.msra.mxu0 0
      %4992 = vmatprep.subr.bf16.mxu0 0
      %4993 = vmatpush2.bf16.msra.mxu0 0
      %4994 = vmatprep.subr.bf16.mxu0 0
      %4995 = vmatpush2.bf16.msra.mxu0 0
      %4996 = vmatprep.mubr.bf16.mxu0 0
      %4997 = vmatmul.mubr.bf16.gmra.mxu0 %v3863
      %v4998 = vpop.f32.mrf.mxu0
      %v4999 = vadd.f32 %v4963, %v4998
      %v5000 = vpop.f32.mrf.mxu0
      %v5001 = vpop.f32.mrf.mxu0
      %v5002 = vadd.f32 %v4963, %v5001
      %v5003 = vpop.f32.mrf.mxu0
      %5004 = vdwg.mxu0
      %v5005 = vpack.c.bf16 %v4898, %v4895
      %v5006 = vpack.c.bf16 %v4950, %v4947
      %v5008 = vsel %vm697, %v5005, 0
      %v5011 = vsel %vm697, %v5006, 0
      %5013 = vmatprep.subr.bf16.mxu0 0
      %5014 = vmatpush1.bf16.xpose.msra.mxu0 0
      %5015 = vmatprep.subr.bf16.mxu0 0
      %5016 = vmatpush1.bf16.xpose.msra.mxu0 0
      %5017 = vmatprep.subr.bf16.mxu0 0
      %5018 = vmatpush1.bf16.xpose.msra.mxu0 0
      %5019 = vmatprep.subr.bf16.mxu0 0
      %5020 = vmatpush1.bf16.xpose.msra.mxu0 0
      %5021 = vmatprep.subr.bf16.mxu0 0
      %5022 = vmatpush1.bf16.xpose.msra.mxu0 0
      %5023 = vmatprep.subr.bf16.mxu0 0
      %5024 = vmatpush1.bf16.xpose.msra.mxu0 0
      %5025 = vmatprep.subr.bf16.mxu0 0
      %5026 = vmatpush1.bf16.xpose.msra.mxu0 0
      %5027 = vmatprep.subr.bf16.mxu0 0
      %5028 = vmatpush1.bf16.xpose.msra.mxu0 %v5011
      %5029 = vmatprep.subr.bf16.mxu0 0
      %5030 = vmatpush2.bf16.xpose.msra.mxu0 0
      %5031 = vmatprep.subr.bf16.mxu0 0
      %5032 = vmatpush2.bf16.xpose.msra.mxu0 0
      %5033 = vmatprep.subr.bf16.mxu0 0
      %5034 = vmatpush2.bf16.xpose.msra.mxu0 0
      %5035 = vmatprep.subr.bf16.mxu0 0
      %5036 = vmatpush2.bf16.xpose.msra.mxu0 0
      %5037 = vmatprep.subr.bf16.mxu0 0
      %5038 = vmatpush2.bf16.xpose.msra.mxu0 0
      %5039 = vmatprep.subr.bf16.mxu0 0
      %5040 = vmatpush2.bf16.xpose.msra.mxu0 0
      %5041 = vmatprep.subr.bf16.mxu0 0
      %5042 = vmatpush2.bf16.xpose.msra.mxu0 0
      %5043 = vmatprep.subr.bf16.mxu0 0
      %5044 = vmatpush2.bf16.xpose.msra.mxu0 0
      %5045 = vmatprep.mubr.bf16.mxu0 0
      %5046 = vmatmul.mubr.bf16.gmra.mxu0 %v5008
      %v5047 = vpop.f32.mrf.mxu0
      %v5048 = vadd.f32 0.0, %v5047
      %v5049 = vpop.f32.mrf.mxu0
      %v5050 = vpop.f32.mrf.mxu0
      %v5051 = vadd.f32 0.0, %v5050
      %v5052 = vpop.f32.mrf.mxu0
      %5053 = vdwg.mxu0
      %v5054 = vmul.f32 %v5048, 0.35355338
      %v5055 = vmul.f32 %v5051, 0.35355338
      %v5056 = vadd.f32 %v5054, %v291
      %v5057 = vadd.f32 %v5055, %v292
      %v5058 = vsel %vm4063, %v5056, -inf
      %5059 = vmax.xlane.f32.xlu0 %v5058
      %v5060 = vpop.xlane.xlu0 %5059
      %v5061 = vsel %vm4067, %v5057, -inf
      %5062 = vmax.xlane.f32.xlu0 %v5061
      %v5063 = vpop.xlane.xlu0 %5062
      %v5064 = vsub.f32 %v5056, %v5060
      %v5065 = vsub.f32 %v5057, %v5063
      %v5066 = vmul.f32 %v5064, 1.442695
      %v5067 = vpow.pop %v5066
      %v5068 = vmul.f32 %v5065, 1.442695
      %v5069 = vpow.pop %v5068
      %v5070 = vsel %vm4063, %v5067, 0.0
      %5071 = vadd.xlane.f32.xlu0 %v5070
      %v5072 = vpop.xlane.xlu0 %5071
      %v5073 = vsel %vm4067, %v5069, 0.0
      %5074 = vadd.xlane.f32.xlu0 %v5073
      %v5075 = vpop.xlane.xlu0 %5074
      %v5076 = vrcp.pop %v5072
      %v5077 = vrcp.pop %v5075
      %v5078 = vmul.f32 %v5067, %v5076
      %v5079 = vmul.f32 %v5069, %v5077
      %v5080 = vpack.c.bf16 %v5079, %v5078
      %v5081 = vpack.c.bf16 %v5002, %v4999
      %v5083 = vsel %vm4063, %v5080, 0
      %v5086 = vsel %vm4092, %v5081, 0
      %5088 = vmatprep.subr.bf16.mxu0 0
      %5089 = vmatpush1.bf16.msra.mxu0 0
      %5090 = vmatprep.subr.bf16.mxu0 0
      %5091 = vmatpush1.bf16.msra.mxu0 0
      %5092 = vmatprep.subr.bf16.mxu0 0
      %5093 = vmatpush1.bf16.msra.mxu0 0
      %5094 = vmatprep.subr.bf16.mxu0 0
      %5095 = vmatpush1.bf16.msra.mxu0 0
      %5096 = vmatprep.subr.bf16.mxu0 0
      %5097 = vmatpush1.bf16.msra.mxu0 0
      %5098 = vmatprep.subr.bf16.mxu0 0
      %5099 = vmatpush1.bf16.msra.mxu0 0
      %5100 = vmatprep.subr.bf16.mxu0 0
      %5101 = vmatpush1.bf16.msra.mxu0 0
      %5102 = vmatprep.subr.bf16.mxu0 0
      %5103 = vmatpush1.bf16.msra.mxu0 %v5086
      %5104 = vmatprep.subr.bf16.mxu0 0
      %5105 = vmatpush2.bf16.msra.mxu0 0
      %5106 = vmatprep.subr.bf16.mxu0 0
      %5107 = vmatpush2.bf16.msra.mxu0 0
      %5108 = vmatprep.subr.bf16.mxu0 0
      %5109 = vmatpush2.bf16.msra.mxu0 0
      %5110 = vmatprep.subr.bf16.mxu0 0
      %5111 = vmatpush2.bf16.msra.mxu0 0
      %5112 = vmatprep.subr.bf16.mxu0 0
      %5113 = vmatpush2.bf16.msra.mxu0 0
      %5114 = vmatprep.subr.bf16.mxu0 0
      %5115 = vmatpush2.bf16.msra.mxu0 0
      %5116 = vmatprep.subr.bf16.mxu0 0
      %5117 = vmatpush2.bf16.msra.mxu0 0
      %5118 = vmatprep.subr.bf16.mxu0 0
      %5119 = vmatpush2.bf16.msra.mxu0 0
      %5120 = vmatprep.mubr.bf16.mxu0 0
      %5121 = vmatmul.mubr.bf16.gmra.mxu0 %v5083
      %v5122 = vpop.f32.mrf.mxu0
      %v5123 = vadd.f32 0.0, %v5122
      %v5124 = vpop.f32.mrf.mxu0
      %v5125 = vpop.f32.mrf.mxu0
      %v5126 = vadd.f32 0.0, %v5125
      %v5127 = vpop.f32.mrf.mxu0
      %5128 = vdwg.mxu0
      %v5129 = vld [vmem:[%s4 + $0x7a8] sm:$0xff]
      %v5130 = vpack.c.bf16 %v5126, %v5123
      %v5131 = vpack.c.bf16 %v5129, %v5129
      %v5133 = vsel %vm697, %v5130, 0
      %v5136 = vsel %vm1100, %v5131, 0
      %5138 = vmatprep.subr.bf16.mxu0 0
      %5139 = vmatpush1.bf16.msra.mxu0 0
      %5140 = vmatprep.subr.bf16.mxu0 0
      %5141 = vmatpush1.bf16.msra.mxu0 0
      %5142 = vmatprep.subr.bf16.mxu0 0
      %5143 = vmatpush1.bf16.msra.mxu0 0
      %5144 = vmatprep.subr.bf16.mxu0 0
      %5145 = vmatpush1.bf16.msra.mxu0 0
      %5146 = vmatprep.subr.bf16.mxu0 0
      %5147 = vmatpush1.bf16.msra.mxu0 0
      %5148 = vmatprep.subr.bf16.mxu0 0
      %5149 = vmatpush1.bf16.msra.mxu0 0
      %5150 = vmatprep.subr.bf16.mxu0 0
      %5151 = vmatpush1.bf16.msra.mxu0 0
      %5152 = vmatprep.subr.bf16.mxu0 0
      %5153 = vmatpush1.bf16.msra.mxu0 %v5136
      %5154 = vmatprep.subr.bf16.mxu0 0
      %5155 = vmatpush2.bf16.msra.mxu0 0
      %5156 = vmatprep.subr.bf16.mxu0 0
      %5157 = vmatpush2.bf16.msra.mxu0 0
      %5158 = vmatprep.subr.bf16.mxu0 0
      %5159 = vmatpush2.bf16.msra.mxu0 0
      %5160 = vmatprep.subr.bf16.mxu0 0
      %5161 = vmatpush2.bf16.msra.mxu0 0
      %5162 = vmatprep.subr.bf16.mxu0 0
      %5163 = vmatpush2.bf16.msra.mxu0 0
      %5164 = vmatprep.subr.bf16.mxu0 0
      %5165 = vmatpush2.bf16.msra.mxu0 0
      %5166 = vmatprep.subr.bf16.mxu0 0
      %5167 = vmatpush2.bf16.msra.mxu0 0
      %5168 = vmatprep.subr.bf16.mxu0 0
      %5169 = vmatpush2.bf16.msra.mxu0 0
      %5170 = vmatprep.mubr.bf16.mxu0 0
      %5171 = vmatmul.mubr.bf16.gmra.mxu0 %v5133
      %v5172 = vpop.f32.mrf.mxu0
      %v5173 = vadd.f32 0.0, %v5172
      %v5174 = vpop.f32.mrf.mxu0
      %v5175 = vpop.f32.mrf.mxu0
      %v5176 = vadd.f32 0.0, %v5175
      %v5177 = vpop.f32.mrf.mxu0
      %5178 = vdwg.mxu0
      %v5179 = vadd.f32 %v4847, %v5173
      %v5180 = vadd.f32 %v4848, %v5176
      %v5181 = vld [vmem:[%s4 + $0x7b0] sm:$0x1]
      %v5182 = vlaneseq
      %v5183 = vshrl.u32 %v5182, 7
      %v5184 = vsub.s32 0, %v5183
      %v5185 = vrot.slane %v5181, %v5184
      %v5186 = vadd.f32 %v5179, %v5185
      %v5187 = vadd.f32 %v5180, %v5185
      %v5188 = vadd.f32 %v3848, %v5186
      %v5189 = vadd.f32 %v3849, %v5187
      %v5190 = vsel %vm546, %v5188, 0.0
      %5191 = vadd.xlane.f32.xlu0 %v5190
      %v5192 = vpop.xlane.xlu0 %5191
      %vm5193 = vcmask 257024
      %v5194 = vsel %vm5193, %v5189, 0.0
      %5195 = vadd.xlane.f32.xlu0 %v5194
      %v5196 = vpop.xlane.xlu0 %5195
      %v5197 = vmul.f32 %v5192, %v1861
      %v5198 = vmul.f32 %v5196, %v1861
      %v5199 = vsub.f32 %v5188, %v5197
      %v5200 = vsub.f32 %v5189, %v5198
      %v5201 = vmul.f32 %v5199, %v5199
      %v5202 = vmul.f32 %v5200, %v5200
      %v5203 = vsel %vm546, %v5201, 0.0
      %5204 = vadd.xlane.f32.xlu0 %v5203
      %v5205 = vpop.xlane.xlu0 %5204
      %v5206 = vsel %vm5193, %v5202, 0.0
      %5207 = vadd.xlane.f32.xlu0 %v5206
      %v5208 = vpop.xlane.xlu0 %5207
      %v5209 = vmul.f32 %v5205, %v1861
      %v5210 = vmul.f32 %v5208, %v1861
      %v5211 = vadd.f32 %v5209, 1e-05
      %v5212 = vadd.f32 %v5210, 1e-05
      %v5213 = vrsqrt.pop %v5211
      %v5214 = vrsqrt.pop %v5212
      %v5215 = vmul.f32 %v5199, %v5213
      %v5216 = vmul.f32 %v5200, %v5214
      %v5217 = vld [vmem:[%s4 + $0xa30] sm:$0x1]
      %v5218 = vlaneseq
      %v5219 = vshrl.u32 %v5218, 7
      %v5220 = vsub.s32 0, %v5219
      %v5221 = vrot.slane %v5217, %v5220
      %v5222 = vmul.f32 %v5215, %v5221
      %v5223 = vmul.f32 %v5216, %v5221
      %v5224 = vld [vmem:[%s4 + $0xa38] sm:$0x1]
      %v5225 = vlaneseq
      %v5226 = vshrl.u32 %v5225, 7
      %v5227 = vsub.s32 0, %v5226
      %v5228 = vrot.slane %v5224, %v5227
      %v5229 = vadd.f32 %v5222, %v5228
      %v5230 = vadd.f32 %v5223, %v5228
      %v5231 = vld [vmem:[%s4 + $0x7b8] sm:$0xff]
      %v5232 = vld [vmem:[%s4 + $0x7c0] sm:$0xff]
      %v5233 = vld [vmem:[%s4 + $0x7c8] sm:$0xff]
      %v5234 = vld [vmem:[%s4 + $0x7d0] sm:$0xff]
      %v5235 = vpack.c.bf16 %v5230, %v5229
      %v5236 = vpack.c.bf16 %v5232, %v5231
      %v5237 = vpack.c.bf16 %v5234, %v5233
      %v5238 = vld [vmem:[%s4 + $0x7d8] sm:$0x1]
      %v5239 = vlaneseq
      %v5240 = vshrl.u32 %v5239, 7
      %v5241 = vsub.s32 0, %v5240
      %v5242 = vrot.slane %v5238, %v5241
      %v5244 = vsel %vm546, %v5235, 0
      %5246 = vmatprep.subr.bf16.mxu0 0
      %5247 = vmatpush1.bf16.msra.mxu0 0
      %5248 = vmatprep.subr.bf16.mxu0 0
      %5249 = vmatpush1.bf16.msra.mxu0 0
      %5250 = vmatprep.subr.bf16.mxu0 0
      %5251 = vmatpush1.bf16.msra.mxu0 0
      %5252 = vmatprep.subr.bf16.mxu0 0
      %5253 = vmatpush1.bf16.msra.mxu0 0
      %5254 = vmatprep.subr.bf16.mxu0 0
      %5255 = vmatpush1.bf16.msra.mxu0 0
      %5256 = vmatprep.subr.bf16.mxu0 0
      %5257 = vmatpush1.bf16.msra.mxu0 0
      %5258 = vmatprep.subr.bf16.mxu0 0
      %5259 = vmatpush1.bf16.msra.mxu0 %v5237
      %5260 = vmatprep.subr.bf16.mxu0 0
      %5261 = vmatpush1.bf16.msra.mxu0 %v5236
      %5262 = vmatprep.subr.bf16.mxu0 0
      %5263 = vmatpush2.bf16.msra.mxu0 0
      %5264 = vmatprep.subr.bf16.mxu0 0
      %5265 = vmatpush2.bf16.msra.mxu0 0
      %5266 = vmatprep.subr.bf16.mxu0 0
      %5267 = vmatpush2.bf16.msra.mxu0 0
      %5268 = vmatprep.subr.bf16.mxu0 0
      %5269 = vmatpush2.bf16.msra.mxu0 0
      %5270 = vmatprep.subr.bf16.mxu0 0
      %5271 = vmatpush2.bf16.msra.mxu0 0
      %5272 = vmatprep.subr.bf16.mxu0 0
      %5273 = vmatpush2.bf16.msra.mxu0 0
      %5274 = vmatprep.subr.bf16.mxu0 0
      %5275 = vmatpush2.bf16.msra.mxu0 0
      %5276 = vmatprep.subr.bf16.mxu0 0
      %5277 = vmatpush2.bf16.msra.mxu0 0
      %5278 = vmatprep.mubr.bf16.mxu0 0
      %5279 = vmatmul.mubr.bf16.gmra.mxu0 %v5244
      %v5280 = vpop.f32.mrf.mxu0
      %v5281 = vadd.f32 %v5242, %v5280
      %v5282 = vpop.f32.mrf.mxu0
      %v5283 = vpop.f32.mrf.mxu0
      %v5284 = vadd.f32 %v5242, %v5283
      %v5285 = vpop.f32.mrf.mxu0
      %5286 = vdwg.mxu0
      %v5287 = vld [vmem:[%s4 + $0x7e0] sm:$0xff]
      %v5288 = vld [vmem:[%s4 + $0x7e8] sm:$0xff]
      %v5289 = vld [vmem:[%s4 + $0x7f0] sm:$0xff]
      %v5290 = vld [vmem:[%s4 + $0x7f8] sm:$0xff]
      %v5291 = vpack.c.bf16 %v3617, %v3616
      %v5292 = vpack.c.bf16 %v5288, %v5287
      %v5293 = vpack.c.bf16 %v5290, %v5289
      %v5294 = vld [vmem:[%s4 + $0x800] sm:$0x1]
      %v5295 = vlaneseq
      %v5296 = vshrl.u32 %v5295, 7
      %v5297 = vsub.s32 0, %v5296
      %v5298 = vrot.slane %v5294, %v5297
      %v5300 = vsel %vm546, %v5291, 0
      %5302 = vmatprep.subr.bf16.mxu0 0
      %5303 = vmatpush1.bf16.msra.mxu0 0
      %5304 = vmatprep.subr.bf16.mxu0 0
      %5305 = vmatpush1.bf16.msra.mxu0 0
      %5306 = vmatprep.subr.bf16.mxu0 0
      %5307 = vmatpush1.bf16.msra.mxu0 0
      %5308 = vmatprep.subr.bf16.mxu0 0
      %5309 = vmatpush1.bf16.msra.mxu0 0
      %5310 = vmatprep.subr.bf16.mxu0 0
      %5311 = vmatpush1.bf16.msra.mxu0 0
      %5312 = vmatprep.subr.bf16.mxu0 0
      %5313 = vmatpush1.bf16.msra.mxu0 0
      %5314 = vmatprep.subr.bf16.mxu0 0
      %5315 = vmatpush1.bf16.msra.mxu0 %v5293
      %5316 = vmatprep.subr.bf16.mxu0 0
      %5317 = vmatpush1.bf16.msra.mxu0 %v5292
      %5318 = vmatprep.subr.bf16.mxu0 0
      %5319 = vmatpush2.bf16.msra.mxu0 0
      %5320 = vmatprep.subr.bf16.mxu0 0
      %5321 = vmatpush2.bf16.msra.mxu0 0
      %5322 = vmatprep.subr.bf16.mxu0 0
      %5323 = vmatpush2.bf16.msra.mxu0 0
      %5324 = vmatprep.subr.bf16.mxu0 0
      %5325 = vmatpush2.bf16.msra.mxu0 0
      %5326 = vmatprep.subr.bf16.mxu0 0
      %5327 = vmatpush2.bf16.msra.mxu0 0
      %5328 = vmatprep.subr.bf16.mxu0 0
      %5329 = vmatpush2.bf16.msra.mxu0 0
      %5330 = vmatprep.subr.bf16.mxu0 0
      %5331 = vmatpush2.bf16.msra.mxu0 0
      %5332 = vmatprep.subr.bf16.mxu0 0
      %5333 = vmatpush2.bf16.msra.mxu0 0
      %5334 = vmatprep.mubr.bf16.mxu0 0
      %5335 = vmatmul.mubr.bf16.gmra.mxu0 %v5300
      %v5336 = vpop.f32.mrf.mxu0
      %v5337 = vadd.f32 %v5298, %v5336
      %v5338 = vpop.f32.mrf.mxu0
      %v5339 = vpop.f32.mrf.mxu0
      %v5340 = vadd.f32 %v5298, %v5339
      %v5341 = vpop.f32.mrf.mxu0
      %5342 = vdwg.mxu0
      %v5343 = vld [vmem:[%s4 + $0x808] sm:$0xff]
      %v5344 = vld [vmem:[%s4 + $0x810] sm:$0xff]
      %v5345 = vld [vmem:[%s4 + $0x818] sm:$0xff]
      %v5346 = vld [vmem:[%s4 + $0x820] sm:$0xff]
      %v5347 = vpack.c.bf16 %v5344, %v5343
      %v5348 = vpack.c.bf16 %v5346, %v5345
      %v5349 = vld [vmem:[%s4 + $0x828] sm:$0x1]
      %v5350 = vlaneseq
      %v5351 = vshrl.u32 %v5350, 7
      %v5352 = vsub.s32 0, %v5351
      %v5353 = vrot.slane %v5349, %v5352
      %5354 = vmatprep.subr.bf16.mxu0 0
      %5355 = vmatpush1.bf16.msra.mxu0 0
      %5356 = vmatprep.subr.bf16.mxu0 0
      %5357 = vmatpush1.bf16.msra.mxu0 0
      %5358 = vmatprep.subr.bf16.mxu0 0
      %5359 = vmatpush1.bf16.msra.mxu0 0
      %5360 = vmatprep.subr.bf16.mxu0 0
      %5361 = vmatpush1.bf16.msra.mxu0 0
      %5362 = vmatprep.subr.bf16.mxu0 0
      %5363 = vmatpush1.bf16.msra.mxu0 0
      %5364 = vmatprep.subr.bf16.mxu0 0
      %5365 = vmatpush1.bf16.msra.mxu0 0
      %5366 = vmatprep.subr.bf16.mxu0 0
      %5367 = vmatpush1.bf16.msra.mxu0 %v5348
      %5368 = vmatprep.subr.bf16.mxu0 0
      %5369 = vmatpush1.bf16.msra.mxu0 %v5347
      %5370 = vmatprep.subr.bf16.mxu0 0
      %5371 = vmatpush2.bf16.msra.mxu0 0
      %5372 = vmatprep.subr.bf16.mxu0 0
      %5373 = vmatpush2.bf16.msra.mxu0 0
      %5374 = vmatprep.subr.bf16.mxu0 0
      %5375 = vmatpush2.bf16.msra.mxu0 0
      %5376 = vmatprep.subr.bf16.mxu0 0
      %5377 = vmatpush2.bf16.msra.mxu0 0
      %5378 = vmatprep.subr.bf16.mxu0 0
      %5379 = vmatpush2.bf16.msra.mxu0 0
      %5380 = vmatprep.subr.bf16.mxu0 0
      %5381 = vmatpush2.bf16.msra.mxu0 0
      %5382 = vmatprep.subr.bf16.mxu0 0
      %5383 = vmatpush2.bf16.msra.mxu0 0
      %5384 = vmatprep.subr.bf16.mxu0 0
      %5385 = vmatpush2.bf16.msra.mxu0 0
      %5386 = vmatprep.mubr.bf16.mxu0 0
      %5387 = vmatmul.mubr.bf16.gmra.mxu0 %v5300
      %v5388 = vpop.f32.mrf.mxu0
      %v5389 = vadd.f32 %v5353, %v5388
      %v5390 = vpop.f32.mrf.mxu0
      %v5391 = vpop.f32.mrf.mxu0
      %v5392 = vadd.f32 %v5353, %v5391
      %v5393 = vpop.f32.mrf.mxu0
      %5394 = vdwg.mxu0
      %v5395 = vpack.c.bf16 %v5284, %v5281
      %v5396 = vpack.c.bf16 %v5340, %v5337
      %v5398 = vsel %vm697, %v5395, 0
      %v5401 = vsel %vm697, %v5396, 0
      %5403 = vmatprep.subr.bf16.mxu0 0
      %5404 = vmatpush1.bf16.xpose.msra.mxu0 0
      %5405 = vmatprep.subr.bf16.mxu0 0
      %5406 = vmatpush1.bf16.xpose.msra.mxu0 0
      %5407 = vmatprep.subr.bf16.mxu0 0
      %5408 = vmatpush1.bf16.xpose.msra.mxu0 0
      %5409 = vmatprep.subr.bf16.mxu0 0
      %5410 = vmatpush1.bf16.xpose.msra.mxu0 0
      %5411 = vmatprep.subr.bf16.mxu0 0
      %5412 = vmatpush1.bf16.xpose.msra.mxu0 0
      %5413 = vmatprep.subr.bf16.mxu0 0
      %5414 = vmatpush1.bf16.xpose.msra.mxu0 0
      %5415 = vmatprep.subr.bf16.mxu0 0
      %5416 = vmatpush1.bf16.xpose.msra.mxu0 0
      %5417 = vmatprep.subr.bf16.mxu0 0
      %5418 = vmatpush1.bf16.xpose.msra.mxu0 %v5401
      %5419 = vmatprep.subr.bf16.mxu0 0
      %5420 = vmatpush2.bf16.xpose.msra.mxu0 0
      %5421 = vmatprep.subr.bf16.mxu0 0
      %5422 = vmatpush2.bf16.xpose.msra.mxu0 0
      %5423 = vmatprep.subr.bf16.mxu0 0
      %5424 = vmatpush2.bf16.xpose.msra.mxu0 0
      %5425 = vmatprep.subr.bf16.mxu0 0
      %5426 = vmatpush2.bf16.xpose.msra.mxu0 0
      %5427 = vmatprep.subr.bf16.mxu0 0
      %5428 = vmatpush2.bf16.xpose.msra.mxu0 0
      %5429 = vmatprep.subr.bf16.mxu0 0
      %5430 = vmatpush2.bf16.xpose.msra.mxu0 0
      %5431 = vmatprep.subr.bf16.mxu0 0
      %5432 = vmatpush2.bf16.xpose.msra.mxu0 0
      %5433 = vmatprep.subr.bf16.mxu0 0
      %5434 = vmatpush2.bf16.xpose.msra.mxu0 0
      %5435 = vmatprep.mubr.bf16.mxu0 0
      %5436 = vmatmul.mubr.bf16.gmra.mxu0 %v5398
      %v5437 = vpop.f32.mrf.mxu0
      %v5438 = vadd.f32 0.0, %v5437
      %v5439 = vpop.f32.mrf.mxu0
      %v5440 = vpop.f32.mrf.mxu0
      %v5441 = vadd.f32 0.0, %v5440
      %v5442 = vpop.f32.mrf.mxu0
      %5443 = vdwg.mxu0
      %v5444 = vmul.f32 %v5438, 0.35355338
      %v5445 = vmul.f32 %v5441, 0.35355338
      %v5446 = vsel %vm747, %v5444, -inf
      %5447 = vmax.xlane.f32.xlu0 %v5446
      %v5448 = vpop.xlane.xlu0 %5447
      %vm5449 = vcmask 125952
      %v5450 = vsel %vm5449, %v5445, -inf
      %5451 = vmax.xlane.f32.xlu0 %v5450
      %v5452 = vpop.xlane.xlu0 %5451
      %v5453 = vsub.f32 %v5444, %v5448
      %v5454 = vsub.f32 %v5445, %v5452
      %v5455 = vmul.f32 %v5453, 1.442695
      %v5456 = vpow.pop %v5455
      %v5457 = vmul.f32 %v5454, 1.442695
      %v5458 = vpow.pop %v5457
      %v5459 = vsel %vm747, %v5456, 0.0
      %5460 = vadd.xlane.f32.xlu0 %v5459
      %v5461 = vpop.xlane.xlu0 %5460
      %v5462 = vsel %vm5449, %v5458, 0.0
      %5463 = vadd.xlane.f32.xlu0 %v5462
      %v5464 = vpop.xlane.xlu0 %5463
      %v5465 = vrcp.pop %v5461
      %v5466 = vrcp.pop %v5464
      %v5467 = vmul.f32 %v5456, %v5465
      %v5468 = vmul.f32 %v5458, %v5466
      %v5469 = vpack.c.bf16 %v5468, %v5467
      %v5470 = vpack.c.bf16 %v5392, %v5389
      %v5472 = vsel %vm747, %v5469, 0
      %5474 = vmatprep.subr.bf16.mxu0 0
      %5475 = vmatpush1.bf16.msra.mxu0 0
      %5476 = vmatprep.subr.bf16.mxu0 0
      %5477 = vmatpush1.bf16.msra.mxu0 0
      %5478 = vmatprep.subr.bf16.mxu0 0
      %5479 = vmatpush1.bf16.msra.mxu0 0
      %5480 = vmatprep.subr.bf16.mxu0 0
      %5481 = vmatpush1.bf16.msra.mxu0 0
      %5482 = vmatprep.subr.bf16.mxu0 0
      %5483 = vmatpush1.bf16.msra.mxu0 0
      %5484 = vmatprep.subr.bf16.mxu0 0
      %5485 = vmatpush1.bf16.msra.mxu0 0
      %5486 = vmatprep.subr.bf16.mxu0 0
      %5487 = vmatpush1.bf16.msra.mxu0 0
      %5488 = vmatprep.subr.bf16.mxu0 0
      %5489 = vmatpush1.bf16.msra.mxu0 %v5470
      %5490 = vmatprep.subr.bf16.mxu0 0
      %5491 = vmatpush2.bf16.msra.mxu0 0
      %5492 = vmatprep.subr.bf16.mxu0 0
      %5493 = vmatpush2.bf16.msra.mxu0 0
      %5494 = vmatprep.subr.bf16.mxu0 0
      %5495 = vmatpush2.bf16.msra.mxu0 0
      %5496 = vmatprep.subr.bf16.mxu0 0
      %5497 = vmatpush2.bf16.msra.mxu0 0
      %5498 = vmatprep.subr.bf16.mxu0 0
      %5499 = vmatpush2.bf16.msra.mxu0 0
      %5500 = vmatprep.subr.bf16.mxu0 0
      %5501 = vmatpush2.bf16.msra.mxu0 0
      %5502 = vmatprep.subr.bf16.mxu0 0
      %5503 = vmatpush2.bf16.msra.mxu0 0
      %5504 = vmatprep.subr.bf16.mxu0 0
      %5505 = vmatpush2.bf16.msra.mxu0 0
      %5506 = vmatprep.mubr.bf16.mxu0 0
      %5507 = vmatmul.mubr.bf16.gmra.mxu0 %v5472
      %v5508 = vpop.f32.mrf.mxu0
      %v5509 = vadd.f32 0.0, %v5508
      %v5510 = vpop.f32.mrf.mxu0
      %v5511 = vpop.f32.mrf.mxu0
      %v5512 = vadd.f32 0.0, %v5511
      %v5513 = vpop.f32.mrf.mxu0
      %5514 = vdwg.mxu0
      %v5515 = vld [vmem:[%s4 + $0x830] sm:$0xff]
      %v5516 = vpack.c.bf16 %v5512, %v5509
      %v5517 = vpack.c.bf16 %v5515, %v5515
      %v5518 = vld [vmem:[%s4 + $0x838] sm:$0xff]
      %v5519 = vld [vmem:[%s4 + $0x840] sm:$0xff]
      %v5520 = vld [vmem:[%s4 + $0x848] sm:$0xff]
      %v5521 = vld [vmem:[%s4 + $0x850] sm:$0xff]
      %v5522 = vpack.c.bf16 %v5519, %v5518
      %v5523 = vpack.c.bf16 %v5521, %v5520
      %v5524 = vld [vmem:[%s4 + $0x858] sm:$0x1]
      %v5525 = vlaneseq
      %v5526 = vshrl.u32 %v5525, 7
      %v5527 = vsub.s32 0, %v5526
      %v5528 = vrot.slane %v5524, %v5527
      %5529 = vmatprep.subr.bf16.mxu0 0
      %5530 = vmatpush1.bf16.msra.mxu0 0
      %5531 = vmatprep.subr.bf16.mxu0 0
      %5532 = vmatpush1.bf16.msra.mxu0 0
      %5533 = vmatprep.subr.bf16.mxu0 0
      %5534 = vmatpush1.bf16.msra.mxu0 0
      %5535 = vmatprep.subr.bf16.mxu0 0
      %5536 = vmatpush1.bf16.msra.mxu0 0
      %5537 = vmatprep.subr.bf16.mxu0 0
      %5538 = vmatpush1.bf16.msra.mxu0 0
      %5539 = vmatprep.subr.bf16.mxu0 0
      %5540 = vmatpush1.bf16.msra.mxu0 0
      %5541 = vmatprep.subr.bf16.mxu0 0
      %5542 = vmatpush1.bf16.msra.mxu0 %v5523
      %5543 = vmatprep.subr.bf16.mxu0 0
      %5544 = vmatpush1.bf16.msra.mxu0 %v5522
      %5545 = vmatprep.subr.bf16.mxu0 0
      %5546 = vmatpush2.bf16.msra.mxu0 0
      %5547 = vmatprep.subr.bf16.mxu0 0
      %5548 = vmatpush2.bf16.msra.mxu0 0
      %5549 = vmatprep.subr.bf16.mxu0 0
      %5550 = vmatpush2.bf16.msra.mxu0 0
      %5551 = vmatprep.subr.bf16.mxu0 0
      %5552 = vmatpush2.bf16.msra.mxu0 0
      %5553 = vmatprep.subr.bf16.mxu0 0
      %5554 = vmatpush2.bf16.msra.mxu0 0
      %5555 = vmatprep.subr.bf16.mxu0 0
      %5556 = vmatpush2.bf16.msra.mxu0 0
      %5557 = vmatprep.subr.bf16.mxu0 0
      %5558 = vmatpush2.bf16.msra.mxu0 0
      %5559 = vmatprep.subr.bf16.mxu0 0
      %5560 = vmatpush2.bf16.msra.mxu0 0
      %5561 = vmatprep.mubr.bf16.mxu0 0
      %5562 = vmatmul.mubr.bf16.gmra.mxu0 %v5244
      %v5563 = vpop.f32.mrf.mxu0
      %v5564 = vadd.f32 %v5528, %v5563
      %v5565 = vpop.f32.mrf.mxu0
      %v5566 = vpop.f32.mrf.mxu0
      %v5567 = vadd.f32 %v5528, %v5566
      %v5568 = vpop.f32.mrf.mxu0
      %5569 = vdwg.mxu0
      %v5570 = vld [vmem:[%s4 + $0x860] sm:$0xff]
      %v5571 = vld [vmem:[%s4 + $0x868] sm:$0xff]
      %v5572 = vld [vmem:[%s4 + $0x870] sm:$0xff]
      %v5573 = vld [vmem:[%s4 + $0x878] sm:$0xff]
      %v5574 = vpack.c.bf16 %v5571, %v5570
      %v5575 = vpack.c.bf16 %v5573, %v5572
      %v5576 = vld [vmem:[%s4 + $0x880] sm:$0x1]
      %v5577 = vlaneseq
      %v5578 = vshrl.u32 %v5577, 7
      %v5579 = vsub.s32 0, %v5578
      %v5580 = vrot.slane %v5576, %v5579
      %5581 = vmatprep.subr.bf16.mxu0 0
      %5582 = vmatpush1.bf16.msra.mxu0 0
      %5583 = vmatprep.subr.bf16.mxu0 0
      %5584 = vmatpush1.bf16.msra.mxu0 0
      %5585 = vmatprep.subr.bf16.mxu0 0
      %5586 = vmatpush1.bf16.msra.mxu0 0
      %5587 = vmatprep.subr.bf16.mxu0 0
      %5588 = vmatpush1.bf16.msra.mxu0 0
      %5589 = vmatprep.subr.bf16.mxu0 0
      %5590 = vmatpush1.bf16.msra.mxu0 0
      %5591 = vmatprep.subr.bf16.mxu0 0
      %5592 = vmatpush1.bf16.msra.mxu0 0
      %5593 = vmatprep.subr.bf16.mxu0 0
      %5594 = vmatpush1.bf16.msra.mxu0 %v5575
      %5595 = vmatprep.subr.bf16.mxu0 0
      %5596 = vmatpush1.bf16.msra.mxu0 %v5574
      %5597 = vmatprep.subr.bf16.mxu0 0
      %5598 = vmatpush2.bf16.msra.mxu0 0
      %5599 = vmatprep.subr.bf16.mxu0 0
      %5600 = vmatpush2.bf16.msra.mxu0 0
      %5601 = vmatprep.subr.bf16.mxu0 0
      %5602 = vmatpush2.bf16.msra.mxu0 0
      %5603 = vmatprep.subr.bf16.mxu0 0
      %5604 = vmatpush2.bf16.msra.mxu0 0
      %5605 = vmatprep.subr.bf16.mxu0 0
      %5606 = vmatpush2.bf16.msra.mxu0 0
      %5607 = vmatprep.subr.bf16.mxu0 0
      %5608 = vmatpush2.bf16.msra.mxu0 0
      %5609 = vmatprep.subr.bf16.mxu0 0
      %5610 = vmatpush2.bf16.msra.mxu0 0
      %5611 = vmatprep.subr.bf16.mxu0 0
      %5612 = vmatpush2.bf16.msra.mxu0 0
      %5613 = vmatprep.mubr.bf16.mxu0 0
      %5614 = vmatmul.mubr.bf16.gmra.mxu0 %v5300
      %v5615 = vpop.f32.mrf.mxu0
      %v5616 = vadd.f32 %v5580, %v5615
      %v5617 = vpop.f32.mrf.mxu0
      %v5618 = vpop.f32.mrf.mxu0
      %v5619 = vadd.f32 %v5580, %v5618
      %v5620 = vpop.f32.mrf.mxu0
      %5621 = vdwg.mxu0
      %v5622 = vld [vmem:[%s4 + $0x888] sm:$0xff]
      %v5623 = vld [vmem:[%s4 + $0x890] sm:$0xff]
      %v5624 = vld [vmem:[%s4 + $0x898] sm:$0xff]
      %v5625 = vld [vmem:[%s4 + $0x8a0] sm:$0xff]
      %v5626 = vpack.c.bf16 %v5623, %v5622
      %v5627 = vpack.c.bf16 %v5625, %v5624
      %v5628 = vld [vmem:[%s4 + $0x8a8] sm:$0x1]
      %v5629 = vlaneseq
      %v5630 = vshrl.u32 %v5629, 7
      %v5631 = vsub.s32 0, %v5630
      %v5632 = vrot.slane %v5628, %v5631
      %5633 = vmatprep.subr.bf16.mxu0 0
      %5634 = vmatpush1.bf16.msra.mxu0 0
      %5635 = vmatprep.subr.bf16.mxu0 0
      %5636 = vmatpush1.bf16.msra.mxu0 0
      %5637 = vmatprep.subr.bf16.mxu0 0
      %5638 = vmatpush1.bf16.msra.mxu0 0
      %5639 = vmatprep.subr.bf16.mxu0 0
      %5640 = vmatpush1.bf16.msra.mxu0 0
      %5641 = vmatprep.subr.bf16.mxu0 0
      %5642 = vmatpush1.bf16.msra.mxu0 0
      %5643 = vmatprep.subr.bf16.mxu0 0
      %5644 = vmatpush1.bf16.msra.mxu0 0
      %5645 = vmatprep.subr.bf16.mxu0 0
      %5646 = vmatpush1.bf16.msra.mxu0 %v5627
      %5647 = vmatprep.subr.bf16.mxu0 0
      %5648 = vmatpush1.bf16.msra.mxu0 %v5626
      %5649 = vmatprep.subr.bf16.mxu0 0
      %5650 = vmatpush2.bf16.msra.mxu0 0
      %5651 = vmatprep.subr.bf16.mxu0 0
      %5652 = vmatpush2.bf16.msra.mxu0 0
      %5653 = vmatprep.subr.bf16.mxu0 0
      %5654 = vmatpush2.bf16.msra.mxu0 0
      %5655 = vmatprep.subr.bf16.mxu0 0
      %5656 = vmatpush2.bf16.msra.mxu0 0
      %5657 = vmatprep.subr.bf16.mxu0 0
      %5658 = vmatpush2.bf16.msra.mxu0 0
      %5659 = vmatprep.subr.bf16.mxu0 0
      %5660 = vmatpush2.bf16.msra.mxu0 0
      %5661 = vmatprep.subr.bf16.mxu0 0
      %5662 = vmatpush2.bf16.msra.mxu0 0
      %5663 = vmatprep.subr.bf16.mxu0 0
      %5664 = vmatpush2.bf16.msra.mxu0 0
      %5665 = vmatprep.mubr.bf16.mxu0 0
      %5666 = vmatmul.mubr.bf16.gmra.mxu0 %v5300
      %v5667 = vpop.f32.mrf.mxu0
      %v5668 = vadd.f32 %v5632, %v5667
      %v5669 = vpop.f32.mrf.mxu0
      %v5670 = vpop.f32.mrf.mxu0
      %v5671 = vadd.f32 %v5632, %v5670
      %v5672 = vpop.f32.mrf.mxu0
      %5673 = vdwg.mxu0
      %v5674 = vpack.c.bf16 %v5567, %v5564
      %v5675 = vpack.c.bf16 %v5619, %v5616
      %v5677 = vsel %vm697, %v5674, 0
      %v5680 = vsel %vm697, %v5675, 0
      %5682 = vmatprep.subr.bf16.mxu0 0
      %5683 = vmatpush1.bf16.xpose.msra.mxu0 0
      %5684 = vmatprep.subr.bf16.mxu0 0
      %5685 = vmatpush1.bf16.xpose.msra.mxu0 0
      %5686 = vmatprep.subr.bf16.mxu0 0
      %5687 = vmatpush1.bf16.xpose.msra.mxu0 0
      %5688 = vmatprep.subr.bf16.mxu0 0
      %5689 = vmatpush1.bf16.xpose.msra.mxu0 0
      %5690 = vmatprep.subr.bf16.mxu0 0
      %5691 = vmatpush1.bf16.xpose.msra.mxu0 0
      %5692 = vmatprep.subr.bf16.mxu0 0
      %5693 = vmatpush1.bf16.xpose.msra.mxu0 0
      %5694 = vmatprep.subr.bf16.mxu0 0
      %5695 = vmatpush1.bf16.xpose.msra.mxu0 0
      %5696 = vmatprep.subr.bf16.mxu0 0
      %5697 = vmatpush1.bf16.xpose.msra.mxu0 %v5680
      %5698 = vmatprep.subr.bf16.mxu0 0
      %5699 = vmatpush2.bf16.xpose.msra.mxu0 0
      %5700 = vmatprep.subr.bf16.mxu0 0
      %5701 = vmatpush2.bf16.xpose.msra.mxu0 0
      %5702 = vmatprep.subr.bf16.mxu0 0
      %5703 = vmatpush2.bf16.xpose.msra.mxu0 0
      %5704 = vmatprep.subr.bf16.mxu0 0
      %5705 = vmatpush2.bf16.xpose.msra.mxu0 0
      %5706 = vmatprep.subr.bf16.mxu0 0
      %5707 = vmatpush2.bf16.xpose.msra.mxu0 0
      %5708 = vmatprep.subr.bf16.mxu0 0
      %5709 = vmatpush2.bf16.xpose.msra.mxu0 0
      %5710 = vmatprep.subr.bf16.mxu0 0
      %5711 = vmatpush2.bf16.xpose.msra.mxu0 0
      %5712 = vmatprep.subr.bf16.mxu0 0
      %5713 = vmatpush2.bf16.xpose.msra.mxu0 0
      %5714 = vmatprep.mubr.bf16.mxu0 0
      %5715 = vmatmul.mubr.bf16.gmra.mxu0 %v5677
      %v5716 = vpop.f32.mrf.mxu0
      %v5717 = vadd.f32 0.0, %v5716
      %v5718 = vpop.f32.mrf.mxu0
      %v5719 = vpop.f32.mrf.mxu0
      %v5720 = vadd.f32 0.0, %v5719
      %v5721 = vpop.f32.mrf.mxu0
      %5722 = vdwg.mxu0
      %v5723 = vmul.f32 %v5717, 0.35355338
      %v5724 = vmul.f32 %v5720, 0.35355338
      %v5725 = vsel %vm747, %v5723, -inf
      %5726 = vmax.xlane.f32.xlu0 %v5725
      %v5727 = vpop.xlane.xlu0 %5726
      %v5728 = vsel %vm5449, %v5724, -inf
      %5729 = vmax.xlane.f32.xlu0 %v5728
      %v5730 = vpop.xlane.xlu0 %5729
      %v5731 = vsub.f32 %v5723, %v5727
      %v5732 = vsub.f32 %v5724, %v5730
      %v5733 = vmul.f32 %v5731, 1.442695
      %v5734 = vpow.pop %v5733
      %v5735 = vmul.f32 %v5732, 1.442695
      %v5736 = vpow.pop %v5735
      %v5737 = vsel %vm747, %v5734, 0.0
      %5738 = vadd.xlane.f32.xlu0 %v5737
      %v5739 = vpop.xlane.xlu0 %5738
      %v5740 = vsel %vm5449, %v5736, 0.0
      %5741 = vadd.xlane.f32.xlu0 %v5740
      %v5742 = vpop.xlane.xlu0 %5741
      %v5743 = vrcp.pop %v5739
      %v5744 = vrcp.pop %v5742
      %v5745 = vmul.f32 %v5734, %v5743
      %v5746 = vmul.f32 %v5736, %v5744
      %v5747 = vpack.c.bf16 %v5746, %v5745
      %v5748 = vpack.c.bf16 %v5671, %v5668
      %v5750 = vsel %vm747, %v5747, 0
      %5752 = vmatprep.subr.bf16.mxu0 0
      %5753 = vmatpush1.bf16.msra.mxu0 0
      %5754 = vmatprep.subr.bf16.mxu0 0
      %5755 = vmatpush1.bf16.msra.mxu0 0
      %5756 = vmatprep.subr.bf16.mxu0 0
      %5757 = vmatpush1.bf16.msra.mxu0 0
      %5758 = vmatprep.subr.bf16.mxu0 0
      %5759 = vmatpush1.bf16.msra.mxu0 0
      %5760 = vmatprep.subr.bf16.mxu0 0
      %5761 = vmatpush1.bf16.msra.mxu0 0
      %5762 = vmatprep.subr.bf16.mxu0 0
      %5763 = vmatpush1.bf16.msra.mxu0 0
      %5764 = vmatprep.subr.bf16.mxu0 0
      %5765 = vmatpush1.bf16.msra.mxu0 0
      %5766 = vmatprep.subr.bf16.mxu0 0
      %5767 = vmatpush1.bf16.msra.mxu0 %v5748
      %5768 = vmatprep.subr.bf16.mxu0 0
      %5769 = vmatpush2.bf16.msra.mxu0 0
      %5770 = vmatprep.subr.bf16.mxu0 0
      %5771 = vmatpush2.bf16.msra.mxu0 0
      %5772 = vmatprep.subr.bf16.mxu0 0
      %5773 = vmatpush2.bf16.msra.mxu0 0
      %5774 = vmatprep.subr.bf16.mxu0 0
      %5775 = vmatpush2.bf16.msra.mxu0 0
      %5776 = vmatprep.subr.bf16.mxu0 0
      %5777 = vmatpush2.bf16.msra.mxu0 0
      %5778 = vmatprep.subr.bf16.mxu0 0
      %5779 = vmatpush2.bf16.msra.mxu0 0
      %5780 = vmatprep.subr.bf16.mxu0 0
      %5781 = vmatpush2.bf16.msra.mxu0 0
      %5782 = vmatprep.subr.bf16.mxu0 0
      %5783 = vmatpush2.bf16.msra.mxu0 0
      %5784 = vmatprep.mubr.bf16.mxu0 0
      %5785 = vmatmul.mubr.bf16.gmra.mxu0 %v5750
      %v5786 = vpop.f32.mrf.mxu0
      %v5787 = vadd.f32 0.0, %v5786
      %v5788 = vpop.f32.mrf.mxu0
      %v5789 = vpop.f32.mrf.mxu0
      %v5790 = vadd.f32 0.0, %v5789
      %v5791 = vpop.f32.mrf.mxu0
      %5792 = vdwg.mxu0
      %v5793 = vld [vmem:[%s4 + $0x8b0] sm:$0xff]
      %v5794 = vpack.c.bf16 %v5790, %v5787
      %v5795 = vpack.c.bf16 %v5793, %v5793
      %v5797 = vsel %vm697, %v5794, 0
      %v5800 = vsel %vm1100, %v5795, 0
      %5802 = vmatprep.subr.bf16.mxu0 0
      %5803 = vmatpush1.bf16.msra.mxu0 0
      %5804 = vmatprep.subr.bf16.mxu0 0
      %5805 = vmatpush1.bf16.msra.mxu0 0
      %5806 = vmatprep.subr.bf16.mxu0 0
      %5807 = vmatpush1.bf16.msra.mxu0 0
      %5808 = vmatprep.subr.bf16.mxu0 0
      %5809 = vmatpush1.bf16.msra.mxu0 0
      %5810 = vmatprep.subr.bf16.mxu0 0
      %5811 = vmatpush1.bf16.msra.mxu0 0
      %5812 = vmatprep.subr.bf16.mxu0 0
      %5813 = vmatpush1.bf16.msra.mxu0 0
      %5814 = vmatprep.subr.bf16.mxu0 0
      %5815 = vmatpush1.bf16.msra.mxu0 0
      %5816 = vmatprep.subr.bf16.mxu0 0
      %5817 = vmatpush1.bf16.msra.mxu0 %v5800
      %5818 = vmatprep.subr.bf16.mxu0 0
      %5819 = vmatpush2.bf16.msra.mxu0 0
      %5820 = vmatprep.subr.bf16.mxu0 0
      %5821 = vmatpush2.bf16.msra.mxu0 0
      %5822 = vmatprep.subr.bf16.mxu0 0
      %5823 = vmatpush2.bf16.msra.mxu0 0
      %5824 = vmatprep.subr.bf16.mxu0 0
      %5825 = vmatpush2.bf16.msra.mxu0 0
      %5826 = vmatprep.subr.bf16.mxu0 0
      %5827 = vmatpush2.bf16.msra.mxu0 0
      %5828 = vmatprep.subr.bf16.mxu0 0
      %5829 = vmatpush2.bf16.msra.mxu0 0
      %5830 = vmatprep.subr.bf16.mxu0 0
      %5831 = vmatpush2.bf16.msra.mxu0 0
      %5832 = vmatprep.subr.bf16.mxu0 0
      %5833 = vmatpush2.bf16.msra.mxu0 0
      %5834 = vmatprep.mubr.bf16.mxu0 0
      %5835 = vmatmul.mubr.bf16.gmra.mxu0 %v5797
      %v5836 = vpop.f32.mrf.mxu0
      %v5837 = vadd.f32 0.0, %v5836
      %v5838 = vpop.f32.mrf.mxu0
      %v5839 = vpop.f32.mrf.mxu0
      %v5840 = vadd.f32 0.0, %v5839
      %v5841 = vpop.f32.mrf.mxu0
      %5842 = vdwg.mxu0
      %v5844 = vsel %vm697, %v5516, 0
      %v5847 = vsel %vm1100, %v5517, 0
      %5849 = vmatprep.subr.bf16.mxu0 0
      %5850 = vmatpush1.bf16.msra.mxu0 0
      %5851 = vmatprep.subr.bf16.mxu0 0
      %5852 = vmatpush1.bf16.msra.mxu0 0
      %5853 = vmatprep.subr.bf16.mxu0 0
      %5854 = vmatpush1.bf16.msra.mxu0 0
      %5855 = vmatprep.subr.bf16.mxu0 0
      %5856 = vmatpush1.bf16.msra.mxu0 0
      %5857 = vmatprep.subr.bf16.mxu0 0
      %5858 = vmatpush1.bf16.msra.mxu0 0
      %5859 = vmatprep.subr.bf16.mxu0 0
      %5860 = vmatpush1.bf16.msra.mxu0 0
      %5861 = vmatprep.subr.bf16.mxu0 0
      %5862 = vmatpush1.bf16.msra.mxu0 0
      %5863 = vmatprep.subr.bf16.mxu0 0
      %5864 = vmatpush1.bf16.msra.mxu0 %v5847
      %5865 = vmatprep.subr.bf16.mxu0 0
      %5866 = vmatpush2.bf16.msra.mxu0 0
      %5867 = vmatprep.subr.bf16.mxu0 0
      %5868 = vmatpush2.bf16.msra.mxu0 0
      %5869 = vmatprep.subr.bf16.mxu0 0
      %5870 = vmatpush2.bf16.msra.mxu0 0
      %5871 = vmatprep.subr.bf16.mxu0 0
      %5872 = vmatpush2.bf16.msra.mxu0 0
      %5873 = vmatprep.subr.bf16.mxu0 0
      %5874 = vmatpush2.bf16.msra.mxu0 0
      %5875 = vmatprep.subr.bf16.mxu0 0
      %5876 = vmatpush2.bf16.msra.mxu0 0
      %5877 = vmatprep.subr.bf16.mxu0 0
      %5878 = vmatpush2.bf16.msra.mxu0 0
      %5879 = vmatprep.subr.bf16.mxu0 0
      %5880 = vmatpush2.bf16.msra.mxu0 0
      %5881 = vmatprep.mubr.bf16.mxu0 0
      %5882 = vmatmul.mubr.bf16.gmra.mxu0 %v5844
      %v5883 = vpop.f32.mrf.mxu0
      %v5884 = vadd.f32 %v5837, %v5883
      %v5885 = vpop.f32.mrf.mxu0
      %v5886 = vpop.f32.mrf.mxu0
      %v5887 = vadd.f32 %v5840, %v5886
      %v5888 = vpop.f32.mrf.mxu0
      %5889 = vdwg.mxu0
      %v5890 = vld [vmem:[%s4 + $0x8b8] sm:$0xff]
      %v5891 = vld [vmem:[%s4 + $0x8c0] sm:$0xff]
      %v5892 = vld [vmem:[%s4 + $0x8c8] sm:$0xff]
      %v5893 = vld [vmem:[%s4 + $0x8d0] sm:$0xff]
      %v5894 = vpack.c.bf16 %v5891, %v5890
      %v5895 = vpack.c.bf16 %v5893, %v5892
      %v5896 = vld [vmem:[%s4 + $0x8d8] sm:$0x1]
      %v5897 = vlaneseq
      %v5898 = vshrl.u32 %v5897, 7
      %v5899 = vsub.s32 0, %v5898
      %v5900 = vrot.slane %v5896, %v5899
      %5901 = vmatprep.subr.bf16.mxu0 0
      %5902 = vmatpush1.bf16.msra.mxu0 0
      %5903 = vmatprep.subr.bf16.mxu0 0
      %5904 = vmatpush1.bf16.msra.mxu0 0
      %5905 = vmatprep.subr.bf16.mxu0 0
      %5906 = vmatpush1.bf16.msra.mxu0 0
      %5907 = vmatprep.subr.bf16.mxu0 0
      %5908 = vmatpush1.bf16.msra.mxu0 0
      %5909 = vmatprep.subr.bf16.mxu0 0
      %5910 = vmatpush1.bf16.msra.mxu0 0
      %5911 = vmatprep.subr.bf16.mxu0 0
      %5912 = vmatpush1.bf16.msra.mxu0 0
      %5913 = vmatprep.subr.bf16.mxu0 0
      %5914 = vmatpush1.bf16.msra.mxu0 %v5895
      %5915 = vmatprep.subr.bf16.mxu0 0
      %5916 = vmatpush1.bf16.msra.mxu0 %v5894
      %5917 = vmatprep.subr.bf16.mxu0 0
      %5918 = vmatpush2.bf16.msra.mxu0 0
      %5919 = vmatprep.subr.bf16.mxu0 0
      %5920 = vmatpush2.bf16.msra.mxu0 0
      %5921 = vmatprep.subr.bf16.mxu0 0
      %5922 = vmatpush2.bf16.msra.mxu0 0
      %5923 = vmatprep.subr.bf16.mxu0 0
      %5924 = vmatpush2.bf16.msra.mxu0 0
      %5925 = vmatprep.subr.bf16.mxu0 0
      %5926 = vmatpush2.bf16.msra.mxu0 0
      %5927 = vmatprep.subr.bf16.mxu0 0
      %5928 = vmatpush2.bf16.msra.mxu0 0
      %5929 = vmatprep.subr.bf16.mxu0 0
      %5930 = vmatpush2.bf16.msra.mxu0 0
      %5931 = vmatprep.subr.bf16.mxu0 0
      %5932 = vmatpush2.bf16.msra.mxu0 0
      %5933 = vmatprep.mubr.bf16.mxu0 0
      %5934 = vmatmul.mubr.bf16.gmra.mxu0 %v5244
      %v5935 = vpop.f32.mrf.mxu0
      %v5936 = vadd.f32 %v5900, %v5935
      %v5937 = vpop.f32.mrf.mxu0
      %v5938 = vpop.f32.mrf.mxu0
      %v5939 = vadd.f32 %v5900, %v5938
      %v5940 = vpop.f32.mrf.mxu0
      %5941 = vdwg.mxu0
      %v5942 = vld [vmem:[%s4 + $0x8e0] sm:$0xff]
      %v5943 = vld [vmem:[%s4 + $0x8e8] sm:$0xff]
      %v5944 = vld [vmem:[%s4 + $0x8f0] sm:$0xff]
      %v5945 = vld [vmem:[%s4 + $0x8f8] sm:$0xff]
      %v5946 = vpack.c.bf16 %v5943, %v5942
      %v5947 = vpack.c.bf16 %v5945, %v5944
      %v5948 = vld [vmem:[%s4 + $0x900] sm:$0x1]
      %v5949 = vlaneseq
      %v5950 = vshrl.u32 %v5949, 7
      %v5951 = vsub.s32 0, %v5950
      %v5952 = vrot.slane %v5948, %v5951
      %5953 = vmatprep.subr.bf16.mxu0 0
      %5954 = vmatpush1.bf16.msra.mxu0 0
      %5955 = vmatprep.subr.bf16.mxu0 0
      %5956 = vmatpush1.bf16.msra.mxu0 0
      %5957 = vmatprep.subr.bf16.mxu0 0
      %5958 = vmatpush1.bf16.msra.mxu0 0
      %5959 = vmatprep.subr.bf16.mxu0 0
      %5960 = vmatpush1.bf16.msra.mxu0 0
      %5961 = vmatprep.subr.bf16.mxu0 0
      %5962 = vmatpush1.bf16.msra.mxu0 0
      %5963 = vmatprep.subr.bf16.mxu0 0
      %5964 = vmatpush1.bf16.msra.mxu0 0
      %5965 = vmatprep.subr.bf16.mxu0 0
      %5966 = vmatpush1.bf16.msra.mxu0 %v5947
      %5967 = vmatprep.subr.bf16.mxu0 0
      %5968 = vmatpush1.bf16.msra.mxu0 %v5946
      %5969 = vmatprep.subr.bf16.mxu0 0
      %5970 = vmatpush2.bf16.msra.mxu0 0
      %5971 = vmatprep.subr.bf16.mxu0 0
      %5972 = vmatpush2.bf16.msra.mxu0 0
      %5973 = vmatprep.subr.bf16.mxu0 0
      %5974 = vmatpush2.bf16.msra.mxu0 0
      %5975 = vmatprep.subr.bf16.mxu0 0
      %5976 = vmatpush2.bf16.msra.mxu0 0
      %5977 = vmatprep.subr.bf16.mxu0 0
      %5978 = vmatpush2.bf16.msra.mxu0 0
      %5979 = vmatprep.subr.bf16.mxu0 0
      %5980 = vmatpush2.bf16.msra.mxu0 0
      %5981 = vmatprep.subr.bf16.mxu0 0
      %5982 = vmatpush2.bf16.msra.mxu0 0
      %5983 = vmatprep.subr.bf16.mxu0 0
      %5984 = vmatpush2.bf16.msra.mxu0 0
      %5985 = vmatprep.mubr.bf16.mxu0 0
      %5986 = vmatmul.mubr.bf16.gmra.mxu0 %v5300
      %v5987 = vpop.f32.mrf.mxu0
      %v5988 = vadd.f32 %v5952, %v5987
      %v5989 = vpop.f32.mrf.mxu0
      %v5990 = vpop.f32.mrf.mxu0
      %v5991 = vadd.f32 %v5952, %v5990
      %v5992 = vpop.f32.mrf.mxu0
      %5993 = vdwg.mxu0
      %v5994 = vld [vmem:[%s4 + $0x908] sm:$0xff]
      %v5995 = vld [vmem:[%s4 + $0x910] sm:$0xff]
      %v5996 = vld [vmem:[%s4 + $0x918] sm:$0xff]
      %v5997 = vld [vmem:[%s4 + $0x920] sm:$0xff]
      %v5998 = vpack.c.bf16 %v5995, %v5994
      %v5999 = vpack.c.bf16 %v5997, %v5996
      %v6000 = vld [vmem:[%s4 + $0x928] sm:$0x1]
      %v6001 = vlaneseq
      %v6002 = vshrl.u32 %v6001, 7
      %v6003 = vsub.s32 0, %v6002
      %v6004 = vrot.slane %v6000, %v6003
      %6005 = vmatprep.subr.bf16.mxu0 0
      %6006 = vmatpush1.bf16.msra.mxu0 0
      %6007 = vmatprep.subr.bf16.mxu0 0
      %6008 = vmatpush1.bf16.msra.mxu0 0
      %6009 = vmatprep.subr.bf16.mxu0 0
      %6010 = vmatpush1.bf16.msra.mxu0 0
      %6011 = vmatprep.subr.bf16.mxu0 0
      %6012 = vmatpush1.bf16.msra.mxu0 0
      %6013 = vmatprep.subr.bf16.mxu0 0
      %6014 = vmatpush1.bf16.msra.mxu0 0
      %6015 = vmatprep.subr.bf16.mxu0 0
      %6016 = vmatpush1.bf16.msra.mxu0 0
      %6017 = vmatprep.subr.bf16.mxu0 0
      %6018 = vmatpush1.bf16.msra.mxu0 %v5999
      %6019 = vmatprep.subr.bf16.mxu0 0
      %6020 = vmatpush1.bf16.msra.mxu0 %v5998
      %6021 = vmatprep.subr.bf16.mxu0 0
      %6022 = vmatpush2.bf16.msra.mxu0 0
      %6023 = vmatprep.subr.bf16.mxu0 0
      %6024 = vmatpush2.bf16.msra.mxu0 0
      %6025 = vmatprep.subr.bf16.mxu0 0
      %6026 = vmatpush2.bf16.msra.mxu0 0
      %6027 = vmatprep.subr.bf16.mxu0 0
      %6028 = vmatpush2.bf16.msra.mxu0 0
      %6029 = vmatprep.subr.bf16.mxu0 0
      %6030 = vmatpush2.bf16.msra.mxu0 0
      %6031 = vmatprep.subr.bf16.mxu0 0
      %6032 = vmatpush2.bf16.msra.mxu0 0
      %6033 = vmatprep.subr.bf16.mxu0 0
      %6034 = vmatpush2.bf16.msra.mxu0 0
      %6035 = vmatprep.subr.bf16.mxu0 0
      %6036 = vmatpush2.bf16.msra.mxu0 0
      %6037 = vmatprep.mubr.bf16.mxu0 0
      %6038 = vmatmul.mubr.bf16.gmra.mxu0 %v5300
      %v6039 = vpop.f32.mrf.mxu0
      %v6040 = vadd.f32 %v6004, %v6039
      %v6041 = vpop.f32.mrf.mxu0
      %v6042 = vpop.f32.mrf.mxu0
      %v6043 = vadd.f32 %v6004, %v6042
      %v6044 = vpop.f32.mrf.mxu0
      %6045 = vdwg.mxu0
      %v6046 = vpack.c.bf16 %v5939, %v5936
      %v6047 = vpack.c.bf16 %v5991, %v5988
      %v6049 = vsel %vm697, %v6046, 0
      %v6052 = vsel %vm697, %v6047, 0
      %6054 = vmatprep.subr.bf16.mxu0 0
      %6055 = vmatpush1.bf16.xpose.msra.mxu0 0
      %6056 = vmatprep.subr.bf16.mxu0 0
      %6057 = vmatpush1.bf16.xpose.msra.mxu0 0
      %6058 = vmatprep.subr.bf16.mxu0 0
      %6059 = vmatpush1.bf16.xpose.msra.mxu0 0
      %6060 = vmatprep.subr.bf16.mxu0 0
      %6061 = vmatpush1.bf16.xpose.msra.mxu0 0
      %6062 = vmatprep.subr.bf16.mxu0 0
      %6063 = vmatpush1.bf16.xpose.msra.mxu0 0
      %6064 = vmatprep.subr.bf16.mxu0 0
      %6065 = vmatpush1.bf16.xpose.msra.mxu0 0
      %6066 = vmatprep.subr.bf16.mxu0 0
      %6067 = vmatpush1.bf16.xpose.msra.mxu0 0
      %6068 = vmatprep.subr.bf16.mxu0 0
      %6069 = vmatpush1.bf16.xpose.msra.mxu0 %v6052
      %6070 = vmatprep.subr.bf16.mxu0 0
      %6071 = vmatpush2.bf16.xpose.msra.mxu0 0
      %6072 = vmatprep.subr.bf16.mxu0 0
      %6073 = vmatpush2.bf16.xpose.msra.mxu0 0
      %6074 = vmatprep.subr.bf16.mxu0 0
      %6075 = vmatpush2.bf16.xpose.msra.mxu0 0
      %6076 = vmatprep.subr.bf16.mxu0 0
      %6077 = vmatpush2.bf16.xpose.msra.mxu0 0
      %6078 = vmatprep.subr.bf16.mxu0 0
      %6079 = vmatpush2.bf16.xpose.msra.mxu0 0
      %6080 = vmatprep.subr.bf16.mxu0 0
      %6081 = vmatpush2.bf16.xpose.msra.mxu0 0
      %6082 = vmatprep.subr.bf16.mxu0 0
      %6083 = vmatpush2.bf16.xpose.msra.mxu0 0
      %6084 = vmatprep.subr.bf16.mxu0 0
      %6085 = vmatpush2.bf16.xpose.msra.mxu0 0
      %6086 = vmatprep.mubr.bf16.mxu0 0
      %6087 = vmatmul.mubr.bf16.gmra.mxu0 %v6049
      %v6088 = vpop.f32.mrf.mxu0
      %v6089 = vadd.f32 0.0, %v6088
      %v6090 = vpop.f32.mrf.mxu0
      %v6091 = vpop.f32.mrf.mxu0
      %v6092 = vadd.f32 0.0, %v6091
      %v6093 = vpop.f32.mrf.mxu0
      %6094 = vdwg.mxu0
      %v6095 = vmul.f32 %v6089, 0.35355338
      %v6096 = vmul.f32 %v6092, 0.35355338
      %v6097 = vsel %vm747, %v6095, -inf
      %6098 = vmax.xlane.f32.xlu0 %v6097
      %v6099 = vpop.xlane.xlu0 %6098
      %v6100 = vsel %vm5449, %v6096, -inf
      %6101 = vmax.xlane.f32.xlu0 %v6100
      %v6102 = vpop.xlane.xlu0 %6101
      %v6103 = vsub.f32 %v6095, %v6099
      %v6104 = vsub.f32 %v6096, %v6102
      %v6105 = vmul.f32 %v6103, 1.442695
      %v6106 = vpow.pop %v6105
      %v6107 = vmul.f32 %v6104, 1.442695
      %v6108 = vpow.pop %v6107
      %v6109 = vsel %vm747, %v6106, 0.0
      %6110 = vadd.xlane.f32.xlu0 %v6109
      %v6111 = vpop.xlane.xlu0 %6110
      %v6112 = vsel %vm5449, %v6108, 0.0
      %6113 = vadd.xlane.f32.xlu0 %v6112
      %v6114 = vpop.xlane.xlu0 %6113
      %v6115 = vrcp.pop %v6111
      %v6116 = vrcp.pop %v6114
      %v6117 = vmul.f32 %v6106, %v6115
      %v6118 = vmul.f32 %v6108, %v6116
      %v6119 = vpack.c.bf16 %v6118, %v6117
      %v6120 = vpack.c.bf16 %v6043, %v6040
      %v6122 = vsel %vm747, %v6119, 0
      %6124 = vmatprep.subr.bf16.mxu0 0
      %6125 = vmatpush1.bf16.msra.mxu0 0
      %6126 = vmatprep.subr.bf16.mxu0 0
      %6127 = vmatpush1.bf16.msra.mxu0 0
      %6128 = vmatprep.subr.bf16.mxu0 0
      %6129 = vmatpush1.bf16.msra.mxu0 0
      %6130 = vmatprep.subr.bf16.mxu0 0
      %6131 = vmatpush1.bf16.msra.mxu0 0
      %6132 = vmatprep.subr.bf16.mxu0 0
      %6133 = vmatpush1.bf16.msra.mxu0 0
      %6134 = vmatprep.subr.bf16.mxu0 0
      %6135 = vmatpush1.bf16.msra.mxu0 0
      %6136 = vmatprep.subr.bf16.mxu0 0
      %6137 = vmatpush1.bf16.msra.mxu0 0
      %6138 = vmatprep.subr.bf16.mxu0 0
      %6139 = vmatpush1.bf16.msra.mxu0 %v6120
      %6140 = vmatprep.subr.bf16.mxu0 0
      %6141 = vmatpush2.bf16.msra.mxu0 0
      %6142 = vmatprep.subr.bf16.mxu0 0
      %6143 = vmatpush2.bf16.msra.mxu0 0
      %6144 = vmatprep.subr.bf16.mxu0 0
      %6145 = vmatpush2.bf16.msra.mxu0 0
      %6146 = vmatprep.subr.bf16.mxu0 0
      %6147 = vmatpush2.bf16.msra.mxu0 0
      %6148 = vmatprep.subr.bf16.mxu0 0
      %6149 = vmatpush2.bf16.msra.mxu0 0
      %6150 = vmatprep.subr.bf16.mxu0 0
      %6151 = vmatpush2.bf16.msra.mxu0 0
      %6152 = vmatprep.subr.bf16.mxu0 0
      %6153 = vmatpush2.bf16.msra.mxu0 0
      %6154 = vmatprep.subr.bf16.mxu0 0
      %6155 = vmatpush2.bf16.msra.mxu0 0
      %6156 = vmatprep.mubr.bf16.mxu0 0
      %6157 = vmatmul.mubr.bf16.gmra.mxu0 %v6122
      %v6158 = vpop.f32.mrf.mxu0
      %v6159 = vadd.f32 0.0, %v6158
      %v6160 = vpop.f32.mrf.mxu0
      %v6161 = vpop.f32.mrf.mxu0
      %v6162 = vadd.f32 0.0, %v6161
      %v6163 = vpop.f32.mrf.mxu0
      %6164 = vdwg.mxu0
      %v6165 = vld [vmem:[%s4 + $0x930] sm:$0xff]
      %v6166 = vpack.c.bf16 %v6162, %v6159
      %v6167 = vpack.c.bf16 %v6165, %v6165
      %v6169 = vsel %vm697, %v6166, 0
      %v6172 = vsel %vm1100, %v6167, 0
      %6174 = vmatprep.subr.bf16.mxu0 0
      %6175 = vmatpush1.bf16.msra.mxu0 0
      %6176 = vmatprep.subr.bf16.mxu0 0
      %6177 = vmatpush1.bf16.msra.mxu0 0
      %6178 = vmatprep.subr.bf16.mxu0 0
      %6179 = vmatpush1.bf16.msra.mxu0 0
      %6180 = vmatprep.subr.bf16.mxu0 0
      %6181 = vmatpush1.bf16.msra.mxu0 0
      %6182 = vmatprep.subr.bf16.mxu0 0
      %6183 = vmatpush1.bf16.msra.mxu0 0
      %6184 = vmatprep.subr.bf16.mxu0 0
      %6185 = vmatpush1.bf16.msra.mxu0 0
      %6186 = vmatprep.subr.bf16.mxu0 0
      %6187 = vmatpush1.bf16.msra.mxu0 0
      %6188 = vmatprep.subr.bf16.mxu0 0
      %6189 = vmatpush1.bf16.msra.mxu0 %v6172
      %6190 = vmatprep.subr.bf16.mxu0 0
      %6191 = vmatpush2.bf16.msra.mxu0 0
      %6192 = vmatprep.subr.bf16.mxu0 0
      %6193 = vmatpush2.bf16.msra.mxu0 0
      %6194 = vmatprep.subr.bf16.mxu0 0
      %6195 = vmatpush2.bf16.msra.mxu0 0
      %6196 = vmatprep.subr.bf16.mxu0 0
      %6197 = vmatpush2.bf16.msra.mxu0 0
      %6198 = vmatprep.subr.bf16.mxu0 0
      %6199 = vmatpush2.bf16.msra.mxu0 0
      %6200 = vmatprep.subr.bf16.mxu0 0
      %6201 = vmatpush2.bf16.msra.mxu0 0
      %6202 = vmatprep.subr.bf16.mxu0 0
      %6203 = vmatpush2.bf16.msra.mxu0 0
      %6204 = vmatprep.subr.bf16.mxu0 0
      %6205 = vmatpush2.bf16.msra.mxu0 0
      %6206 = vmatprep.mubr.bf16.mxu0 0
      %6207 = vmatmul.mubr.bf16.gmra.mxu0 %v6169
      %v6208 = vpop.f32.mrf.mxu0
      %v6209 = vadd.f32 0.0, %v6208
      %v6210 = vpop.f32.mrf.mxu0
      %v6211 = vpop.f32.mrf.mxu0
      %v6212 = vadd.f32 0.0, %v6211
      %v6213 = vpop.f32.mrf.mxu0
      %6214 = vdwg.mxu0
      %v6215 = vadd.f32 %v5884, %v6209
      %v6216 = vadd.f32 %v5887, %v6212
      %v6217 = vld [vmem:[%s4 + $0x938] sm:$0xff]
      %v6218 = vld [vmem:[%s4 + $0x940] sm:$0xff]
      %v6219 = vld [vmem:[%s4 + $0x948] sm:$0xff]
      %v6220 = vld [vmem:[%s4 + $0x950] sm:$0xff]
      %v6221 = vpack.c.bf16 %v6218, %v6217
      %v6222 = vpack.c.bf16 %v6220, %v6219
      %v6223 = vld [vmem:[%s4 + $0x958] sm:$0x1]
      %v6224 = vlaneseq
      %v6225 = vshrl.u32 %v6224, 7
      %v6226 = vsub.s32 0, %v6225
      %v6227 = vrot.slane %v6223, %v6226
      %6228 = vmatprep.subr.bf16.mxu0 0
      %6229 = vmatpush1.bf16.msra.mxu0 0
      %6230 = vmatprep.subr.bf16.mxu0 0
      %6231 = vmatpush1.bf16.msra.mxu0 0
      %6232 = vmatprep.subr.bf16.mxu0 0
      %6233 = vmatpush1.bf16.msra.mxu0 0
      %6234 = vmatprep.subr.bf16.mxu0 0
      %6235 = vmatpush1.bf16.msra.mxu0 0
      %6236 = vmatprep.subr.bf16.mxu0 0
      %6237 = vmatpush1.bf16.msra.mxu0 0
      %6238 = vmatprep.subr.bf16.mxu0 0
      %6239 = vmatpush1.bf16.msra.mxu0 0
      %6240 = vmatprep.subr.bf16.mxu0 0
      %6241 = vmatpush1.bf16.msra.mxu0 %v6222
      %6242 = vmatprep.subr.bf16.mxu0 0
      %6243 = vmatpush1.bf16.msra.mxu0 %v6221
      %6244 = vmatprep.subr.bf16.mxu0 0
      %6245 = vmatpush2.bf16.msra.mxu0 0
      %6246 = vmatprep.subr.bf16.mxu0 0
      %6247 = vmatpush2.bf16.msra.mxu0 0
      %6248 = vmatprep.subr.bf16.mxu0 0
      %6249 = vmatpush2.bf16.msra.mxu0 0
      %6250 = vmatprep.subr.bf16.mxu0 0
      %6251 = vmatpush2.bf16.msra.mxu0 0
      %6252 = vmatprep.subr.bf16.mxu0 0
      %6253 = vmatpush2.bf16.msra.mxu0 0
      %6254 = vmatprep.subr.bf16.mxu0 0
      %6255 = vmatpush2.bf16.msra.mxu0 0
      %6256 = vmatprep.subr.bf16.mxu0 0
      %6257 = vmatpush2.bf16.msra.mxu0 0
      %6258 = vmatprep.subr.bf16.mxu0 0
      %6259 = vmatpush2.bf16.msra.mxu0 0
      %6260 = vmatprep.mubr.bf16.mxu0 0
      %6261 = vmatmul.mubr.bf16.gmra.mxu0 %v5244
      %v6262 = vpop.f32.mrf.mxu0
      %v6263 = vadd.f32 %v6227, %v6262
      %v6264 = vpop.f32.mrf.mxu0
      %v6265 = vpop.f32.mrf.mxu0
      %v6266 = vadd.f32 %v6227, %v6265
      %v6267 = vpop.f32.mrf.mxu0
      %6268 = vdwg.mxu0
      %v6269 = vld [vmem:[%s4 + $0x960] sm:$0xff]
      %v6270 = vld [vmem:[%s4 + $0x968] sm:$0xff]
      %v6271 = vld [vmem:[%s4 + $0x970] sm:$0xff]
      %v6272 = vld [vmem:[%s4 + $0x978] sm:$0xff]
      %v6273 = vpack.c.bf16 %v6270, %v6269
      %v6274 = vpack.c.bf16 %v6272, %v6271
      %v6275 = vld [vmem:[%s4 + $0x980] sm:$0x1]
      %v6276 = vlaneseq
      %v6277 = vshrl.u32 %v6276, 7
      %v6278 = vsub.s32 0, %v6277
      %v6279 = vrot.slane %v6275, %v6278
      %6280 = vmatprep.subr.bf16.mxu0 0
      %6281 = vmatpush1.bf16.msra.mxu0 0
      %6282 = vmatprep.subr.bf16.mxu0 0
      %6283 = vmatpush1.bf16.msra.mxu0 0
      %6284 = vmatprep.subr.bf16.mxu0 0
      %6285 = vmatpush1.bf16.msra.mxu0 0
      %6286 = vmatprep.subr.bf16.mxu0 0
      %6287 = vmatpush1.bf16.msra.mxu0 0
      %6288 = vmatprep.subr.bf16.mxu0 0
      %6289 = vmatpush1.bf16.msra.mxu0 0
      %6290 = vmatprep.subr.bf16.mxu0 0
      %6291 = vmatpush1.bf16.msra.mxu0 0
      %6292 = vmatprep.subr.bf16.mxu0 0
      %6293 = vmatpush1.bf16.msra.mxu0 %v6274
      %6294 = vmatprep.subr.bf16.mxu0 0
      %6295 = vmatpush1.bf16.msra.mxu0 %v6273
      %6296 = vmatprep.subr.bf16.mxu0 0
      %6297 = vmatpush2.bf16.msra.mxu0 0
      %6298 = vmatprep.subr.bf16.mxu0 0
      %6299 = vmatpush2.bf16.msra.mxu0 0
      %6300 = vmatprep.subr.bf16.mxu0 0
      %6301 = vmatpush2.bf16.msra.mxu0 0
      %6302 = vmatprep.subr.bf16.mxu0 0
      %6303 = vmatpush2.bf16.msra.mxu0 0
      %6304 = vmatprep.subr.bf16.mxu0 0
      %6305 = vmatpush2.bf16.msra.mxu0 0
      %6306 = vmatprep.subr.bf16.mxu0 0
      %6307 = vmatpush2.bf16.msra.mxu0 0
      %6308 = vmatprep.subr.bf16.mxu0 0
      %6309 = vmatpush2.bf16.msra.mxu0 0
      %6310 = vmatprep.subr.bf16.mxu0 0
      %6311 = vmatpush2.bf16.msra.mxu0 0
      %6312 = vmatprep.mubr.bf16.mxu0 0
      %6313 = vmatmul.mubr.bf16.gmra.mxu0 %v5300
      %v6314 = vpop.f32.mrf.mxu0
      %v6315 = vadd.f32 %v6279, %v6314
      %v6316 = vpop.f32.mrf.mxu0
      %v6317 = vpop.f32.mrf.mxu0
      %v6318 = vadd.f32 %v6279, %v6317
      %v6319 = vpop.f32.mrf.mxu0
      %6320 = vdwg.mxu0
      %v6321 = vld [vmem:[%s4 + $0x988] sm:$0xff]
      %v6322 = vld [vmem:[%s4 + $0x990] sm:$0xff]
      %v6323 = vld [vmem:[%s4 + $0x998] sm:$0xff]
      %v6324 = vld [vmem:[%s4 + $0x9a0] sm:$0xff]
      %v6325 = vpack.c.bf16 %v6322, %v6321
      %v6326 = vpack.c.bf16 %v6324, %v6323
      %v6327 = vld [vmem:[%s4 + $0x9a8] sm:$0x1]
      %v6328 = vlaneseq
      %v6329 = vshrl.u32 %v6328, 7
      %v6330 = vsub.s32 0, %v6329
      %v6331 = vrot.slane %v6327, %v6330
      %6332 = vmatprep.subr.bf16.mxu0 0
      %6333 = vmatpush1.bf16.msra.mxu0 0
      %6334 = vmatprep.subr.bf16.mxu0 0
      %6335 = vmatpush1.bf16.msra.mxu0 0
      %6336 = vmatprep.subr.bf16.mxu0 0
      %6337 = vmatpush1.bf16.msra.mxu0 0
      %6338 = vmatprep.subr.bf16.mxu0 0
      %6339 = vmatpush1.bf16.msra.mxu0 0
      %6340 = vmatprep.subr.bf16.mxu0 0
      %6341 = vmatpush1.bf16.msra.mxu0 0
      %6342 = vmatprep.subr.bf16.mxu0 0
      %6343 = vmatpush1.bf16.msra.mxu0 0
      %6344 = vmatprep.subr.bf16.mxu0 0
      %6345 = vmatpush1.bf16.msra.mxu0 %v6326
      %6346 = vmatprep.subr.bf16.mxu0 0
      %6347 = vmatpush1.bf16.msra.mxu0 %v6325
      %6348 = vmatprep.subr.bf16.mxu0 0
      %6349 = vmatpush2.bf16.msra.mxu0 0
      %6350 = vmatprep.subr.bf16.mxu0 0
      %6351 = vmatpush2.bf16.msra.mxu0 0
      %6352 = vmatprep.subr.bf16.mxu0 0
      %6353 = vmatpush2.bf16.msra.mxu0 0
      %6354 = vmatprep.subr.bf16.mxu0 0
      %6355 = vmatpush2.bf16.msra.mxu0 0
      %6356 = vmatprep.subr.bf16.mxu0 0
      %6357 = vmatpush2.bf16.msra.mxu0 0
      %6358 = vmatprep.subr.bf16.mxu0 0
      %6359 = vmatpush2.bf16.msra.mxu0 0
      %6360 = vmatprep.subr.bf16.mxu0 0
      %6361 = vmatpush2.bf16.msra.mxu0 0
      %6362 = vmatprep.subr.bf16.mxu0 0
      %6363 = vmatpush2.bf16.msra.mxu0 0
      %6364 = vmatprep.mubr.bf16.mxu0 0
      %6365 = vmatmul.mubr.bf16.gmra.mxu0 %v5300
      %v6366 = vpop.f32.mrf.mxu0
      %v6367 = vadd.f32 %v6331, %v6366
      %v6368 = vpop.f32.mrf.mxu0
      %v6369 = vpop.f32.mrf.mxu0
      %v6370 = vadd.f32 %v6331, %v6369
      %v6371 = vpop.f32.mrf.mxu0
      %6372 = vdwg.mxu0
      %v6373 = vpack.c.bf16 %v6266, %v6263
      %v6374 = vpack.c.bf16 %v6318, %v6315
      %v6376 = vsel %vm697, %v6373, 0
      %v6379 = vsel %vm697, %v6374, 0
      %6381 = vmatprep.subr.bf16.mxu0 0
      %6382 = vmatpush1.bf16.xpose.msra.mxu0 0
      %6383 = vmatprep.subr.bf16.mxu0 0
      %6384 = vmatpush1.bf16.xpose.msra.mxu0 0
      %6385 = vmatprep.subr.bf16.mxu0 0
      %6386 = vmatpush1.bf16.xpose.msra.mxu0 0
      %6387 = vmatprep.subr.bf16.mxu0 0
      %6388 = vmatpush1.bf16.xpose.msra.mxu0 0
      %6389 = vmatprep.subr.bf16.mxu0 0
      %6390 = vmatpush1.bf16.xpose.msra.mxu0 0
      %6391 = vmatprep.subr.bf16.mxu0 0
      %6392 = vmatpush1.bf16.xpose.msra.mxu0 0
      %6393 = vmatprep.subr.bf16.mxu0 0
      %6394 = vmatpush1.bf16.xpose.msra.mxu0 0
      %6395 = vmatprep.subr.bf16.mxu0 0
      %6396 = vmatpush1.bf16.xpose.msra.mxu0 %v6379
      %6397 = vmatprep.subr.bf16.mxu0 0
      %6398 = vmatpush2.bf16.xpose.msra.mxu0 0
      %6399 = vmatprep.subr.bf16.mxu0 0
      %6400 = vmatpush2.bf16.xpose.msra.mxu0 0
      %6401 = vmatprep.subr.bf16.mxu0 0
      %6402 = vmatpush2.bf16.xpose.msra.mxu0 0
      %6403 = vmatprep.subr.bf16.mxu0 0
      %6404 = vmatpush2.bf16.xpose.msra.mxu0 0
      %6405 = vmatprep.subr.bf16.mxu0 0
      %6406 = vmatpush2.bf16.xpose.msra.mxu0 0
      %6407 = vmatprep.subr.bf16.mxu0 0
      %6408 = vmatpush2.bf16.xpose.msra.mxu0 0
      %6409 = vmatprep.subr.bf16.mxu0 0
      %6410 = vmatpush2.bf16.xpose.msra.mxu0 0
      %6411 = vmatprep.subr.bf16.mxu0 0
      %6412 = vmatpush2.bf16.xpose.msra.mxu0 0
      %6413 = vmatprep.mubr.bf16.mxu0 0
      %6414 = vmatmul.mubr.bf16.gmra.mxu0 %v6376
      %v6415 = vpop.f32.mrf.mxu0
      %v6416 = vadd.f32 0.0, %v6415
      %v6417 = vpop.f32.mrf.mxu0
      %v6418 = vpop.f32.mrf.mxu0
      %v6419 = vadd.f32 0.0, %v6418
      %v6420 = vpop.f32.mrf.mxu0
      %6421 = vdwg.mxu0
      %v6422 = vmul.f32 %v6416, 0.35355338
      %v6423 = vmul.f32 %v6419, 0.35355338
      %v6424 = vsel %vm747, %v6422, -inf
      %6425 = vmax.xlane.f32.xlu0 %v6424
      %v6426 = vpop.xlane.xlu0 %6425
      %v6427 = vsel %vm5449, %v6423, -inf
      %6428 = vmax.xlane.f32.xlu0 %v6427
      %v6429 = vpop.xlane.xlu0 %6428
      %v6430 = vsub.f32 %v6422, %v6426
      %v6431 = vsub.f32 %v6423, %v6429
      %v6432 = vmul.f32 %v6430, 1.442695
      %v6433 = vpow.pop %v6432
      %v6434 = vmul.f32 %v6431, 1.442695
      %v6435 = vpow.pop %v6434
      %v6436 = vsel %vm747, %v6433, 0.0
      %6437 = vadd.xlane.f32.xlu0 %v6436
      %v6438 = vpop.xlane.xlu0 %6437
      %v6439 = vsel %vm5449, %v6435, 0.0
      %6440 = vadd.xlane.f32.xlu0 %v6439
      %v6441 = vpop.xlane.xlu0 %6440
      %v6442 = vrcp.pop %v6438
      %v6443 = vrcp.pop %v6441
      %v6444 = vmul.f32 %v6433, %v6442
      %v6445 = vmul.f32 %v6435, %v6443
      %v6446 = vpack.c.bf16 %v6445, %v6444
      %v6447 = vpack.c.bf16 %v6370, %v6367
      %v6449 = vsel %vm747, %v6446, 0
      %6451 = vmatprep.subr.bf16.mxu0 0
      %6452 = vmatpush1.bf16.msra.mxu0 0
      %6453 = vmatprep.subr.bf16.mxu0 0
      %6454 = vmatpush1.bf16.msra.mxu0 0
      %6455 = vmatprep.subr.bf16.mxu0 0
      %6456 = vmatpush1.bf16.msra.mxu0 0
      %6457 = vmatprep.subr.bf16.mxu0 0
      %6458 = vmatpush1.bf16.msra.mxu0 0
      %6459 = vmatprep.subr.bf16.mxu0 0
      %6460 = vmatpush1.bf16.msra.mxu0 0
      %6461 = vmatprep.subr.bf16.mxu0 0
      %6462 = vmatpush1.bf16.msra.mxu0 0
      %6463 = vmatprep.subr.bf16.mxu0 0
      %6464 = vmatpush1.bf16.msra.mxu0 0
      %6465 = vmatprep.subr.bf16.mxu0 0
      %6466 = vmatpush1.bf16.msra.mxu0 %v6447
      %6467 = vmatprep.subr.bf16.mxu0 0
      %6468 = vmatpush2.bf16.msra.mxu0 0
      %6469 = vmatprep.subr.bf16.mxu0 0
      %6470 = vmatpush2.bf16.msra.mxu0 0
      %6471 = vmatprep.subr.bf16.mxu0 0
      %6472 = vmatpush2.bf16.msra.mxu0 0
      %6473 = vmatprep.subr.bf16.mxu0 0
      %6474 = vmatpush2.bf16.msra.mxu0 0
      %6475 = vmatprep.subr.bf16.mxu0 0
      %6476 = vmatpush2.bf16.msra.mxu0 0
      %6477 = vmatprep.subr.bf16.mxu0 0
      %6478 = vmatpush2.bf16.msra.mxu0 0
      %6479 = vmatprep.subr.bf16.mxu0 0
      %6480 = vmatpush2.bf16.msra.mxu0 0
      %6481 = vmatprep.subr.bf16.mxu0 0
      %6482 = vmatpush2.bf16.msra.mxu0 0
      %6483 = vmatprep.mubr.bf16.mxu0 0
      %6484 = vmatmul.mubr.bf16.gmra.mxu0 %v6449
      %v6485 = vpop.f32.mrf.mxu0
      %v6486 = vadd.f32 0.0, %v6485
      %v6487 = vpop.f32.mrf.mxu0
      %v6488 = vpop.f32.mrf.mxu0
      %v6489 = vadd.f32 0.0, %v6488
      %v6490 = vpop.f32.mrf.mxu0
      %6491 = vdwg.mxu0
      %v6492 = vld [vmem:[%s4 + $0x9b0] sm:$0xff]
      %v6493 = vpack.c.bf16 %v6489, %v6486
      %v6494 = vpack.c.bf16 %v6492, %v6492
      %v6496 = vsel %vm697, %v6493, 0
      %v6499 = vsel %vm1100, %v6494, 0
      %6501 = vmatprep.subr.bf16.mxu0 0
      %6502 = vmatpush1.bf16.msra.mxu0 0
      %6503 = vmatprep.subr.bf16.mxu0 0
      %6504 = vmatpush1.bf16.msra.mxu0 0
      %6505 = vmatprep.subr.bf16.mxu0 0
      %6506 = vmatpush1.bf16.msra.mxu0 0
      %6507 = vmatprep.subr.bf16.mxu0 0
      %6508 = vmatpush1.bf16.msra.mxu0 0
      %6509 = vmatprep.subr.bf16.mxu0 0
      %6510 = vmatpush1.bf16.msra.mxu0 0
      %6511 = vmatprep.subr.bf16.mxu0 0
      %6512 = vmatpush1.bf16.msra.mxu0 0
      %6513 = vmatprep.subr.bf16.mxu0 0
      %6514 = vmatpush1.bf16.msra.mxu0 0
      %6515 = vmatprep.subr.bf16.mxu0 0
      %6516 = vmatpush1.bf16.msra.mxu0 %v6499
      %6517 = vmatprep.subr.bf16.mxu0 0
      %6518 = vmatpush2.bf16.msra.mxu0 0
      %6519 = vmatprep.subr.bf16.mxu0 0
      %6520 = vmatpush2.bf16.msra.mxu0 0
      %6521 = vmatprep.subr.bf16.mxu0 0
      %6522 = vmatpush2.bf16.msra.mxu0 0
      %6523 = vmatprep.subr.bf16.mxu0 0
      %6524 = vmatpush2.bf16.msra.mxu0 0
      %6525 = vmatprep.subr.bf16.mxu0 0
      %6526 = vmatpush2.bf16.msra.mxu0 0
      %6527 = vmatprep.subr.bf16.mxu0 0
      %6528 = vmatpush2.bf16.msra.mxu0 0
      %6529 = vmatprep.subr.bf16.mxu0 0
      %6530 = vmatpush2.bf16.msra.mxu0 0
      %6531 = vmatprep.subr.bf16.mxu0 0
      %6532 = vmatpush2.bf16.msra.mxu0 0
      %6533 = vmatprep.mubr.bf16.mxu0 0
      %6534 = vmatmul.mubr.bf16.gmra.mxu0 %v6496
      %v6535 = vpop.f32.mrf.mxu0
      %v6536 = vadd.f32 0.0, %v6535
      %v6537 = vpop.f32.mrf.mxu0
      %v6538 = vpop.f32.mrf.mxu0
      %v6539 = vadd.f32 0.0, %v6538
      %v6540 = vpop.f32.mrf.mxu0
      %6541 = vdwg.mxu0
      %v6542 = vadd.f32 %v6215, %v6536
      %v6543 = vadd.f32 %v6216, %v6539
      %v6544 = vld [vmem:[%s4 + $0x9b8] sm:$0x1]
      %v6545 = vlaneseq
      %v6546 = vshrl.u32 %v6545, 7
      %v6547 = vsub.s32 0, %v6546
      %v6548 = vrot.slane %v6544, %v6547
      %v6549 = vadd.f32 %v6542, %v6548
      %v6550 = vadd.f32 %v6543, %v6548
      %v6551 = vadd.f32 %v5229, %v6549
      %v6552 = vadd.f32 %v5230, %v6550
      %v6553 = vsel %vm546, %v6551, 0.0
      %6554 = vadd.xlane.f32.xlu0 %v6553
      %v6555 = vpop.xlane.xlu0 %6554
      %v6556 = vsel %vm5193, %v6552, 0.0
      %6557 = vadd.xlane.f32.xlu0 %v6556
      %v6558 = vpop.xlane.xlu0 %6557
      %v6559 = vmul.f32 %v6555, %v1861
      %v6560 = vmul.f32 %v6558, %v1861
      %v6561 = vsub.f32 %v6551, %v6559
      %v6562 = vsub.f32 %v6552, %v6560
      %v6563 = vmul.f32 %v6561, %v6561
      %v6564 = vmul.f32 %v6562, %v6562
      %v6565 = vsel %vm546, %v6563, 0.0
      %6566 = vadd.xlane.f32.xlu0 %v6565
      %v6567 = vpop.xlane.xlu0 %6566
      %v6568 = vsel %vm5193, %v6564, 0.0
      %6569 = vadd.xlane.f32.xlu0 %v6568
      %v6570 = vpop.xlane.xlu0 %6569
      %v6571 = vmul.f32 %v6567, %v1861
      %v6572 = vmul.f32 %v6570, %v1861
      %v6573 = vadd.f32 %v6571, 1e-05
      %v6574 = vadd.f32 %v6572, 1e-05
      %v6575 = vrsqrt.pop %v6573
      %v6576 = vrsqrt.pop %v6574
      %v6577 = vmul.f32 %v6561, %v6575
      %v6578 = vmul.f32 %v6562, %v6576
      %v6579 = vld [vmem:[%s4 + $0xa40] sm:$0x1]
      %v6580 = vlaneseq
      %v6581 = vshrl.u32 %v6580, 7
      %v6582 = vsub.s32 0, %v6581
      %v6583 = vrot.slane %v6579, %v6582
      %v6584 = vmul.f32 %v6577, %v6583
      %v6585 = vmul.f32 %v6578, %v6583
      %v6586 = vld [vmem:[%s4 + $0xa48] sm:$0x1]
      %v6587 = vlaneseq
      %v6588 = vshrl.u32 %v6587, 7
      %v6589 = vsub.s32 0, %v6588
      %v6590 = vrot.slane %v6586, %v6589
      %v6591 = vadd.f32 %v6584, %v6590
      %v6592 = vadd.f32 %v6585, %v6590
      %v6593 = vld [vmem:[%s4 + $0x9c0] sm:$0xff]
      %v6594 = vld [vmem:[%s4 + $0x9c8] sm:$0xff]
      %v6595 = vld [vmem:[%s4 + $0x9d0] sm:$0xff]
      %v6596 = vld [vmem:[%s4 + $0x9d8] sm:$0xff]
      %v6597 = vpack.c.bf16 %v6592, %v6591
      %v6598 = vpack.c.bf16 %v6594, %v6593
      %v6599 = vpack.c.bf16 %v6596, %v6595
      %v6600 = vld [vmem:[%s4 + $0x9e0] sm:$0x1]
      %v6601 = vlaneseq
      %v6602 = vshrl.u32 %v6601, 7
      %v6603 = vsub.s32 0, %v6602
      %v6604 = vrot.slane %v6600, %v6603
      %v6606 = vsel %vm546, %v6597, 0
      %6608 = vmatprep.subr.bf16.mxu0 0
      %6609 = vmatpush1.bf16.msra.mxu0 0
      %6610 = vmatprep.subr.bf16.mxu0 0
      %6611 = vmatpush1.bf16.msra.mxu0 0
      %6612 = vmatprep.subr.bf16.mxu0 0
      %6613 = vmatpush1.bf16.msra.mxu0 0
      %6614 = vmatprep.subr.bf16.mxu0 0
      %6615 = vmatpush1.bf16.msra.mxu0 0
      %6616 = vmatprep.subr.bf16.mxu0 0
      %6617 = vmatpush1.bf16.msra.mxu0 0
      %6618 = vmatprep.subr.bf16.mxu0 0
      %6619 = vmatpush1.bf16.msra.mxu0 0
      %6620 = vmatprep.subr.bf16.mxu0 0
      %6621 = vmatpush1.bf16.msra.mxu0 %v6599
      %6622 = vmatprep.subr.bf16.mxu0 0
      %6623 = vmatpush1.bf16.msra.mxu0 %v6598
      %6624 = vmatprep.subr.bf16.mxu0 0
      %6625 = vmatpush2.bf16.msra.mxu0 0
      %6626 = vmatprep.subr.bf16.mxu0 0
      %6627 = vmatpush2.bf16.msra.mxu0 0
      %6628 = vmatprep.subr.bf16.mxu0 0
      %6629 = vmatpush2.bf16.msra.mxu0 0
      %6630 = vmatprep.subr.bf16.mxu0 0
      %6631 = vmatpush2.bf16.msra.mxu0 0
      %6632 = vmatprep.subr.bf16.mxu0 0
      %6633 = vmatpush2.bf16.msra.mxu0 0
      %6634 = vmatprep.subr.bf16.mxu0 0
      %6635 = vmatpush2.bf16.msra.mxu0 0
      %6636 = vmatprep.subr.bf16.mxu0 0
      %6637 = vmatpush2.bf16.msra.mxu0 0
      %6638 = vmatprep.subr.bf16.mxu0 0
      %6639 = vmatpush2.bf16.msra.mxu0 0
      %6640 = vmatprep.mubr.bf16.mxu0 0
      %6641 = vmatmul.mubr.bf16.gmra.mxu0 %v6606
      %v6642 = vpop.f32.mrf.mxu0
      %v6643 = vadd.f32 %v6604, %v6642
      %v6644 = vpop.f32.mrf.mxu0
      %v6645 = vpop.f32.mrf.mxu0
      %v6646 = vadd.f32 %v6604, %v6645
      %v6647 = vpop.f32.mrf.mxu0
      %6648 = vdwg.mxu0
      %v6649 = vmax.f32 %v6643, 0.0
      %v6650 = vmax.f32 %v6646, 0.0
      %v6651 = vld [vmem:[%s4 + $0x9e8] sm:$0xff]
      %v6652 = vld [vmem:[%s4 + $0x9f0] sm:$0xff]
      %v6653 = vld [vmem:[%s4 + $0x9f8] sm:$0xff]
      %v6654 = vld [vmem:[%s4 + $0xa00] sm:$0xff]
      %v6655 = vld [vmem:[%s4 + $0xa08] sm:$0xff]
      %v6656 = vld [vmem:[%s4 + $0xa10] sm:$0xff]
      %v6657 = vld [vmem:[%s4 + $0xa18] sm:$0xff]
      %v6658 = vld [vmem:[%s4 + $0xa20] sm:$0xff]
      %v6659 = vpack.c.bf16 %v6650, %v6649
      %v6660 = vpack.c.bf16 %v6652, %v6651
      %v6661 = vpack.c.bf16 %v6654, %v6653
      %v6662 = vpack.c.bf16 %v6656, %v6655
      %v6663 = vpack.c.bf16 %v6658, %v6657
      %v6664 = vld [vmem:[%s4 + $0xa28] sm:$0x1]
      %v6665 = vlaneseq
      %v6666 = vshrl.u32 %v6665, 7
      %v6667 = vsub.s32 0, %v6666
      %v6668 = vrot.slane %v6664, %v6667
      %v6670 = vsel %vm1972, %v6659, 0
      %6672 = vmatprep.subr.bf16.mxu0 0
      %6673 = vmatpush1.bf16.msra.mxu0 0
      %6674 = vmatprep.subr.bf16.mxu0 0
      %6675 = vmatpush1.bf16.msra.mxu0 0
      %6676 = vmatprep.subr.bf16.mxu0 0
      %6677 = vmatpush1.bf16.msra.mxu0 0
      %6678 = vmatprep.subr.bf16.mxu0 0
      %6679 = vmatpush1.bf16.msra.mxu0 0
      %6680 = vmatprep.subr.bf16.mxu0 0
      %6681 = vmatpush1.bf16.msra.mxu0 %v6663
      %6682 = vmatprep.subr.bf16.mxu0 0
      %6683 = vmatpush1.bf16.msra.mxu0 %v6662
      %6684 = vmatprep.subr.bf16.mxu0 0
      %6685 = vmatpush1.bf16.msra.mxu0 %v6661
      %6686 = vmatprep.subr.bf16.mxu0 0
      %6687 = vmatpush1.bf16.msra.mxu0 %v6660
      %6688 = vmatprep.subr.bf16.mxu0 0
      %6689 = vmatpush2.bf16.msra.mxu0 0
      %6690 = vmatprep.subr.bf16.mxu0 0
      %6691 = vmatpush2.bf16.msra.mxu0 0
      %6692 = vmatprep.subr.bf16.mxu0 0
      %6693 = vmatpush2.bf16.msra.mxu0 0
      %6694 = vmatprep.subr.bf16.mxu0 0
      %6695 = vmatpush2.bf16.msra.mxu0 0
      %6696 = vmatprep.subr.bf16.mxu0 0
      %6697 = vmatpush2.bf16.msra.mxu0 0
      %6698 = vmatprep.subr.bf16.mxu0 0
      %6699 = vmatpush2.bf16.msra.mxu0 0
      %6700 = vmatprep.subr.bf16.mxu0 0
      %6701 = vmatpush2.bf16.msra.mxu0 0
      %6702 = vmatprep.subr.bf16.mxu0 0
      %6703 = vmatpush2.bf16.msra.mxu0 0
      %6704 = vmatprep.mubr.bf16.mxu0 0
      %6705 = vmatmul.mubr.bf16.gmra.mxu0 %v6670
      %v6706 = vpop.f32.mrf.mxu0
      %v6707 = vadd.f32 %v6668, %v6706
      %v6708 = vpop.f32.mrf.mxu0
      %v6709 = vpop.f32.mrf.mxu0
      %v6710 = vadd.f32 %v6668, %v6709
      %v6711 = vpop.f32.mrf.mxu0
      %6712 = vdwg.mxu0
      %v6713 = vadd.f32 %v6591, %v6707
      %v6714 = vadd.f32 %v6592, %v6710
      %v6715 = vsel %vm546, %v6713, 0.0
      %6716 = vadd.xlane.f32.xlu0 %v6715
      %v6717 = vpop.xlane.xlu0 %6716
      %v6718 = vsel %vm5193, %v6714, 0.0
      %6719 = vadd.xlane.f32.xlu0 %v6718
      %v6720 = vpop.xlane.xlu0 %6719
      %v6721 = vmul.f32 %v6717, %v1861
      %v6722 = vmul.f32 %v6720, %v1861
      %v6723 = vsub.f32 %v6713, %v6721
      %v6724 = vsub.f32 %v6714, %v6722
      %v6725 = vmul.f32 %v6723, %v6723
      %v6726 = vmul.f32 %v6724, %v6724
      %v6727 = vsel %vm546, %v6725, 0.0
      %6728 = vadd.xlane.f32.xlu0 %v6727
      %v6729 = vpop.xlane.xlu0 %6728
      %v6730 = vsel %vm5193, %v6726, 0.0
      %6731 = vadd.xlane.f32.xlu0 %v6730
      %v6732 = vpop.xlane.xlu0 %6731
      %v6733 = vmul.f32 %v6729, %v1861
      %v6734 = vmul.f32 %v6732, %v1861
      %v6735 = vadd.f32 %v6733, 1e-05
      %v6736 = vadd.f32 %v6734, 1e-05
      %v6737 = vrsqrt.pop %v6735
      %v6738 = vrsqrt.pop %v6736
      %v6739 = vmul.f32 %v6723, %v6737
      %v6740 = vmul.f32 %v6724, %v6738
      %v6741 = vld [vmem:[%s4 + $0xa50] sm:$0x1]
      %v6742 = vlaneseq
      %v6743 = vshrl.u32 %v6742, 7
      %v6744 = vsub.s32 0, %v6743
      %v6745 = vrot.slane %v6741, %v6744
      %v6746 = vmul.f32 %v6739, %v6745
      %v6747 = vmul.f32 %v6740, %v6745
      %v6748 = vld [vmem:[%s4 + $0xa58] sm:$0x1]
      %v6749 = vlaneseq
      %v6750 = vshrl.u32 %v6749, 7
      %v6751 = vsub.s32 0, %v6750
      %v6752 = vrot.slane %v6748, %v6751
      %v6753 = vadd.f32 %v6746, %v6752
      %v6754 = vadd.f32 %v6747, %v6752
      %v6755 = vsel %vm546, %v6753, 0.0
      %6756 = vadd.xlane.f32.xlu0 %v6755
      %v6757 = vpop.xlane.xlu0 %6756
      %v6758 = vsel %vm5193, %v6754, 0.0
      %6759 = vadd.xlane.f32.xlu0 %v6758
      %v6760 = vpop.xlane.xlu0 %6759
      %v6761 = vmul.f32 %v6757, %v1861
      %v6762 = vmul.f32 %v6760, %v1861
      %v6763 = vsub.f32 %v6753, %v6761
      %v6764 = vsub.f32 %v6754, %v6762
      %v6765 = vmul.f32 %v6763, %v6763
      %v6766 = vmul.f32 %v6764, %v6764
      %v6767 = vsel %vm546, %v6765, 0.0
      %6768 = vadd.xlane.f32.xlu0 %v6767
      %v6769 = vpop.xlane.xlu0 %6768
      %v6770 = vsel %vm5193, %v6766, 0.0
      %6771 = vadd.xlane.f32.xlu0 %v6770
      %v6772 = vpop.xlane.xlu0 %6771
      %v6773 = vmul.f32 %v6769, %v1861
      %v6774 = vmul.f32 %v6772, %v1861
      %v6775 = vadd.f32 %v6773, 1e-05
      %v6776 = vadd.f32 %v6774, 1e-05
      %v6777 = vrsqrt.pop %v6775
      %v6778 = vrsqrt.pop %v6776
      %v6779 = vmul.f32 %v6763, %v6777
      %v6780 = vmul.f32 %v6764, %v6778
      %v6781 = vld [vmem:[%s4 + $0xa60] sm:$0x1]
      %v6782 = vlaneseq
      %v6783 = vshrl.u32 %v6782, 7
      %v6784 = vsub.s32 0, %v6783
      %v6785 = vrot.slane %v6781, %v6784
      %v6786 = vmul.f32 %v6779, %v6785
      %v6787 = vmul.f32 %v6780, %v6785
      %v6788 = vld [vmem:[%s4 + $0xa68] sm:$0x1]
      %v6789 = vlaneseq
      %v6790 = vshrl.u32 %v6789, 7
      %v6791 = vsub.s32 0, %v6790
      %v6792 = vrot.slane %v6788, %v6791
      %v6793 = vadd.f32 %v6786, %v6792
      %v6794 = vadd.f32 %v6787, %v6792
      %v6795 = vld [vmem:[%s4 + $0xa70] sm:$0xff]
      %v6796 = vld [vmem:[%s4 + $0xa78] sm:$0xff]
      %v6797 = vld [vmem:[%s4 + $0xa80] sm:$0xff]
      %v6798 = vld [vmem:[%s4 + $0xa88] sm:$0xff]
      %v6799 = vpack.c.bf16 %v6794, %v6793
      %v6800 = vpack.c.bf16 %v6796, %v6795
      %v6801 = vpack.c.bf16 %v6798, %v6797
      %v6802 = vld [vmem:[%s4 + $0xa90] sm:$0x1]
      %v6803 = vlaneseq
      %v6804 = vshrl.u32 %v6803, 7
      %v6805 = vsub.s32 0, %v6804
      %v6806 = vrot.slane %v6802, %v6805
      %v6808 = vsel %vm546, %v6799, 0
      %6810 = vmatprep.subr.bf16.mxu0 0
      %6811 = vmatpush1.bf16.msra.mxu0 0
      %6812 = vmatprep.subr.bf16.mxu0 0
      %6813 = vmatpush1.bf16.msra.mxu0 0
      %6814 = vmatprep.subr.bf16.mxu0 0
      %6815 = vmatpush1.bf16.msra.mxu0 0
      %6816 = vmatprep.subr.bf16.mxu0 0
      %6817 = vmatpush1.bf16.msra.mxu0 0
      %6818 = vmatprep.subr.bf16.mxu0 0
      %6819 = vmatpush1.bf16.msra.mxu0 0
      %6820 = vmatprep.subr.bf16.mxu0 0
      %6821 = vmatpush1.bf16.msra.mxu0 0
      %6822 = vmatprep.subr.bf16.mxu0 0
      %6823 = vmatpush1.bf16.msra.mxu0 %v6801
      %6824 = vmatprep.subr.bf16.mxu0 0
      %6825 = vmatpush1.bf16.msra.mxu0 %v6800
      %6826 = vmatprep.subr.bf16.mxu0 0
      %6827 = vmatpush2.bf16.msra.mxu0 0
      %6828 = vmatprep.subr.bf16.mxu0 0
      %6829 = vmatpush2.bf16.msra.mxu0 0
      %6830 = vmatprep.subr.bf16.mxu0 0
      %6831 = vmatpush2.bf16.msra.mxu0 0
      %6832 = vmatprep.subr.bf16.mxu0 0
      %6833 = vmatpush2.bf16.msra.mxu0 0
      %6834 = vmatprep.subr.bf16.mxu0 0
      %6835 = vmatpush2.bf16.msra.mxu0 0
      %6836 = vmatprep.subr.bf16.mxu0 0
      %6837 = vmatpush2.bf16.msra.mxu0 0
      %6838 = vmatprep.subr.bf16.mxu0 0
      %6839 = vmatpush2.bf16.msra.mxu0 0
      %6840 = vmatprep.subr.bf16.mxu0 0
      %6841 = vmatpush2.bf16.msra.mxu0 0
      %6842 = vmatprep.mubr.bf16.mxu0 0
      %6843 = vmatmul.mubr.bf16.gmra.mxu0 %v6808
      %v6844 = vpop.f32.mrf.mxu0
      %v6845 = vadd.f32 %v6806, %v6844
      %v6846 = vpop.f32.mrf.mxu0
      %v6847 = vpop.f32.mrf.mxu0
      %v6848 = vadd.f32 %v6806, %v6847
      %v6849 = vpop.f32.mrf.mxu0
      %6850 = vdwg.mxu0
      %vm6851 = vcmask 31748
      %6852 = vst.msk [vmem:[%s282 - $0x4] sm:$0xf0] %vm6851, %v6845
      %vm6853 = vcmask 27648
      %6854 = vst.msk [vmem:[%s282 + $0x4] sm:$0xf] %vm6853, %v6848
      %p6855 = scmp.lt.s32.totalorder %s16, 1
      %s6856 = scalar_select %p6855, %s16, 1
      %s6857 = smul.addr %s6856, 8
      %s6858 = scalar_lea.vmem %s5, %s6857
      // Predicated region
      $region41: #{informer_forward.1} parent=39 // pred_check
        %p6859 = pneg %p159
      $region42: #{informer_forward.1} parent=39 // pred_check_branch
        %6861 = sbr.rel (%p6859) target = $region44
      $region43: #{informer_forward.1} parent=39 // pred_region
        _
      $region44: #{informer_forward.1} parent=39 // pred_fallthru
        _
    $region40: #{informer_forward.1} parent=5 // pred_fallthru
      _
    %p6862 = scmp.le.s32.totalorder 2, %s11
    // Predicated region
    $region45: #{informer_forward.1} parent=5 // pred_check
      %p6863 = pneg %p6862
    $region46: #{informer_forward.1} parent=5 // pred_check_branch
      %6865 = sbr.rel (%p6863) target = $region48
    $region47: #{informer_forward.1} parent=5 // pred_region
      %s6866 = ssub.s32 %s11, 2
      // Predicated region
      $region49: #{informer_forward.1} parent=47 // pred_check
        %p6867 = pneg %p165
      $region50: #{informer_forward.1} parent=47 // pred_check_branch
        %6869 = sbr.rel (%p6867) target = $region52
      $region51: #{informer_forward.1} parent=47 // pred_region
        %p6870 = scmp.lt.s32.totalorder %s17, 1
        %s6871 = scalar_select %p6870, %s17, 1
        %s6872 = smul.addr %s6871, 8
        %s6873 = scalar_lea.vmem %s5, %s6872
      $region52: #{informer_forward.1} parent=47 // pred_fallthru
        _
    $region48: #{informer_forward.1} parent=5 // pred_fallthru
      _
  $region6: #{informer_forward.1} parent=0 // loop_footer
    %s15 = sadd.s32 1, %s11
  $region7: #{informer_forward.1} parent=0 // loop_footer_branch
    %10 = sbr.rel target = $region3
  $region8: #{informer_forward.1} parent=0 // loop_exit
    _

</llo_original>
